<compile_context>
chip_gen: v6e
topology: v6e:2x2x1
jax: 0.10.0
libtpu: 0.0.40
codegen_flags: <defaults>
</compile_context>

<pallas_src>
import functools

import jax
import jax.numpy as jnp
from jax.experimental import pallas as pl
from jax.experimental.pallas import tpu as pltpu

HIDDEN = 1024  # fixed by the module: nn.Linear(3, 1024)


# ----------------------------------------------------------------------------
# Kernel 1: reparameterization + Linear(3,1024) + LeakyReLU(0.2).
# Runs once (grid=(1,)).  K=3 -> three VPU broadcast-FMAs, no MXU.
# Emits h zero-padded to an 8-row (sublane) boundary for the big matmul.
# ----------------------------------------------------------------------------
def reparam_fc1_kernel(mean_ref, var_ref, eps_ref, w1_ref, b1_ref,
                       w_out_ref, h_out_ref):
    # z = mean + var * eps  (matches the torch code: var, not sqrt(var))
    w = mean_ref[...] + var_ref[...] * eps_ref[...]            # (B, 3)
    w_out_ref[...] = w

    # Linear(3, 1024) as 3 broadcast-FMAs + bias, then LeakyReLU(0.2).
    h = (w[:, 0:1] * w1_ref[0:1, :]
         + w[:, 1:2] * w1_ref[1:2, :]
         + w[:, 2:3] * w1_ref[2:3, :]
         + b1_ref[...])                                        # (B, 1024)
    h = jnp.where(h > 0.0, h, 0.2 * h)

    # Zero-pad batch rows to the 8-sublane boundary (unmasked stores later).
    pad_rows = h_out_ref.shape[0] - h.shape[0]
    if pad_rows:
        h = jnp.concatenate(
            [h, jnp.zeros((pad_rows, h.shape[1]), h.dtype)], axis=0)
    h_out_ref[...] = h


# ----------------------------------------------------------------------------
# Kernel 2: Linear(1024, 1024*max_seq_len), tiled over the output dimension.
# Pure (Bpad,1024) x (1024,tn) matmul per grid step.  W2 streamed as bf16,
# accumulation in f32 on the MXU.  Grid axis is "parallel".
# ----------------------------------------------------------------------------
def decoder_emb_kernel(h_ref, w2_ref, b2_ref, out_ref):
    h = h_ref[...].astype(jnp.bfloat16)                        # (Bpad, 1024)
    acc = jnp.dot(h, w2_ref[...], preferred_element_type=jnp.float32)
    out_ref[...] = (acc + b2_ref[...]).astype(out_ref.dtype)


def decoder_forward(gt_mean, gt_var, eps, w1, b1, w2_bf16, b2,
                    *, max_seq_len, tn=2048):
    """Reparameterization + decoder_emb via two Pallas calls."""
    B = gt_mean.shape[0]
    N = HIDDEN * max_seq_len
    tn = min(tn, N)
    assert N % tn == 0
    Bpad = ((B + 7) // 8) * 8                                  # 8-sublane pad

    b1_2d = b1.reshape(1, HIDDEN).astype(jnp.float32)
    b2_2d = b2.reshape(1, N).astype(jnp.float32)

    # --- tiny kernel: w = mean + var*eps ; h = LeakyReLU(w @ W1 + b1) -------
    w_out, h_pad = pl.pallas_call(
        reparam_fc1_kernel,
        out_shape=(
            jax.ShapeDtypeStruct((B, 3), jnp.float32),
            jax.ShapeDtypeStruct((Bpad, HIDDEN), jnp.float32),
        ),
        grid=(1,),
        in_specs=[
            pl.BlockSpec((B, 3), lambda i: (0, 0)),            # gt_mean
            pl.BlockSpec((B, 3), lambda i: (0, 0)),            # gt_var
            pl.BlockSpec((B, 3), lambda i: (0, 0)),            # eps
            pl.BlockSpec((3, HIDDEN), lambda i: (0, 0)),       # W1
            pl.BlockSpec((1, HIDDEN), lambda i: (0, 0)),       # b1
        ],
        out_specs=(
            pl.BlockSpec((B, 3), lambda i: (0, 0)),            # w
            pl.BlockSpec((Bpad, HIDDEN), lambda i: (0, 0)),    # h (padded)
        ),
    )(gt_mean, gt_var, eps, w1, b1_2d)

    # --- big kernel: embeds = h @ W2 + b2, tiled over N ---------------------
    # VMEM per step (tn=2048, bf16 W2): 4 MiB W2 tile x2 buffers + small
    # h/b2/out buffers ~ 8.3 MiB total -> fits the default scoped-VMEM limit
    # on v5e/v6e/v7x, so no vmem_limit_bytes override.
    # (Optional: pipeline_mode=pl.Buffered(3) on the W2 spec if traces show
    #  exposed DMA at the short 4-step loop.)
    emb_pad = pl.pallas_call(
        decoder_emb_kernel,
        out_shape=jax.ShapeDtypeStruct((Bpad, N), jnp.float32),
        grid=(N // tn,),
        in_specs=[
            pl.BlockSpec((Bpad, HIDDEN), lambda j: (0, 0)),    # h (small, reused)
            pl.BlockSpec((HIDDEN, tn), lambda j: (0, j)),      # W2 tile (bf16)
            pl.BlockSpec((1, tn), lambda j: (0, j)),           # b2 tile
        ],
        out_specs=pl.BlockSpec((Bpad, tn), lambda j: (0, j)),
        compiler_params=pltpu.CompilerParams(
            dimension_semantics=("parallel",),                 # shard tiles on v7x's 2 TCs
        ),
    )(h_pad, w2_bf16, b2_2d)

    embeds = emb_pad[:B].reshape(B, max_seq_len, HIDDEN)
    return w_out, embeds


# ----------------------------------------------------------------------------
# Synthetic "pretrained_encoder" (model_2 is injected into the torch module;
# its architecture is not defined there -> simple deterministic linear encoder).
# ----------------------------------------------------------------------------
def synthetic_pretrained_encoder(x, enc, *, max_seq_len):
    B = x.shape[0]
    xf = x.reshape(B, -1)                                      # torch.flatten(x, 1)
    gt_mean = xf @ enc["Wm"] + enc["bm"]                       # (B, 3)
    gt_var = jax.nn.softplus(xf @ enc["Wv"] + enc["bv"])       # (B, 3), positive "var"
    embeds_gt = (xf @ enc["We"] + enc["be"]).reshape(B, max_seq_len, HIDDEN)
    return gt_mean, gt_var, embeds_gt


# ----------------------------------------------------------------------------
# Full VAE_Net.forward (mode='Embeddings')
# ----------------------------------------------------------------------------
def vae_net_forward(x, params, eps, mode, *, max_seq_len):
    gt_mean, gt_var, embeds_gt = synthetic_pretrained_encoder(
        x, params["encoder"], max_seq_len=max_seq_len)
    w, embeds = decoder_forward(
        gt_mean, gt_var, eps,
        params["dec_W1"], params["dec_b1"], params["dec_W2"], params["dec_b2"],
        max_seq_len=max_seq_len)
    if mode == "Embeddings":
        return [gt_mean, gt_var], w, [embeds_gt, embeds]
    # TODO(synk): 'Ids' mode uses decoder_distr/decoder_mean/decoder_var which
    # are never defined in the module's __init__, so it cannot be implemented
    # faithfully.
    raise ValueError("Wrong mode.")


# ----------------------------------------------------------------------------
# Deterministic parameter construction.  dec_W2 is stored as bf16 (the kernel
# streams it directly; f32 accumulation on the MXU).
# ----------------------------------------------------------------------------
def make_params(key, in_features, max_seq_len):
    ks = jax.random.split(key, 10)
    s = 0.02
    N = HIDDEN * max_seq_len
    encoder = {
        "Wm": s * jax.random.normal(ks[0], (in_features, 3), jnp.float32),
        "bm": jnp.zeros((3,), jnp.float32),
        "Wv": s * jax.random.normal(ks[1], (in_features, 3), jnp.float32),
        "bv": jnp.zeros((3,), jnp.float32),
        "We": s * jax.random.normal(ks[2], (in_features, N), jnp.float32),
        "be": jnp.zeros((N,), jnp.float32),
    }
    params = {
        "encoder": encoder,
        "dec_W1": s * jax.random.normal(ks[3], (3, HIDDEN), jnp.float32),
        "dec_b1": s * jax.random.normal(ks[4], (HIDDEN,), jnp.float32),
        "dec_W2": (s * jax.random.normal(ks[5], (HIDDEN, N), jnp.float32)
                   ).astype(jnp.bfloat16),
        "dec_b2": s * jax.random.normal(ks[6], (N,), jnp.float32),
    }
    return params


if __name__ == "__main__":
    B, C, H, W = 2, 4, 16, 16      # NCHW input, small shapes
    max_seq_len = 8

    key = jax.random.PRNGKey(0)
    k_x, k_p, k_eps = jax.random.split(key, 3)

    x = jax.random.normal(k_x, (B, C, H, W), jnp.float32)
    params = make_params(k_p, C * H * W, max_seq_len)
    eps = jax.random.normal(k_eps, (B, 3), jnp.float32)  # torch.randn_like(var)

    fwd = jax.jit(functools.partial(vae_net_forward, mode="Embeddings",
                                    max_seq_len=max_seq_len))
    gt_stats, w, embeds_pair = fwd(x, params, eps)
    jax.block_until_ready((gt_stats, w, embeds_pair))

    gt_mean, gt_var = gt_stats
    embeds_gt, embeds = embeds_pair
    assert gt_mean.shape == (B, 3) and gt_var.shape == (B, 3)
    assert w.shape == (B, 3)
    assert embeds_gt.shape == (B, max_seq_len, HIDDEN)
    assert embeds.shape == (B, max_seq_len, HIDDEN)

    # Correctness check vs. a plain-JAX reference of the decoder path that
    # follows the same precision (bf16 W2 / bf16-rounded h, f32 accumulate).
    w_ref = gt_mean + gt_var * eps
    h_ref = w_ref @ params["dec_W1"] + params["dec_b1"]
    h_ref = jnp.where(h_ref > 0, h_ref, 0.2 * h_ref)
    w2_f32 = params["dec_W2"].astype(jnp.float32)
    emb_ref = (h_ref.astype(jnp.bfloat16).astype(jnp.float32) @ w2_f32
               + params["dec_b2"]).reshape(B, max_seq_len, HIDDEN)
    assert jnp.allclose(w, w_ref, atol=1e-5)
    assert jnp.allclose(embeds, emb_ref, atol=2e-3)

    print("KERNEL_OK")
</pallas_src>

<mosaic_0001>
module attributes {stable_mosaic.version = 11 : i64} {
  func.func @reparam_fc1_kernel(%arg0: i32, %arg1: memref<2x3xf32, #tpu.memory_space<vmem>>, %arg2: memref<2x3xf32, #tpu.memory_space<vmem>>, %arg3: memref<2x3xf32, #tpu.memory_space<vmem>>, %arg4: memref<3x1024xf32, #tpu.memory_space<vmem>>, %arg5: memref<1x1024xf32, #tpu.memory_space<vmem>>, %arg6: memref<2x3xf32, #tpu.memory_space<vmem>>, %arg7: memref<8x1024xf32, #tpu.memory_space<vmem>>) attributes {dimension_semantics = [#tpu.dimension_semantics<arbitrary>], iteration_bounds = array<i64: 1>, scalar_prefetch = 0 : i64, scratch_operands = 0 : i64, tpu.core_type = #tpu.core_type<tc>, window_params = [{pipeline_mode = #tpu.pipeline_mode<synchronous>, transform_indices = @transform_0, window_bounds = array<i64: 2, 3>}, {pipeline_mode = #tpu.pipeline_mode<synchronous>, transform_indices = @transform_1, window_bounds = array<i64: 2, 3>}, {pipeline_mode = #tpu.pipeline_mode<synchronous>, transform_indices = @transform_2, window_bounds = array<i64: 2, 3>}, {pipeline_mode = #tpu.pipeline_mode<synchronous>, transform_indices = @transform_3, window_bounds = array<i64: 3, 1024>}, {pipeline_mode = #tpu.pipeline_mode<synchronous>, transform_indices = @transform_4, window_bounds = array<i64: 1, 1024>}, {pipeline_mode = #tpu.pipeline_mode<synchronous>, transform_indices = @transform_5, window_bounds = array<i64: 2, 3>}, {pipeline_mode = #tpu.pipeline_mode<synchronous>, transform_indices = @transform_6, window_bounds = array<i64: 8, 1024>}]} {
    %c0 = arith.constant 0 : index
    %c0_0 = arith.constant 0 : index
    %0 = vector.load %arg1[%c0, %c0_0] : memref<2x3xf32, #tpu.memory_space<vmem>>, vector<2x3xf32>
    %c0_1 = arith.constant 0 : index
    %c0_2 = arith.constant 0 : index
    %1 = vector.load %arg2[%c0_1, %c0_2] : memref<2x3xf32, #tpu.memory_space<vmem>>, vector<2x3xf32>
    %c0_3 = arith.constant 0 : index
    %c0_4 = arith.constant 0 : index
    %2 = vector.load %arg3[%c0_3, %c0_4] : memref<2x3xf32, #tpu.memory_space<vmem>>, vector<2x3xf32>
    %3 = arith.mulf %1, %2 : vector<2x3xf32>
    %4 = arith.addf %0, %3 : vector<2x3xf32>
    %c0_5 = arith.constant 0 : index
    %c0_6 = arith.constant 0 : index
    %5 = vector.load %arg6[%c0_5, %c0_6] : memref<2x3xf32, #tpu.memory_space<vmem>>, vector<2x3xf32>
    tpu.vector_store %arg6[%c0_5, %c0_6], %4 {strides = array<i32>} : memref<2x3xf32, #tpu.memory_space<vmem>>, vector<2x3xf32>,
    %6 = vector.extract_strided_slice %4 {offsets = [0, 0], sizes = [2, 1], strides = [1, 1]} : vector<2x3xf32> to vector<2x1xf32>
    %c0_7 = arith.constant 0 : index
    %c0_8 = arith.constant 0 : index
    %7 = vector.load %arg4[%c0_7, %c0_8] : memref<3x1024xf32, #tpu.memory_space<vmem>>, vector<1x1024xf32>
    %8 = vector.broadcast %6 : vector<2x1xf32> to vector<2x1024xf32>
    %9 = vector.broadcast %7 : vector<1x1024xf32> to vector<2x1024xf32>
    %10 = arith.mulf %8, %9 : vector<2x1024xf32>
    %11 = vector.extract_strided_slice %4 {offsets = [0, 1], sizes = [2, 1], strides = [1, 1]} : vector<2x3xf32> to vector<2x1xf32>
    %c1 = arith.constant 1 : index
    %c0_9 = arith.constant 0 : index
    %12 = vector.load %arg4[%c1, %c0_9] : memref<3x1024xf32, #tpu.memory_space<vmem>>, vector<1x1024xf32>
    %13 = vector.broadcast %11 : vector<2x1xf32> to vector<2x1024xf32>
    %14 = vector.broadcast %12 : vector<1x1024xf32> to vector<2x1024xf32>
    %15 = arith.mulf %13, %14 : vector<2x1024xf32>
    %16 = arith.addf %10, %15 : vector<2x1024xf32>
    %17 = vector.extract_strided_slice %4 {offsets = [0, 2], sizes = [2, 1], strides = [1, 1]} : vector<2x3xf32> to vector<2x1xf32>
    %c2 = arith.constant 2 : index
    %c0_10 = arith.constant 0 : index
    %18 = vector.load %arg4[%c2, %c0_10] : memref<3x1024xf32, #tpu.memory_space<vmem>>, vector<1x1024xf32>
    %19 = vector.broadcast %17 : vector<2x1xf32> to vector<2x1024xf32>
    %20 = vector.broadcast %18 : vector<1x1024xf32> to vector<2x1024xf32>
    %21 = arith.mulf %19, %20 : vector<2x1024xf32>
    %22 = arith.addf %16, %21 : vector<2x1024xf32>
    %c0_11 = arith.constant 0 : index
    %c0_12 = arith.constant 0 : index
    %23 = vector.load %arg5[%c0_11, %c0_12] : memref<1x1024xf32, #tpu.memory_space<vmem>>, vector<1x1024xf32>
    %24 = vector.broadcast %23 : vector<1x1024xf32> to vector<2x1024xf32>
    %25 = arith.addf %22, %24 : vector<2x1024xf32>
    %cst = arith.constant 0.000000e+00 : f32
    %26 = vector.broadcast %cst : f32 to vector<2x1024xf32>
    %27 = arith.cmpf ogt, %25, %26 : vector<2x1024xf32>
    %cst_13 = arith.constant 2.000000e-01 : f32
    %28 = vector.broadcast %cst_13 : f32 to vector<2x1024xf32>
    %29 = arith.mulf %28, %25 : vector<2x1024xf32>
    %30 = arith.select %27, %25, %29 : vector<2x1024xi1>, vector<2x1024xf32>
    %cst_14 = arith.constant 0.000000e+00 : f32
    %31 = vector.broadcast %cst_14 : f32 to vector<6x1024xf32>
    %32 = tpu.concatenate %30, %31 in 0 : vector<2x1024xf32>, vector<6x1024xf32> -> vector<8x1024xf32>
    %c0_15 = arith.constant 0 : index
    %c0_16 = arith.constant 0 : index
    %33 = vector.load %arg7[%c0_15, %c0_16] : memref<8x1024xf32, #tpu.memory_space<vmem>>, vector<8x1024xf32>
    tpu.vector_store %arg7[%c0_15, %c0_16], %32 {strides = array<i32>} : memref<8x1024xf32, #tpu.memory_space<vmem>>, vector<8x1024xf32>,
    return
  }
  func.func @transform_0(%arg0: i32) -> (i32, i32) {
    %c0_i32 = arith.constant 0 : i32
    %c0_i32_0 = arith.constant 0 : i32
    %c0_i32_1 = arith.constant 0 : i32
    return %c0_i32, %c0_i32_0 : i32, i32
  }
  func.func @transform_1(%arg0: i32) -> (i32, i32) {
    %c0_i32 = arith.constant 0 : i32
    %c0_i32_0 = arith.constant 0 : i32
    %c0_i32_1 = arith.constant 0 : i32
    return %c0_i32, %c0_i32_0 : i32, i32
  }
  func.func @transform_2(%arg0: i32) -> (i32, i32) {
    %c0_i32 = arith.constant 0 : i32
    %c0_i32_0 = arith.constant 0 : i32
    %c0_i32_1 = arith.constant 0 : i32
    return %c0_i32, %c0_i32_0 : i32, i32
  }
  func.func @transform_3(%arg0: i32) -> (i32, i32) {
    %c0_i32 = arith.constant 0 : i32
    %c0_i32_0 = arith.constant 0 : i32
    %c0_i32_1 = arith.constant 0 : i32
    return %c0_i32, %c0_i32_0 : i32, i32
  }
  func.func @transform_4(%arg0: i32) -> (i32, i32) {
    %c0_i32 = arith.constant 0 : i32
    %c0_i32_0 = arith.constant 0 : i32
    %c0_i32_1 = arith.constant 0 : i32
    return %c0_i32, %c0_i32_0 : i32, i32
  }
  func.func @transform_5(%arg0: i32) -> (i32, i32) {
    %c0_i32 = arith.constant 0 : i32
    %c0_i32_0 = arith.constant 0 : i32
    %c0_i32_1 = arith.constant 0 : i32
    return %c0_i32, %c0_i32_0 : i32, i32
  }
  func.func @transform_6(%arg0: i32) -> (i32, i32) {
    %c0_i32 = arith.constant 0 : i32
    %c0_i32_0 = arith.constant 0 : i32
    %c0_i32_1 = arith.constant 0 : i32
    return %c0_i32, %c0_i32_0 : i32, i32
  }
}

module attributes {stable_mosaic.version = 11 : i64} {
  func.func @decoder_emb_kernel(%arg0: i32, %arg1: memref<8x1024xf32, #tpu.memory_space<vmem>>, %arg2: memref<1024x2048xbf16, #tpu.memory_space<vmem>>, %arg3: memref<1x2048xf32, #tpu.memory_space<vmem>>, %arg4: memref<8x2048xf32, #tpu.memory_space<vmem>>) attributes {dimension_semantics = [#tpu.dimension_semantics<parallel>], iteration_bounds = array<i64: 4>, scalar_prefetch = 0 : i64, scratch_operands = 0 : i64, tpu.core_type = #tpu.core_type<tc>, window_params = [{pipeline_mode = #tpu.pipeline_mode<synchronous>, transform_indices = @transform_0, window_bounds = array<i64: 8, 1024>}, {transform_indices = @transform_1, window_bounds = array<i64: 1024, 2048>}, {transform_indices = @transform_2, window_bounds = array<i64: 1, 2048>}, {transform_indices = @transform_3, window_bounds = array<i64: 8, 2048>}]} {
    %c0 = arith.constant 0 : index
    %c0_0 = arith.constant 0 : index
    %0 = vector.load %arg1[%c0, %c0_0] : memref<8x1024xf32, #tpu.memory_space<vmem>>, vector<8x1024xf32>
    %1 = arith.truncf %0 : vector<8x1024xf32> to vector<8x1024xbf16>
    %c0_1 = arith.constant 0 : index
    %c0_2 = arith.constant 0 : index
    %2 = vector.load %arg2[%c0_1, %c0_2] : memref<1024x2048xbf16, #tpu.memory_space<vmem>>, vector<1024x2048xbf16>
    %cst = arith.constant dense<0.000000e+00> : vector<8x2048xf32>
    %3 = tpu.matmul %1, %2, %cst {dimension_numbers = #tpu.dot_dimension_numbers<[1], [0], [0], [1], [0, 0, 1, 1], [], []>} : vector<8x1024xbf16>, vector<1024x2048xbf16>, vector<8x2048xf32> -> vector<8x2048xf32>
    %c0_3 = arith.constant 0 : index
    %c0_4 = arith.constant 0 : index
    %4 = vector.load %arg3[%c0_3, %c0_4] : memref<1x2048xf32, #tpu.memory_space<vmem>>, vector<1x2048xf32>
    %5 = vector.broadcast %4 : vector<1x2048xf32> to vector<8x2048xf32>
    %6 = arith.addf %3, %5 : vector<8x2048xf32>
    %c0_5 = arith.constant 0 : index
    %c0_6 = arith.constant 0 : index
    %7 = vector.load %arg4[%c0_5, %c0_6] : memref<8x2048xf32, #tpu.memory_space<vmem>>, vector<8x2048xf32>
    tpu.vector_store %arg4[%c0_5, %c0_6], %6 {strides = array<i32>} : memref<8x2048xf32, #tpu.memory_space<vmem>>, vector<8x2048xf32>,
    return
  }
  func.func @transform_0(%arg0: i32) -> (i32, i32) {
    %c0_i32 = arith.constant 0 : i32
    %c0_i32_0 = arith.constant 0 : i32
    %c0_i32_1 = arith.constant 0 : i32
    return %c0_i32, %c0_i32_0 : i32, i32
  }
  func.func @transform_1(%arg0: i32) -> (i32, i32) {
    %c0_i32 = arith.constant 0 : i32
    %c0_i32_0 = arith.constant 0 : i32
    return %c0_i32, %arg0 : i32, i32
  }
  func.func @transform_2(%arg0: i32) -> (i32, i32) {
    %c0_i32 = arith.constant 0 : i32
    %c0_i32_0 = arith.constant 0 : i32
    return %c0_i32, %arg0 : i32, i32
  }
  func.func @transform_3(%arg0: i32) -> (i32, i32) {
    %c0_i32 = arith.constant 0 : i32
    %c0_i32_0 = arith.constant 0 : i32
    return %c0_i32, %arg0 : i32, i32
  }
}

</mosaic_0001>

<llo_original>
// kernel: vae_net_forward.2
$region0: #{vae_net_forward.2}
  #allocation0 [shape = 'u32[]', space=smem, size = 0x4, offset = 0x4, fixed_abs, tag = 'smem constant byte address 0x4 - core index']
  #allocation1 [shape = 'u32[144,128]{1,0:T(1,128)}', space=vmem, size = 0x12000, scoped, tag = 'internal scratch']
  %s0 = inlined_call_operand.vmem [shape: f32[2,3], index: 0, kind: input, shape index: {}]
  %s1 = inlined_call_operand.vmem [shape: f32[2,3], index: 1, kind: input, shape index: {}]
  %s2 = inlined_call_operand.hbm [shape: f32[2,3], index: 2, kind: input, shape index: {}]
  %s3 = inlined_call_operand.hbm [shape: f32[3,1024], index: 3, kind: input, shape index: {}]
  %s4 = inlined_call_operand.hbm [shape: f32[1,1024], index: 4, kind: input, shape index: {}]
  %s5 = inlined_call_operand.hbm [shape: f32[2,3], index: 5, kind: output, shape index: {0}]
  %s6 = inlined_call_operand.vmem [shape: f32[8,1024], index: 6, kind: output, shape index: {1}]
  %7 = xla_tuple %s5, %s6
  %s8 = sld [smem:[#allocation0]]
  $region50: #{vae_net_forward.2} parent=0
    _
  %s10 = ssub.s32 1, %s8
  %s11 = scalar_select 0, %s10, %s8
  $region1: #{vae_net_forward.2} parent=0
    #allocation2 [shape = 'u8[1024]{0}', space=vmem, size = 0x400, scoped, tag = 'input window, operand 2, single buffered']
    #allocation3 [shape = 's32[1]{0}', space=sflag, size = 0x4, scoped, tag = 'scoped memory for vae_net_forward.2']
    #allocation4 [shape = 's32[1]{0}', space=sflag, size = 0x4, scoped, tag = 'scoped memory for vae_net_forward.2']
    #allocation5 [shape = 'u8[16384]{0}', space=vmem, size = 0x4000, scoped, tag = 'input window, operand 3, single buffered']
    #allocation6 [shape = 's32[1]{0}', space=sflag, size = 0x4, scoped, tag = 'scoped memory for vae_net_forward.2']
    #allocation7 [shape = 'u8[4096]{0}', space=vmem, size = 0x1000, scoped, tag = 'input window, operand 4, single buffered']
    #allocation8 [shape = 'u8[1024]{0}', space=vmem, size = 0x400, scoped, tag = 'output window, operand 0, single buffered']
    %12 = vsyncpa [#allocation3], 0
    %13 = vsyncpa [#allocation6], 0
    %14 = vsyncpa [#allocation4], 0
    // Predicated region
    $region2: #{vae_net_forward.2} parent=1 // pred_check
      _
    $region3: #{vae_net_forward.2} parent=1 // pred_check_branch
      %16 = sbr.rel (0) target = $region5
    $region4: #{vae_net_forward.2} parent=1 // pred_region
      _
    $region5: #{vae_net_forward.2} parent=1 // pred_fallthru
      _
    // Predicated region
    $region6: #{vae_net_forward.2} parent=1 // pred_check
      _
    $region7: #{vae_net_forward.2} parent=1 // pred_check_branch
      %18 = sbr.rel (0) target = $region9
    $region8: #{vae_net_forward.2} parent=1 // pred_region
      _
    $region9: #{vae_net_forward.2} parent=1 // pred_fallthru
      _
    // Predicated region
    $region10: #{vae_net_forward.2} parent=1 // pred_check
      _
    $region11: #{vae_net_forward.2} parent=1 // pred_check_branch
      %20 = sbr.rel (0) target = $region13
    $region12: #{vae_net_forward.2} parent=1 // pred_region
      %s22 = ssub.s32 32, 32
      %23 = vsyncadd [#allocation3], %s22
      %s25 = sshll.u32 [#allocation2], 4
      %s26 = int_to_ptr.vmem [resolvable:$true] %s25
      %28 = dma.hbm_to_vmem [thread:$0]  %s2, 32, %s26, [#allocation3]
    $region13: #{vae_net_forward.2} parent=1 // pred_fallthru
      _
    // Predicated region
    $region14: #{vae_net_forward.2} parent=1 // pred_check
      _
    $region15: #{vae_net_forward.2} parent=1 // pred_check_branch
      %30 = sbr.rel (0) target = $region17
    $region16: #{vae_net_forward.2} parent=1 // pred_region
      %s32 = ssub.s32 512, 512
      %33 = vsyncadd [#allocation6], %s32
      %s35 = sshll.u32 [#allocation5], 4
      %s36 = int_to_ptr.vmem [resolvable:$true] %s35
      %38 = dma.hbm_to_vmem [thread:$0]  %s3, 512, %s36, [#allocation6]
    $region17: #{vae_net_forward.2} parent=1 // pred_fallthru
      _
    // Predicated region
    $region18: #{vae_net_forward.2} parent=1 // pred_check
      _
    $region19: #{vae_net_forward.2} parent=1 // pred_check_branch
      %40 = sbr.rel (0) target = $region21
    $region20: #{vae_net_forward.2} parent=1 // pred_region
      %s42 = ssub.s32 128, 128
      %43 = vsyncadd [#allocation6], %s42
      %s45 = sshll.u32 [#allocation7], 4
      %s46 = int_to_ptr.vmem [resolvable:$true] %s45
      %48 = dma.hbm_to_vmem [thread:$0]  %s4, 128, %s46, [#allocation6]
    $region21: #{vae_net_forward.2} parent=1 // pred_fallthru
      _
    // Predicated region
    $region22: #{vae_net_forward.2} parent=1 // pred_check
      _
    $region23: #{vae_net_forward.2} parent=1 // pred_check_branch
      %50 = sbr.rel (0) target = $region25
    $region24: #{vae_net_forward.2} parent=1 // pred_region
      %51 = dma.done [#allocation3], 32
    $region25: #{vae_net_forward.2} parent=1 // pred_fallthru
      _
    // Predicated region
    $region26: #{vae_net_forward.2} parent=1 // pred_check
      _
    $region27: #{vae_net_forward.2} parent=1 // pred_check_branch
      %53 = sbr.rel (0) target = $region29
    $region28: #{vae_net_forward.2} parent=1 // pred_region
      %54 = dma.done [#allocation6], 512
    $region29: #{vae_net_forward.2} parent=1 // pred_fallthru
      _
    // Predicated region
    $region30: #{vae_net_forward.2} parent=1 // pred_check
      _
    $region31: #{vae_net_forward.2} parent=1 // pred_check_branch
      %56 = sbr.rel (0) target = $region33
    $region32: #{vae_net_forward.2} parent=1 // pred_region
      %57 = dma.done [#allocation6], 128
    $region33: #{vae_net_forward.2} parent=1 // pred_fallthru
      _
    %v58 = vld [vmem:[%s0] sm:$0x3]
    %v59 = vld [vmem:[%s1] sm:$0x3]
    %v60 = vld [vmem:[#allocation2] sm:$0x3]
    %v61 = vmul.f32 %v59, %v60
    %v62 = vadd.f32 %v58, %v61
    %vm63 = vcmask 17408
    %64 = vst.msk [vmem:[#allocation8] sm:$0x3] %vm63, %v62
    %v65 = vld [vmem:[#allocation5] ss:$4 sm:$0xff]
    %67 = vset.pattern.permute.xlu0 0
    %68 = vperm.xlu0 %67, %v62
    %v69 = vpop.permute.xlu0 %68
    %v72 = vlaneseq
    %v73 = vshrl.u32 %v72, 7
    %v74 = vsub.s32 0, %v73
    %v75 = vrot.slane %v65, %v74
    %v76 = vlaneseq
    %v77 = vshrl.u32 %v76, 7
    %v78 = vsub.s32 1, %v77
    %v79 = vrot.slane %v65, %v78
    %v80 = vlaneseq
    %v81 = vshrl.u32 %v80, 7
    %v82 = vsub.s32 2, %v81
    %v83 = vrot.slane %v65, %v82
    %v84 = vlaneseq
    %v85 = vshrl.u32 %v84, 7
    %v86 = vsub.s32 3, %v85
    %v87 = vrot.slane %v65, %v86
    %v88 = vlaneseq
    %v89 = vshrl.u32 %v88, 7
    %v90 = vsub.s32 4, %v89
    %v91 = vrot.slane %v65, %v90
    %v92 = vlaneseq
    %v93 = vshrl.u32 %v92, 7
    %v94 = vsub.s32 5, %v93
    %v95 = vrot.slane %v65, %v94
    %v96 = vlaneseq
    %v97 = vshrl.u32 %v96, 7
    %v98 = vsub.s32 6, %v97
    %v99 = vrot.slane %v65, %v98
    %v100 = vlaneseq
    %v101 = vshrl.u32 %v100, 7
    %v102 = vsub.s32 7, %v101
    %v103 = vrot.slane %v65, %v102
    %v112 = vmul.f32 %v69, %v75
    %v113 = vmul.f32 %v69, %v79
    %v114 = vmul.f32 %v69, %v83
    %v115 = vmul.f32 %v69, %v87
    %v116 = vmul.f32 %v69, %v91
    %v117 = vmul.f32 %v69, %v95
    %v118 = vmul.f32 %v69, %v99
    %v119 = vmul.f32 %v69, %v103
    %s120 = scalar_lea.vmem [#allocation5], 1
    %v121 = vld [vmem:[%s120] ss:$4 sm:$0xff]
    %122 = vset.pattern.permute.xlu0 1
    %123 = vperm.xlu0 %122, %v62
    %v124 = vpop.permute.xlu0 %123
    %v127 = vlaneseq
    %v128 = vshrl.u32 %v127, 7
    %v129 = vsub.s32 0, %v128
    %v130 = vrot.slane %v121, %v129
    %v131 = vlaneseq
    %v132 = vshrl.u32 %v131, 7
    %v133 = vsub.s32 1, %v132
    %v134 = vrot.slane %v121, %v133
    %v135 = vlaneseq
    %v136 = vshrl.u32 %v135, 7
    %v137 = vsub.s32 2, %v136
    %v138 = vrot.slane %v121, %v137
    %v139 = vlaneseq
    %v140 = vshrl.u32 %v139, 7
    %v141 = vsub.s32 3, %v140
    %v142 = vrot.slane %v121, %v141
    %v143 = vlaneseq
    %v144 = vshrl.u32 %v143, 7
    %v145 = vsub.s32 4, %v144
    %v146 = vrot.slane %v121, %v145
    %v147 = vlaneseq
    %v148 = vshrl.u32 %v147, 7
    %v149 = vsub.s32 5, %v148
    %v150 = vrot.slane %v121, %v149
    %v151 = vlaneseq
    %v152 = vshrl.u32 %v151, 7
    %v153 = vsub.s32 6, %v152
    %v154 = vrot.slane %v121, %v153
    %v155 = vlaneseq
    %v156 = vshrl.u32 %v155, 7
    %v157 = vsub.s32 7, %v156
    %v158 = vrot.slane %v121, %v157
    %v167 = vmul.f32 %v124, %v130
    %v168 = vmul.f32 %v124, %v134
    %v169 = vmul.f32 %v124, %v138
    %v170 = vmul.f32 %v124, %v142
    %v171 = vmul.f32 %v124, %v146
    %v172 = vmul.f32 %v124, %v150
    %v173 = vmul.f32 %v124, %v154
    %v174 = vmul.f32 %v124, %v158
    %v175 = vadd.f32 %v112, %v167
    %v176 = vadd.f32 %v113, %v168
    %v177 = vadd.f32 %v114, %v169
    %v178 = vadd.f32 %v115, %v170
    %v179 = vadd.f32 %v116, %v171
    %v180 = vadd.f32 %v117, %v172
    %v181 = vadd.f32 %v118, %v173
    %v182 = vadd.f32 %v119, %v174
    %s183 = scalar_lea.vmem [#allocation5], 2
    %v184 = vld [vmem:[%s183] ss:$4 sm:$0xff]
    %185 = vset.pattern.permute.xlu0 2
    %186 = vperm.xlu0 %185, %v62
    %v187 = vpop.permute.xlu0 %186
    %v190 = vlaneseq
    %v191 = vshrl.u32 %v190, 7
    %v192 = vsub.s32 0, %v191
    %v193 = vrot.slane %v184, %v192
    %v194 = vlaneseq
    %v195 = vshrl.u32 %v194, 7
    %v196 = vsub.s32 1, %v195
    %v197 = vrot.slane %v184, %v196
    %v198 = vlaneseq
    %v199 = vshrl.u32 %v198, 7
    %v200 = vsub.s32 2, %v199
    %v201 = vrot.slane %v184, %v200
    %v202 = vlaneseq
    %v203 = vshrl.u32 %v202, 7
    %v204 = vsub.s32 3, %v203
    %v205 = vrot.slane %v184, %v204
    %v206 = vlaneseq
    %v207 = vshrl.u32 %v206, 7
    %v208 = vsub.s32 4, %v207
    %v209 = vrot.slane %v184, %v208
    %v210 = vlaneseq
    %v211 = vshrl.u32 %v210, 7
    %v212 = vsub.s32 5, %v211
    %v213 = vrot.slane %v184, %v212
    %v214 = vlaneseq
    %v215 = vshrl.u32 %v214, 7
    %v216 = vsub.s32 6, %v215
    %v217 = vrot.slane %v184, %v216
    %v218 = vlaneseq
    %v219 = vshrl.u32 %v218, 7
    %v220 = vsub.s32 7, %v219
    %v221 = vrot.slane %v184, %v220
    %v230 = vmul.f32 %v187, %v193
    %v231 = vmul.f32 %v187, %v197
    %v232 = vmul.f32 %v187, %v201
    %v233 = vmul.f32 %v187, %v205
    %v234 = vmul.f32 %v187, %v209
    %v235 = vmul.f32 %v187, %v213
    %v236 = vmul.f32 %v187, %v217
    %v237 = vmul.f32 %v187, %v221
    %v238 = vadd.f32 %v175, %v230
    %v239 = vadd.f32 %v176, %v231
    %v240 = vadd.f32 %v177, %v232
    %v241 = vadd.f32 %v178, %v233
    %v242 = vadd.f32 %v179, %v234
    %v243 = vadd.f32 %v180, %v235
    %v244 = vadd.f32 %v181, %v236
    %v245 = vadd.f32 %v182, %v237
    %v246 = vld [vmem:[#allocation7] sm:$0xff]
    %v248 = vlaneseq
    %v249 = vshrl.u32 %v248, 7
    %v250 = vsub.s32 0, %v249
    %v251 = vrot.slane %v246, %v250
    %v252 = vlaneseq
    %v253 = vshrl.u32 %v252, 7
    %v254 = vsub.s32 1, %v253
    %v255 = vrot.slane %v246, %v254
    %v256 = vlaneseq
    %v257 = vshrl.u32 %v256, 7
    %v258 = vsub.s32 2, %v257
    %v259 = vrot.slane %v246, %v258
    %v260 = vlaneseq
    %v261 = vshrl.u32 %v260, 7
    %v262 = vsub.s32 3, %v261
    %v263 = vrot.slane %v246, %v262
    %v264 = vlaneseq
    %v265 = vshrl.u32 %v264, 7
    %v266 = vsub.s32 4, %v265
    %v267 = vrot.slane %v246, %v266
    %v268 = vlaneseq
    %v269 = vshrl.u32 %v268, 7
    %v270 = vsub.s32 5, %v269
    %v271 = vrot.slane %v246, %v270
    %v272 = vlaneseq
    %v273 = vshrl.u32 %v272, 7
    %v274 = vsub.s32 6, %v273
    %v275 = vrot.slane %v246, %v274
    %v276 = vlaneseq
    %v277 = vshrl.u32 %v276, 7
    %v278 = vsub.s32 7, %v277
    %v279 = vrot.slane %v246, %v278
    %v288 = vadd.f32 %v238, %v251
    %v289 = vadd.f32 %v239, %v255
    %v290 = vadd.f32 %v240, %v259
    %v291 = vadd.f32 %v241, %v263
    %v292 = vadd.f32 %v242, %v267
    %v293 = vadd.f32 %v243, %v271
    %v294 = vadd.f32 %v244, %v275
    %v295 = vadd.f32 %v245, %v279
    %vm296 = vcmp.gt.f32.partialorder %v288, 0.0
    %vm297 = vcmp.gt.f32.partialorder %v289, 0.0
    %vm298 = vcmp.gt.f32.partialorder %v290, 0.0
    %vm299 = vcmp.gt.f32.partialorder %v291, 0.0
    %vm300 = vcmp.gt.f32.partialorder %v292, 0.0
    %vm301 = vcmp.gt.f32.partialorder %v293, 0.0
    %vm302 = vcmp.gt.f32.partialorder %v294, 0.0
    %vm303 = vcmp.gt.f32.partialorder %v295, 0.0
    %v304 = vmul.f32 %v288, 0.2
    %v305 = vmul.f32 %v289, 0.2
    %v306 = vmul.f32 %v290, 0.2
    %v307 = vmul.f32 %v291, 0.2
    %v308 = vmul.f32 %v292, 0.2
    %v309 = vmul.f32 %v293, 0.2
    %v310 = vmul.f32 %v294, 0.2
    %v311 = vmul.f32 %v295, 0.2
    %v312 = vsel %vm296, %v288, %v304
    %v313 = vsel %vm297, %v289, %v305
    %v314 = vsel %vm298, %v290, %v306
    %v315 = vsel %vm299, %v291, %v307
    %v316 = vsel %vm300, %v292, %v308
    %v317 = vsel %vm301, %v293, %v309
    %v318 = vsel %vm302, %v294, %v310
    %v319 = vsel %vm303, %v295, %v311
    %vm320 = vcmask 1041408
    %v321 = vsel %vm320, %v312, 0.0
    %v322 = vsel %vm320, %v313, 0.0
    %v323 = vsel %vm320, %v314, 0.0
    %v324 = vsel %vm320, %v315, 0.0
    %v325 = vsel %vm320, %v316, 0.0
    %v326 = vsel %vm320, %v317, 0.0
    %v327 = vsel %vm320, %v318, 0.0
    %v328 = vsel %vm320, %v319, 0.0
    %329 = vst [vmem:[%s6] sm:$0xff] %v321
    %330 = vst [vmem:[%s6 + $0x8] sm:$0xff] %v322
    %331 = vst [vmem:[%s6 + $0x10] sm:$0xff] %v323
    %332 = vst [vmem:[%s6 + $0x18] sm:$0xff] %v324
    %333 = vst [vmem:[%s6 + $0x20] sm:$0xff] %v325
    %334 = vst [vmem:[%s6 + $0x28] sm:$0xff] %v326
    %335 = vst [vmem:[%s6 + $0x30] sm:$0xff] %v327
    %336 = vst [vmem:[%s6 + $0x38] sm:$0xff] %v328
    // Predicated region
    $region34: #{vae_net_forward.2} parent=1 // pred_check
      _
    $region35: #{vae_net_forward.2} parent=1 // pred_check_branch
      %338 = sbr.rel (0) target = $region37
    $region36: #{vae_net_forward.2} parent=1 // pred_region
      %s340 = ssub.s32 32, 32
      %341 = vsyncadd [#allocation4], %s340
      %s343 = sshll.u32 [#allocation8], 4
      %s344 = int_to_ptr.vmem [resolvable:$true] %s343
      %346 = dma.vmem_to_hbm [thread:$0]  %s344, 32, %s5, [#allocation4]
    $region37: #{vae_net_forward.2} parent=1 // pred_fallthru
      _
    // Predicated region
    $region38: #{vae_net_forward.2} parent=1 // pred_check
      _
    $region39: #{vae_net_forward.2} parent=1 // pred_check_branch
      %348 = sbr.rel (0) target = $region41
    $region40: #{vae_net_forward.2} parent=1 // pred_region
      _
    $region41: #{vae_net_forward.2} parent=1 // pred_fallthru
      _
    // Predicated region
    $region42: #{vae_net_forward.2} parent=1 // pred_check
      _
    $region43: #{vae_net_forward.2} parent=1 // pred_check_branch
      %350 = sbr.rel (0) target = $region45
    $region44: #{vae_net_forward.2} parent=1 // pred_region
      %351 = dma.done [#allocation4], 32
    $region45: #{vae_net_forward.2} parent=1 // pred_fallthru
      _
    // Predicated region
    $region46: #{vae_net_forward.2} parent=1 // pred_check
      _
    $region47: #{vae_net_forward.2} parent=1 // pred_check_branch
      %353 = sbr.rel (0) target = $region49
    $region48: #{vae_net_forward.2} parent=1 // pred_region
      _
    $region49: #{vae_net_forward.2} parent=1 // pred_fallthru
      _
    %354 = vsyncpa [#allocation3], 1
    %355 = vsyncpa [#allocation6], 1
    %356 = vsyncpa [#allocation4], 1

// kernel: vae_net_forward.3
$region0: #{vae_net_forward.3}
  #allocation0 [shape = 'u32[]', space=smem, size = 0x4, offset = 0x4, fixed_abs, tag = 'smem constant byte address 0x4 - core index']
  #allocation1 [shape = 'u32[144,128]{1,0:T(1,128)}', space=vmem, size = 0x12000, scoped, tag = 'internal scratch']
  %s0 = inlined_call_operand.vmem [shape: f32[8,1024], index: 0, kind: input, shape index: {}]
  %s1 = inlined_call_operand.hbm [shape: bf16[1024,8192], index: 1, kind: input, shape index: {}]
  %s2 = inlined_call_operand.hbm [shape: f32[1,8192], index: 2, kind: input, shape index: {}]
  %s3 = inlined_call_operand.vmem [shape: f32[8,8192], index: 3, kind: output, shape index: {}]
  %s4 = sld [smem:[#allocation0]]
  $region53: #{vae_net_forward.3} parent=0
    _
  %s6 = ssub.s32 1, %s4
  %s7 = scalar_select 0, %s6, %s4
  $region1: #{vae_net_forward.3} parent=0
    #allocation2 [shape = 'u8[8388608]{0}', space=vmem, size = 0x800000, scoped, tag = 'input window, operand 1']
    #allocation3 [shape = 's32[2]{0}', space=sflag, size = 0x8, scoped, tag = 'scoped memory for vae_net_forward.3']
    #allocation4 [shape = 'u8[16384]{0}', space=vmem, size = 0x4000, scoped, tag = 'input window, operand 2']
    #allocation5 [shape = 's32[2]{0}', space=sflag, size = 0x8, scoped, tag = 'scoped memory for vae_net_forward.3']
    %8 = vsyncpa [#allocation3], 0
    %s9 = scalar_lea.sflag [#allocation3], 1
    %10 = vsyncpa %s9, 0
    %11 = vsyncpa [#allocation5], 0
    %s12 = scalar_lea.sflag [#allocation5], 1
    %13 = vsyncpa %s12, 0
    loop: start=0, step=1, limit=6
    $region2: #{vae_net_forward.3} parent=1 // loop_pre_header
      _
    $region3: #{vae_net_forward.3} parent=1 // loop_header
      %s15 = sphi 0, %s19
      %p16 = scmp.ge.s32.totalorder %s15, 6
      %s23 = sphi 0, %s23
      %s25 = sphi 0, %s23
      %s26 = sphi 0, %s25
      %s40 = sphi 0, %s26
      %s46 = sphi 0, %s48
      %s49 = sphi 0, %s46
      %s50 = sphi 0, %s49
      %s66 = sphi 0, %s50
      %s72 = sphi 0, %s74
      %s75 = sphi 0, %s72
      %s76 = sphi 0, %s75
      %s92 = sphi 0, %s76
      %s98 = sphi 0, %s100
      %s101 = sphi 0, %s98
      %s102 = sphi 0, %s101
      %s118 = sphi 0, %s102
    $region4: #{vae_net_forward.3} parent=1 // loop_header_branch
      %18 = sbr.rel (%p16) target = $region8
    $region5: #{vae_net_forward.3} parent=1 // loop_body
      %s20 = ssub.s32 %s15, 1
      %s21 = ssub.s32 %s15, 2
      %s22 = sadd.s32 %s15, 1
      %s24 = sadd.s32 %s23, 1
      %p27 = scmp.eq.s32.totalorder %s15, 3
      %p28 = scmp.ne.s32.totalorder %s23, %s25
      %p29 = scmp.eq.s32.totalorder %s15, 0
      %p30 = por %p28, %p29
      %p31 = scmp.ne.s32.totalorder %s23, %s25
      %p32 = scmp.eq.s32.totalorder %s20, 3
      %p33 = por %p31, %p32
      %p34 = scmp.ne.s32.totalorder %s25, %s26
      %p35 = scmp.eq.s32.totalorder %s20, 0
      %p36 = por %p34, %p35
      %p37 = scmp.ne.s32.totalorder %s25, %s26
      %p38 = scmp.eq.s32.totalorder %s21, 3
      %p39 = por %p37, %p38
      %p41 = scmp.ne.s32.totalorder %s26, %s40
      %p42 = scmp.eq.s32.totalorder %s21, 0
      %p43 = por %p41, %p42
      %s44 = ssub.s32 %s15, %s22
      %p45 = scmp.eq.s32.totalorder %s44, 0
      %s47 = sadd.s32 %s46, 1
      %s48 = scalar_select %p45, %s46, %s47
      %p51 = pneg %p45
      %p52 = scmp.eq.s32.totalorder %s15, 3
      %p53 = por %p51, %p52
      %p54 = scmp.ne.s32.totalorder %s46, %s49
      %p55 = scmp.eq.s32.totalorder %s15, 0
      %p56 = por %p54, %p55
      %p57 = scmp.ne.s32.totalorder %s46, %s49
      %p58 = scmp.eq.s32.totalorder %s20, 3
      %p59 = por %p57, %p58
      %p60 = scmp.ne.s32.totalorder %s49, %s50
      %p61 = scmp.eq.s32.totalorder %s20, 0
      %p62 = por %p60, %p61
      %p63 = scmp.ne.s32.totalorder %s49, %s50
      %p64 = scmp.eq.s32.totalorder %s21, 3
      %p65 = por %p63, %p64
      %p67 = scmp.ne.s32.totalorder %s50, %s66
      %p68 = scmp.eq.s32.totalorder %s21, 0
      %p69 = por %p67, %p68
      %s70 = ssub.s32 %s15, %s22
      %p71 = scmp.eq.s32.totalorder %s70, 0
      %s73 = sadd.s32 %s72, 1
      %s74 = scalar_select %p71, %s72, %s73
      %p77 = pneg %p71
      %p78 = scmp.eq.s32.totalorder %s15, 3
      %p79 = por %p77, %p78
      %p80 = scmp.ne.s32.totalorder %s72, %s75
      %p81 = scmp.eq.s32.totalorder %s15, 0
      %p82 = por %p80, %p81
      %p83 = scmp.ne.s32.totalorder %s72, %s75
      %p84 = scmp.eq.s32.totalorder %s20, 3
      %p85 = por %p83, %p84
      %p86 = scmp.ne.s32.totalorder %s75, %s76
      %p87 = scmp.eq.s32.totalorder %s20, 0
      %p88 = por %p86, %p87
      %p89 = scmp.ne.s32.totalorder %s75, %s76
      %p90 = scmp.eq.s32.totalorder %s21, 3
      %p91 = por %p89, %p90
      %p93 = scmp.ne.s32.totalorder %s76, %s92
      %p94 = scmp.eq.s32.totalorder %s21, 0
      %p95 = por %p93, %p94
      %s96 = ssub.s32 %s15, %s22
      %p97 = scmp.eq.s32.totalorder %s96, 0
      %s99 = sadd.s32 %s98, 1
      %s100 = scalar_select %p97, %s98, %s99
      %p103 = pneg %p97
      %p104 = scmp.eq.s32.totalorder %s15, 3
      %p105 = por %p103, %p104
      %p106 = scmp.ne.s32.totalorder %s98, %s101
      %p107 = scmp.eq.s32.totalorder %s15, 0
      %p108 = por %p106, %p107
      %p109 = scmp.ne.s32.totalorder %s98, %s101
      %p110 = scmp.eq.s32.totalorder %s20, 3
      %p111 = por %p109, %p110
      %p112 = scmp.ne.s32.totalorder %s101, %s102
      %p113 = scmp.eq.s32.totalorder %s20, 0
      %p114 = por %p112, %p113
      %p115 = scmp.ne.s32.totalorder %s101, %s102
      %p116 = scmp.eq.s32.totalorder %s21, 3
      %p117 = por %p115, %p116
      %p119 = scmp.ne.s32.totalorder %s102, %s118
      %p120 = scmp.eq.s32.totalorder %s21, 0
      %p121 = por %p119, %p120
      %p122 = scmp.le.s32.totalorder 1, %s15
      %p123 = scmp.lt.s32.totalorder %s15, 5
      %p124 = pnand %p122, %p123
      %p125 = pneg %p124
      // Predicated region
      $region9: #{vae_net_forward.3} parent=5 // pred_check
        _
      $region10: #{vae_net_forward.3} parent=5 // pred_check_branch
        %127 = sbr.rel (%p124) target = $region12
      $region11: #{vae_net_forward.3} parent=5 // pred_region
        %s128 = ssub.s32 %s15, 1
        // Predicated region
        $region13: #{vae_net_forward.3} parent=11 // pred_check
          %p129 = pneg %p36
        $region14: #{vae_net_forward.3} parent=11 // pred_check_branch
          %131 = sbr.rel (%p129) target = $region16
        $region15: #{vae_net_forward.3} parent=11 // pred_region
          _
        $region16: #{vae_net_forward.3} parent=11 // pred_fallthru
          _
      $region12: #{vae_net_forward.3} parent=5 // pred_fallthru
        _
      %p132 = scmp.lt.s32.totalorder %s15, 4
      // Predicated region
      $region17: #{vae_net_forward.3} parent=5 // pred_check
        %p133 = pneg %p132
      $region18: #{vae_net_forward.3} parent=5 // pred_check_branch
        %135 = sbr.rel (%p133) target = $region20
      $region19: #{vae_net_forward.3} parent=5 // pred_region
        // Predicated region
        $region21: #{vae_net_forward.3} parent=19 // pred_check
          %p136 = pneg %p56
        $region22: #{vae_net_forward.3} parent=19 // pred_check_branch
          %138 = sbr.rel (%p136) target = $region24
        $region23: #{vae_net_forward.3} parent=19 // pred_region
          %s139 = sand.u32 %s46, 1
          %s140 = scalar_lea.sflag [#allocation3], %s139
          %s141 = sand.u32 %s46, 1
          %s142 = smul.addr %s141, 8192
          %s143 = scalar_lea.vmem [#allocation2], %s142
          %s144 = smul.u32 16, %s15
          %s146 = ssub.s32 131072, 131072
          %147 = vsyncadd %s140, %s146
          %s148 = smul.addr %s144, 64
          %s149 = scalar_lea.hbm %s1, %s148
          %s150 = sshll.u32 %s143, 4
          %s151 = int_to_ptr.vmem [resolvable:$true] %s150
          %156 = dma.hbm_to_vmem [thread:$0]  %s149, 131072, %s151, %s140, 4096, 1024, 64
        $region24: #{vae_net_forward.3} parent=19 // pred_fallthru
          _
        // Predicated region
        $region25: #{vae_net_forward.3} parent=19 // pred_check
          %p157 = pneg %p82
        $region26: #{vae_net_forward.3} parent=19 // pred_check_branch
          %159 = sbr.rel (%p157) target = $region28
        $region27: #{vae_net_forward.3} parent=19 // pred_region
          %s160 = sand.u32 %s72, 1
          %s161 = scalar_lea.sflag [#allocation5], %s160
          %s162 = sand.u32 %s72, 1
          %s163 = smul.addr %s162, 16
          %s164 = scalar_lea.vmem [#allocation4], %s163
          %s165 = smul.u32 16, %s15
          %s167 = ssub.s32 256, 256
          %168 = vsyncadd %s161, %s167
          %s169 = smul.addr %s165, 16
          %s170 = scalar_lea.hbm %s2, %s169
          %s172 = sshll.u32 %s164, 4
          %s173 = int_to_ptr.vmem [resolvable:$true] %s172
          %175 = dma.hbm_to_vmem [thread:$0]  %s170, 256, %s173, %s161
        $region28: #{vae_net_forward.3} parent=19 // pred_fallthru
          _
      $region20: #{vae_net_forward.3} parent=5 // pred_fallthru
        _
      %p176 = scmp.le.s32.totalorder 1, %s15
      %p177 = scmp.lt.s32.totalorder %s15, 5
      %p178 = pnand %p176, %p177
      %p179 = pneg %p178
      // Predicated region
      $region29: #{vae_net_forward.3} parent=5 // pred_check
        _
      $region30: #{vae_net_forward.3} parent=5 // pred_check_branch
        %181 = sbr.rel (%p178) target = $region32
      $region31: #{vae_net_forward.3} parent=5 // pred_region
        %s182 = ssub.s32 %s15, 1
        %s183 = sand.u32 %s49, 1
        %s184 = scalar_lea.sflag [#allocation3], %s183
        %s185 = sand.u32 %s49, 1
        %s186 = smul.addr %s185, 8192
        %s187 = scalar_lea.vmem [#allocation2], %s186
        // Predicated region
        $region33: #{vae_net_forward.3} parent=31 // pred_check
          %p188 = pneg %p62
        $region34: #{vae_net_forward.3} parent=31 // pred_check_branch
          %190 = sbr.rel (%p188) target = $region36
        $region35: #{vae_net_forward.3} parent=31 // pred_region
          %191 = dma.done %s184, 131072
        $region36: #{vae_net_forward.3} parent=31 // pred_fallthru
          _
        %s192 = sand.u32 %s75, 1
        %s193 = scalar_lea.sflag [#allocation5], %s192
        %s194 = sand.u32 %s75, 1
        %s195 = smul.addr %s194, 16
        %s196 = scalar_lea.vmem [#allocation4], %s195
        // Predicated region
        $region37: #{vae_net_forward.3} parent=31 // pred_check
          %p197 = pneg %p88
        $region38: #{vae_net_forward.3} parent=31 // pred_check_branch
          %199 = sbr.rel (%p197) target = $region40
        $region39: #{vae_net_forward.3} parent=31 // pred_region
          %200 = dma.done %s193, 256
        $region40: #{vae_net_forward.3} parent=31 // pred_fallthru
          _
        %p201 = pneg %p36
        %p202 = pneg %p33
        %s203 = sand.u32 %s49, 1
        %s204 = scalar_lea.sflag [#allocation3], %s203
        %s205 = sand.u32 %s49, 1
        %s206 = smul.addr %s205, 8192
        %s207 = scalar_lea.vmem [#allocation2], %s206
        %p208 = pneg %p62
        %p209 = pneg %p59
        %s210 = sand.u32 %s75, 1
        %s211 = scalar_lea.sflag [#allocation5], %s210
        %s212 = sand.u32 %s75, 1
        %s213 = smul.addr %s212, 16
        %s214 = scalar_lea.vmem [#allocation4], %s213
        %p215 = pneg %p88
        %p216 = pneg %p85
        %p217 = pneg %p114
        %p218 = pneg %p111
        %s219 = smul.u32 16, %s20
        %p220 = scmp.lt.s32.totalorder %s219, 63
        %s221 = scalar_select %p220, %s219, 63
        %s222 = smul.addr %s221, 8
        %s223 = scalar_lea.vmem %s3, %s222
        %s224 = smul.u32 16, %s20
        %s225 = smul.u32 16, %s20
        %s226 = smul.u32 16, %s20
        %p227 = scmp.lt.s32.totalorder %s226, 63
        %s228 = scalar_select %p227, %s226, 63
        %s229 = smul.addr %s228, 8
        %s230 = scalar_lea.vmem %s3, %s229
        %s231 = smul.u32 16, %s20
        %v232 = vld [vmem:[%s0] sm:$0xff]
        %v233 = vld [vmem:[%s0 + $0x8] sm:$0xff]
        %v234 = vld [vmem:[%s0 + $0x10] sm:$0xff]
        %v235 = vld [vmem:[%s0 + $0x18] sm:$0xff]
        %v236 = vld [vmem:[%s0 + $0x20] sm:$0xff]
        %v237 = vld [vmem:[%s0 + $0x28] sm:$0xff]
        %v238 = vld [vmem:[%s0 + $0x30] sm:$0xff]
        %v239 = vld [vmem:[%s0 + $0x38] sm:$0xff]
        %v240 = vpack.c.bf16 %v232, %v232
        %v241 = vpack.c.bf16 %v233, %v233
        %v242 = vpack.c.bf16 %v234, %v234
        %v243 = vpack.c.bf16 %v235, %v235
        %v244 = vpack.c.bf16 %v236, %v236
        %v245 = vpack.c.bf16 %v237, %v237
        %v246 = vpack.c.bf16 %v238, %v238
        %v247 = vpack.c.bf16 %v239, %v239
        %v248 = vld [vmem:[%s187] sm:$0xff]
        %v249 = vld [vmem:[%s187 + $0x8] sm:$0xff]
        %v250 = vld [vmem:[%s187 + $0x10] sm:$0xff]
        %v251 = vld [vmem:[%s187 + $0x18] sm:$0xff]
        %v252 = vld [vmem:[%s187 + $0x20] sm:$0xff]
        %v253 = vld [vmem:[%s187 + $0x28] sm:$0xff]
        %v254 = vld [vmem:[%s187 + $0x30] sm:$0xff]
        %v255 = vld [vmem:[%s187 + $0x38] sm:$0xff]
        %v256 = vld [vmem:[%s187 + $0x40] sm:$0xff]
        %v257 = vld [vmem:[%s187 + $0x48] sm:$0xff]
        %v258 = vld [vmem:[%s187 + $0x50] sm:$0xff]
        %v259 = vld [vmem:[%s187 + $0x58] sm:$0xff]
        %v260 = vld [vmem:[%s187 + $0x60] sm:$0xff]
        %v261 = vld [vmem:[%s187 + $0x68] sm:$0xff]
        %v262 = vld [vmem:[%s187 + $0x70] sm:$0xff]
        %v263 = vld [vmem:[%s187 + $0x78] sm:$0xff]
        %v264 = vld [vmem:[%s187 + $0x80] sm:$0xff]
        %v265 = vld [vmem:[%s187 + $0x88] sm:$0xff]
        %v266 = vld [vmem:[%s187 + $0x90] sm:$0xff]
        %v267 = vld [vmem:[%s187 + $0x98] sm:$0xff]
        %v268 = vld [vmem:[%s187 + $0xa0] sm:$0xff]
        %v269 = vld [vmem:[%s187 + $0xa8] sm:$0xff]
        %v270 = vld [vmem:[%s187 + $0xb0] sm:$0xff]
        %v271 = vld [vmem:[%s187 + $0xb8] sm:$0xff]
        %v272 = vld [vmem:[%s187 + $0xc0] sm:$0xff]
        %v273 = vld [vmem:[%s187 + $0xc8] sm:$0xff]
        %v274 = vld [vmem:[%s187 + $0xd0] sm:$0xff]
        %v275 = vld [vmem:[%s187 + $0xd8] sm:$0xff]
        %v276 = vld [vmem:[%s187 + $0xe0] sm:$0xff]
        %v277 = vld [vmem:[%s187 + $0xe8] sm:$0xff]
        %v278 = vld [vmem:[%s187 + $0xf0] sm:$0xff]
        %v279 = vld [vmem:[%s187 + $0xf8] sm:$0xff]
        %v280 = vld [vmem:[%s187 + $0x100] sm:$0xff]
        %v281 = vld [vmem:[%s187 + $0x108] sm:$0xff]
        %v282 = vld [vmem:[%s187 + $0x110] sm:$0xff]
        %v283 = vld [vmem:[%s187 + $0x118] sm:$0xff]
        %v284 = vld [vmem:[%s187 + $0x120] sm:$0xff]
        %v285 = vld [vmem:[%s187 + $0x128] sm:$0xff]
        %v286 = vld [vmem:[%s187 + $0x130] sm:$0xff]
        %v287 = vld [vmem:[%s187 + $0x138] sm:$0xff]
        %v288 = vld [vmem:[%s187 + $0x140] sm:$0xff]
        %v289 = vld [vmem:[%s187 + $0x148] sm:$0xff]
        %v290 = vld [vmem:[%s187 + $0x150] sm:$0xff]
        %v291 = vld [vmem:[%s187 + $0x158] sm:$0xff]
        %v292 = vld [vmem:[%s187 + $0x160] sm:$0xff]
        %v293 = vld [vmem:[%s187 + $0x168] sm:$0xff]
        %v294 = vld [vmem:[%s187 + $0x170] sm:$0xff]
        %v295 = vld [vmem:[%s187 + $0x178] sm:$0xff]
        %v296 = vld [vmem:[%s187 + $0x180] sm:$0xff]
        %v297 = vld [vmem:[%s187 + $0x188] sm:$0xff]
        %v298 = vld [vmem:[%s187 + $0x190] sm:$0xff]
        %v299 = vld [vmem:[%s187 + $0x198] sm:$0xff]
        %v300 = vld [vmem:[%s187 + $0x1a0] sm:$0xff]
        %v301 = vld [vmem:[%s187 + $0x1a8] sm:$0xff]
        %v302 = vld [vmem:[%s187 + $0x1b0] sm:$0xff]
        %v303 = vld [vmem:[%s187 + $0x1b8] sm:$0xff]
        %v304 = vld [vmem:[%s187 + $0x1c0] sm:$0xff]
        %v305 = vld [vmem:[%s187 + $0x1c8] sm:$0xff]
        %v306 = vld [vmem:[%s187 + $0x1d0] sm:$0xff]
        %v307 = vld [vmem:[%s187 + $0x1d8] sm:$0xff]
        %v308 = vld [vmem:[%s187 + $0x1e0] sm:$0xff]
        %v309 = vld [vmem:[%s187 + $0x1e8] sm:$0xff]
        %v310 = vld [vmem:[%s187 + $0x1f0] sm:$0xff]
        %v311 = vld [vmem:[%s187 + $0x1f8] sm:$0xff]
        %v312 = vld [vmem:[%s187 + $0x200] sm:$0xff]
        %v313 = vld [vmem:[%s187 + $0x208] sm:$0xff]
        %v314 = vld [vmem:[%s187 + $0x210] sm:$0xff]
        %v315 = vld [vmem:[%s187 + $0x218] sm:$0xff]
        %v316 = vld [vmem:[%s187 + $0x220] sm:$0xff]
        %v317 = vld [vmem:[%s187 + $0x228] sm:$0xff]
        %v318 = vld [vmem:[%s187 + $0x230] sm:$0xff]
        %v319 = vld [vmem:[%s187 + $0x238] sm:$0xff]
        %v320 = vld [vmem:[%s187 + $0x240] sm:$0xff]
        %v321 = vld [vmem:[%s187 + $0x248] sm:$0xff]
        %v322 = vld [vmem:[%s187 + $0x250] sm:$0xff]
        %v323 = vld [vmem:[%s187 + $0x258] sm:$0xff]
        %v324 = vld [vmem:[%s187 + $0x260] sm:$0xff]
        %v325 = vld [vmem:[%s187 + $0x268] sm:$0xff]
        %v326 = vld [vmem:[%s187 + $0x270] sm:$0xff]
        %v327 = vld [vmem:[%s187 + $0x278] sm:$0xff]
        %v328 = vld [vmem:[%s187 + $0x280] sm:$0xff]
        %v329 = vld [vmem:[%s187 + $0x288] sm:$0xff]
        %v330 = vld [vmem:[%s187 + $0x290] sm:$0xff]
        %v331 = vld [vmem:[%s187 + $0x298] sm:$0xff]
        %v332 = vld [vmem:[%s187 + $0x2a0] sm:$0xff]
        %v333 = vld [vmem:[%s187 + $0x2a8] sm:$0xff]
        %v334 = vld [vmem:[%s187 + $0x2b0] sm:$0xff]
        %v335 = vld [vmem:[%s187 + $0x2b8] sm:$0xff]
        %v336 = vld [vmem:[%s187 + $0x2c0] sm:$0xff]
        %v337 = vld [vmem:[%s187 + $0x2c8] sm:$0xff]
        %v338 = vld [vmem:[%s187 + $0x2d0] sm:$0xff]
        %v339 = vld [vmem:[%s187 + $0x2d8] sm:$0xff]
        %v340 = vld [vmem:[%s187 + $0x2e0] sm:$0xff]
        %v341 = vld [vmem:[%s187 + $0x2e8] sm:$0xff]
        %v342 = vld [vmem:[%s187 + $0x2f0] sm:$0xff]
        %v343 = vld [vmem:[%s187 + $0x2f8] sm:$0xff]
        %v344 = vld [vmem:[%s187 + $0x300] sm:$0xff]
        %v345 = vld [vmem:[%s187 + $0x308] sm:$0xff]
        %v346 = vld [vmem:[%s187 + $0x310] sm:$0xff]
        %v347 = vld [vmem:[%s187 + $0x318] sm:$0xff]
        %v348 = vld [vmem:[%s187 + $0x320] sm:$0xff]
        %v349 = vld [vmem:[%s187 + $0x328] sm:$0xff]
        %v350 = vld [vmem:[%s187 + $0x330] sm:$0xff]
        %v351 = vld [vmem:[%s187 + $0x338] sm:$0xff]
        %v352 = vld [vmem:[%s187 + $0x340] sm:$0xff]
        %v353 = vld [vmem:[%s187 + $0x348] sm:$0xff]
        %v354 = vld [vmem:[%s187 + $0x350] sm:$0xff]
        %v355 = vld [vmem:[%s187 + $0x358] sm:$0xff]
        %v356 = vld [vmem:[%s187 + $0x360] sm:$0xff]
        %v357 = vld [vmem:[%s187 + $0x368] sm:$0xff]
        %v358 = vld [vmem:[%s187 + $0x370] sm:$0xff]
        %v359 = vld [vmem:[%s187 + $0x378] sm:$0xff]
        %v360 = vld [vmem:[%s187 + $0x380] sm:$0xff]
        %v361 = vld [vmem:[%s187 + $0x388] sm:$0xff]
        %v362 = vld [vmem:[%s187 + $0x390] sm:$0xff]
        %v363 = vld [vmem:[%s187 + $0x398] sm:$0xff]
        %v364 = vld [vmem:[%s187 + $0x3a0] sm:$0xff]
        %v365 = vld [vmem:[%s187 + $0x3a8] sm:$0xff]
        %v366 = vld [vmem:[%s187 + $0x3b0] sm:$0xff]
        %v367 = vld [vmem:[%s187 + $0x3b8] sm:$0xff]
        %v368 = vld [vmem:[%s187 + $0x3c0] sm:$0xff]
        %v369 = vld [vmem:[%s187 + $0x3c8] sm:$0xff]
        %v370 = vld [vmem:[%s187 + $0x3d0] sm:$0xff]
        %v371 = vld [vmem:[%s187 + $0x3d8] sm:$0xff]
        %v372 = vld [vmem:[%s187 + $0x3e0] sm:$0xff]
        %v373 = vld [vmem:[%s187 + $0x3e8] sm:$0xff]
        %v374 = vld [vmem:[%s187 + $0x3f0] sm:$0xff]
        %v375 = vld [vmem:[%s187 + $0x3f8] sm:$0xff]
        %v376 = vld [vmem:[%s187 + $0x400] sm:$0xff]
        %v377 = vld [vmem:[%s187 + $0x408] sm:$0xff]
        %v378 = vld [vmem:[%s187 + $0x410] sm:$0xff]
        %v379 = vld [vmem:[%s187 + $0x418] sm:$0xff]
        %v380 = vld [vmem:[%s187 + $0x420] sm:$0xff]
        %v381 = vld [vmem:[%s187 + $0x428] sm:$0xff]
        %v382 = vld [vmem:[%s187 + $0x430] sm:$0xff]
        %v383 = vld [vmem:[%s187 + $0x438] sm:$0xff]
        %v384 = vld [vmem:[%s187 + $0x440] sm:$0xff]
        %v385 = vld [vmem:[%s187 + $0x448] sm:$0xff]
        %v386 = vld [vmem:[%s187 + $0x450] sm:$0xff]
        %v387 = vld [vmem:[%s187 + $0x458] sm:$0xff]
        %v388 = vld [vmem:[%s187 + $0x460] sm:$0xff]
        %v389 = vld [vmem:[%s187 + $0x468] sm:$0xff]
        %v390 = vld [vmem:[%s187 + $0x470] sm:$0xff]
        %v391 = vld [vmem:[%s187 + $0x478] sm:$0xff]
        %v392 = vld [vmem:[%s187 + $0x480] sm:$0xff]
        %v393 = vld [vmem:[%s187 + $0x488] sm:$0xff]
        %v394 = vld [vmem:[%s187 + $0x490] sm:$0xff]
        %v395 = vld [vmem:[%s187 + $0x498] sm:$0xff]
        %v396 = vld [vmem:[%s187 + $0x4a0] sm:$0xff]
        %v397 = vld [vmem:[%s187 + $0x4a8] sm:$0xff]
        %v398 = vld [vmem:[%s187 + $0x4b0] sm:$0xff]
        %v399 = vld [vmem:[%s187 + $0x4b8] sm:$0xff]
        %v400 = vld [vmem:[%s187 + $0x4c0] sm:$0xff]
        %v401 = vld [vmem:[%s187 + $0x4c8] sm:$0xff]
        %v402 = vld [vmem:[%s187 + $0x4d0] sm:$0xff]
        %v403 = vld [vmem:[%s187 + $0x4d8] sm:$0xff]
        %v404 = vld [vmem:[%s187 + $0x4e0] sm:$0xff]
        %v405 = vld [vmem:[%s187 + $0x4e8] sm:$0xff]
        %v406 = vld [vmem:[%s187 + $0x4f0] sm:$0xff]
        %v407 = vld [vmem:[%s187 + $0x4f8] sm:$0xff]
        %v408 = vld [vmem:[%s187 + $0x500] sm:$0xff]
        %v409 = vld [vmem:[%s187 + $0x508] sm:$0xff]
        %v410 = vld [vmem:[%s187 + $0x510] sm:$0xff]
        %v411 = vld [vmem:[%s187 + $0x518] sm:$0xff]
        %v412 = vld [vmem:[%s187 + $0x520] sm:$0xff]
        %v413 = vld [vmem:[%s187 + $0x528] sm:$0xff]
        %v414 = vld [vmem:[%s187 + $0x530] sm:$0xff]
        %v415 = vld [vmem:[%s187 + $0x538] sm:$0xff]
        %v416 = vld [vmem:[%s187 + $0x540] sm:$0xff]
        %v417 = vld [vmem:[%s187 + $0x548] sm:$0xff]
        %v418 = vld [vmem:[%s187 + $0x550] sm:$0xff]
        %v419 = vld [vmem:[%s187 + $0x558] sm:$0xff]
        %v420 = vld [vmem:[%s187 + $0x560] sm:$0xff]
        %v421 = vld [vmem:[%s187 + $0x568] sm:$0xff]
        %v422 = vld [vmem:[%s187 + $0x570] sm:$0xff]
        %v423 = vld [vmem:[%s187 + $0x578] sm:$0xff]
        %v424 = vld [vmem:[%s187 + $0x580] sm:$0xff]
        %v425 = vld [vmem:[%s187 + $0x588] sm:$0xff]
        %v426 = vld [vmem:[%s187 + $0x590] sm:$0xff]
        %v427 = vld [vmem:[%s187 + $0x598] sm:$0xff]
        %v428 = vld [vmem:[%s187 + $0x5a0] sm:$0xff]
        %v429 = vld [vmem:[%s187 + $0x5a8] sm:$0xff]
        %v430 = vld [vmem:[%s187 + $0x5b0] sm:$0xff]
        %v431 = vld [vmem:[%s187 + $0x5b8] sm:$0xff]
        %v432 = vld [vmem:[%s187 + $0x5c0] sm:$0xff]
        %v433 = vld [vmem:[%s187 + $0x5c8] sm:$0xff]
        %v434 = vld [vmem:[%s187 + $0x5d0] sm:$0xff]
        %v435 = vld [vmem:[%s187 + $0x5d8] sm:$0xff]
        %v436 = vld [vmem:[%s187 + $0x5e0] sm:$0xff]
        %v437 = vld [vmem:[%s187 + $0x5e8] sm:$0xff]
        %v438 = vld [vmem:[%s187 + $0x5f0] sm:$0xff]
        %v439 = vld [vmem:[%s187 + $0x5f8] sm:$0xff]
        %v440 = vld [vmem:[%s187 + $0x600] sm:$0xff]
        %v441 = vld [vmem:[%s187 + $0x608] sm:$0xff]
        %v442 = vld [vmem:[%s187 + $0x610] sm:$0xff]
        %v443 = vld [vmem:[%s187 + $0x618] sm:$0xff]
        %v444 = vld [vmem:[%s187 + $0x620] sm:$0xff]
        %v445 = vld [vmem:[%s187 + $0x628] sm:$0xff]
        %v446 = vld [vmem:[%s187 + $0x630] sm:$0xff]
        %v447 = vld [vmem:[%s187 + $0x638] sm:$0xff]
        %v448 = vld [vmem:[%s187 + $0x640] sm:$0xff]
        %v449 = vld [vmem:[%s187 + $0x648] sm:$0xff]
        %v450 = vld [vmem:[%s187 + $0x650] sm:$0xff]
        %v451 = vld [vmem:[%s187 + $0x658] sm:$0xff]
        %v452 = vld [vmem:[%s187 + $0x660] sm:$0xff]
        %v453 = vld [vmem:[%s187 + $0x668] sm:$0xff]
        %v454 = vld [vmem:[%s187 + $0x670] sm:$0xff]
        %v455 = vld [vmem:[%s187 + $0x678] sm:$0xff]
        %v456 = vld [vmem:[%s187 + $0x680] sm:$0xff]
        %v457 = vld [vmem:[%s187 + $0x688] sm:$0xff]
        %v458 = vld [vmem:[%s187 + $0x690] sm:$0xff]
        %v459 = vld [vmem:[%s187 + $0x698] sm:$0xff]
        %v460 = vld [vmem:[%s187 + $0x6a0] sm:$0xff]
        %v461 = vld [vmem:[%s187 + $0x6a8] sm:$0xff]
        %v462 = vld [vmem:[%s187 + $0x6b0] sm:$0xff]
        %v463 = vld [vmem:[%s187 + $0x6b8] sm:$0xff]
        %v464 = vld [vmem:[%s187 + $0x6c0] sm:$0xff]
        %v465 = vld [vmem:[%s187 + $0x6c8] sm:$0xff]
        %v466 = vld [vmem:[%s187 + $0x6d0] sm:$0xff]
        %v467 = vld [vmem:[%s187 + $0x6d8] sm:$0xff]
        %v468 = vld [vmem:[%s187 + $0x6e0] sm:$0xff]
        %v469 = vld [vmem:[%s187 + $0x6e8] sm:$0xff]
        %v470 = vld [vmem:[%s187 + $0x6f0] sm:$0xff]
        %v471 = vld [vmem:[%s187 + $0x6f8] sm:$0xff]
        %v472 = vld [vmem:[%s187 + $0x700] sm:$0xff]
        %v473 = vld [vmem:[%s187 + $0x708] sm:$0xff]
        %v474 = vld [vmem:[%s187 + $0x710] sm:$0xff]
        %v475 = vld [vmem:[%s187 + $0x718] sm:$0xff]
        %v476 = vld [vmem:[%s187 + $0x720] sm:$0xff]
        %v477 = vld [vmem:[%s187 + $0x728] sm:$0xff]
        %v478 = vld [vmem:[%s187 + $0x730] sm:$0xff]
        %v479 = vld [vmem:[%s187 + $0x738] sm:$0xff]
        %v480 = vld [vmem:[%s187 + $0x740] sm:$0xff]
        %v481 = vld [vmem:[%s187 + $0x748] sm:$0xff]
        %v482 = vld [vmem:[%s187 + $0x750] sm:$0xff]
        %v483 = vld [vmem:[%s187 + $0x758] sm:$0xff]
        %v484 = vld [vmem:[%s187 + $0x760] sm:$0xff]
        %v485 = vld [vmem:[%s187 + $0x768] sm:$0xff]
        %v486 = vld [vmem:[%s187 + $0x770] sm:$0xff]
        %v487 = vld [vmem:[%s187 + $0x778] sm:$0xff]
        %v488 = vld [vmem:[%s187 + $0x780] sm:$0xff]
        %v489 = vld [vmem:[%s187 + $0x788] sm:$0xff]
        %v490 = vld [vmem:[%s187 + $0x790] sm:$0xff]
        %v491 = vld [vmem:[%s187 + $0x798] sm:$0xff]
        %v492 = vld [vmem:[%s187 + $0x7a0] sm:$0xff]
        %v493 = vld [vmem:[%s187 + $0x7a8] sm:$0xff]
        %v494 = vld [vmem:[%s187 + $0x7b0] sm:$0xff]
        %v495 = vld [vmem:[%s187 + $0x7b8] sm:$0xff]
        %v496 = vld [vmem:[%s187 + $0x7c0] sm:$0xff]
        %v497 = vld [vmem:[%s187 + $0x7c8] sm:$0xff]
        %v498 = vld [vmem:[%s187 + $0x7d0] sm:$0xff]
        %v499 = vld [vmem:[%s187 + $0x7d8] sm:$0xff]
        %v500 = vld [vmem:[%s187 + $0x7e0] sm:$0xff]
        %v501 = vld [vmem:[%s187 + $0x7e8] sm:$0xff]
        %v502 = vld [vmem:[%s187 + $0x7f0] sm:$0xff]
        %v503 = vld [vmem:[%s187 + $0x7f8] sm:$0xff]
        %v504 = vld [vmem:[%s187 + $0x800] sm:$0xff]
        %v505 = vld [vmem:[%s187 + $0x808] sm:$0xff]
        %v506 = vld [vmem:[%s187 + $0x810] sm:$0xff]
        %v507 = vld [vmem:[%s187 + $0x818] sm:$0xff]
        %v508 = vld [vmem:[%s187 + $0x820] sm:$0xff]
        %v509 = vld [vmem:[%s187 + $0x828] sm:$0xff]
        %v510 = vld [vmem:[%s187 + $0x830] sm:$0xff]
        %v511 = vld [vmem:[%s187 + $0x838] sm:$0xff]
        %v512 = vld [vmem:[%s187 + $0x840] sm:$0xff]
        %v513 = vld [vmem:[%s187 + $0x848] sm:$0xff]
        %v514 = vld [vmem:[%s187 + $0x850] sm:$0xff]
        %v515 = vld [vmem:[%s187 + $0x858] sm:$0xff]
        %v516 = vld [vmem:[%s187 + $0x860] sm:$0xff]
        %v517 = vld [vmem:[%s187 + $0x868] sm:$0xff]
        %v518 = vld [vmem:[%s187 + $0x870] sm:$0xff]
        %v519 = vld [vmem:[%s187 + $0x878] sm:$0xff]
        %v520 = vld [vmem:[%s187 + $0x880] sm:$0xff]
        %v521 = vld [vmem:[%s187 + $0x888] sm:$0xff]
        %v522 = vld [vmem:[%s187 + $0x890] sm:$0xff]
        %v523 = vld [vmem:[%s187 + $0x898] sm:$0xff]
        %v524 = vld [vmem:[%s187 + $0x8a0] sm:$0xff]
        %v525 = vld [vmem:[%s187 + $0x8a8] sm:$0xff]
        %v526 = vld [vmem:[%s187 + $0x8b0] sm:$0xff]
        %v527 = vld [vmem:[%s187 + $0x8b8] sm:$0xff]
        %v528 = vld [vmem:[%s187 + $0x8c0] sm:$0xff]
        %v529 = vld [vmem:[%s187 + $0x8c8] sm:$0xff]
        %v530 = vld [vmem:[%s187 + $0x8d0] sm:$0xff]
        %v531 = vld [vmem:[%s187 + $0x8d8] sm:$0xff]
        %v532 = vld [vmem:[%s187 + $0x8e0] sm:$0xff]
        %v533 = vld [vmem:[%s187 + $0x8e8] sm:$0xff]
        %v534 = vld [vmem:[%s187 + $0x8f0] sm:$0xff]
        %v535 = vld [vmem:[%s187 + $0x8f8] sm:$0xff]
        %v536 = vld [vmem:[%s187 + $0x900] sm:$0xff]
        %v537 = vld [vmem:[%s187 + $0x908] sm:$0xff]
        %v538 = vld [vmem:[%s187 + $0x910] sm:$0xff]
        %v539 = vld [vmem:[%s187 + $0x918] sm:$0xff]
        %v540 = vld [vmem:[%s187 + $0x920] sm:$0xff]
        %v541 = vld [vmem:[%s187 + $0x928] sm:$0xff]
        %v542 = vld [vmem:[%s187 + $0x930] sm:$0xff]
        %v543 = vld [vmem:[%s187 + $0x938] sm:$0xff]
        %v544 = vld [vmem:[%s187 + $0x940] sm:$0xff]
        %v545 = vld [vmem:[%s187 + $0x948] sm:$0xff]
        %v546 = vld [vmem:[%s187 + $0x950] sm:$0xff]
        %v547 = vld [vmem:[%s187 + $0x958] sm:$0xff]
        %v548 = vld [vmem:[%s187 + $0x960] sm:$0xff]
        %v549 = vld [vmem:[%s187 + $0x968] sm:$0xff]
        %v550 = vld [vmem:[%s187 + $0x970] sm:$0xff]
        %v551 = vld [vmem:[%s187 + $0x978] sm:$0xff]
        %v552 = vld [vmem:[%s187 + $0x980] sm:$0xff]
        %v553 = vld [vmem:[%s187 + $0x988] sm:$0xff]
        %v554 = vld [vmem:[%s187 + $0x990] sm:$0xff]
        %v555 = vld [vmem:[%s187 + $0x998] sm:$0xff]
        %v556 = vld [vmem:[%s187 + $0x9a0] sm:$0xff]
        %v557 = vld [vmem:[%s187 + $0x9a8] sm:$0xff]
        %v558 = vld [vmem:[%s187 + $0x9b0] sm:$0xff]
        %v559 = vld [vmem:[%s187 + $0x9b8] sm:$0xff]
        %v560 = vld [vmem:[%s187 + $0x9c0] sm:$0xff]
        %v561 = vld [vmem:[%s187 + $0x9c8] sm:$0xff]
        %v562 = vld [vmem:[%s187 + $0x9d0] sm:$0xff]
        %v563 = vld [vmem:[%s187 + $0x9d8] sm:$0xff]
        %v564 = vld [vmem:[%s187 + $0x9e0] sm:$0xff]
        %v565 = vld [vmem:[%s187 + $0x9e8] sm:$0xff]
        %v566 = vld [vmem:[%s187 + $0x9f0] sm:$0xff]
        %v567 = vld [vmem:[%s187 + $0x9f8] sm:$0xff]
        %v568 = vld [vmem:[%s187 + $0xa00] sm:$0xff]
        %v569 = vld [vmem:[%s187 + $0xa08] sm:$0xff]
        %v570 = vld [vmem:[%s187 + $0xa10] sm:$0xff]
        %v571 = vld [vmem:[%s187 + $0xa18] sm:$0xff]
        %v572 = vld [vmem:[%s187 + $0xa20] sm:$0xff]
        %v573 = vld [vmem:[%s187 + $0xa28] sm:$0xff]
        %v574 = vld [vmem:[%s187 + $0xa30] sm:$0xff]
        %v575 = vld [vmem:[%s187 + $0xa38] sm:$0xff]
        %v576 = vld [vmem:[%s187 + $0xa40] sm:$0xff]
        %v577 = vld [vmem:[%s187 + $0xa48] sm:$0xff]
        %v578 = vld [vmem:[%s187 + $0xa50] sm:$0xff]
        %v579 = vld [vmem:[%s187 + $0xa58] sm:$0xff]
        %v580 = vld [vmem:[%s187 + $0xa60] sm:$0xff]
        %v581 = vld [vmem:[%s187 + $0xa68] sm:$0xff]
        %v582 = vld [vmem:[%s187 + $0xa70] sm:$0xff]
        %v583 = vld [vmem:[%s187 + $0xa78] sm:$0xff]
        %v584 = vld [vmem:[%s187 + $0xa80] sm:$0xff]
        %v585 = vld [vmem:[%s187 + $0xa88] sm:$0xff]
        %v586 = vld [vmem:[%s187 + $0xa90] sm:$0xff]
        %v587 = vld [vmem:[%s187 + $0xa98] sm:$0xff]
        %v588 = vld [vmem:[%s187 + $0xaa0] sm:$0xff]
        %v589 = vld [vmem:[%s187 + $0xaa8] sm:$0xff]
        %v590 = vld [vmem:[%s187 + $0xab0] sm:$0xff]
        %v591 = vld [vmem:[%s187 + $0xab8] sm:$0xff]
        %v592 = vld [vmem:[%s187 + $0xac0] sm:$0xff]
        %v593 = vld [vmem:[%s187 + $0xac8] sm:$0xff]
        %v594 = vld [vmem:[%s187 + $0xad0] sm:$0xff]
        %v595 = vld [vmem:[%s187 + $0xad8] sm:$0xff]
        %v596 = vld [vmem:[%s187 + $0xae0] sm:$0xff]
        %v597 = vld [vmem:[%s187 + $0xae8] sm:$0xff]
        %v598 = vld [vmem:[%s187 + $0xaf0] sm:$0xff]
        %v599 = vld [vmem:[%s187 + $0xaf8] sm:$0xff]
        %v600 = vld [vmem:[%s187 + $0xb00] sm:$0xff]
        %v601 = vld [vmem:[%s187 + $0xb08] sm:$0xff]
        %v602 = vld [vmem:[%s187 + $0xb10] sm:$0xff]
        %v603 = vld [vmem:[%s187 + $0xb18] sm:$0xff]
        %v604 = vld [vmem:[%s187 + $0xb20] sm:$0xff]
        %v605 = vld [vmem:[%s187 + $0xb28] sm:$0xff]
        %v606 = vld [vmem:[%s187 + $0xb30] sm:$0xff]
        %v607 = vld [vmem:[%s187 + $0xb38] sm:$0xff]
        %v608 = vld [vmem:[%s187 + $0xb40] sm:$0xff]
        %v609 = vld [vmem:[%s187 + $0xb48] sm:$0xff]
        %v610 = vld [vmem:[%s187 + $0xb50] sm:$0xff]
        %v611 = vld [vmem:[%s187 + $0xb58] sm:$0xff]
        %v612 = vld [vmem:[%s187 + $0xb60] sm:$0xff]
        %v613 = vld [vmem:[%s187 + $0xb68] sm:$0xff]
        %v614 = vld [vmem:[%s187 + $0xb70] sm:$0xff]
        %v615 = vld [vmem:[%s187 + $0xb78] sm:$0xff]
        %v616 = vld [vmem:[%s187 + $0xb80] sm:$0xff]
        %v617 = vld [vmem:[%s187 + $0xb88] sm:$0xff]
        %v618 = vld [vmem:[%s187 + $0xb90] sm:$0xff]
        %v619 = vld [vmem:[%s187 + $0xb98] sm:$0xff]
        %v620 = vld [vmem:[%s187 + $0xba0] sm:$0xff]
        %v621 = vld [vmem:[%s187 + $0xba8] sm:$0xff]
        %v622 = vld [vmem:[%s187 + $0xbb0] sm:$0xff]
        %v623 = vld [vmem:[%s187 + $0xbb8] sm:$0xff]
        %v624 = vld [vmem:[%s187 + $0xbc0] sm:$0xff]
        %v625 = vld [vmem:[%s187 + $0xbc8] sm:$0xff]
        %v626 = vld [vmem:[%s187 + $0xbd0] sm:$0xff]
        %v627 = vld [vmem:[%s187 + $0xbd8] sm:$0xff]
        %v628 = vld [vmem:[%s187 + $0xbe0] sm:$0xff]
        %v629 = vld [vmem:[%s187 + $0xbe8] sm:$0xff]
        %v630 = vld [vmem:[%s187 + $0xbf0] sm:$0xff]
        %v631 = vld [vmem:[%s187 + $0xbf8] sm:$0xff]
        %v632 = vld [vmem:[%s187 + $0xc00] sm:$0xff]
        %v633 = vld [vmem:[%s187 + $0xc08] sm:$0xff]
        %v634 = vld [vmem:[%s187 + $0xc10] sm:$0xff]
        %v635 = vld [vmem:[%s187 + $0xc18] sm:$0xff]
        %v636 = vld [vmem:[%s187 + $0xc20] sm:$0xff]
        %v637 = vld [vmem:[%s187 + $0xc28] sm:$0xff]
        %v638 = vld [vmem:[%s187 + $0xc30] sm:$0xff]
        %v639 = vld [vmem:[%s187 + $0xc38] sm:$0xff]
        %v640 = vld [vmem:[%s187 + $0xc40] sm:$0xff]
        %v641 = vld [vmem:[%s187 + $0xc48] sm:$0xff]
        %v642 = vld [vmem:[%s187 + $0xc50] sm:$0xff]
        %v643 = vld [vmem:[%s187 + $0xc58] sm:$0xff]
        %v644 = vld [vmem:[%s187 + $0xc60] sm:$0xff]
        %v645 = vld [vmem:[%s187 + $0xc68] sm:$0xff]
        %v646 = vld [vmem:[%s187 + $0xc70] sm:$0xff]
        %v647 = vld [vmem:[%s187 + $0xc78] sm:$0xff]
        %v648 = vld [vmem:[%s187 + $0xc80] sm:$0xff]
        %v649 = vld [vmem:[%s187 + $0xc88] sm:$0xff]
        %v650 = vld [vmem:[%s187 + $0xc90] sm:$0xff]
        %v651 = vld [vmem:[%s187 + $0xc98] sm:$0xff]
        %v652 = vld [vmem:[%s187 + $0xca0] sm:$0xff]
        %v653 = vld [vmem:[%s187 + $0xca8] sm:$0xff]
        %v654 = vld [vmem:[%s187 + $0xcb0] sm:$0xff]
        %v655 = vld [vmem:[%s187 + $0xcb8] sm:$0xff]
        %v656 = vld [vmem:[%s187 + $0xcc0] sm:$0xff]
        %v657 = vld [vmem:[%s187 + $0xcc8] sm:$0xff]
        %v658 = vld [vmem:[%s187 + $0xcd0] sm:$0xff]
        %v659 = vld [vmem:[%s187 + $0xcd8] sm:$0xff]
        %v660 = vld [vmem:[%s187 + $0xce0] sm:$0xff]
        %v661 = vld [vmem:[%s187 + $0xce8] sm:$0xff]
        %v662 = vld [vmem:[%s187 + $0xcf0] sm:$0xff]
        %v663 = vld [vmem:[%s187 + $0xcf8] sm:$0xff]
        %v664 = vld [vmem:[%s187 + $0xd00] sm:$0xff]
        %v665 = vld [vmem:[%s187 + $0xd08] sm:$0xff]
        %v666 = vld [vmem:[%s187 + $0xd10] sm:$0xff]
        %v667 = vld [vmem:[%s187 + $0xd18] sm:$0xff]
        %v668 = vld [vmem:[%s187 + $0xd20] sm:$0xff]
        %v669 = vld [vmem:[%s187 + $0xd28] sm:$0xff]
        %v670 = vld [vmem:[%s187 + $0xd30] sm:$0xff]
        %v671 = vld [vmem:[%s187 + $0xd38] sm:$0xff]
        %v672 = vld [vmem:[%s187 + $0xd40] sm:$0xff]
        %v673 = vld [vmem:[%s187 + $0xd48] sm:$0xff]
        %v674 = vld [vmem:[%s187 + $0xd50] sm:$0xff]
        %v675 = vld [vmem:[%s187 + $0xd58] sm:$0xff]
        %v676 = vld [vmem:[%s187 + $0xd60] sm:$0xff]
        %v677 = vld [vmem:[%s187 + $0xd68] sm:$0xff]
        %v678 = vld [vmem:[%s187 + $0xd70] sm:$0xff]
        %v679 = vld [vmem:[%s187 + $0xd78] sm:$0xff]
        %v680 = vld [vmem:[%s187 + $0xd80] sm:$0xff]
        %v681 = vld [vmem:[%s187 + $0xd88] sm:$0xff]
        %v682 = vld [vmem:[%s187 + $0xd90] sm:$0xff]
        %v683 = vld [vmem:[%s187 + $0xd98] sm:$0xff]
        %v684 = vld [vmem:[%s187 + $0xda0] sm:$0xff]
        %v685 = vld [vmem:[%s187 + $0xda8] sm:$0xff]
        %v686 = vld [vmem:[%s187 + $0xdb0] sm:$0xff]
        %v687 = vld [vmem:[%s187 + $0xdb8] sm:$0xff]
        %v688 = vld [vmem:[%s187 + $0xdc0] sm:$0xff]
        %v689 = vld [vmem:[%s187 + $0xdc8] sm:$0xff]
        %v690 = vld [vmem:[%s187 + $0xdd0] sm:$0xff]
        %v691 = vld [vmem:[%s187 + $0xdd8] sm:$0xff]
        %v692 = vld [vmem:[%s187 + $0xde0] sm:$0xff]
        %v693 = vld [vmem:[%s187 + $0xde8] sm:$0xff]
        %v694 = vld [vmem:[%s187 + $0xdf0] sm:$0xff]
        %v695 = vld [vmem:[%s187 + $0xdf8] sm:$0xff]
        %v696 = vld [vmem:[%s187 + $0xe00] sm:$0xff]
        %v697 = vld [vmem:[%s187 + $0xe08] sm:$0xff]
        %v698 = vld [vmem:[%s187 + $0xe10] sm:$0xff]
        %v699 = vld [vmem:[%s187 + $0xe18] sm:$0xff]
        %v700 = vld [vmem:[%s187 + $0xe20] sm:$0xff]
        %v701 = vld [vmem:[%s187 + $0xe28] sm:$0xff]
        %v702 = vld [vmem:[%s187 + $0xe30] sm:$0xff]
        %v703 = vld [vmem:[%s187 + $0xe38] sm:$0xff]
        %v704 = vld [vmem:[%s187 + $0xe40] sm:$0xff]
        %v705 = vld [vmem:[%s187 + $0xe48] sm:$0xff]
        %v706 = vld [vmem:[%s187 + $0xe50] sm:$0xff]
        %v707 = vld [vmem:[%s187 + $0xe58] sm:$0xff]
        %v708 = vld [vmem:[%s187 + $0xe60] sm:$0xff]
        %v709 = vld [vmem:[%s187 + $0xe68] sm:$0xff]
        %v710 = vld [vmem:[%s187 + $0xe70] sm:$0xff]
        %v711 = vld [vmem:[%s187 + $0xe78] sm:$0xff]
        %v712 = vld [vmem:[%s187 + $0xe80] sm:$0xff]
        %v713 = vld [vmem:[%s187 + $0xe88] sm:$0xff]
        %v714 = vld [vmem:[%s187 + $0xe90] sm:$0xff]
        %v715 = vld [vmem:[%s187 + $0xe98] sm:$0xff]
        %v716 = vld [vmem:[%s187 + $0xea0] sm:$0xff]
        %v717 = vld [vmem:[%s187 + $0xea8] sm:$0xff]
        %v718 = vld [vmem:[%s187 + $0xeb0] sm:$0xff]
        %v719 = vld [vmem:[%s187 + $0xeb8] sm:$0xff]
        %v720 = vld [vmem:[%s187 + $0xec0] sm:$0xff]
        %v721 = vld [vmem:[%s187 + $0xec8] sm:$0xff]
        %v722 = vld [vmem:[%s187 + $0xed0] sm:$0xff]
        %v723 = vld [vmem:[%s187 + $0xed8] sm:$0xff]
        %v724 = vld [vmem:[%s187 + $0xee0] sm:$0xff]
        %v725 = vld [vmem:[%s187 + $0xee8] sm:$0xff]
        %v726 = vld [vmem:[%s187 + $0xef0] sm:$0xff]
        %v727 = vld [vmem:[%s187 + $0xef8] sm:$0xff]
        %v728 = vld [vmem:[%s187 + $0xf00] sm:$0xff]
        %v729 = vld [vmem:[%s187 + $0xf08] sm:$0xff]
        %v730 = vld [vmem:[%s187 + $0xf10] sm:$0xff]
        %v731 = vld [vmem:[%s187 + $0xf18] sm:$0xff]
        %v732 = vld [vmem:[%s187 + $0xf20] sm:$0xff]
        %v733 = vld [vmem:[%s187 + $0xf28] sm:$0xff]
        %v734 = vld [vmem:[%s187 + $0xf30] sm:$0xff]
        %v735 = vld [vmem:[%s187 + $0xf38] sm:$0xff]
        %v736 = vld [vmem:[%s187 + $0xf40] sm:$0xff]
        %v737 = vld [vmem:[%s187 + $0xf48] sm:$0xff]
        %v738 = vld [vmem:[%s187 + $0xf50] sm:$0xff]
        %v739 = vld [vmem:[%s187 + $0xf58] sm:$0xff]
        %v740 = vld [vmem:[%s187 + $0xf60] sm:$0xff]
        %v741 = vld [vmem:[%s187 + $0xf68] sm:$0xff]
        %v742 = vld [vmem:[%s187 + $0xf70] sm:$0xff]
        %v743 = vld [vmem:[%s187 + $0xf78] sm:$0xff]
        %v744 = vld [vmem:[%s187 + $0xf80] sm:$0xff]
        %v745 = vld [vmem:[%s187 + $0xf88] sm:$0xff]
        %v746 = vld [vmem:[%s187 + $0xf90] sm:$0xff]
        %v747 = vld [vmem:[%s187 + $0xf98] sm:$0xff]
        %v748 = vld [vmem:[%s187 + $0xfa0] sm:$0xff]
        %v749 = vld [vmem:[%s187 + $0xfa8] sm:$0xff]
        %v750 = vld [vmem:[%s187 + $0xfb0] sm:$0xff]
        %v751 = vld [vmem:[%s187 + $0xfb8] sm:$0xff]
        %v752 = vld [vmem:[%s187 + $0xfc0] sm:$0xff]
        %v753 = vld [vmem:[%s187 + $0xfc8] sm:$0xff]
        %v754 = vld [vmem:[%s187 + $0xfd0] sm:$0xff]
        %v755 = vld [vmem:[%s187 + $0xfd8] sm:$0xff]
        %v756 = vld [vmem:[%s187 + $0xfe0] sm:$0xff]
        %v757 = vld [vmem:[%s187 + $0xfe8] sm:$0xff]
        %v758 = vld [vmem:[%s187 + $0xff0] sm:$0xff]
        %v759 = vld [vmem:[%s187 + $0xff8] sm:$0xff]
        %v760 = vld [vmem:[%s187 + $0x1000] sm:$0xff]
        %v761 = vld [vmem:[%s187 + $0x1008] sm:$0xff]
        %v762 = vld [vmem:[%s187 + $0x1010] sm:$0xff]
        %v763 = vld [vmem:[%s187 + $0x1018] sm:$0xff]
        %v764 = vld [vmem:[%s187 + $0x1020] sm:$0xff]
        %v765 = vld [vmem:[%s187 + $0x1028] sm:$0xff]
        %v766 = vld [vmem:[%s187 + $0x1030] sm:$0xff]
        %v767 = vld [vmem:[%s187 + $0x1038] sm:$0xff]
        %v768 = vld [vmem:[%s187 + $0x1040] sm:$0xff]
        %v769 = vld [vmem:[%s187 + $0x1048] sm:$0xff]
        %v770 = vld [vmem:[%s187 + $0x1050] sm:$0xff]
        %v771 = vld [vmem:[%s187 + $0x1058] sm:$0xff]
        %v772 = vld [vmem:[%s187 + $0x1060] sm:$0xff]
        %v773 = vld [vmem:[%s187 + $0x1068] sm:$0xff]
        %v774 = vld [vmem:[%s187 + $0x1070] sm:$0xff]
        %v775 = vld [vmem:[%s187 + $0x1078] sm:$0xff]
        %v776 = vld [vmem:[%s187 + $0x1080] sm:$0xff]
        %v777 = vld [vmem:[%s187 + $0x1088] sm:$0xff]
        %v778 = vld [vmem:[%s187 + $0x1090] sm:$0xff]
        %v779 = vld [vmem:[%s187 + $0x1098] sm:$0xff]
        %v780 = vld [vmem:[%s187 + $0x10a0] sm:$0xff]
        %v781 = vld [vmem:[%s187 + $0x10a8] sm:$0xff]
        %v782 = vld [vmem:[%s187 + $0x10b0] sm:$0xff]
        %v783 = vld [vmem:[%s187 + $0x10b8] sm:$0xff]
        %v784 = vld [vmem:[%s187 + $0x10c0] sm:$0xff]
        %v785 = vld [vmem:[%s187 + $0x10c8] sm:$0xff]
        %v786 = vld [vmem:[%s187 + $0x10d0] sm:$0xff]
        %v787 = vld [vmem:[%s187 + $0x10d8] sm:$0xff]
        %v788 = vld [vmem:[%s187 + $0x10e0] sm:$0xff]
        %v789 = vld [vmem:[%s187 + $0x10e8] sm:$0xff]
        %v790 = vld [vmem:[%s187 + $0x10f0] sm:$0xff]
        %v791 = vld [vmem:[%s187 + $0x10f8] sm:$0xff]
        %v792 = vld [vmem:[%s187 + $0x1100] sm:$0xff]
        %v793 = vld [vmem:[%s187 + $0x1108] sm:$0xff]
        %v794 = vld [vmem:[%s187 + $0x1110] sm:$0xff]
        %v795 = vld [vmem:[%s187 + $0x1118] sm:$0xff]
        %v796 = vld [vmem:[%s187 + $0x1120] sm:$0xff]
        %v797 = vld [vmem:[%s187 + $0x1128] sm:$0xff]
        %v798 = vld [vmem:[%s187 + $0x1130] sm:$0xff]
        %v799 = vld [vmem:[%s187 + $0x1138] sm:$0xff]
        %v800 = vld [vmem:[%s187 + $0x1140] sm:$0xff]
        %v801 = vld [vmem:[%s187 + $0x1148] sm:$0xff]
        %v802 = vld [vmem:[%s187 + $0x1150] sm:$0xff]
        %v803 = vld [vmem:[%s187 + $0x1158] sm:$0xff]
        %v804 = vld [vmem:[%s187 + $0x1160] sm:$0xff]
        %v805 = vld [vmem:[%s187 + $0x1168] sm:$0xff]
        %v806 = vld [vmem:[%s187 + $0x1170] sm:$0xff]
        %v807 = vld [vmem:[%s187 + $0x1178] sm:$0xff]
        %v808 = vld [vmem:[%s187 + $0x1180] sm:$0xff]
        %v809 = vld [vmem:[%s187 + $0x1188] sm:$0xff]
        %v810 = vld [vmem:[%s187 + $0x1190] sm:$0xff]
        %v811 = vld [vmem:[%s187 + $0x1198] sm:$0xff]
        %v812 = vld [vmem:[%s187 + $0x11a0] sm:$0xff]
        %v813 = vld [vmem:[%s187 + $0x11a8] sm:$0xff]
        %v814 = vld [vmem:[%s187 + $0x11b0] sm:$0xff]
        %v815 = vld [vmem:[%s187 + $0x11b8] sm:$0xff]
        %v816 = vld [vmem:[%s187 + $0x11c0] sm:$0xff]
        %v817 = vld [vmem:[%s187 + $0x11c8] sm:$0xff]
        %v818 = vld [vmem:[%s187 + $0x11d0] sm:$0xff]
        %v819 = vld [vmem:[%s187 + $0x11d8] sm:$0xff]
        %v820 = vld [vmem:[%s187 + $0x11e0] sm:$0xff]
        %v821 = vld [vmem:[%s187 + $0x11e8] sm:$0xff]
        %v822 = vld [vmem:[%s187 + $0x11f0] sm:$0xff]
        %v823 = vld [vmem:[%s187 + $0x11f8] sm:$0xff]
        %v824 = vld [vmem:[%s187 + $0x1200] sm:$0xff]
        %v825 = vld [vmem:[%s187 + $0x1208] sm:$0xff]
        %v826 = vld [vmem:[%s187 + $0x1210] sm:$0xff]
        %v827 = vld [vmem:[%s187 + $0x1218] sm:$0xff]
        %v828 = vld [vmem:[%s187 + $0x1220] sm:$0xff]
        %v829 = vld [vmem:[%s187 + $0x1228] sm:$0xff]
        %v830 = vld [vmem:[%s187 + $0x1230] sm:$0xff]
        %v831 = vld [vmem:[%s187 + $0x1238] sm:$0xff]
        %v832 = vld [vmem:[%s187 + $0x1240] sm:$0xff]
        %v833 = vld [vmem:[%s187 + $0x1248] sm:$0xff]
        %v834 = vld [vmem:[%s187 + $0x1250] sm:$0xff]
        %v835 = vld [vmem:[%s187 + $0x1258] sm:$0xff]
        %v836 = vld [vmem:[%s187 + $0x1260] sm:$0xff]
        %v837 = vld [vmem:[%s187 + $0x1268] sm:$0xff]
        %v838 = vld [vmem:[%s187 + $0x1270] sm:$0xff]
        %v839 = vld [vmem:[%s187 + $0x1278] sm:$0xff]
        %v840 = vld [vmem:[%s187 + $0x1280] sm:$0xff]
        %v841 = vld [vmem:[%s187 + $0x1288] sm:$0xff]
        %v842 = vld [vmem:[%s187 + $0x1290] sm:$0xff]
        %v843 = vld [vmem:[%s187 + $0x1298] sm:$0xff]
        %v844 = vld [vmem:[%s187 + $0x12a0] sm:$0xff]
        %v845 = vld [vmem:[%s187 + $0x12a8] sm:$0xff]
        %v846 = vld [vmem:[%s187 + $0x12b0] sm:$0xff]
        %v847 = vld [vmem:[%s187 + $0x12b8] sm:$0xff]
        %v848 = vld [vmem:[%s187 + $0x12c0] sm:$0xff]
        %v849 = vld [vmem:[%s187 + $0x12c8] sm:$0xff]
        %v850 = vld [vmem:[%s187 + $0x12d0] sm:$0xff]
        %v851 = vld [vmem:[%s187 + $0x12d8] sm:$0xff]
        %v852 = vld [vmem:[%s187 + $0x12e0] sm:$0xff]
        %v853 = vld [vmem:[%s187 + $0x12e8] sm:$0xff]
        %v854 = vld [vmem:[%s187 + $0x12f0] sm:$0xff]
        %v855 = vld [vmem:[%s187 + $0x12f8] sm:$0xff]
        %v856 = vld [vmem:[%s187 + $0x1300] sm:$0xff]
        %v857 = vld [vmem:[%s187 + $0x1308] sm:$0xff]
        %v858 = vld [vmem:[%s187 + $0x1310] sm:$0xff]
        %v859 = vld [vmem:[%s187 + $0x1318] sm:$0xff]
        %v860 = vld [vmem:[%s187 + $0x1320] sm:$0xff]
        %v861 = vld [vmem:[%s187 + $0x1328] sm:$0xff]
        %v862 = vld [vmem:[%s187 + $0x1330] sm:$0xff]
        %v863 = vld [vmem:[%s187 + $0x1338] sm:$0xff]
        %v864 = vld [vmem:[%s187 + $0x1340] sm:$0xff]
        %v865 = vld [vmem:[%s187 + $0x1348] sm:$0xff]
        %v866 = vld [vmem:[%s187 + $0x1350] sm:$0xff]
        %v867 = vld [vmem:[%s187 + $0x1358] sm:$0xff]
        %v868 = vld [vmem:[%s187 + $0x1360] sm:$0xff]
        %v869 = vld [vmem:[%s187 + $0x1368] sm:$0xff]
        %v870 = vld [vmem:[%s187 + $0x1370] sm:$0xff]
        %v871 = vld [vmem:[%s187 + $0x1378] sm:$0xff]
        %v872 = vld [vmem:[%s187 + $0x1380] sm:$0xff]
        %v873 = vld [vmem:[%s187 + $0x1388] sm:$0xff]
        %v874 = vld [vmem:[%s187 + $0x1390] sm:$0xff]
        %v875 = vld [vmem:[%s187 + $0x1398] sm:$0xff]
        %v876 = vld [vmem:[%s187 + $0x13a0] sm:$0xff]
        %v877 = vld [vmem:[%s187 + $0x13a8] sm:$0xff]
        %v878 = vld [vmem:[%s187 + $0x13b0] sm:$0xff]
        %v879 = vld [vmem:[%s187 + $0x13b8] sm:$0xff]
        %v880 = vld [vmem:[%s187 + $0x13c0] sm:$0xff]
        %v881 = vld [vmem:[%s187 + $0x13c8] sm:$0xff]
        %v882 = vld [vmem:[%s187 + $0x13d0] sm:$0xff]
        %v883 = vld [vmem:[%s187 + $0x13d8] sm:$0xff]
        %v884 = vld [vmem:[%s187 + $0x13e0] sm:$0xff]
        %v885 = vld [vmem:[%s187 + $0x13e8] sm:$0xff]
        %v886 = vld [vmem:[%s187 + $0x13f0] sm:$0xff]
        %v887 = vld [vmem:[%s187 + $0x13f8] sm:$0xff]
        %v888 = vld [vmem:[%s187 + $0x1400] sm:$0xff]
        %v889 = vld [vmem:[%s187 + $0x1408] sm:$0xff]
        %v890 = vld [vmem:[%s187 + $0x1410] sm:$0xff]
        %v891 = vld [vmem:[%s187 + $0x1418] sm:$0xff]
        %v892 = vld [vmem:[%s187 + $0x1420] sm:$0xff]
        %v893 = vld [vmem:[%s187 + $0x1428] sm:$0xff]
        %v894 = vld [vmem:[%s187 + $0x1430] sm:$0xff]
        %v895 = vld [vmem:[%s187 + $0x1438] sm:$0xff]
        %v896 = vld [vmem:[%s187 + $0x1440] sm:$0xff]
        %v897 = vld [vmem:[%s187 + $0x1448] sm:$0xff]
        %v898 = vld [vmem:[%s187 + $0x1450] sm:$0xff]
        %v899 = vld [vmem:[%s187 + $0x1458] sm:$0xff]
        %v900 = vld [vmem:[%s187 + $0x1460] sm:$0xff]
        %v901 = vld [vmem:[%s187 + $0x1468] sm:$0xff]
        %v902 = vld [vmem:[%s187 + $0x1470] sm:$0xff]
        %v903 = vld [vmem:[%s187 + $0x1478] sm:$0xff]
        %v904 = vld [vmem:[%s187 + $0x1480] sm:$0xff]
        %v905 = vld [vmem:[%s187 + $0x1488] sm:$0xff]
        %v906 = vld [vmem:[%s187 + $0x1490] sm:$0xff]
        %v907 = vld [vmem:[%s187 + $0x1498] sm:$0xff]
        %v908 = vld [vmem:[%s187 + $0x14a0] sm:$0xff]
        %v909 = vld [vmem:[%s187 + $0x14a8] sm:$0xff]
        %v910 = vld [vmem:[%s187 + $0x14b0] sm:$0xff]
        %v911 = vld [vmem:[%s187 + $0x14b8] sm:$0xff]
        %v912 = vld [vmem:[%s187 + $0x14c0] sm:$0xff]
        %v913 = vld [vmem:[%s187 + $0x14c8] sm:$0xff]
        %v914 = vld [vmem:[%s187 + $0x14d0] sm:$0xff]
        %v915 = vld [vmem:[%s187 + $0x14d8] sm:$0xff]
        %v916 = vld [vmem:[%s187 + $0x14e0] sm:$0xff]
        %v917 = vld [vmem:[%s187 + $0x14e8] sm:$0xff]
        %v918 = vld [vmem:[%s187 + $0x14f0] sm:$0xff]
        %v919 = vld [vmem:[%s187 + $0x14f8] sm:$0xff]
        %v920 = vld [vmem:[%s187 + $0x1500] sm:$0xff]
        %v921 = vld [vmem:[%s187 + $0x1508] sm:$0xff]
        %v922 = vld [vmem:[%s187 + $0x1510] sm:$0xff]
        %v923 = vld [vmem:[%s187 + $0x1518] sm:$0xff]
        %v924 = vld [vmem:[%s187 + $0x1520] sm:$0xff]
        %v925 = vld [vmem:[%s187 + $0x1528] sm:$0xff]
        %v926 = vld [vmem:[%s187 + $0x1530] sm:$0xff]
        %v927 = vld [vmem:[%s187 + $0x1538] sm:$0xff]
        %v928 = vld [vmem:[%s187 + $0x1540] sm:$0xff]
        %v929 = vld [vmem:[%s187 + $0x1548] sm:$0xff]
        %v930 = vld [vmem:[%s187 + $0x1550] sm:$0xff]
        %v931 = vld [vmem:[%s187 + $0x1558] sm:$0xff]
        %v932 = vld [vmem:[%s187 + $0x1560] sm:$0xff]
        %v933 = vld [vmem:[%s187 + $0x1568] sm:$0xff]
        %v934 = vld [vmem:[%s187 + $0x1570] sm:$0xff]
        %v935 = vld [vmem:[%s187 + $0x1578] sm:$0xff]
        %v936 = vld [vmem:[%s187 + $0x1580] sm:$0xff]
        %v937 = vld [vmem:[%s187 + $0x1588] sm:$0xff]
        %v938 = vld [vmem:[%s187 + $0x1590] sm:$0xff]
        %v939 = vld [vmem:[%s187 + $0x1598] sm:$0xff]
        %v940 = vld [vmem:[%s187 + $0x15a0] sm:$0xff]
        %v941 = vld [vmem:[%s187 + $0x15a8] sm:$0xff]
        %v942 = vld [vmem:[%s187 + $0x15b0] sm:$0xff]
        %v943 = vld [vmem:[%s187 + $0x15b8] sm:$0xff]
        %v944 = vld [vmem:[%s187 + $0x15c0] sm:$0xff]
        %v945 = vld [vmem:[%s187 + $0x15c8] sm:$0xff]
        %v946 = vld [vmem:[%s187 + $0x15d0] sm:$0xff]
        %v947 = vld [vmem:[%s187 + $0x15d8] sm:$0xff]
        %v948 = vld [vmem:[%s187 + $0x15e0] sm:$0xff]
        %v949 = vld [vmem:[%s187 + $0x15e8] sm:$0xff]
        %v950 = vld [vmem:[%s187 + $0x15f0] sm:$0xff]
        %v951 = vld [vmem:[%s187 + $0x15f8] sm:$0xff]
        %v952 = vld [vmem:[%s187 + $0x1600] sm:$0xff]
        %v953 = vld [vmem:[%s187 + $0x1608] sm:$0xff]
        %v954 = vld [vmem:[%s187 + $0x1610] sm:$0xff]
        %v955 = vld [vmem:[%s187 + $0x1618] sm:$0xff]
        %v956 = vld [vmem:[%s187 + $0x1620] sm:$0xff]
        %v957 = vld [vmem:[%s187 + $0x1628] sm:$0xff]
        %v958 = vld [vmem:[%s187 + $0x1630] sm:$0xff]
        %v959 = vld [vmem:[%s187 + $0x1638] sm:$0xff]
        %v960 = vld [vmem:[%s187 + $0x1640] sm:$0xff]
        %v961 = vld [vmem:[%s187 + $0x1648] sm:$0xff]
        %v962 = vld [vmem:[%s187 + $0x1650] sm:$0xff]
        %v963 = vld [vmem:[%s187 + $0x1658] sm:$0xff]
        %v964 = vld [vmem:[%s187 + $0x1660] sm:$0xff]
        %v965 = vld [vmem:[%s187 + $0x1668] sm:$0xff]
        %v966 = vld [vmem:[%s187 + $0x1670] sm:$0xff]
        %v967 = vld [vmem:[%s187 + $0x1678] sm:$0xff]
        %v968 = vld [vmem:[%s187 + $0x1680] sm:$0xff]
        %v969 = vld [vmem:[%s187 + $0x1688] sm:$0xff]
        %v970 = vld [vmem:[%s187 + $0x1690] sm:$0xff]
        %v971 = vld [vmem:[%s187 + $0x1698] sm:$0xff]
        %v972 = vld [vmem:[%s187 + $0x16a0] sm:$0xff]
        %v973 = vld [vmem:[%s187 + $0x16a8] sm:$0xff]
        %v974 = vld [vmem:[%s187 + $0x16b0] sm:$0xff]
        %v975 = vld [vmem:[%s187 + $0x16b8] sm:$0xff]
        %v976 = vld [vmem:[%s187 + $0x16c0] sm:$0xff]
        %v977 = vld [vmem:[%s187 + $0x16c8] sm:$0xff]
        %v978 = vld [vmem:[%s187 + $0x16d0] sm:$0xff]
        %v979 = vld [vmem:[%s187 + $0x16d8] sm:$0xff]
        %v980 = vld [vmem:[%s187 + $0x16e0] sm:$0xff]
        %v981 = vld [vmem:[%s187 + $0x16e8] sm:$0xff]
        %v982 = vld [vmem:[%s187 + $0x16f0] sm:$0xff]
        %v983 = vld [vmem:[%s187 + $0x16f8] sm:$0xff]
        %v984 = vld [vmem:[%s187 + $0x1700] sm:$0xff]
        %v985 = vld [vmem:[%s187 + $0x1708] sm:$0xff]
        %v986 = vld [vmem:[%s187 + $0x1710] sm:$0xff]
        %v987 = vld [vmem:[%s187 + $0x1718] sm:$0xff]
        %v988 = vld [vmem:[%s187 + $0x1720] sm:$0xff]
        %v989 = vld [vmem:[%s187 + $0x1728] sm:$0xff]
        %v990 = vld [vmem:[%s187 + $0x1730] sm:$0xff]
        %v991 = vld [vmem:[%s187 + $0x1738] sm:$0xff]
        %v992 = vld [vmem:[%s187 + $0x1740] sm:$0xff]
        %v993 = vld [vmem:[%s187 + $0x1748] sm:$0xff]
        %v994 = vld [vmem:[%s187 + $0x1750] sm:$0xff]
        %v995 = vld [vmem:[%s187 + $0x1758] sm:$0xff]
        %v996 = vld [vmem:[%s187 + $0x1760] sm:$0xff]
        %v997 = vld [vmem:[%s187 + $0x1768] sm:$0xff]
        %v998 = vld [vmem:[%s187 + $0x1770] sm:$0xff]
        %v999 = vld [vmem:[%s187 + $0x1778] sm:$0xff]
        %v1000 = vld [vmem:[%s187 + $0x1780] sm:$0xff]
        %v1001 = vld [vmem:[%s187 + $0x1788] sm:$0xff]
        %v1002 = vld [vmem:[%s187 + $0x1790] sm:$0xff]
        %v1003 = vld [vmem:[%s187 + $0x1798] sm:$0xff]
        %v1004 = vld [vmem:[%s187 + $0x17a0] sm:$0xff]
        %v1005 = vld [vmem:[%s187 + $0x17a8] sm:$0xff]
        %v1006 = vld [vmem:[%s187 + $0x17b0] sm:$0xff]
        %v1007 = vld [vmem:[%s187 + $0x17b8] sm:$0xff]
        %v1008 = vld [vmem:[%s187 + $0x17c0] sm:$0xff]
        %v1009 = vld [vmem:[%s187 + $0x17c8] sm:$0xff]
        %v1010 = vld [vmem:[%s187 + $0x17d0] sm:$0xff]
        %v1011 = vld [vmem:[%s187 + $0x17d8] sm:$0xff]
        %v1012 = vld [vmem:[%s187 + $0x17e0] sm:$0xff]
        %v1013 = vld [vmem:[%s187 + $0x17e8] sm:$0xff]
        %v1014 = vld [vmem:[%s187 + $0x17f0] sm:$0xff]
        %v1015 = vld [vmem:[%s187 + $0x17f8] sm:$0xff]
        %v1016 = vld [vmem:[%s187 + $0x1800] sm:$0xff]
        %v1017 = vld [vmem:[%s187 + $0x1808] sm:$0xff]
        %v1018 = vld [vmem:[%s187 + $0x1810] sm:$0xff]
        %v1019 = vld [vmem:[%s187 + $0x1818] sm:$0xff]
        %v1020 = vld [vmem:[%s187 + $0x1820] sm:$0xff]
        %v1021 = vld [vmem:[%s187 + $0x1828] sm:$0xff]
        %v1022 = vld [vmem:[%s187 + $0x1830] sm:$0xff]
        %v1023 = vld [vmem:[%s187 + $0x1838] sm:$0xff]
        %v1024 = vld [vmem:[%s187 + $0x1840] sm:$0xff]
        %v1025 = vld [vmem:[%s187 + $0x1848] sm:$0xff]
        %v1026 = vld [vmem:[%s187 + $0x1850] sm:$0xff]
        %v1027 = vld [vmem:[%s187 + $0x1858] sm:$0xff]
        %v1028 = vld [vmem:[%s187 + $0x1860] sm:$0xff]
        %v1029 = vld [vmem:[%s187 + $0x1868] sm:$0xff]
        %v1030 = vld [vmem:[%s187 + $0x1870] sm:$0xff]
        %v1031 = vld [vmem:[%s187 + $0x1878] sm:$0xff]
        %v1032 = vld [vmem:[%s187 + $0x1880] sm:$0xff]
        %v1033 = vld [vmem:[%s187 + $0x1888] sm:$0xff]
        %v1034 = vld [vmem:[%s187 + $0x1890] sm:$0xff]
        %v1035 = vld [vmem:[%s187 + $0x1898] sm:$0xff]
        %v1036 = vld [vmem:[%s187 + $0x18a0] sm:$0xff]
        %v1037 = vld [vmem:[%s187 + $0x18a8] sm:$0xff]
        %v1038 = vld [vmem:[%s187 + $0x18b0] sm:$0xff]
        %v1039 = vld [vmem:[%s187 + $0x18b8] sm:$0xff]
        %v1040 = vld [vmem:[%s187 + $0x18c0] sm:$0xff]
        %v1041 = vld [vmem:[%s187 + $0x18c8] sm:$0xff]
        %v1042 = vld [vmem:[%s187 + $0x18d0] sm:$0xff]
        %v1043 = vld [vmem:[%s187 + $0x18d8] sm:$0xff]
        %v1044 = vld [vmem:[%s187 + $0x18e0] sm:$0xff]
        %v1045 = vld [vmem:[%s187 + $0x18e8] sm:$0xff]
        %v1046 = vld [vmem:[%s187 + $0x18f0] sm:$0xff]
        %v1047 = vld [vmem:[%s187 + $0x18f8] sm:$0xff]
        %v1048 = vld [vmem:[%s187 + $0x1900] sm:$0xff]
        %v1049 = vld [vmem:[%s187 + $0x1908] sm:$0xff]
        %v1050 = vld [vmem:[%s187 + $0x1910] sm:$0xff]
        %v1051 = vld [vmem:[%s187 + $0x1918] sm:$0xff]
        %v1052 = vld [vmem:[%s187 + $0x1920] sm:$0xff]
        %v1053 = vld [vmem:[%s187 + $0x1928] sm:$0xff]
        %v1054 = vld [vmem:[%s187 + $0x1930] sm:$0xff]
        %v1055 = vld [vmem:[%s187 + $0x1938] sm:$0xff]
        %v1056 = vld [vmem:[%s187 + $0x1940] sm:$0xff]
        %v1057 = vld [vmem:[%s187 + $0x1948] sm:$0xff]
        %v1058 = vld [vmem:[%s187 + $0x1950] sm:$0xff]
        %v1059 = vld [vmem:[%s187 + $0x1958] sm:$0xff]
        %v1060 = vld [vmem:[%s187 + $0x1960] sm:$0xff]
        %v1061 = vld [vmem:[%s187 + $0x1968] sm:$0xff]
        %v1062 = vld [vmem:[%s187 + $0x1970] sm:$0xff]
        %v1063 = vld [vmem:[%s187 + $0x1978] sm:$0xff]
        %v1064 = vld [vmem:[%s187 + $0x1980] sm:$0xff]
        %v1065 = vld [vmem:[%s187 + $0x1988] sm:$0xff]
        %v1066 = vld [vmem:[%s187 + $0x1990] sm:$0xff]
        %v1067 = vld [vmem:[%s187 + $0x1998] sm:$0xff]
        %v1068 = vld [vmem:[%s187 + $0x19a0] sm:$0xff]
        %v1069 = vld [vmem:[%s187 + $0x19a8] sm:$0xff]
        %v1070 = vld [vmem:[%s187 + $0x19b0] sm:$0xff]
        %v1071 = vld [vmem:[%s187 + $0x19b8] sm:$0xff]
        %v1072 = vld [vmem:[%s187 + $0x19c0] sm:$0xff]
        %v1073 = vld [vmem:[%s187 + $0x19c8] sm:$0xff]
        %v1074 = vld [vmem:[%s187 + $0x19d0] sm:$0xff]
        %v1075 = vld [vmem:[%s187 + $0x19d8] sm:$0xff]
        %v1076 = vld [vmem:[%s187 + $0x19e0] sm:$0xff]
        %v1077 = vld [vmem:[%s187 + $0x19e8] sm:$0xff]
        %v1078 = vld [vmem:[%s187 + $0x19f0] sm:$0xff]
        %v1079 = vld [vmem:[%s187 + $0x19f8] sm:$0xff]
        %v1080 = vld [vmem:[%s187 + $0x1a00] sm:$0xff]
        %v1081 = vld [vmem:[%s187 + $0x1a08] sm:$0xff]
        %v1082 = vld [vmem:[%s187 + $0x1a10] sm:$0xff]
        %v1083 = vld [vmem:[%s187 + $0x1a18] sm:$0xff]
        %v1084 = vld [vmem:[%s187 + $0x1a20] sm:$0xff]
        %v1085 = vld [vmem:[%s187 + $0x1a28] sm:$0xff]
        %v1086 = vld [vmem:[%s187 + $0x1a30] sm:$0xff]
        %v1087 = vld [vmem:[%s187 + $0x1a38] sm:$0xff]
        %v1088 = vld [vmem:[%s187 + $0x1a40] sm:$0xff]
        %v1089 = vld [vmem:[%s187 + $0x1a48] sm:$0xff]
        %v1090 = vld [vmem:[%s187 + $0x1a50] sm:$0xff]
        %v1091 = vld [vmem:[%s187 + $0x1a58] sm:$0xff]
        %v1092 = vld [vmem:[%s187 + $0x1a60] sm:$0xff]
        %v1093 = vld [vmem:[%s187 + $0x1a68] sm:$0xff]
        %v1094 = vld [vmem:[%s187 + $0x1a70] sm:$0xff]
        %v1095 = vld [vmem:[%s187 + $0x1a78] sm:$0xff]
        %v1096 = vld [vmem:[%s187 + $0x1a80] sm:$0xff]
        %v1097 = vld [vmem:[%s187 + $0x1a88] sm:$0xff]
        %v1098 = vld [vmem:[%s187 + $0x1a90] sm:$0xff]
        %v1099 = vld [vmem:[%s187 + $0x1a98] sm:$0xff]
        %v1100 = vld [vmem:[%s187 + $0x1aa0] sm:$0xff]
        %v1101 = vld [vmem:[%s187 + $0x1aa8] sm:$0xff]
        %v1102 = vld [vmem:[%s187 + $0x1ab0] sm:$0xff]
        %v1103 = vld [vmem:[%s187 + $0x1ab8] sm:$0xff]
        %v1104 = vld [vmem:[%s187 + $0x1ac0] sm:$0xff]
        %v1105 = vld [vmem:[%s187 + $0x1ac8] sm:$0xff]
        %v1106 = vld [vmem:[%s187 + $0x1ad0] sm:$0xff]
        %v1107 = vld [vmem:[%s187 + $0x1ad8] sm:$0xff]
        %v1108 = vld [vmem:[%s187 + $0x1ae0] sm:$0xff]
        %v1109 = vld [vmem:[%s187 + $0x1ae8] sm:$0xff]
        %v1110 = vld [vmem:[%s187 + $0x1af0] sm:$0xff]
        %v1111 = vld [vmem:[%s187 + $0x1af8] sm:$0xff]
        %v1112 = vld [vmem:[%s187 + $0x1b00] sm:$0xff]
        %v1113 = vld [vmem:[%s187 + $0x1b08] sm:$0xff]
        %v1114 = vld [vmem:[%s187 + $0x1b10] sm:$0xff]
        %v1115 = vld [vmem:[%s187 + $0x1b18] sm:$0xff]
        %v1116 = vld [vmem:[%s187 + $0x1b20] sm:$0xff]
        %v1117 = vld [vmem:[%s187 + $0x1b28] sm:$0xff]
        %v1118 = vld [vmem:[%s187 + $0x1b30] sm:$0xff]
        %v1119 = vld [vmem:[%s187 + $0x1b38] sm:$0xff]
        %v1120 = vld [vmem:[%s187 + $0x1b40] sm:$0xff]
        %v1121 = vld [vmem:[%s187 + $0x1b48] sm:$0xff]
        %v1122 = vld [vmem:[%s187 + $0x1b50] sm:$0xff]
        %v1123 = vld [vmem:[%s187 + $0x1b58] sm:$0xff]
        %v1124 = vld [vmem:[%s187 + $0x1b60] sm:$0xff]
        %v1125 = vld [vmem:[%s187 + $0x1b68] sm:$0xff]
        %v1126 = vld [vmem:[%s187 + $0x1b70] sm:$0xff]
        %v1127 = vld [vmem:[%s187 + $0x1b78] sm:$0xff]
        %v1128 = vld [vmem:[%s187 + $0x1b80] sm:$0xff]
        %v1129 = vld [vmem:[%s187 + $0x1b88] sm:$0xff]
        %v1130 = vld [vmem:[%s187 + $0x1b90] sm:$0xff]
        %v1131 = vld [vmem:[%s187 + $0x1b98] sm:$0xff]
        %v1132 = vld [vmem:[%s187 + $0x1ba0] sm:$0xff]
        %v1133 = vld [vmem:[%s187 + $0x1ba8] sm:$0xff]
        %v1134 = vld [vmem:[%s187 + $0x1bb0] sm:$0xff]
        %v1135 = vld [vmem:[%s187 + $0x1bb8] sm:$0xff]
        %v1136 = vld [vmem:[%s187 + $0x1bc0] sm:$0xff]
        %v1137 = vld [vmem:[%s187 + $0x1bc8] sm:$0xff]
        %v1138 = vld [vmem:[%s187 + $0x1bd0] sm:$0xff]
        %v1139 = vld [vmem:[%s187 + $0x1bd8] sm:$0xff]
        %v1140 = vld [vmem:[%s187 + $0x1be0] sm:$0xff]
        %v1141 = vld [vmem:[%s187 + $0x1be8] sm:$0xff]
        %v1142 = vld [vmem:[%s187 + $0x1bf0] sm:$0xff]
        %v1143 = vld [vmem:[%s187 + $0x1bf8] sm:$0xff]
        %v1144 = vld [vmem:[%s187 + $0x1c00] sm:$0xff]
        %v1145 = vld [vmem:[%s187 + $0x1c08] sm:$0xff]
        %v1146 = vld [vmem:[%s187 + $0x1c10] sm:$0xff]
        %v1147 = vld [vmem:[%s187 + $0x1c18] sm:$0xff]
        %v1148 = vld [vmem:[%s187 + $0x1c20] sm:$0xff]
        %v1149 = vld [vmem:[%s187 + $0x1c28] sm:$0xff]
        %v1150 = vld [vmem:[%s187 + $0x1c30] sm:$0xff]
        %v1151 = vld [vmem:[%s187 + $0x1c38] sm:$0xff]
        %v1152 = vld [vmem:[%s187 + $0x1c40] sm:$0xff]
        %v1153 = vld [vmem:[%s187 + $0x1c48] sm:$0xff]
        %v1154 = vld [vmem:[%s187 + $0x1c50] sm:$0xff]
        %v1155 = vld [vmem:[%s187 + $0x1c58] sm:$0xff]
        %v1156 = vld [vmem:[%s187 + $0x1c60] sm:$0xff]
        %v1157 = vld [vmem:[%s187 + $0x1c68] sm:$0xff]
        %v1158 = vld [vmem:[%s187 + $0x1c70] sm:$0xff]
        %v1159 = vld [vmem:[%s187 + $0x1c78] sm:$0xff]
        %v1160 = vld [vmem:[%s187 + $0x1c80] sm:$0xff]
        %v1161 = vld [vmem:[%s187 + $0x1c88] sm:$0xff]
        %v1162 = vld [vmem:[%s187 + $0x1c90] sm:$0xff]
        %v1163 = vld [vmem:[%s187 + $0x1c98] sm:$0xff]
        %v1164 = vld [vmem:[%s187 + $0x1ca0] sm:$0xff]
        %v1165 = vld [vmem:[%s187 + $0x1ca8] sm:$0xff]
        %v1166 = vld [vmem:[%s187 + $0x1cb0] sm:$0xff]
        %v1167 = vld [vmem:[%s187 + $0x1cb8] sm:$0xff]
        %v1168 = vld [vmem:[%s187 + $0x1cc0] sm:$0xff]
        %v1169 = vld [vmem:[%s187 + $0x1cc8] sm:$0xff]
        %v1170 = vld [vmem:[%s187 + $0x1cd0] sm:$0xff]
        %v1171 = vld [vmem:[%s187 + $0x1cd8] sm:$0xff]
        %v1172 = vld [vmem:[%s187 + $0x1ce0] sm:$0xff]
        %v1173 = vld [vmem:[%s187 + $0x1ce8] sm:$0xff]
        %v1174 = vld [vmem:[%s187 + $0x1cf0] sm:$0xff]
        %v1175 = vld [vmem:[%s187 + $0x1cf8] sm:$0xff]
        %v1176 = vld [vmem:[%s187 + $0x1d00] sm:$0xff]
        %v1177 = vld [vmem:[%s187 + $0x1d08] sm:$0xff]
        %v1178 = vld [vmem:[%s187 + $0x1d10] sm:$0xff]
        %v1179 = vld [vmem:[%s187 + $0x1d18] sm:$0xff]
        %v1180 = vld [vmem:[%s187 + $0x1d20] sm:$0xff]
        %v1181 = vld [vmem:[%s187 + $0x1d28] sm:$0xff]
        %v1182 = vld [vmem:[%s187 + $0x1d30] sm:$0xff]
        %v1183 = vld [vmem:[%s187 + $0x1d38] sm:$0xff]
        %v1184 = vld [vmem:[%s187 + $0x1d40] sm:$0xff]
        %v1185 = vld [vmem:[%s187 + $0x1d48] sm:$0xff]
        %v1186 = vld [vmem:[%s187 + $0x1d50] sm:$0xff]
        %v1187 = vld [vmem:[%s187 + $0x1d58] sm:$0xff]
        %v1188 = vld [vmem:[%s187 + $0x1d60] sm:$0xff]
        %v1189 = vld [vmem:[%s187 + $0x1d68] sm:$0xff]
        %v1190 = vld [vmem:[%s187 + $0x1d70] sm:$0xff]
        %v1191 = vld [vmem:[%s187 + $0x1d78] sm:$0xff]
        %v1192 = vld [vmem:[%s187 + $0x1d80] sm:$0xff]
        %v1193 = vld [vmem:[%s187 + $0x1d88] sm:$0xff]
        %v1194 = vld [vmem:[%s187 + $0x1d90] sm:$0xff]
        %v1195 = vld [vmem:[%s187 + $0x1d98] sm:$0xff]
        %v1196 = vld [vmem:[%s187 + $0x1da0] sm:$0xff]
        %v1197 = vld [vmem:[%s187 + $0x1da8] sm:$0xff]
        %v1198 = vld [vmem:[%s187 + $0x1db0] sm:$0xff]
        %v1199 = vld [vmem:[%s187 + $0x1db8] sm:$0xff]
        %v1200 = vld [vmem:[%s187 + $0x1dc0] sm:$0xff]
        %v1201 = vld [vmem:[%s187 + $0x1dc8] sm:$0xff]
        %v1202 = vld [vmem:[%s187 + $0x1dd0] sm:$0xff]
        %v1203 = vld [vmem:[%s187 + $0x1dd8] sm:$0xff]
        %v1204 = vld [vmem:[%s187 + $0x1de0] sm:$0xff]
        %v1205 = vld [vmem:[%s187 + $0x1de8] sm:$0xff]
        %v1206 = vld [vmem:[%s187 + $0x1df0] sm:$0xff]
        %v1207 = vld [vmem:[%s187 + $0x1df8] sm:$0xff]
        %v1208 = vld [vmem:[%s187 + $0x1e00] sm:$0xff]
        %v1209 = vld [vmem:[%s187 + $0x1e08] sm:$0xff]
        %v1210 = vld [vmem:[%s187 + $0x1e10] sm:$0xff]
        %v1211 = vld [vmem:[%s187 + $0x1e18] sm:$0xff]
        %v1212 = vld [vmem:[%s187 + $0x1e20] sm:$0xff]
        %v1213 = vld [vmem:[%s187 + $0x1e28] sm:$0xff]
        %v1214 = vld [vmem:[%s187 + $0x1e30] sm:$0xff]
        %v1215 = vld [vmem:[%s187 + $0x1e38] sm:$0xff]
        %v1216 = vld [vmem:[%s187 + $0x1e40] sm:$0xff]
        %v1217 = vld [vmem:[%s187 + $0x1e48] sm:$0xff]
        %v1218 = vld [vmem:[%s187 + $0x1e50] sm:$0xff]
        %v1219 = vld [vmem:[%s187 + $0x1e58] sm:$0xff]
        %v1220 = vld [vmem:[%s187 + $0x1e60] sm:$0xff]
        %v1221 = vld [vmem:[%s187 + $0x1e68] sm:$0xff]
        %v1222 = vld [vmem:[%s187 + $0x1e70] sm:$0xff]
        %v1223 = vld [vmem:[%s187 + $0x1e78] sm:$0xff]
        %v1224 = vld [vmem:[%s187 + $0x1e80] sm:$0xff]
        %v1225 = vld [vmem:[%s187 + $0x1e88] sm:$0xff]
        %v1226 = vld [vmem:[%s187 + $0x1e90] sm:$0xff]
        %v1227 = vld [vmem:[%s187 + $0x1e98] sm:$0xff]
        %v1228 = vld [vmem:[%s187 + $0x1ea0] sm:$0xff]
        %v1229 = vld [vmem:[%s187 + $0x1ea8] sm:$0xff]
        %v1230 = vld [vmem:[%s187 + $0x1eb0] sm:$0xff]
        %v1231 = vld [vmem:[%s187 + $0x1eb8] sm:$0xff]
        %v1232 = vld [vmem:[%s187 + $0x1ec0] sm:$0xff]
        %v1233 = vld [vmem:[%s187 + $0x1ec8] sm:$0xff]
        %v1234 = vld [vmem:[%s187 + $0x1ed0] sm:$0xff]
        %v1235 = vld [vmem:[%s187 + $0x1ed8] sm:$0xff]
        %v1236 = vld [vmem:[%s187 + $0x1ee0] sm:$0xff]
        %v1237 = vld [vmem:[%s187 + $0x1ee8] sm:$0xff]
        %v1238 = vld [vmem:[%s187 + $0x1ef0] sm:$0xff]
        %v1239 = vld [vmem:[%s187 + $0x1ef8] sm:$0xff]
        %v1240 = vld [vmem:[%s187 + $0x1f00] sm:$0xff]
        %v1241 = vld [vmem:[%s187 + $0x1f08] sm:$0xff]
        %v1242 = vld [vmem:[%s187 + $0x1f10] sm:$0xff]
        %v1243 = vld [vmem:[%s187 + $0x1f18] sm:$0xff]
        %v1244 = vld [vmem:[%s187 + $0x1f20] sm:$0xff]
        %v1245 = vld [vmem:[%s187 + $0x1f28] sm:$0xff]
        %v1246 = vld [vmem:[%s187 + $0x1f30] sm:$0xff]
        %v1247 = vld [vmem:[%s187 + $0x1f38] sm:$0xff]
        %v1248 = vld [vmem:[%s187 + $0x1f40] sm:$0xff]
        %v1249 = vld [vmem:[%s187 + $0x1f48] sm:$0xff]
        %v1250 = vld [vmem:[%s187 + $0x1f50] sm:$0xff]
        %v1251 = vld [vmem:[%s187 + $0x1f58] sm:$0xff]
        %v1252 = vld [vmem:[%s187 + $0x1f60] sm:$0xff]
        %v1253 = vld [vmem:[%s187 + $0x1f68] sm:$0xff]
        %v1254 = vld [vmem:[%s187 + $0x1f70] sm:$0xff]
        %v1255 = vld [vmem:[%s187 + $0x1f78] sm:$0xff]
        %v1256 = vld [vmem:[%s187 + $0x1f80] sm:$0xff]
        %v1257 = vld [vmem:[%s187 + $0x1f88] sm:$0xff]
        %v1258 = vld [vmem:[%s187 + $0x1f90] sm:$0xff]
        %v1259 = vld [vmem:[%s187 + $0x1f98] sm:$0xff]
        %v1260 = vld [vmem:[%s187 + $0x1fa0] sm:$0xff]
        %v1261 = vld [vmem:[%s187 + $0x1fa8] sm:$0xff]
        %v1262 = vld [vmem:[%s187 + $0x1fb0] sm:$0xff]
        %v1263 = vld [vmem:[%s187 + $0x1fb8] sm:$0xff]
        %v1264 = vld [vmem:[%s187 + $0x1fc0] sm:$0xff]
        %v1265 = vld [vmem:[%s187 + $0x1fc8] sm:$0xff]
        %v1266 = vld [vmem:[%s187 + $0x1fd0] sm:$0xff]
        %v1267 = vld [vmem:[%s187 + $0x1fd8] sm:$0xff]
        %v1268 = vld [vmem:[%s187 + $0x1fe0] sm:$0xff]
        %v1269 = vld [vmem:[%s187 + $0x1fe8] sm:$0xff]
        %v1270 = vld [vmem:[%s187 + $0x1ff0] sm:$0xff]
        %v1271 = vld [vmem:[%s187 + $0x1ff8] sm:$0xff]
        %v1272 = vld [vmem:[%s196] sm:$0xff]
        %v1273 = vld [vmem:[%s196 + $0x8] sm:$0xff]
        %v1276 = vlaneseq
        %v1277 = vshrl.u32 %v1276, 7
        %v1278 = vsub.s32 0, %v1277
        %v1279 = vrot.slane %v1272, %v1278
        %v1280 = vlaneseq
        %v1281 = vshrl.u32 %v1280, 7
        %v1282 = vsub.s32 1, %v1281
        %v1283 = vrot.slane %v1272, %v1282
        %v1284 = vlaneseq
        %v1285 = vshrl.u32 %v1284, 7
        %v1286 = vsub.s32 2, %v1285
        %v1287 = vrot.slane %v1272, %v1286
        %v1288 = vlaneseq
        %v1289 = vshrl.u32 %v1288, 7
        %v1290 = vsub.s32 3, %v1289
        %v1291 = vrot.slane %v1272, %v1290
        %v1292 = vlaneseq
        %v1293 = vshrl.u32 %v1292, 7
        %v1294 = vsub.s32 4, %v1293
        %v1295 = vrot.slane %v1272, %v1294
        %v1296 = vlaneseq
        %v1297 = vshrl.u32 %v1296, 7
        %v1298 = vsub.s32 5, %v1297
        %v1299 = vrot.slane %v1272, %v1298
        %v1300 = vlaneseq
        %v1301 = vshrl.u32 %v1300, 7
        %v1302 = vsub.s32 6, %v1301
        %v1303 = vrot.slane %v1272, %v1302
        %v1304 = vlaneseq
        %v1305 = vshrl.u32 %v1304, 7
        %v1306 = vsub.s32 7, %v1305
        %v1307 = vrot.slane %v1272, %v1306
        %v1308 = vlaneseq
        %v1309 = vshrl.u32 %v1308, 7
        %v1310 = vsub.s32 0, %v1309
        %v1311 = vrot.slane %v1273, %v1310
        %v1312 = vlaneseq
        %v1313 = vshrl.u32 %v1312, 7
        %v1314 = vsub.s32 1, %v1313
        %v1315 = vrot.slane %v1273, %v1314
        %v1316 = vlaneseq
        %v1317 = vshrl.u32 %v1316, 7
        %v1318 = vsub.s32 2, %v1317
        %v1319 = vrot.slane %v1273, %v1318
        %v1320 = vlaneseq
        %v1321 = vshrl.u32 %v1320, 7
        %v1322 = vsub.s32 3, %v1321
        %v1323 = vrot.slane %v1273, %v1322
        %v1324 = vlaneseq
        %v1325 = vshrl.u32 %v1324, 7
        %v1326 = vsub.s32 4, %v1325
        %v1327 = vrot.slane %v1273, %v1326
        %v1328 = vlaneseq
        %v1329 = vshrl.u32 %v1328, 7
        %v1330 = vsub.s32 5, %v1329
        %v1331 = vrot.slane %v1273, %v1330
        %v1332 = vlaneseq
        %v1333 = vshrl.u32 %v1332, 7
        %v1334 = vsub.s32 6, %v1333
        %v1335 = vrot.slane %v1273, %v1334
        %v1336 = vlaneseq
        %v1337 = vshrl.u32 %v1336, 7
        %v1338 = vsub.s32 7, %v1337
        %v1339 = vrot.slane %v1273, %v1338
        %v2380 = vunpack.c.l.b16 %v248
        %v2381 = vunpack.c.h.b16 %v248
        %v2382 = vunpack.c.l.b16 %v249
        %v2383 = vunpack.c.h.b16 %v249
        %v2384 = vunpack.c.l.b16 %v250
        %v2385 = vunpack.c.h.b16 %v250
        %v2386 = vunpack.c.l.b16 %v251
        %v2387 = vunpack.c.h.b16 %v251
        %v2388 = vunpack.c.l.b16 %v252
        %v2389 = vunpack.c.h.b16 %v252
        %v2390 = vunpack.c.l.b16 %v253
        %v2391 = vunpack.c.h.b16 %v253
        %v2392 = vunpack.c.l.b16 %v254
        %v2393 = vunpack.c.h.b16 %v254
        %v2394 = vunpack.c.l.b16 %v255
        %v2395 = vunpack.c.h.b16 %v255
        %v2396 = vunpack.c.l.b16 %v256
        %v2397 = vunpack.c.h.b16 %v256
        %v2398 = vunpack.c.l.b16 %v257
        %v2399 = vunpack.c.h.b16 %v257
        %v2400 = vunpack.c.l.b16 %v258
        %v2401 = vunpack.c.h.b16 %v258
        %v2402 = vunpack.c.l.b16 %v259
        %v2403 = vunpack.c.h.b16 %v259
        %v2404 = vunpack.c.l.b16 %v260
        %v2405 = vunpack.c.h.b16 %v260
        %v2406 = vunpack.c.l.b16 %v261
        %v2407 = vunpack.c.h.b16 %v261
        %v2408 = vunpack.c.l.b16 %v262
        %v2409 = vunpack.c.h.b16 %v262
        %v2410 = vunpack.c.l.b16 %v263
        %v2411 = vunpack.c.h.b16 %v263
        %v2412 = vunpack.c.l.b16 %v264
        %v2413 = vunpack.c.h.b16 %v264
        %v2414 = vunpack.c.l.b16 %v265
        %v2415 = vunpack.c.h.b16 %v265
        %v2416 = vunpack.c.l.b16 %v266
        %v2417 = vunpack.c.h.b16 %v266
        %v2418 = vunpack.c.l.b16 %v267
        %v2419 = vunpack.c.h.b16 %v267
        %v2420 = vunpack.c.l.b16 %v268
        %v2421 = vunpack.c.h.b16 %v268
        %v2422 = vunpack.c.l.b16 %v269
        %v2423 = vunpack.c.h.b16 %v269
        %v2424 = vunpack.c.l.b16 %v270
        %v2425 = vunpack.c.h.b16 %v270
        %v2426 = vunpack.c.l.b16 %v271
        %v2427 = vunpack.c.h.b16 %v271
        %v2428 = vunpack.c.l.b16 %v272
        %v2429 = vunpack.c.h.b16 %v272
        %v2430 = vunpack.c.l.b16 %v273
        %v2431 = vunpack.c.h.b16 %v273
        %v2432 = vunpack.c.l.b16 %v274
        %v2433 = vunpack.c.h.b16 %v274
        %v2434 = vunpack.c.l.b16 %v275
        %v2435 = vunpack.c.h.b16 %v275
        %v2436 = vunpack.c.l.b16 %v276
        %v2437 = vunpack.c.h.b16 %v276
        %v2438 = vunpack.c.l.b16 %v277
        %v2439 = vunpack.c.h.b16 %v277
        %v2440 = vunpack.c.l.b16 %v278
        %v2441 = vunpack.c.h.b16 %v278
        %v2442 = vunpack.c.l.b16 %v279
        %v2443 = vunpack.c.h.b16 %v279
        %v2444 = vunpack.c.l.b16 %v280
        %v2445 = vunpack.c.h.b16 %v280
        %v2446 = vunpack.c.l.b16 %v281
        %v2447 = vunpack.c.h.b16 %v281
        %v2448 = vunpack.c.l.b16 %v282
        %v2449 = vunpack.c.h.b16 %v282
        %v2450 = vunpack.c.l.b16 %v283
        %v2451 = vunpack.c.h.b16 %v283
        %v2452 = vunpack.c.l.b16 %v284
        %v2453 = vunpack.c.h.b16 %v284
        %v2454 = vunpack.c.l.b16 %v285
        %v2455 = vunpack.c.h.b16 %v285
        %v2456 = vunpack.c.l.b16 %v286
        %v2457 = vunpack.c.h.b16 %v286
        %v2458 = vunpack.c.l.b16 %v287
        %v2459 = vunpack.c.h.b16 %v287
        %v2460 = vunpack.c.l.b16 %v288
        %v2461 = vunpack.c.h.b16 %v288
        %v2462 = vunpack.c.l.b16 %v289
        %v2463 = vunpack.c.h.b16 %v289
        %v2464 = vunpack.c.l.b16 %v290
        %v2465 = vunpack.c.h.b16 %v290
        %v2466 = vunpack.c.l.b16 %v291
        %v2467 = vunpack.c.h.b16 %v291
        %v2468 = vunpack.c.l.b16 %v292
        %v2469 = vunpack.c.h.b16 %v292
        %v2470 = vunpack.c.l.b16 %v293
        %v2471 = vunpack.c.h.b16 %v293
        %v2472 = vunpack.c.l.b16 %v294
        %v2473 = vunpack.c.h.b16 %v294
        %v2474 = vunpack.c.l.b16 %v295
        %v2475 = vunpack.c.h.b16 %v295
        %v2476 = vunpack.c.l.b16 %v296
        %v2477 = vunpack.c.h.b16 %v296
        %v2478 = vunpack.c.l.b16 %v297
        %v2479 = vunpack.c.h.b16 %v297
        %v2480 = vunpack.c.l.b16 %v298
        %v2481 = vunpack.c.h.b16 %v298
        %v2482 = vunpack.c.l.b16 %v299
        %v2483 = vunpack.c.h.b16 %v299
        %v2484 = vunpack.c.l.b16 %v300
        %v2485 = vunpack.c.h.b16 %v300
        %v2486 = vunpack.c.l.b16 %v301
        %v2487 = vunpack.c.h.b16 %v301
        %v2488 = vunpack.c.l.b16 %v302
        %v2489 = vunpack.c.h.b16 %v302
        %v2490 = vunpack.c.l.b16 %v303
        %v2491 = vunpack.c.h.b16 %v303
        %v2492 = vunpack.c.l.b16 %v304
        %v2493 = vunpack.c.h.b16 %v304
        %v2494 = vunpack.c.l.b16 %v305
        %v2495 = vunpack.c.h.b16 %v305
        %v2496 = vunpack.c.l.b16 %v306
        %v2497 = vunpack.c.h.b16 %v306
        %v2498 = vunpack.c.l.b16 %v307
        %v2499 = vunpack.c.h.b16 %v307
        %v2500 = vunpack.c.l.b16 %v308
        %v2501 = vunpack.c.h.b16 %v308
        %v2502 = vunpack.c.l.b16 %v309
        %v2503 = vunpack.c.h.b16 %v309
        %v2504 = vunpack.c.l.b16 %v310
        %v2505 = vunpack.c.h.b16 %v310
        %v2506 = vunpack.c.l.b16 %v311
        %v2507 = vunpack.c.h.b16 %v311
        %v2508 = vunpack.c.l.b16 %v312
        %v2509 = vunpack.c.h.b16 %v312
        %v2510 = vunpack.c.l.b16 %v313
        %v2511 = vunpack.c.h.b16 %v313
        %v2512 = vunpack.c.l.b16 %v314
        %v2513 = vunpack.c.h.b16 %v314
        %v2514 = vunpack.c.l.b16 %v315
        %v2515 = vunpack.c.h.b16 %v315
        %v2516 = vunpack.c.l.b16 %v316
        %v2517 = vunpack.c.h.b16 %v316
        %v2518 = vunpack.c.l.b16 %v317
        %v2519 = vunpack.c.h.b16 %v317
        %v2520 = vunpack.c.l.b16 %v318
        %v2521 = vunpack.c.h.b16 %v318
        %v2522 = vunpack.c.l.b16 %v319
        %v2523 = vunpack.c.h.b16 %v319
        %v2524 = vunpack.c.l.b16 %v320
        %v2525 = vunpack.c.h.b16 %v320
        %v2526 = vunpack.c.l.b16 %v321
        %v2527 = vunpack.c.h.b16 %v321
        %v2528 = vunpack.c.l.b16 %v322
        %v2529 = vunpack.c.h.b16 %v322
        %v2530 = vunpack.c.l.b16 %v323
        %v2531 = vunpack.c.h.b16 %v323
        %v2532 = vunpack.c.l.b16 %v324
        %v2533 = vunpack.c.h.b16 %v324
        %v2534 = vunpack.c.l.b16 %v325
        %v2535 = vunpack.c.h.b16 %v325
        %v2536 = vunpack.c.l.b16 %v326
        %v2537 = vunpack.c.h.b16 %v326
        %v2538 = vunpack.c.l.b16 %v327
        %v2539 = vunpack.c.h.b16 %v327
        %v2540 = vunpack.c.l.b16 %v328
        %v2541 = vunpack.c.h.b16 %v328
        %v2542 = vunpack.c.l.b16 %v329
        %v2543 = vunpack.c.h.b16 %v329
        %v2544 = vunpack.c.l.b16 %v330
        %v2545 = vunpack.c.h.b16 %v330
        %v2546 = vunpack.c.l.b16 %v331
        %v2547 = vunpack.c.h.b16 %v331
        %v2548 = vunpack.c.l.b16 %v332
        %v2549 = vunpack.c.h.b16 %v332
        %v2550 = vunpack.c.l.b16 %v333
        %v2551 = vunpack.c.h.b16 %v333
        %v2552 = vunpack.c.l.b16 %v334
        %v2553 = vunpack.c.h.b16 %v334
        %v2554 = vunpack.c.l.b16 %v335
        %v2555 = vunpack.c.h.b16 %v335
        %v2556 = vunpack.c.l.b16 %v336
        %v2557 = vunpack.c.h.b16 %v336
        %v2558 = vunpack.c.l.b16 %v337
        %v2559 = vunpack.c.h.b16 %v337
        %v2560 = vunpack.c.l.b16 %v338
        %v2561 = vunpack.c.h.b16 %v338
        %v2562 = vunpack.c.l.b16 %v339
        %v2563 = vunpack.c.h.b16 %v339
        %v2564 = vunpack.c.l.b16 %v340
        %v2565 = vunpack.c.h.b16 %v340
        %v2566 = vunpack.c.l.b16 %v341
        %v2567 = vunpack.c.h.b16 %v341
        %v2568 = vunpack.c.l.b16 %v342
        %v2569 = vunpack.c.h.b16 %v342
        %v2570 = vunpack.c.l.b16 %v343
        %v2571 = vunpack.c.h.b16 %v343
        %v2572 = vunpack.c.l.b16 %v344
        %v2573 = vunpack.c.h.b16 %v344
        %v2574 = vunpack.c.l.b16 %v345
        %v2575 = vunpack.c.h.b16 %v345
        %v2576 = vunpack.c.l.b16 %v346
        %v2577 = vunpack.c.h.b16 %v346
        %v2578 = vunpack.c.l.b16 %v347
        %v2579 = vunpack.c.h.b16 %v347
        %v2580 = vunpack.c.l.b16 %v348
        %v2581 = vunpack.c.h.b16 %v348
        %v2582 = vunpack.c.l.b16 %v349
        %v2583 = vunpack.c.h.b16 %v349
        %v2584 = vunpack.c.l.b16 %v350
        %v2585 = vunpack.c.h.b16 %v350
        %v2586 = vunpack.c.l.b16 %v351
        %v2587 = vunpack.c.h.b16 %v351
        %v2588 = vunpack.c.l.b16 %v352
        %v2589 = vunpack.c.h.b16 %v352
        %v2590 = vunpack.c.l.b16 %v353
        %v2591 = vunpack.c.h.b16 %v353
        %v2592 = vunpack.c.l.b16 %v354
        %v2593 = vunpack.c.h.b16 %v354
        %v2594 = vunpack.c.l.b16 %v355
        %v2595 = vunpack.c.h.b16 %v355
        %v2596 = vunpack.c.l.b16 %v356
        %v2597 = vunpack.c.h.b16 %v356
        %v2598 = vunpack.c.l.b16 %v357
        %v2599 = vunpack.c.h.b16 %v357
        %v2600 = vunpack.c.l.b16 %v358
        %v2601 = vunpack.c.h.b16 %v358
        %v2602 = vunpack.c.l.b16 %v359
        %v2603 = vunpack.c.h.b16 %v359
        %v2604 = vunpack.c.l.b16 %v360
        %v2605 = vunpack.c.h.b16 %v360
        %v2606 = vunpack.c.l.b16 %v361
        %v2607 = vunpack.c.h.b16 %v361
        %v2608 = vunpack.c.l.b16 %v362
        %v2609 = vunpack.c.h.b16 %v362
        %v2610 = vunpack.c.l.b16 %v363
        %v2611 = vunpack.c.h.b16 %v363
        %v2612 = vunpack.c.l.b16 %v364
        %v2613 = vunpack.c.h.b16 %v364
        %v2614 = vunpack.c.l.b16 %v365
        %v2615 = vunpack.c.h.b16 %v365
        %v2616 = vunpack.c.l.b16 %v366
        %v2617 = vunpack.c.h.b16 %v366
        %v2618 = vunpack.c.l.b16 %v367
        %v2619 = vunpack.c.h.b16 %v367
        %v2620 = vunpack.c.l.b16 %v368
        %v2621 = vunpack.c.h.b16 %v368
        %v2622 = vunpack.c.l.b16 %v369
        %v2623 = vunpack.c.h.b16 %v369
        %v2624 = vunpack.c.l.b16 %v370
        %v2625 = vunpack.c.h.b16 %v370
        %v2626 = vunpack.c.l.b16 %v371
        %v2627 = vunpack.c.h.b16 %v371
        %v2628 = vunpack.c.l.b16 %v372
        %v2629 = vunpack.c.h.b16 %v372
        %v2630 = vunpack.c.l.b16 %v373
        %v2631 = vunpack.c.h.b16 %v373
        %v2632 = vunpack.c.l.b16 %v374
        %v2633 = vunpack.c.h.b16 %v374
        %v2634 = vunpack.c.l.b16 %v375
        %v2635 = vunpack.c.h.b16 %v375
        %v2636 = vunpack.c.l.b16 %v376
        %v2637 = vunpack.c.h.b16 %v376
        %v2638 = vunpack.c.l.b16 %v377
        %v2639 = vunpack.c.h.b16 %v377
        %v2640 = vunpack.c.l.b16 %v378
        %v2641 = vunpack.c.h.b16 %v378
        %v2642 = vunpack.c.l.b16 %v379
        %v2643 = vunpack.c.h.b16 %v379
        %v2644 = vunpack.c.l.b16 %v380
        %v2645 = vunpack.c.h.b16 %v380
        %v2646 = vunpack.c.l.b16 %v381
        %v2647 = vunpack.c.h.b16 %v381
        %v2648 = vunpack.c.l.b16 %v382
        %v2649 = vunpack.c.h.b16 %v382
        %v2650 = vunpack.c.l.b16 %v383
        %v2651 = vunpack.c.h.b16 %v383
        %v2652 = vunpack.c.l.b16 %v384
        %v2653 = vunpack.c.h.b16 %v384
        %v2654 = vunpack.c.l.b16 %v385
        %v2655 = vunpack.c.h.b16 %v385
        %v2656 = vunpack.c.l.b16 %v386
        %v2657 = vunpack.c.h.b16 %v386
        %v2658 = vunpack.c.l.b16 %v387
        %v2659 = vunpack.c.h.b16 %v387
        %v2660 = vunpack.c.l.b16 %v388
        %v2661 = vunpack.c.h.b16 %v388
        %v2662 = vunpack.c.l.b16 %v389
        %v2663 = vunpack.c.h.b16 %v389
        %v2664 = vunpack.c.l.b16 %v390
        %v2665 = vunpack.c.h.b16 %v390
        %v2666 = vunpack.c.l.b16 %v391
        %v2667 = vunpack.c.h.b16 %v391
        %v2668 = vunpack.c.l.b16 %v392
        %v2669 = vunpack.c.h.b16 %v392
        %v2670 = vunpack.c.l.b16 %v393
        %v2671 = vunpack.c.h.b16 %v393
        %v2672 = vunpack.c.l.b16 %v394
        %v2673 = vunpack.c.h.b16 %v394
        %v2674 = vunpack.c.l.b16 %v395
        %v2675 = vunpack.c.h.b16 %v395
        %v2676 = vunpack.c.l.b16 %v396
        %v2677 = vunpack.c.h.b16 %v396
        %v2678 = vunpack.c.l.b16 %v397
        %v2679 = vunpack.c.h.b16 %v397
        %v2680 = vunpack.c.l.b16 %v398
        %v2681 = vunpack.c.h.b16 %v398
        %v2682 = vunpack.c.l.b16 %v399
        %v2683 = vunpack.c.h.b16 %v399
        %v2684 = vunpack.c.l.b16 %v400
        %v2685 = vunpack.c.h.b16 %v400
        %v2686 = vunpack.c.l.b16 %v401
        %v2687 = vunpack.c.h.b16 %v401
        %v2688 = vunpack.c.l.b16 %v402
        %v2689 = vunpack.c.h.b16 %v402
        %v2690 = vunpack.c.l.b16 %v403
        %v2691 = vunpack.c.h.b16 %v403
        %v2692 = vunpack.c.l.b16 %v404
        %v2693 = vunpack.c.h.b16 %v404
        %v2694 = vunpack.c.l.b16 %v405
        %v2695 = vunpack.c.h.b16 %v405
        %v2696 = vunpack.c.l.b16 %v406
        %v2697 = vunpack.c.h.b16 %v406
        %v2698 = vunpack.c.l.b16 %v407
        %v2699 = vunpack.c.h.b16 %v407
        %v2700 = vunpack.c.l.b16 %v408
        %v2701 = vunpack.c.h.b16 %v408
        %v2702 = vunpack.c.l.b16 %v409
        %v2703 = vunpack.c.h.b16 %v409
        %v2704 = vunpack.c.l.b16 %v410
        %v2705 = vunpack.c.h.b16 %v410
        %v2706 = vunpack.c.l.b16 %v411
        %v2707 = vunpack.c.h.b16 %v411
        %v2708 = vunpack.c.l.b16 %v412
        %v2709 = vunpack.c.h.b16 %v412
        %v2710 = vunpack.c.l.b16 %v413
        %v2711 = vunpack.c.h.b16 %v413
        %v2712 = vunpack.c.l.b16 %v414
        %v2713 = vunpack.c.h.b16 %v414
        %v2714 = vunpack.c.l.b16 %v415
        %v2715 = vunpack.c.h.b16 %v415
        %v2716 = vunpack.c.l.b16 %v416
        %v2717 = vunpack.c.h.b16 %v416
        %v2718 = vunpack.c.l.b16 %v417
        %v2719 = vunpack.c.h.b16 %v417
        %v2720 = vunpack.c.l.b16 %v418
        %v2721 = vunpack.c.h.b16 %v418
        %v2722 = vunpack.c.l.b16 %v419
        %v2723 = vunpack.c.h.b16 %v419
        %v2724 = vunpack.c.l.b16 %v420
        %v2725 = vunpack.c.h.b16 %v420
        %v2726 = vunpack.c.l.b16 %v421
        %v2727 = vunpack.c.h.b16 %v421
        %v2728 = vunpack.c.l.b16 %v422
        %v2729 = vunpack.c.h.b16 %v422
        %v2730 = vunpack.c.l.b16 %v423
        %v2731 = vunpack.c.h.b16 %v423
        %v2732 = vunpack.c.l.b16 %v424
        %v2733 = vunpack.c.h.b16 %v424
        %v2734 = vunpack.c.l.b16 %v425
        %v2735 = vunpack.c.h.b16 %v425
        %v2736 = vunpack.c.l.b16 %v426
        %v2737 = vunpack.c.h.b16 %v426
        %v2738 = vunpack.c.l.b16 %v427
        %v2739 = vunpack.c.h.b16 %v427
        %v2740 = vunpack.c.l.b16 %v428
        %v2741 = vunpack.c.h.b16 %v428
        %v2742 = vunpack.c.l.b16 %v429
        %v2743 = vunpack.c.h.b16 %v429
        %v2744 = vunpack.c.l.b16 %v430
        %v2745 = vunpack.c.h.b16 %v430
        %v2746 = vunpack.c.l.b16 %v431
        %v2747 = vunpack.c.h.b16 %v431
        %v2748 = vunpack.c.l.b16 %v432
        %v2749 = vunpack.c.h.b16 %v432
        %v2750 = vunpack.c.l.b16 %v433
        %v2751 = vunpack.c.h.b16 %v433
        %v2752 = vunpack.c.l.b16 %v434
        %v2753 = vunpack.c.h.b16 %v434
        %v2754 = vunpack.c.l.b16 %v435
        %v2755 = vunpack.c.h.b16 %v435
        %v2756 = vunpack.c.l.b16 %v436
        %v2757 = vunpack.c.h.b16 %v436
        %v2758 = vunpack.c.l.b16 %v437
        %v2759 = vunpack.c.h.b16 %v437
        %v2760 = vunpack.c.l.b16 %v438
        %v2761 = vunpack.c.h.b16 %v438
        %v2762 = vunpack.c.l.b16 %v439
        %v2763 = vunpack.c.h.b16 %v439
        %v2764 = vunpack.c.l.b16 %v440
        %v2765 = vunpack.c.h.b16 %v440
        %v2766 = vunpack.c.l.b16 %v441
        %v2767 = vunpack.c.h.b16 %v441
        %v2768 = vunpack.c.l.b16 %v442
        %v2769 = vunpack.c.h.b16 %v442
        %v2770 = vunpack.c.l.b16 %v443
        %v2771 = vunpack.c.h.b16 %v443
        %v2772 = vunpack.c.l.b16 %v444
        %v2773 = vunpack.c.h.b16 %v444
        %v2774 = vunpack.c.l.b16 %v445
        %v2775 = vunpack.c.h.b16 %v445
        %v2776 = vunpack.c.l.b16 %v446
        %v2777 = vunpack.c.h.b16 %v446
        %v2778 = vunpack.c.l.b16 %v447
        %v2779 = vunpack.c.h.b16 %v447
        %v2780 = vunpack.c.l.b16 %v448
        %v2781 = vunpack.c.h.b16 %v448
        %v2782 = vunpack.c.l.b16 %v449
        %v2783 = vunpack.c.h.b16 %v449
        %v2784 = vunpack.c.l.b16 %v450
        %v2785 = vunpack.c.h.b16 %v450
        %v2786 = vunpack.c.l.b16 %v451
        %v2787 = vunpack.c.h.b16 %v451
        %v2788 = vunpack.c.l.b16 %v452
        %v2789 = vunpack.c.h.b16 %v452
        %v2790 = vunpack.c.l.b16 %v453
        %v2791 = vunpack.c.h.b16 %v453
        %v2792 = vunpack.c.l.b16 %v454
        %v2793 = vunpack.c.h.b16 %v454
        %v2794 = vunpack.c.l.b16 %v455
        %v2795 = vunpack.c.h.b16 %v455
        %v2796 = vunpack.c.l.b16 %v456
        %v2797 = vunpack.c.h.b16 %v456
        %v2798 = vunpack.c.l.b16 %v457
        %v2799 = vunpack.c.h.b16 %v457
        %v2800 = vunpack.c.l.b16 %v458
        %v2801 = vunpack.c.h.b16 %v458
        %v2802 = vunpack.c.l.b16 %v459
        %v2803 = vunpack.c.h.b16 %v459
        %v2804 = vunpack.c.l.b16 %v460
        %v2805 = vunpack.c.h.b16 %v460
        %v2806 = vunpack.c.l.b16 %v461
        %v2807 = vunpack.c.h.b16 %v461
        %v2808 = vunpack.c.l.b16 %v462
        %v2809 = vunpack.c.h.b16 %v462
        %v2810 = vunpack.c.l.b16 %v463
        %v2811 = vunpack.c.h.b16 %v463
        %v2812 = vunpack.c.l.b16 %v464
        %v2813 = vunpack.c.h.b16 %v464
        %v2814 = vunpack.c.l.b16 %v465
        %v2815 = vunpack.c.h.b16 %v465
        %v2816 = vunpack.c.l.b16 %v466
        %v2817 = vunpack.c.h.b16 %v466
        %v2818 = vunpack.c.l.b16 %v467
        %v2819 = vunpack.c.h.b16 %v467
        %v2820 = vunpack.c.l.b16 %v468
        %v2821 = vunpack.c.h.b16 %v468
        %v2822 = vunpack.c.l.b16 %v469
        %v2823 = vunpack.c.h.b16 %v469
        %v2824 = vunpack.c.l.b16 %v470
        %v2825 = vunpack.c.h.b16 %v470
        %v2826 = vunpack.c.l.b16 %v471
        %v2827 = vunpack.c.h.b16 %v471
        %v2828 = vunpack.c.l.b16 %v472
        %v2829 = vunpack.c.h.b16 %v472
        %v2830 = vunpack.c.l.b16 %v473
        %v2831 = vunpack.c.h.b16 %v473
        %v2832 = vunpack.c.l.b16 %v474
        %v2833 = vunpack.c.h.b16 %v474
        %v2834 = vunpack.c.l.b16 %v475
        %v2835 = vunpack.c.h.b16 %v475
        %v2836 = vunpack.c.l.b16 %v476
        %v2837 = vunpack.c.h.b16 %v476
        %v2838 = vunpack.c.l.b16 %v477
        %v2839 = vunpack.c.h.b16 %v477
        %v2840 = vunpack.c.l.b16 %v478
        %v2841 = vunpack.c.h.b16 %v478
        %v2842 = vunpack.c.l.b16 %v479
        %v2843 = vunpack.c.h.b16 %v479
        %v2844 = vunpack.c.l.b16 %v480
        %v2845 = vunpack.c.h.b16 %v480
        %v2846 = vunpack.c.l.b16 %v481
        %v2847 = vunpack.c.h.b16 %v481
        %v2848 = vunpack.c.l.b16 %v482
        %v2849 = vunpack.c.h.b16 %v482
        %v2850 = vunpack.c.l.b16 %v483
        %v2851 = vunpack.c.h.b16 %v483
        %v2852 = vunpack.c.l.b16 %v484
        %v2853 = vunpack.c.h.b16 %v484
        %v2854 = vunpack.c.l.b16 %v485
        %v2855 = vunpack.c.h.b16 %v485
        %v2856 = vunpack.c.l.b16 %v486
        %v2857 = vunpack.c.h.b16 %v486
        %v2858 = vunpack.c.l.b16 %v487
        %v2859 = vunpack.c.h.b16 %v487
        %v2860 = vunpack.c.l.b16 %v488
        %v2861 = vunpack.c.h.b16 %v488
        %v2862 = vunpack.c.l.b16 %v489
        %v2863 = vunpack.c.h.b16 %v489
        %v2864 = vunpack.c.l.b16 %v490
        %v2865 = vunpack.c.h.b16 %v490
        %v2866 = vunpack.c.l.b16 %v491
        %v2867 = vunpack.c.h.b16 %v491
        %v2868 = vunpack.c.l.b16 %v492
        %v2869 = vunpack.c.h.b16 %v492
        %v2870 = vunpack.c.l.b16 %v493
        %v2871 = vunpack.c.h.b16 %v493
        %v2872 = vunpack.c.l.b16 %v494
        %v2873 = vunpack.c.h.b16 %v494
        %v2874 = vunpack.c.l.b16 %v495
        %v2875 = vunpack.c.h.b16 %v495
        %v2876 = vunpack.c.l.b16 %v496
        %v2877 = vunpack.c.h.b16 %v496
        %v2878 = vunpack.c.l.b16 %v497
        %v2879 = vunpack.c.h.b16 %v497
        %v2880 = vunpack.c.l.b16 %v498
        %v2881 = vunpack.c.h.b16 %v498
        %v2882 = vunpack.c.l.b16 %v499
        %v2883 = vunpack.c.h.b16 %v499
        %v2884 = vunpack.c.l.b16 %v500
        %v2885 = vunpack.c.h.b16 %v500
        %v2886 = vunpack.c.l.b16 %v501
        %v2887 = vunpack.c.h.b16 %v501
        %v2888 = vunpack.c.l.b16 %v502
        %v2889 = vunpack.c.h.b16 %v502
        %v2890 = vunpack.c.l.b16 %v503
        %v2891 = vunpack.c.h.b16 %v503
        %v2892 = vunpack.c.l.b16 %v504
        %v2893 = vunpack.c.h.b16 %v504
        %v2894 = vunpack.c.l.b16 %v505
        %v2895 = vunpack.c.h.b16 %v505
        %v2896 = vunpack.c.l.b16 %v506
        %v2897 = vunpack.c.h.b16 %v506
        %v2898 = vunpack.c.l.b16 %v507
        %v2899 = vunpack.c.h.b16 %v507
        %v2900 = vunpack.c.l.b16 %v508
        %v2901 = vunpack.c.h.b16 %v508
        %v2902 = vunpack.c.l.b16 %v509
        %v2903 = vunpack.c.h.b16 %v509
        %v2904 = vunpack.c.l.b16 %v510
        %v2905 = vunpack.c.h.b16 %v510
        %v2906 = vunpack.c.l.b16 %v511
        %v2907 = vunpack.c.h.b16 %v511
        %v2908 = vunpack.c.l.b16 %v512
        %v2909 = vunpack.c.h.b16 %v512
        %v2910 = vunpack.c.l.b16 %v513
        %v2911 = vunpack.c.h.b16 %v513
        %v2912 = vunpack.c.l.b16 %v514
        %v2913 = vunpack.c.h.b16 %v514
        %v2914 = vunpack.c.l.b16 %v515
        %v2915 = vunpack.c.h.b16 %v515
        %v2916 = vunpack.c.l.b16 %v516
        %v2917 = vunpack.c.h.b16 %v516
        %v2918 = vunpack.c.l.b16 %v517
        %v2919 = vunpack.c.h.b16 %v517
        %v2920 = vunpack.c.l.b16 %v518
        %v2921 = vunpack.c.h.b16 %v518
        %v2922 = vunpack.c.l.b16 %v519
        %v2923 = vunpack.c.h.b16 %v519
        %v2924 = vunpack.c.l.b16 %v520
        %v2925 = vunpack.c.h.b16 %v520
        %v2926 = vunpack.c.l.b16 %v521
        %v2927 = vunpack.c.h.b16 %v521
        %v2928 = vunpack.c.l.b16 %v522
        %v2929 = vunpack.c.h.b16 %v522
        %v2930 = vunpack.c.l.b16 %v523
        %v2931 = vunpack.c.h.b16 %v523
        %v2932 = vunpack.c.l.b16 %v524
        %v2933 = vunpack.c.h.b16 %v524
        %v2934 = vunpack.c.l.b16 %v525
        %v2935 = vunpack.c.h.b16 %v525
        %v2936 = vunpack.c.l.b16 %v526
        %v2937 = vunpack.c.h.b16 %v526
        %v2938 = vunpack.c.l.b16 %v527
        %v2939 = vunpack.c.h.b16 %v527
        %v2940 = vunpack.c.l.b16 %v528
        %v2941 = vunpack.c.h.b16 %v528
        %v2942 = vunpack.c.l.b16 %v529
        %v2943 = vunpack.c.h.b16 %v529
        %v2944 = vunpack.c.l.b16 %v530
        %v2945 = vunpack.c.h.b16 %v530
        %v2946 = vunpack.c.l.b16 %v531
        %v2947 = vunpack.c.h.b16 %v531
        %v2948 = vunpack.c.l.b16 %v532
        %v2949 = vunpack.c.h.b16 %v532
        %v2950 = vunpack.c.l.b16 %v533
        %v2951 = vunpack.c.h.b16 %v533
        %v2952 = vunpack.c.l.b16 %v534
        %v2953 = vunpack.c.h.b16 %v534
        %v2954 = vunpack.c.l.b16 %v535
        %v2955 = vunpack.c.h.b16 %v535
        %v2956 = vunpack.c.l.b16 %v536
        %v2957 = vunpack.c.h.b16 %v536
        %v2958 = vunpack.c.l.b16 %v537
        %v2959 = vunpack.c.h.b16 %v537
        %v2960 = vunpack.c.l.b16 %v538
        %v2961 = vunpack.c.h.b16 %v538
        %v2962 = vunpack.c.l.b16 %v539
        %v2963 = vunpack.c.h.b16 %v539
        %v2964 = vunpack.c.l.b16 %v540
        %v2965 = vunpack.c.h.b16 %v540
        %v2966 = vunpack.c.l.b16 %v541
        %v2967 = vunpack.c.h.b16 %v541
        %v2968 = vunpack.c.l.b16 %v542
        %v2969 = vunpack.c.h.b16 %v542
        %v2970 = vunpack.c.l.b16 %v543
        %v2971 = vunpack.c.h.b16 %v543
        %v2972 = vunpack.c.l.b16 %v544
        %v2973 = vunpack.c.h.b16 %v544
        %v2974 = vunpack.c.l.b16 %v545
        %v2975 = vunpack.c.h.b16 %v545
        %v2976 = vunpack.c.l.b16 %v546
        %v2977 = vunpack.c.h.b16 %v546
        %v2978 = vunpack.c.l.b16 %v547
        %v2979 = vunpack.c.h.b16 %v547
        %v2980 = vunpack.c.l.b16 %v548
        %v2981 = vunpack.c.h.b16 %v548
        %v2982 = vunpack.c.l.b16 %v549
        %v2983 = vunpack.c.h.b16 %v549
        %v2984 = vunpack.c.l.b16 %v550
        %v2985 = vunpack.c.h.b16 %v550
        %v2986 = vunpack.c.l.b16 %v551
        %v2987 = vunpack.c.h.b16 %v551
        %v2988 = vunpack.c.l.b16 %v552
        %v2989 = vunpack.c.h.b16 %v552
        %v2990 = vunpack.c.l.b16 %v553
        %v2991 = vunpack.c.h.b16 %v553
        %v2992 = vunpack.c.l.b16 %v554
        %v2993 = vunpack.c.h.b16 %v554
        %v2994 = vunpack.c.l.b16 %v555
        %v2995 = vunpack.c.h.b16 %v555
        %v2996 = vunpack.c.l.b16 %v556
        %v2997 = vunpack.c.h.b16 %v556
        %v2998 = vunpack.c.l.b16 %v557
        %v2999 = vunpack.c.h.b16 %v557
        %v3000 = vunpack.c.l.b16 %v558
        %v3001 = vunpack.c.h.b16 %v558
        %v3002 = vunpack.c.l.b16 %v559
        %v3003 = vunpack.c.h.b16 %v559
        %v3004 = vunpack.c.l.b16 %v560
        %v3005 = vunpack.c.h.b16 %v560
        %v3006 = vunpack.c.l.b16 %v561
        %v3007 = vunpack.c.h.b16 %v561
        %v3008 = vunpack.c.l.b16 %v562
        %v3009 = vunpack.c.h.b16 %v562
        %v3010 = vunpack.c.l.b16 %v563
        %v3011 = vunpack.c.h.b16 %v563
        %v3012 = vunpack.c.l.b16 %v564
        %v3013 = vunpack.c.h.b16 %v564
        %v3014 = vunpack.c.l.b16 %v565
        %v3015 = vunpack.c.h.b16 %v565
        %v3016 = vunpack.c.l.b16 %v566
        %v3017 = vunpack.c.h.b16 %v566
        %v3018 = vunpack.c.l.b16 %v567
        %v3019 = vunpack.c.h.b16 %v567
        %v3020 = vunpack.c.l.b16 %v568
        %v3021 = vunpack.c.h.b16 %v568
        %v3022 = vunpack.c.l.b16 %v569
        %v3023 = vunpack.c.h.b16 %v569
        %v3024 = vunpack.c.l.b16 %v570
        %v3025 = vunpack.c.h.b16 %v570
        %v3026 = vunpack.c.l.b16 %v571
        %v3027 = vunpack.c.h.b16 %v571
        %v3028 = vunpack.c.l.b16 %v572
        %v3029 = vunpack.c.h.b16 %v572
        %v3030 = vunpack.c.l.b16 %v573
        %v3031 = vunpack.c.h.b16 %v573
        %v3032 = vunpack.c.l.b16 %v574
        %v3033 = vunpack.c.h.b16 %v574
        %v3034 = vunpack.c.l.b16 %v575
        %v3035 = vunpack.c.h.b16 %v575
        %v3036 = vunpack.c.l.b16 %v576
        %v3037 = vunpack.c.h.b16 %v576
        %v3038 = vunpack.c.l.b16 %v577
        %v3039 = vunpack.c.h.b16 %v577
        %v3040 = vunpack.c.l.b16 %v578
        %v3041 = vunpack.c.h.b16 %v578
        %v3042 = vunpack.c.l.b16 %v579
        %v3043 = vunpack.c.h.b16 %v579
        %v3044 = vunpack.c.l.b16 %v580
        %v3045 = vunpack.c.h.b16 %v580
        %v3046 = vunpack.c.l.b16 %v581
        %v3047 = vunpack.c.h.b16 %v581
        %v3048 = vunpack.c.l.b16 %v582
        %v3049 = vunpack.c.h.b16 %v582
        %v3050 = vunpack.c.l.b16 %v583
        %v3051 = vunpack.c.h.b16 %v583
        %v3052 = vunpack.c.l.b16 %v584
        %v3053 = vunpack.c.h.b16 %v584
        %v3054 = vunpack.c.l.b16 %v585
        %v3055 = vunpack.c.h.b16 %v585
        %v3056 = vunpack.c.l.b16 %v586
        %v3057 = vunpack.c.h.b16 %v586
        %v3058 = vunpack.c.l.b16 %v587
        %v3059 = vunpack.c.h.b16 %v587
        %v3060 = vunpack.c.l.b16 %v588
        %v3061 = vunpack.c.h.b16 %v588
        %v3062 = vunpack.c.l.b16 %v589
        %v3063 = vunpack.c.h.b16 %v589
        %v3064 = vunpack.c.l.b16 %v590
        %v3065 = vunpack.c.h.b16 %v590
        %v3066 = vunpack.c.l.b16 %v591
        %v3067 = vunpack.c.h.b16 %v591
        %v3068 = vunpack.c.l.b16 %v592
        %v3069 = vunpack.c.h.b16 %v592
        %v3070 = vunpack.c.l.b16 %v593
        %v3071 = vunpack.c.h.b16 %v593
        %v3072 = vunpack.c.l.b16 %v594
        %v3073 = vunpack.c.h.b16 %v594
        %v3074 = vunpack.c.l.b16 %v595
        %v3075 = vunpack.c.h.b16 %v595
        %v3076 = vunpack.c.l.b16 %v596
        %v3077 = vunpack.c.h.b16 %v596
        %v3078 = vunpack.c.l.b16 %v597
        %v3079 = vunpack.c.h.b16 %v597
        %v3080 = vunpack.c.l.b16 %v598
        %v3081 = vunpack.c.h.b16 %v598
        %v3082 = vunpack.c.l.b16 %v599
        %v3083 = vunpack.c.h.b16 %v599
        %v3084 = vunpack.c.l.b16 %v600
        %v3085 = vunpack.c.h.b16 %v600
        %v3086 = vunpack.c.l.b16 %v601
        %v3087 = vunpack.c.h.b16 %v601
        %v3088 = vunpack.c.l.b16 %v602
        %v3089 = vunpack.c.h.b16 %v602
        %v3090 = vunpack.c.l.b16 %v603
        %v3091 = vunpack.c.h.b16 %v603
        %v3092 = vunpack.c.l.b16 %v604
        %v3093 = vunpack.c.h.b16 %v604
        %v3094 = vunpack.c.l.b16 %v605
        %v3095 = vunpack.c.h.b16 %v605
        %v3096 = vunpack.c.l.b16 %v606
        %v3097 = vunpack.c.h.b16 %v606
        %v3098 = vunpack.c.l.b16 %v607
        %v3099 = vunpack.c.h.b16 %v607
        %v3100 = vunpack.c.l.b16 %v608
        %v3101 = vunpack.c.h.b16 %v608
        %v3102 = vunpack.c.l.b16 %v609
        %v3103 = vunpack.c.h.b16 %v609
        %v3104 = vunpack.c.l.b16 %v610
        %v3105 = vunpack.c.h.b16 %v610
        %v3106 = vunpack.c.l.b16 %v611
        %v3107 = vunpack.c.h.b16 %v611
        %v3108 = vunpack.c.l.b16 %v612
        %v3109 = vunpack.c.h.b16 %v612
        %v3110 = vunpack.c.l.b16 %v613
        %v3111 = vunpack.c.h.b16 %v613
        %v3112 = vunpack.c.l.b16 %v614
        %v3113 = vunpack.c.h.b16 %v614
        %v3114 = vunpack.c.l.b16 %v615
        %v3115 = vunpack.c.h.b16 %v615
        %v3116 = vunpack.c.l.b16 %v616
        %v3117 = vunpack.c.h.b16 %v616
        %v3118 = vunpack.c.l.b16 %v617
        %v3119 = vunpack.c.h.b16 %v617
        %v3120 = vunpack.c.l.b16 %v618
        %v3121 = vunpack.c.h.b16 %v618
        %v3122 = vunpack.c.l.b16 %v619
        %v3123 = vunpack.c.h.b16 %v619
        %v3124 = vunpack.c.l.b16 %v620
        %v3125 = vunpack.c.h.b16 %v620
        %v3126 = vunpack.c.l.b16 %v621
        %v3127 = vunpack.c.h.b16 %v621
        %v3128 = vunpack.c.l.b16 %v622
        %v3129 = vunpack.c.h.b16 %v622
        %v3130 = vunpack.c.l.b16 %v623
        %v3131 = vunpack.c.h.b16 %v623
        %v3132 = vunpack.c.l.b16 %v624
        %v3133 = vunpack.c.h.b16 %v624
        %v3134 = vunpack.c.l.b16 %v625
        %v3135 = vunpack.c.h.b16 %v625
        %v3136 = vunpack.c.l.b16 %v626
        %v3137 = vunpack.c.h.b16 %v626
        %v3138 = vunpack.c.l.b16 %v627
        %v3139 = vunpack.c.h.b16 %v627
        %v3140 = vunpack.c.l.b16 %v628
        %v3141 = vunpack.c.h.b16 %v628
        %v3142 = vunpack.c.l.b16 %v629
        %v3143 = vunpack.c.h.b16 %v629
        %v3144 = vunpack.c.l.b16 %v630
        %v3145 = vunpack.c.h.b16 %v630
        %v3146 = vunpack.c.l.b16 %v631
        %v3147 = vunpack.c.h.b16 %v631
        %v3148 = vunpack.c.l.b16 %v632
        %v3149 = vunpack.c.h.b16 %v632
        %v3150 = vunpack.c.l.b16 %v633
        %v3151 = vunpack.c.h.b16 %v633
        %v3152 = vunpack.c.l.b16 %v634
        %v3153 = vunpack.c.h.b16 %v634
        %v3154 = vunpack.c.l.b16 %v635
        %v3155 = vunpack.c.h.b16 %v635
        %v3156 = vunpack.c.l.b16 %v636
        %v3157 = vunpack.c.h.b16 %v636
        %v3158 = vunpack.c.l.b16 %v637
        %v3159 = vunpack.c.h.b16 %v637
        %v3160 = vunpack.c.l.b16 %v638
        %v3161 = vunpack.c.h.b16 %v638
        %v3162 = vunpack.c.l.b16 %v639
        %v3163 = vunpack.c.h.b16 %v639
        %v3164 = vunpack.c.l.b16 %v640
        %v3165 = vunpack.c.h.b16 %v640
        %v3166 = vunpack.c.l.b16 %v641
        %v3167 = vunpack.c.h.b16 %v641
        %v3168 = vunpack.c.l.b16 %v642
        %v3169 = vunpack.c.h.b16 %v642
        %v3170 = vunpack.c.l.b16 %v643
        %v3171 = vunpack.c.h.b16 %v643
        %v3172 = vunpack.c.l.b16 %v644
        %v3173 = vunpack.c.h.b16 %v644
        %v3174 = vunpack.c.l.b16 %v645
        %v3175 = vunpack.c.h.b16 %v645
        %v3176 = vunpack.c.l.b16 %v646
        %v3177 = vunpack.c.h.b16 %v646
        %v3178 = vunpack.c.l.b16 %v647
        %v3179 = vunpack.c.h.b16 %v647
        %v3180 = vunpack.c.l.b16 %v648
        %v3181 = vunpack.c.h.b16 %v648
        %v3182 = vunpack.c.l.b16 %v649
        %v3183 = vunpack.c.h.b16 %v649
        %v3184 = vunpack.c.l.b16 %v650
        %v3185 = vunpack.c.h.b16 %v650
        %v3186 = vunpack.c.l.b16 %v651
        %v3187 = vunpack.c.h.b16 %v651
        %v3188 = vunpack.c.l.b16 %v652
        %v3189 = vunpack.c.h.b16 %v652
        %v3190 = vunpack.c.l.b16 %v653
        %v3191 = vunpack.c.h.b16 %v653
        %v3192 = vunpack.c.l.b16 %v654
        %v3193 = vunpack.c.h.b16 %v654
        %v3194 = vunpack.c.l.b16 %v655
        %v3195 = vunpack.c.h.b16 %v655
        %v3196 = vunpack.c.l.b16 %v656
        %v3197 = vunpack.c.h.b16 %v656
        %v3198 = vunpack.c.l.b16 %v657
        %v3199 = vunpack.c.h.b16 %v657
        %v3200 = vunpack.c.l.b16 %v658
        %v3201 = vunpack.c.h.b16 %v658
        %v3202 = vunpack.c.l.b16 %v659
        %v3203 = vunpack.c.h.b16 %v659
        %v3204 = vunpack.c.l.b16 %v660
        %v3205 = vunpack.c.h.b16 %v660
        %v3206 = vunpack.c.l.b16 %v661
        %v3207 = vunpack.c.h.b16 %v661
        %v3208 = vunpack.c.l.b16 %v662
        %v3209 = vunpack.c.h.b16 %v662
        %v3210 = vunpack.c.l.b16 %v663
        %v3211 = vunpack.c.h.b16 %v663
        %v3212 = vunpack.c.l.b16 %v664
        %v3213 = vunpack.c.h.b16 %v664
        %v3214 = vunpack.c.l.b16 %v665
        %v3215 = vunpack.c.h.b16 %v665
        %v3216 = vunpack.c.l.b16 %v666
        %v3217 = vunpack.c.h.b16 %v666
        %v3218 = vunpack.c.l.b16 %v667
        %v3219 = vunpack.c.h.b16 %v667
        %v3220 = vunpack.c.l.b16 %v668
        %v3221 = vunpack.c.h.b16 %v668
        %v3222 = vunpack.c.l.b16 %v669
        %v3223 = vunpack.c.h.b16 %v669
        %v3224 = vunpack.c.l.b16 %v670
        %v3225 = vunpack.c.h.b16 %v670
        %v3226 = vunpack.c.l.b16 %v671
        %v3227 = vunpack.c.h.b16 %v671
        %v3228 = vunpack.c.l.b16 %v672
        %v3229 = vunpack.c.h.b16 %v672
        %v3230 = vunpack.c.l.b16 %v673
        %v3231 = vunpack.c.h.b16 %v673
        %v3232 = vunpack.c.l.b16 %v674
        %v3233 = vunpack.c.h.b16 %v674
        %v3234 = vunpack.c.l.b16 %v675
        %v3235 = vunpack.c.h.b16 %v675
        %v3236 = vunpack.c.l.b16 %v676
        %v3237 = vunpack.c.h.b16 %v676
        %v3238 = vunpack.c.l.b16 %v677
        %v3239 = vunpack.c.h.b16 %v677
        %v3240 = vunpack.c.l.b16 %v678
        %v3241 = vunpack.c.h.b16 %v678
        %v3242 = vunpack.c.l.b16 %v679
        %v3243 = vunpack.c.h.b16 %v679
        %v3244 = vunpack.c.l.b16 %v680
        %v3245 = vunpack.c.h.b16 %v680
        %v3246 = vunpack.c.l.b16 %v681
        %v3247 = vunpack.c.h.b16 %v681
        %v3248 = vunpack.c.l.b16 %v682
        %v3249 = vunpack.c.h.b16 %v682
        %v3250 = vunpack.c.l.b16 %v683
        %v3251 = vunpack.c.h.b16 %v683
        %v3252 = vunpack.c.l.b16 %v684
        %v3253 = vunpack.c.h.b16 %v684
        %v3254 = vunpack.c.l.b16 %v685
        %v3255 = vunpack.c.h.b16 %v685
        %v3256 = vunpack.c.l.b16 %v686
        %v3257 = vunpack.c.h.b16 %v686
        %v3258 = vunpack.c.l.b16 %v687
        %v3259 = vunpack.c.h.b16 %v687
        %v3260 = vunpack.c.l.b16 %v688
        %v3261 = vunpack.c.h.b16 %v688
        %v3262 = vunpack.c.l.b16 %v689
        %v3263 = vunpack.c.h.b16 %v689
        %v3264 = vunpack.c.l.b16 %v690
        %v3265 = vunpack.c.h.b16 %v690
        %v3266 = vunpack.c.l.b16 %v691
        %v3267 = vunpack.c.h.b16 %v691
        %v3268 = vunpack.c.l.b16 %v692
        %v3269 = vunpack.c.h.b16 %v692
        %v3270 = vunpack.c.l.b16 %v693
        %v3271 = vunpack.c.h.b16 %v693
        %v3272 = vunpack.c.l.b16 %v694
        %v3273 = vunpack.c.h.b16 %v694
        %v3274 = vunpack.c.l.b16 %v695
        %v3275 = vunpack.c.h.b16 %v695
        %v3276 = vunpack.c.l.b16 %v696
        %v3277 = vunpack.c.h.b16 %v696
        %v3278 = vunpack.c.l.b16 %v697
        %v3279 = vunpack.c.h.b16 %v697
        %v3280 = vunpack.c.l.b16 %v698
        %v3281 = vunpack.c.h.b16 %v698
        %v3282 = vunpack.c.l.b16 %v699
        %v3283 = vunpack.c.h.b16 %v699
        %v3284 = vunpack.c.l.b16 %v700
        %v3285 = vunpack.c.h.b16 %v700
        %v3286 = vunpack.c.l.b16 %v701
        %v3287 = vunpack.c.h.b16 %v701
        %v3288 = vunpack.c.l.b16 %v702
        %v3289 = vunpack.c.h.b16 %v702
        %v3290 = vunpack.c.l.b16 %v703
        %v3291 = vunpack.c.h.b16 %v703
        %v3292 = vunpack.c.l.b16 %v704
        %v3293 = vunpack.c.h.b16 %v704
        %v3294 = vunpack.c.l.b16 %v705
        %v3295 = vunpack.c.h.b16 %v705
        %v3296 = vunpack.c.l.b16 %v706
        %v3297 = vunpack.c.h.b16 %v706
        %v3298 = vunpack.c.l.b16 %v707
        %v3299 = vunpack.c.h.b16 %v707
        %v3300 = vunpack.c.l.b16 %v708
        %v3301 = vunpack.c.h.b16 %v708
        %v3302 = vunpack.c.l.b16 %v709
        %v3303 = vunpack.c.h.b16 %v709
        %v3304 = vunpack.c.l.b16 %v710
        %v3305 = vunpack.c.h.b16 %v710
        %v3306 = vunpack.c.l.b16 %v711
        %v3307 = vunpack.c.h.b16 %v711
        %v3308 = vunpack.c.l.b16 %v712
        %v3309 = vunpack.c.h.b16 %v712
        %v3310 = vunpack.c.l.b16 %v713
        %v3311 = vunpack.c.h.b16 %v713
        %v3312 = vunpack.c.l.b16 %v714
        %v3313 = vunpack.c.h.b16 %v714
        %v3314 = vunpack.c.l.b16 %v715
        %v3315 = vunpack.c.h.b16 %v715
        %v3316 = vunpack.c.l.b16 %v716
        %v3317 = vunpack.c.h.b16 %v716
        %v3318 = vunpack.c.l.b16 %v717
        %v3319 = vunpack.c.h.b16 %v717
        %v3320 = vunpack.c.l.b16 %v718
        %v3321 = vunpack.c.h.b16 %v718
        %v3322 = vunpack.c.l.b16 %v719
        %v3323 = vunpack.c.h.b16 %v719
        %v3324 = vunpack.c.l.b16 %v720
        %v3325 = vunpack.c.h.b16 %v720
        %v3326 = vunpack.c.l.b16 %v721
        %v3327 = vunpack.c.h.b16 %v721
        %v3328 = vunpack.c.l.b16 %v722
        %v3329 = vunpack.c.h.b16 %v722
        %v3330 = vunpack.c.l.b16 %v723
        %v3331 = vunpack.c.h.b16 %v723
        %v3332 = vunpack.c.l.b16 %v724
        %v3333 = vunpack.c.h.b16 %v724
        %v3334 = vunpack.c.l.b16 %v725
        %v3335 = vunpack.c.h.b16 %v725
        %v3336 = vunpack.c.l.b16 %v726
        %v3337 = vunpack.c.h.b16 %v726
        %v3338 = vunpack.c.l.b16 %v727
        %v3339 = vunpack.c.h.b16 %v727
        %v3340 = vunpack.c.l.b16 %v728
        %v3341 = vunpack.c.h.b16 %v728
        %v3342 = vunpack.c.l.b16 %v729
        %v3343 = vunpack.c.h.b16 %v729
        %v3344 = vunpack.c.l.b16 %v730
        %v3345 = vunpack.c.h.b16 %v730
        %v3346 = vunpack.c.l.b16 %v731
        %v3347 = vunpack.c.h.b16 %v731
        %v3348 = vunpack.c.l.b16 %v732
        %v3349 = vunpack.c.h.b16 %v732
        %v3350 = vunpack.c.l.b16 %v733
        %v3351 = vunpack.c.h.b16 %v733
        %v3352 = vunpack.c.l.b16 %v734
        %v3353 = vunpack.c.h.b16 %v734
        %v3354 = vunpack.c.l.b16 %v735
        %v3355 = vunpack.c.h.b16 %v735
        %v3356 = vunpack.c.l.b16 %v736
        %v3357 = vunpack.c.h.b16 %v736
        %v3358 = vunpack.c.l.b16 %v737
        %v3359 = vunpack.c.h.b16 %v737
        %v3360 = vunpack.c.l.b16 %v738
        %v3361 = vunpack.c.h.b16 %v738
        %v3362 = vunpack.c.l.b16 %v739
        %v3363 = vunpack.c.h.b16 %v739
        %v3364 = vunpack.c.l.b16 %v740
        %v3365 = vunpack.c.h.b16 %v740
        %v3366 = vunpack.c.l.b16 %v741
        %v3367 = vunpack.c.h.b16 %v741
        %v3368 = vunpack.c.l.b16 %v742
        %v3369 = vunpack.c.h.b16 %v742
        %v3370 = vunpack.c.l.b16 %v743
        %v3371 = vunpack.c.h.b16 %v743
        %v3372 = vunpack.c.l.b16 %v744
        %v3373 = vunpack.c.h.b16 %v744
        %v3374 = vunpack.c.l.b16 %v745
        %v3375 = vunpack.c.h.b16 %v745
        %v3376 = vunpack.c.l.b16 %v746
        %v3377 = vunpack.c.h.b16 %v746
        %v3378 = vunpack.c.l.b16 %v747
        %v3379 = vunpack.c.h.b16 %v747
        %v3380 = vunpack.c.l.b16 %v748
        %v3381 = vunpack.c.h.b16 %v748
        %v3382 = vunpack.c.l.b16 %v749
        %v3383 = vunpack.c.h.b16 %v749
        %v3384 = vunpack.c.l.b16 %v750
        %v3385 = vunpack.c.h.b16 %v750
        %v3386 = vunpack.c.l.b16 %v751
        %v3387 = vunpack.c.h.b16 %v751
        %v3388 = vunpack.c.l.b16 %v752
        %v3389 = vunpack.c.h.b16 %v752
        %v3390 = vunpack.c.l.b16 %v753
        %v3391 = vunpack.c.h.b16 %v753
        %v3392 = vunpack.c.l.b16 %v754
        %v3393 = vunpack.c.h.b16 %v754
        %v3394 = vunpack.c.l.b16 %v755
        %v3395 = vunpack.c.h.b16 %v755
        %v3396 = vunpack.c.l.b16 %v756
        %v3397 = vunpack.c.h.b16 %v756
        %v3398 = vunpack.c.l.b16 %v757
        %v3399 = vunpack.c.h.b16 %v757
        %v3400 = vunpack.c.l.b16 %v758
        %v3401 = vunpack.c.h.b16 %v758
        %v3402 = vunpack.c.l.b16 %v759
        %v3403 = vunpack.c.h.b16 %v759
        %v3404 = vunpack.c.l.b16 %v760
        %v3405 = vunpack.c.h.b16 %v760
        %v3406 = vunpack.c.l.b16 %v761
        %v3407 = vunpack.c.h.b16 %v761
        %v3408 = vunpack.c.l.b16 %v762
        %v3409 = vunpack.c.h.b16 %v762
        %v3410 = vunpack.c.l.b16 %v763
        %v3411 = vunpack.c.h.b16 %v763
        %v3412 = vunpack.c.l.b16 %v764
        %v3413 = vunpack.c.h.b16 %v764
        %v3414 = vunpack.c.l.b16 %v765
        %v3415 = vunpack.c.h.b16 %v765
        %v3416 = vunpack.c.l.b16 %v766
        %v3417 = vunpack.c.h.b16 %v766
        %v3418 = vunpack.c.l.b16 %v767
        %v3419 = vunpack.c.h.b16 %v767
        %v3420 = vunpack.c.l.b16 %v768
        %v3421 = vunpack.c.h.b16 %v768
        %v3422 = vunpack.c.l.b16 %v769
        %v3423 = vunpack.c.h.b16 %v769
        %v3424 = vunpack.c.l.b16 %v770
        %v3425 = vunpack.c.h.b16 %v770
        %v3426 = vunpack.c.l.b16 %v771
        %v3427 = vunpack.c.h.b16 %v771
        %v3428 = vunpack.c.l.b16 %v772
        %v3429 = vunpack.c.h.b16 %v772
        %v3430 = vunpack.c.l.b16 %v773
        %v3431 = vunpack.c.h.b16 %v773
        %v3432 = vunpack.c.l.b16 %v774
        %v3433 = vunpack.c.h.b16 %v774
        %v3434 = vunpack.c.l.b16 %v775
        %v3435 = vunpack.c.h.b16 %v775
        %v3436 = vunpack.c.l.b16 %v776
        %v3437 = vunpack.c.h.b16 %v776
        %v3438 = vunpack.c.l.b16 %v777
        %v3439 = vunpack.c.h.b16 %v777
        %v3440 = vunpack.c.l.b16 %v778
        %v3441 = vunpack.c.h.b16 %v778
        %v3442 = vunpack.c.l.b16 %v779
        %v3443 = vunpack.c.h.b16 %v779
        %v3444 = vunpack.c.l.b16 %v780
        %v3445 = vunpack.c.h.b16 %v780
        %v3446 = vunpack.c.l.b16 %v781
        %v3447 = vunpack.c.h.b16 %v781
        %v3448 = vunpack.c.l.b16 %v782
        %v3449 = vunpack.c.h.b16 %v782
        %v3450 = vunpack.c.l.b16 %v783
        %v3451 = vunpack.c.h.b16 %v783
        %v3452 = vunpack.c.l.b16 %v784
        %v3453 = vunpack.c.h.b16 %v784
        %v3454 = vunpack.c.l.b16 %v785
        %v3455 = vunpack.c.h.b16 %v785
        %v3456 = vunpack.c.l.b16 %v786
        %v3457 = vunpack.c.h.b16 %v786
        %v3458 = vunpack.c.l.b16 %v787
        %v3459 = vunpack.c.h.b16 %v787
        %v3460 = vunpack.c.l.b16 %v788
        %v3461 = vunpack.c.h.b16 %v788
        %v3462 = vunpack.c.l.b16 %v789
        %v3463 = vunpack.c.h.b16 %v789
        %v3464 = vunpack.c.l.b16 %v790
        %v3465 = vunpack.c.h.b16 %v790
        %v3466 = vunpack.c.l.b16 %v791
        %v3467 = vunpack.c.h.b16 %v791
        %v3468 = vunpack.c.l.b16 %v792
        %v3469 = vunpack.c.h.b16 %v792
        %v3470 = vunpack.c.l.b16 %v793
        %v3471 = vunpack.c.h.b16 %v793
        %v3472 = vunpack.c.l.b16 %v794
        %v3473 = vunpack.c.h.b16 %v794
        %v3474 = vunpack.c.l.b16 %v795
        %v3475 = vunpack.c.h.b16 %v795
        %v3476 = vunpack.c.l.b16 %v796
        %v3477 = vunpack.c.h.b16 %v796
        %v3478 = vunpack.c.l.b16 %v797
        %v3479 = vunpack.c.h.b16 %v797
        %v3480 = vunpack.c.l.b16 %v798
        %v3481 = vunpack.c.h.b16 %v798
        %v3482 = vunpack.c.l.b16 %v799
        %v3483 = vunpack.c.h.b16 %v799
        %v3484 = vunpack.c.l.b16 %v800
        %v3485 = vunpack.c.h.b16 %v800
        %v3486 = vunpack.c.l.b16 %v801
        %v3487 = vunpack.c.h.b16 %v801
        %v3488 = vunpack.c.l.b16 %v802
        %v3489 = vunpack.c.h.b16 %v802
        %v3490 = vunpack.c.l.b16 %v803
        %v3491 = vunpack.c.h.b16 %v803
        %v3492 = vunpack.c.l.b16 %v804
        %v3493 = vunpack.c.h.b16 %v804
        %v3494 = vunpack.c.l.b16 %v805
        %v3495 = vunpack.c.h.b16 %v805
        %v3496 = vunpack.c.l.b16 %v806
        %v3497 = vunpack.c.h.b16 %v806
        %v3498 = vunpack.c.l.b16 %v807
        %v3499 = vunpack.c.h.b16 %v807
        %v3500 = vunpack.c.l.b16 %v808
        %v3501 = vunpack.c.h.b16 %v808
        %v3502 = vunpack.c.l.b16 %v809
        %v3503 = vunpack.c.h.b16 %v809
        %v3504 = vunpack.c.l.b16 %v810
        %v3505 = vunpack.c.h.b16 %v810
        %v3506 = vunpack.c.l.b16 %v811
        %v3507 = vunpack.c.h.b16 %v811
        %v3508 = vunpack.c.l.b16 %v812
        %v3509 = vunpack.c.h.b16 %v812
        %v3510 = vunpack.c.l.b16 %v813
        %v3511 = vunpack.c.h.b16 %v813
        %v3512 = vunpack.c.l.b16 %v814
        %v3513 = vunpack.c.h.b16 %v814
        %v3514 = vunpack.c.l.b16 %v815
        %v3515 = vunpack.c.h.b16 %v815
        %v3516 = vunpack.c.l.b16 %v816
        %v3517 = vunpack.c.h.b16 %v816
        %v3518 = vunpack.c.l.b16 %v817
        %v3519 = vunpack.c.h.b16 %v817
        %v3520 = vunpack.c.l.b16 %v818
        %v3521 = vunpack.c.h.b16 %v818
        %v3522 = vunpack.c.l.b16 %v819
        %v3523 = vunpack.c.h.b16 %v819
        %v3524 = vunpack.c.l.b16 %v820
        %v3525 = vunpack.c.h.b16 %v820
        %v3526 = vunpack.c.l.b16 %v821
        %v3527 = vunpack.c.h.b16 %v821
        %v3528 = vunpack.c.l.b16 %v822
        %v3529 = vunpack.c.h.b16 %v822
        %v3530 = vunpack.c.l.b16 %v823
        %v3531 = vunpack.c.h.b16 %v823
        %v3532 = vunpack.c.l.b16 %v824
        %v3533 = vunpack.c.h.b16 %v824
        %v3534 = vunpack.c.l.b16 %v825
        %v3535 = vunpack.c.h.b16 %v825
        %v3536 = vunpack.c.l.b16 %v826
        %v3537 = vunpack.c.h.b16 %v826
        %v3538 = vunpack.c.l.b16 %v827
        %v3539 = vunpack.c.h.b16 %v827
        %v3540 = vunpack.c.l.b16 %v828
        %v3541 = vunpack.c.h.b16 %v828
        %v3542 = vunpack.c.l.b16 %v829
        %v3543 = vunpack.c.h.b16 %v829
        %v3544 = vunpack.c.l.b16 %v830
        %v3545 = vunpack.c.h.b16 %v830
        %v3546 = vunpack.c.l.b16 %v831
        %v3547 = vunpack.c.h.b16 %v831
        %v3548 = vunpack.c.l.b16 %v832
        %v3549 = vunpack.c.h.b16 %v832
        %v3550 = vunpack.c.l.b16 %v833
        %v3551 = vunpack.c.h.b16 %v833
        %v3552 = vunpack.c.l.b16 %v834
        %v3553 = vunpack.c.h.b16 %v834
        %v3554 = vunpack.c.l.b16 %v835
        %v3555 = vunpack.c.h.b16 %v835
        %v3556 = vunpack.c.l.b16 %v836
        %v3557 = vunpack.c.h.b16 %v836
        %v3558 = vunpack.c.l.b16 %v837
        %v3559 = vunpack.c.h.b16 %v837
        %v3560 = vunpack.c.l.b16 %v838
        %v3561 = vunpack.c.h.b16 %v838
        %v3562 = vunpack.c.l.b16 %v839
        %v3563 = vunpack.c.h.b16 %v839
        %v3564 = vunpack.c.l.b16 %v840
        %v3565 = vunpack.c.h.b16 %v840
        %v3566 = vunpack.c.l.b16 %v841
        %v3567 = vunpack.c.h.b16 %v841
        %v3568 = vunpack.c.l.b16 %v842
        %v3569 = vunpack.c.h.b16 %v842
        %v3570 = vunpack.c.l.b16 %v843
        %v3571 = vunpack.c.h.b16 %v843
        %v3572 = vunpack.c.l.b16 %v844
        %v3573 = vunpack.c.h.b16 %v844
        %v3574 = vunpack.c.l.b16 %v845
        %v3575 = vunpack.c.h.b16 %v845
        %v3576 = vunpack.c.l.b16 %v846
        %v3577 = vunpack.c.h.b16 %v846
        %v3578 = vunpack.c.l.b16 %v847
        %v3579 = vunpack.c.h.b16 %v847
        %v3580 = vunpack.c.l.b16 %v848
        %v3581 = vunpack.c.h.b16 %v848
        %v3582 = vunpack.c.l.b16 %v849
        %v3583 = vunpack.c.h.b16 %v849
        %v3584 = vunpack.c.l.b16 %v850
        %v3585 = vunpack.c.h.b16 %v850
        %v3586 = vunpack.c.l.b16 %v851
        %v3587 = vunpack.c.h.b16 %v851
        %v3588 = vunpack.c.l.b16 %v852
        %v3589 = vunpack.c.h.b16 %v852
        %v3590 = vunpack.c.l.b16 %v853
        %v3591 = vunpack.c.h.b16 %v853
        %v3592 = vunpack.c.l.b16 %v854
        %v3593 = vunpack.c.h.b16 %v854
        %v3594 = vunpack.c.l.b16 %v855
        %v3595 = vunpack.c.h.b16 %v855
        %v3596 = vunpack.c.l.b16 %v856
        %v3597 = vunpack.c.h.b16 %v856
        %v3598 = vunpack.c.l.b16 %v857
        %v3599 = vunpack.c.h.b16 %v857
        %v3600 = vunpack.c.l.b16 %v858
        %v3601 = vunpack.c.h.b16 %v858
        %v3602 = vunpack.c.l.b16 %v859
        %v3603 = vunpack.c.h.b16 %v859
        %v3604 = vunpack.c.l.b16 %v860
        %v3605 = vunpack.c.h.b16 %v860
        %v3606 = vunpack.c.l.b16 %v861
        %v3607 = vunpack.c.h.b16 %v861
        %v3608 = vunpack.c.l.b16 %v862
        %v3609 = vunpack.c.h.b16 %v862
        %v3610 = vunpack.c.l.b16 %v863
        %v3611 = vunpack.c.h.b16 %v863
        %v3612 = vunpack.c.l.b16 %v864
        %v3613 = vunpack.c.h.b16 %v864
        %v3614 = vunpack.c.l.b16 %v865
        %v3615 = vunpack.c.h.b16 %v865
        %v3616 = vunpack.c.l.b16 %v866
        %v3617 = vunpack.c.h.b16 %v866
        %v3618 = vunpack.c.l.b16 %v867
        %v3619 = vunpack.c.h.b16 %v867
        %v3620 = vunpack.c.l.b16 %v868
        %v3621 = vunpack.c.h.b16 %v868
        %v3622 = vunpack.c.l.b16 %v869
        %v3623 = vunpack.c.h.b16 %v869
        %v3624 = vunpack.c.l.b16 %v870
        %v3625 = vunpack.c.h.b16 %v870
        %v3626 = vunpack.c.l.b16 %v871
        %v3627 = vunpack.c.h.b16 %v871
        %v3628 = vunpack.c.l.b16 %v872
        %v3629 = vunpack.c.h.b16 %v872
        %v3630 = vunpack.c.l.b16 %v873
        %v3631 = vunpack.c.h.b16 %v873
        %v3632 = vunpack.c.l.b16 %v874
        %v3633 = vunpack.c.h.b16 %v874
        %v3634 = vunpack.c.l.b16 %v875
        %v3635 = vunpack.c.h.b16 %v875
        %v3636 = vunpack.c.l.b16 %v876
        %v3637 = vunpack.c.h.b16 %v876
        %v3638 = vunpack.c.l.b16 %v877
        %v3639 = vunpack.c.h.b16 %v877
        %v3640 = vunpack.c.l.b16 %v878
        %v3641 = vunpack.c.h.b16 %v878
        %v3642 = vunpack.c.l.b16 %v879
        %v3643 = vunpack.c.h.b16 %v879
        %v3644 = vunpack.c.l.b16 %v880
        %v3645 = vunpack.c.h.b16 %v880
        %v3646 = vunpack.c.l.b16 %v881
        %v3647 = vunpack.c.h.b16 %v881
        %v3648 = vunpack.c.l.b16 %v882
        %v3649 = vunpack.c.h.b16 %v882
        %v3650 = vunpack.c.l.b16 %v883
        %v3651 = vunpack.c.h.b16 %v883
        %v3652 = vunpack.c.l.b16 %v884
        %v3653 = vunpack.c.h.b16 %v884
        %v3654 = vunpack.c.l.b16 %v885
        %v3655 = vunpack.c.h.b16 %v885
        %v3656 = vunpack.c.l.b16 %v886
        %v3657 = vunpack.c.h.b16 %v886
        %v3658 = vunpack.c.l.b16 %v887
        %v3659 = vunpack.c.h.b16 %v887
        %v3660 = vunpack.c.l.b16 %v888
        %v3661 = vunpack.c.h.b16 %v888
        %v3662 = vunpack.c.l.b16 %v889
        %v3663 = vunpack.c.h.b16 %v889
        %v3664 = vunpack.c.l.b16 %v890
        %v3665 = vunpack.c.h.b16 %v890
        %v3666 = vunpack.c.l.b16 %v891
        %v3667 = vunpack.c.h.b16 %v891
        %v3668 = vunpack.c.l.b16 %v892
        %v3669 = vunpack.c.h.b16 %v892
        %v3670 = vunpack.c.l.b16 %v893
        %v3671 = vunpack.c.h.b16 %v893
        %v3672 = vunpack.c.l.b16 %v894
        %v3673 = vunpack.c.h.b16 %v894
        %v3674 = vunpack.c.l.b16 %v895
        %v3675 = vunpack.c.h.b16 %v895
        %v3676 = vunpack.c.l.b16 %v896
        %v3677 = vunpack.c.h.b16 %v896
        %v3678 = vunpack.c.l.b16 %v897
        %v3679 = vunpack.c.h.b16 %v897
        %v3680 = vunpack.c.l.b16 %v898
        %v3681 = vunpack.c.h.b16 %v898
        %v3682 = vunpack.c.l.b16 %v899
        %v3683 = vunpack.c.h.b16 %v899
        %v3684 = vunpack.c.l.b16 %v900
        %v3685 = vunpack.c.h.b16 %v900
        %v3686 = vunpack.c.l.b16 %v901
        %v3687 = vunpack.c.h.b16 %v901
        %v3688 = vunpack.c.l.b16 %v902
        %v3689 = vunpack.c.h.b16 %v902
        %v3690 = vunpack.c.l.b16 %v903
        %v3691 = vunpack.c.h.b16 %v903
        %v3692 = vunpack.c.l.b16 %v904
        %v3693 = vunpack.c.h.b16 %v904
        %v3694 = vunpack.c.l.b16 %v905
        %v3695 = vunpack.c.h.b16 %v905
        %v3696 = vunpack.c.l.b16 %v906
        %v3697 = vunpack.c.h.b16 %v906
        %v3698 = vunpack.c.l.b16 %v907
        %v3699 = vunpack.c.h.b16 %v907
        %v3700 = vunpack.c.l.b16 %v908
        %v3701 = vunpack.c.h.b16 %v908
        %v3702 = vunpack.c.l.b16 %v909
        %v3703 = vunpack.c.h.b16 %v909
        %v3704 = vunpack.c.l.b16 %v910
        %v3705 = vunpack.c.h.b16 %v910
        %v3706 = vunpack.c.l.b16 %v911
        %v3707 = vunpack.c.h.b16 %v911
        %v3708 = vunpack.c.l.b16 %v912
        %v3709 = vunpack.c.h.b16 %v912
        %v3710 = vunpack.c.l.b16 %v913
        %v3711 = vunpack.c.h.b16 %v913
        %v3712 = vunpack.c.l.b16 %v914
        %v3713 = vunpack.c.h.b16 %v914
        %v3714 = vunpack.c.l.b16 %v915
        %v3715 = vunpack.c.h.b16 %v915
        %v3716 = vunpack.c.l.b16 %v916
        %v3717 = vunpack.c.h.b16 %v916
        %v3718 = vunpack.c.l.b16 %v917
        %v3719 = vunpack.c.h.b16 %v917
        %v3720 = vunpack.c.l.b16 %v918
        %v3721 = vunpack.c.h.b16 %v918
        %v3722 = vunpack.c.l.b16 %v919
        %v3723 = vunpack.c.h.b16 %v919
        %v3724 = vunpack.c.l.b16 %v920
        %v3725 = vunpack.c.h.b16 %v920
        %v3726 = vunpack.c.l.b16 %v921
        %v3727 = vunpack.c.h.b16 %v921
        %v3728 = vunpack.c.l.b16 %v922
        %v3729 = vunpack.c.h.b16 %v922
        %v3730 = vunpack.c.l.b16 %v923
        %v3731 = vunpack.c.h.b16 %v923
        %v3732 = vunpack.c.l.b16 %v924
        %v3733 = vunpack.c.h.b16 %v924
        %v3734 = vunpack.c.l.b16 %v925
        %v3735 = vunpack.c.h.b16 %v925
        %v3736 = vunpack.c.l.b16 %v926
        %v3737 = vunpack.c.h.b16 %v926
        %v3738 = vunpack.c.l.b16 %v927
        %v3739 = vunpack.c.h.b16 %v927
        %v3740 = vunpack.c.l.b16 %v928
        %v3741 = vunpack.c.h.b16 %v928
        %v3742 = vunpack.c.l.b16 %v929
        %v3743 = vunpack.c.h.b16 %v929
        %v3744 = vunpack.c.l.b16 %v930
        %v3745 = vunpack.c.h.b16 %v930
        %v3746 = vunpack.c.l.b16 %v931
        %v3747 = vunpack.c.h.b16 %v931
        %v3748 = vunpack.c.l.b16 %v932
        %v3749 = vunpack.c.h.b16 %v932
        %v3750 = vunpack.c.l.b16 %v933
        %v3751 = vunpack.c.h.b16 %v933
        %v3752 = vunpack.c.l.b16 %v934
        %v3753 = vunpack.c.h.b16 %v934
        %v3754 = vunpack.c.l.b16 %v935
        %v3755 = vunpack.c.h.b16 %v935
        %v3756 = vunpack.c.l.b16 %v936
        %v3757 = vunpack.c.h.b16 %v936
        %v3758 = vunpack.c.l.b16 %v937
        %v3759 = vunpack.c.h.b16 %v937
        %v3760 = vunpack.c.l.b16 %v938
        %v3761 = vunpack.c.h.b16 %v938
        %v3762 = vunpack.c.l.b16 %v939
        %v3763 = vunpack.c.h.b16 %v939
        %v3764 = vunpack.c.l.b16 %v940
        %v3765 = vunpack.c.h.b16 %v940
        %v3766 = vunpack.c.l.b16 %v941
        %v3767 = vunpack.c.h.b16 %v941
        %v3768 = vunpack.c.l.b16 %v942
        %v3769 = vunpack.c.h.b16 %v942
        %v3770 = vunpack.c.l.b16 %v943
        %v3771 = vunpack.c.h.b16 %v943
        %v3772 = vunpack.c.l.b16 %v944
        %v3773 = vunpack.c.h.b16 %v944
        %v3774 = vunpack.c.l.b16 %v945
        %v3775 = vunpack.c.h.b16 %v945
        %v3776 = vunpack.c.l.b16 %v946
        %v3777 = vunpack.c.h.b16 %v946
        %v3778 = vunpack.c.l.b16 %v947
        %v3779 = vunpack.c.h.b16 %v947
        %v3780 = vunpack.c.l.b16 %v948
        %v3781 = vunpack.c.h.b16 %v948
        %v3782 = vunpack.c.l.b16 %v949
        %v3783 = vunpack.c.h.b16 %v949
        %v3784 = vunpack.c.l.b16 %v950
        %v3785 = vunpack.c.h.b16 %v950
        %v3786 = vunpack.c.l.b16 %v951
        %v3787 = vunpack.c.h.b16 %v951
        %v3788 = vunpack.c.l.b16 %v952
        %v3789 = vunpack.c.h.b16 %v952
        %v3790 = vunpack.c.l.b16 %v953
        %v3791 = vunpack.c.h.b16 %v953
        %v3792 = vunpack.c.l.b16 %v954
        %v3793 = vunpack.c.h.b16 %v954
        %v3794 = vunpack.c.l.b16 %v955
        %v3795 = vunpack.c.h.b16 %v955
        %v3796 = vunpack.c.l.b16 %v956
        %v3797 = vunpack.c.h.b16 %v956
        %v3798 = vunpack.c.l.b16 %v957
        %v3799 = vunpack.c.h.b16 %v957
        %v3800 = vunpack.c.l.b16 %v958
        %v3801 = vunpack.c.h.b16 %v958
        %v3802 = vunpack.c.l.b16 %v959
        %v3803 = vunpack.c.h.b16 %v959
        %v3804 = vunpack.c.l.b16 %v960
        %v3805 = vunpack.c.h.b16 %v960
        %v3806 = vunpack.c.l.b16 %v961
        %v3807 = vunpack.c.h.b16 %v961
        %v3808 = vunpack.c.l.b16 %v962
        %v3809 = vunpack.c.h.b16 %v962
        %v3810 = vunpack.c.l.b16 %v963
        %v3811 = vunpack.c.h.b16 %v963
        %v3812 = vunpack.c.l.b16 %v964
        %v3813 = vunpack.c.h.b16 %v964
        %v3814 = vunpack.c.l.b16 %v965
        %v3815 = vunpack.c.h.b16 %v965
        %v3816 = vunpack.c.l.b16 %v966
        %v3817 = vunpack.c.h.b16 %v966
        %v3818 = vunpack.c.l.b16 %v967
        %v3819 = vunpack.c.h.b16 %v967
        %v3820 = vunpack.c.l.b16 %v968
        %v3821 = vunpack.c.h.b16 %v968
        %v3822 = vunpack.c.l.b16 %v969
        %v3823 = vunpack.c.h.b16 %v969
        %v3824 = vunpack.c.l.b16 %v970
        %v3825 = vunpack.c.h.b16 %v970
        %v3826 = vunpack.c.l.b16 %v971
        %v3827 = vunpack.c.h.b16 %v971
        %v3828 = vunpack.c.l.b16 %v972
        %v3829 = vunpack.c.h.b16 %v972
        %v3830 = vunpack.c.l.b16 %v973
        %v3831 = vunpack.c.h.b16 %v973
        %v3832 = vunpack.c.l.b16 %v974
        %v3833 = vunpack.c.h.b16 %v974
        %v3834 = vunpack.c.l.b16 %v975
        %v3835 = vunpack.c.h.b16 %v975
        %v3836 = vunpack.c.l.b16 %v976
        %v3837 = vunpack.c.h.b16 %v976
        %v3838 = vunpack.c.l.b16 %v977
        %v3839 = vunpack.c.h.b16 %v977
        %v3840 = vunpack.c.l.b16 %v978
        %v3841 = vunpack.c.h.b16 %v978
        %v3842 = vunpack.c.l.b16 %v979
        %v3843 = vunpack.c.h.b16 %v979
        %v3844 = vunpack.c.l.b16 %v980
        %v3845 = vunpack.c.h.b16 %v980
        %v3846 = vunpack.c.l.b16 %v981
        %v3847 = vunpack.c.h.b16 %v981
        %v3848 = vunpack.c.l.b16 %v982
        %v3849 = vunpack.c.h.b16 %v982
        %v3850 = vunpack.c.l.b16 %v983
        %v3851 = vunpack.c.h.b16 %v983
        %v3852 = vunpack.c.l.b16 %v984
        %v3853 = vunpack.c.h.b16 %v984
        %v3854 = vunpack.c.l.b16 %v985
        %v3855 = vunpack.c.h.b16 %v985
        %v3856 = vunpack.c.l.b16 %v986
        %v3857 = vunpack.c.h.b16 %v986
        %v3858 = vunpack.c.l.b16 %v987
        %v3859 = vunpack.c.h.b16 %v987
        %v3860 = vunpack.c.l.b16 %v988
        %v3861 = vunpack.c.h.b16 %v988
        %v3862 = vunpack.c.l.b16 %v989
        %v3863 = vunpack.c.h.b16 %v989
        %v3864 = vunpack.c.l.b16 %v990
        %v3865 = vunpack.c.h.b16 %v990
        %v3866 = vunpack.c.l.b16 %v991
        %v3867 = vunpack.c.h.b16 %v991
        %v3868 = vunpack.c.l.b16 %v992
        %v3869 = vunpack.c.h.b16 %v992
        %v3870 = vunpack.c.l.b16 %v993
        %v3871 = vunpack.c.h.b16 %v993
        %v3872 = vunpack.c.l.b16 %v994
        %v3873 = vunpack.c.h.b16 %v994
        %v3874 = vunpack.c.l.b16 %v995
        %v3875 = vunpack.c.h.b16 %v995
        %v3876 = vunpack.c.l.b16 %v996
        %v3877 = vunpack.c.h.b16 %v996
        %v3878 = vunpack.c.l.b16 %v997
        %v3879 = vunpack.c.h.b16 %v997
        %v3880 = vunpack.c.l.b16 %v998
        %v3881 = vunpack.c.h.b16 %v998
        %v3882 = vunpack.c.l.b16 %v999
        %v3883 = vunpack.c.h.b16 %v999
        %v3884 = vunpack.c.l.b16 %v1000
        %v3885 = vunpack.c.h.b16 %v1000
        %v3886 = vunpack.c.l.b16 %v1001
        %v3887 = vunpack.c.h.b16 %v1001
        %v3888 = vunpack.c.l.b16 %v1002
        %v3889 = vunpack.c.h.b16 %v1002
        %v3890 = vunpack.c.l.b16 %v1003
        %v3891 = vunpack.c.h.b16 %v1003
        %v3892 = vunpack.c.l.b16 %v1004
        %v3893 = vunpack.c.h.b16 %v1004
        %v3894 = vunpack.c.l.b16 %v1005
        %v3895 = vunpack.c.h.b16 %v1005
        %v3896 = vunpack.c.l.b16 %v1006
        %v3897 = vunpack.c.h.b16 %v1006
        %v3898 = vunpack.c.l.b16 %v1007
        %v3899 = vunpack.c.h.b16 %v1007
        %v3900 = vunpack.c.l.b16 %v1008
        %v3901 = vunpack.c.h.b16 %v1008
        %v3902 = vunpack.c.l.b16 %v1009
        %v3903 = vunpack.c.h.b16 %v1009
        %v3904 = vunpack.c.l.b16 %v1010
        %v3905 = vunpack.c.h.b16 %v1010
        %v3906 = vunpack.c.l.b16 %v1011
        %v3907 = vunpack.c.h.b16 %v1011
        %v3908 = vunpack.c.l.b16 %v1012
        %v3909 = vunpack.c.h.b16 %v1012
        %v3910 = vunpack.c.l.b16 %v1013
        %v3911 = vunpack.c.h.b16 %v1013
        %v3912 = vunpack.c.l.b16 %v1014
        %v3913 = vunpack.c.h.b16 %v1014
        %v3914 = vunpack.c.l.b16 %v1015
        %v3915 = vunpack.c.h.b16 %v1015
        %v3916 = vunpack.c.l.b16 %v1016
        %v3917 = vunpack.c.h.b16 %v1016
        %v3918 = vunpack.c.l.b16 %v1017
        %v3919 = vunpack.c.h.b16 %v1017
        %v3920 = vunpack.c.l.b16 %v1018
        %v3921 = vunpack.c.h.b16 %v1018
        %v3922 = vunpack.c.l.b16 %v1019
        %v3923 = vunpack.c.h.b16 %v1019
        %v3924 = vunpack.c.l.b16 %v1020
        %v3925 = vunpack.c.h.b16 %v1020
        %v3926 = vunpack.c.l.b16 %v1021
        %v3927 = vunpack.c.h.b16 %v1021
        %v3928 = vunpack.c.l.b16 %v1022
        %v3929 = vunpack.c.h.b16 %v1022
        %v3930 = vunpack.c.l.b16 %v1023
        %v3931 = vunpack.c.h.b16 %v1023
        %v3932 = vunpack.c.l.b16 %v1024
        %v3933 = vunpack.c.h.b16 %v1024
        %v3934 = vunpack.c.l.b16 %v1025
        %v3935 = vunpack.c.h.b16 %v1025
        %v3936 = vunpack.c.l.b16 %v1026
        %v3937 = vunpack.c.h.b16 %v1026
        %v3938 = vunpack.c.l.b16 %v1027
        %v3939 = vunpack.c.h.b16 %v1027
        %v3940 = vunpack.c.l.b16 %v1028
        %v3941 = vunpack.c.h.b16 %v1028
        %v3942 = vunpack.c.l.b16 %v1029
        %v3943 = vunpack.c.h.b16 %v1029
        %v3944 = vunpack.c.l.b16 %v1030
        %v3945 = vunpack.c.h.b16 %v1030
        %v3946 = vunpack.c.l.b16 %v1031
        %v3947 = vunpack.c.h.b16 %v1031
        %v3948 = vunpack.c.l.b16 %v1032
        %v3949 = vunpack.c.h.b16 %v1032
        %v3950 = vunpack.c.l.b16 %v1033
        %v3951 = vunpack.c.h.b16 %v1033
        %v3952 = vunpack.c.l.b16 %v1034
        %v3953 = vunpack.c.h.b16 %v1034
        %v3954 = vunpack.c.l.b16 %v1035
        %v3955 = vunpack.c.h.b16 %v1035
        %v3956 = vunpack.c.l.b16 %v1036
        %v3957 = vunpack.c.h.b16 %v1036
        %v3958 = vunpack.c.l.b16 %v1037
        %v3959 = vunpack.c.h.b16 %v1037
        %v3960 = vunpack.c.l.b16 %v1038
        %v3961 = vunpack.c.h.b16 %v1038
        %v3962 = vunpack.c.l.b16 %v1039
        %v3963 = vunpack.c.h.b16 %v1039
        %v3964 = vunpack.c.l.b16 %v1040
        %v3965 = vunpack.c.h.b16 %v1040
        %v3966 = vunpack.c.l.b16 %v1041
        %v3967 = vunpack.c.h.b16 %v1041
        %v3968 = vunpack.c.l.b16 %v1042
        %v3969 = vunpack.c.h.b16 %v1042
        %v3970 = vunpack.c.l.b16 %v1043
        %v3971 = vunpack.c.h.b16 %v1043
        %v3972 = vunpack.c.l.b16 %v1044
        %v3973 = vunpack.c.h.b16 %v1044
        %v3974 = vunpack.c.l.b16 %v1045
        %v3975 = vunpack.c.h.b16 %v1045
        %v3976 = vunpack.c.l.b16 %v1046
        %v3977 = vunpack.c.h.b16 %v1046
        %v3978 = vunpack.c.l.b16 %v1047
        %v3979 = vunpack.c.h.b16 %v1047
        %v3980 = vunpack.c.l.b16 %v1048
        %v3981 = vunpack.c.h.b16 %v1048
        %v3982 = vunpack.c.l.b16 %v1049
        %v3983 = vunpack.c.h.b16 %v1049
        %v3984 = vunpack.c.l.b16 %v1050
        %v3985 = vunpack.c.h.b16 %v1050
        %v3986 = vunpack.c.l.b16 %v1051
        %v3987 = vunpack.c.h.b16 %v1051
        %v3988 = vunpack.c.l.b16 %v1052
        %v3989 = vunpack.c.h.b16 %v1052
        %v3990 = vunpack.c.l.b16 %v1053
        %v3991 = vunpack.c.h.b16 %v1053
        %v3992 = vunpack.c.l.b16 %v1054
        %v3993 = vunpack.c.h.b16 %v1054
        %v3994 = vunpack.c.l.b16 %v1055
        %v3995 = vunpack.c.h.b16 %v1055
        %v3996 = vunpack.c.l.b16 %v1056
        %v3997 = vunpack.c.h.b16 %v1056
        %v3998 = vunpack.c.l.b16 %v1057
        %v3999 = vunpack.c.h.b16 %v1057
        %v4000 = vunpack.c.l.b16 %v1058
        %v4001 = vunpack.c.h.b16 %v1058
        %v4002 = vunpack.c.l.b16 %v1059
        %v4003 = vunpack.c.h.b16 %v1059
        %v4004 = vunpack.c.l.b16 %v1060
        %v4005 = vunpack.c.h.b16 %v1060
        %v4006 = vunpack.c.l.b16 %v1061
        %v4007 = vunpack.c.h.b16 %v1061
        %v4008 = vunpack.c.l.b16 %v1062
        %v4009 = vunpack.c.h.b16 %v1062
        %v4010 = vunpack.c.l.b16 %v1063
        %v4011 = vunpack.c.h.b16 %v1063
        %v4012 = vunpack.c.l.b16 %v1064
        %v4013 = vunpack.c.h.b16 %v1064
        %v4014 = vunpack.c.l.b16 %v1065
        %v4015 = vunpack.c.h.b16 %v1065
        %v4016 = vunpack.c.l.b16 %v1066
        %v4017 = vunpack.c.h.b16 %v1066
        %v4018 = vunpack.c.l.b16 %v1067
        %v4019 = vunpack.c.h.b16 %v1067
        %v4020 = vunpack.c.l.b16 %v1068
        %v4021 = vunpack.c.h.b16 %v1068
        %v4022 = vunpack.c.l.b16 %v1069
        %v4023 = vunpack.c.h.b16 %v1069
        %v4024 = vunpack.c.l.b16 %v1070
        %v4025 = vunpack.c.h.b16 %v1070
        %v4026 = vunpack.c.l.b16 %v1071
        %v4027 = vunpack.c.h.b16 %v1071
        %v4028 = vunpack.c.l.b16 %v1072
        %v4029 = vunpack.c.h.b16 %v1072
        %v4030 = vunpack.c.l.b16 %v1073
        %v4031 = vunpack.c.h.b16 %v1073
        %v4032 = vunpack.c.l.b16 %v1074
        %v4033 = vunpack.c.h.b16 %v1074
        %v4034 = vunpack.c.l.b16 %v1075
        %v4035 = vunpack.c.h.b16 %v1075
        %v4036 = vunpack.c.l.b16 %v1076
        %v4037 = vunpack.c.h.b16 %v1076
        %v4038 = vunpack.c.l.b16 %v1077
        %v4039 = vunpack.c.h.b16 %v1077
        %v4040 = vunpack.c.l.b16 %v1078
        %v4041 = vunpack.c.h.b16 %v1078
        %v4042 = vunpack.c.l.b16 %v1079
        %v4043 = vunpack.c.h.b16 %v1079
        %v4044 = vunpack.c.l.b16 %v1080
        %v4045 = vunpack.c.h.b16 %v1080
        %v4046 = vunpack.c.l.b16 %v1081
        %v4047 = vunpack.c.h.b16 %v1081
        %v4048 = vunpack.c.l.b16 %v1082
        %v4049 = vunpack.c.h.b16 %v1082
        %v4050 = vunpack.c.l.b16 %v1083
        %v4051 = vunpack.c.h.b16 %v1083
        %v4052 = vunpack.c.l.b16 %v1084
        %v4053 = vunpack.c.h.b16 %v1084
        %v4054 = vunpack.c.l.b16 %v1085
        %v4055 = vunpack.c.h.b16 %v1085
        %v4056 = vunpack.c.l.b16 %v1086
        %v4057 = vunpack.c.h.b16 %v1086
        %v4058 = vunpack.c.l.b16 %v1087
        %v4059 = vunpack.c.h.b16 %v1087
        %v4060 = vunpack.c.l.b16 %v1088
        %v4061 = vunpack.c.h.b16 %v1088
        %v4062 = vunpack.c.l.b16 %v1089
        %v4063 = vunpack.c.h.b16 %v1089
        %v4064 = vunpack.c.l.b16 %v1090
        %v4065 = vunpack.c.h.b16 %v1090
        %v4066 = vunpack.c.l.b16 %v1091
        %v4067 = vunpack.c.h.b16 %v1091
        %v4068 = vunpack.c.l.b16 %v1092
        %v4069 = vunpack.c.h.b16 %v1092
        %v4070 = vunpack.c.l.b16 %v1093
        %v4071 = vunpack.c.h.b16 %v1093
        %v4072 = vunpack.c.l.b16 %v1094
        %v4073 = vunpack.c.h.b16 %v1094
        %v4074 = vunpack.c.l.b16 %v1095
        %v4075 = vunpack.c.h.b16 %v1095
        %v4076 = vunpack.c.l.b16 %v1096
        %v4077 = vunpack.c.h.b16 %v1096
        %v4078 = vunpack.c.l.b16 %v1097
        %v4079 = vunpack.c.h.b16 %v1097
        %v4080 = vunpack.c.l.b16 %v1098
        %v4081 = vunpack.c.h.b16 %v1098
        %v4082 = vunpack.c.l.b16 %v1099
        %v4083 = vunpack.c.h.b16 %v1099
        %v4084 = vunpack.c.l.b16 %v1100
        %v4085 = vunpack.c.h.b16 %v1100
        %v4086 = vunpack.c.l.b16 %v1101
        %v4087 = vunpack.c.h.b16 %v1101
        %v4088 = vunpack.c.l.b16 %v1102
        %v4089 = vunpack.c.h.b16 %v1102
        %v4090 = vunpack.c.l.b16 %v1103
        %v4091 = vunpack.c.h.b16 %v1103
        %v4092 = vunpack.c.l.b16 %v1104
        %v4093 = vunpack.c.h.b16 %v1104
        %v4094 = vunpack.c.l.b16 %v1105
        %v4095 = vunpack.c.h.b16 %v1105
        %v4096 = vunpack.c.l.b16 %v1106
        %v4097 = vunpack.c.h.b16 %v1106
        %v4098 = vunpack.c.l.b16 %v1107
        %v4099 = vunpack.c.h.b16 %v1107
        %v4100 = vunpack.c.l.b16 %v1108
        %v4101 = vunpack.c.h.b16 %v1108
        %v4102 = vunpack.c.l.b16 %v1109
        %v4103 = vunpack.c.h.b16 %v1109
        %v4104 = vunpack.c.l.b16 %v1110
        %v4105 = vunpack.c.h.b16 %v1110
        %v4106 = vunpack.c.l.b16 %v1111
        %v4107 = vunpack.c.h.b16 %v1111
        %v4108 = vunpack.c.l.b16 %v1112
        %v4109 = vunpack.c.h.b16 %v1112
        %v4110 = vunpack.c.l.b16 %v1113
        %v4111 = vunpack.c.h.b16 %v1113
        %v4112 = vunpack.c.l.b16 %v1114
        %v4113 = vunpack.c.h.b16 %v1114
        %v4114 = vunpack.c.l.b16 %v1115
        %v4115 = vunpack.c.h.b16 %v1115
        %v4116 = vunpack.c.l.b16 %v1116
        %v4117 = vunpack.c.h.b16 %v1116
        %v4118 = vunpack.c.l.b16 %v1117
        %v4119 = vunpack.c.h.b16 %v1117
        %v4120 = vunpack.c.l.b16 %v1118
        %v4121 = vunpack.c.h.b16 %v1118
        %v4122 = vunpack.c.l.b16 %v1119
        %v4123 = vunpack.c.h.b16 %v1119
        %v4124 = vunpack.c.l.b16 %v1120
        %v4125 = vunpack.c.h.b16 %v1120
        %v4126 = vunpack.c.l.b16 %v1121
        %v4127 = vunpack.c.h.b16 %v1121
        %v4128 = vunpack.c.l.b16 %v1122
        %v4129 = vunpack.c.h.b16 %v1122
        %v4130 = vunpack.c.l.b16 %v1123
        %v4131 = vunpack.c.h.b16 %v1123
        %v4132 = vunpack.c.l.b16 %v1124
        %v4133 = vunpack.c.h.b16 %v1124
        %v4134 = vunpack.c.l.b16 %v1125
        %v4135 = vunpack.c.h.b16 %v1125
        %v4136 = vunpack.c.l.b16 %v1126
        %v4137 = vunpack.c.h.b16 %v1126
        %v4138 = vunpack.c.l.b16 %v1127
        %v4139 = vunpack.c.h.b16 %v1127
        %v4140 = vunpack.c.l.b16 %v1128
        %v4141 = vunpack.c.h.b16 %v1128
        %v4142 = vunpack.c.l.b16 %v1129
        %v4143 = vunpack.c.h.b16 %v1129
        %v4144 = vunpack.c.l.b16 %v1130
        %v4145 = vunpack.c.h.b16 %v1130
        %v4146 = vunpack.c.l.b16 %v1131
        %v4147 = vunpack.c.h.b16 %v1131
        %v4148 = vunpack.c.l.b16 %v1132
        %v4149 = vunpack.c.h.b16 %v1132
        %v4150 = vunpack.c.l.b16 %v1133
        %v4151 = vunpack.c.h.b16 %v1133
        %v4152 = vunpack.c.l.b16 %v1134
        %v4153 = vunpack.c.h.b16 %v1134
        %v4154 = vunpack.c.l.b16 %v1135
        %v4155 = vunpack.c.h.b16 %v1135
        %v4156 = vunpack.c.l.b16 %v1136
        %v4157 = vunpack.c.h.b16 %v1136
        %v4158 = vunpack.c.l.b16 %v1137
        %v4159 = vunpack.c.h.b16 %v1137
        %v4160 = vunpack.c.l.b16 %v1138
        %v4161 = vunpack.c.h.b16 %v1138
        %v4162 = vunpack.c.l.b16 %v1139
        %v4163 = vunpack.c.h.b16 %v1139
        %v4164 = vunpack.c.l.b16 %v1140
        %v4165 = vunpack.c.h.b16 %v1140
        %v4166 = vunpack.c.l.b16 %v1141
        %v4167 = vunpack.c.h.b16 %v1141
        %v4168 = vunpack.c.l.b16 %v1142
        %v4169 = vunpack.c.h.b16 %v1142
        %v4170 = vunpack.c.l.b16 %v1143
        %v4171 = vunpack.c.h.b16 %v1143
        %v4172 = vunpack.c.l.b16 %v1144
        %v4173 = vunpack.c.h.b16 %v1144
        %v4174 = vunpack.c.l.b16 %v1145
        %v4175 = vunpack.c.h.b16 %v1145
        %v4176 = vunpack.c.l.b16 %v1146
        %v4177 = vunpack.c.h.b16 %v1146
        %v4178 = vunpack.c.l.b16 %v1147
        %v4179 = vunpack.c.h.b16 %v1147
        %v4180 = vunpack.c.l.b16 %v1148
        %v4181 = vunpack.c.h.b16 %v1148
        %v4182 = vunpack.c.l.b16 %v1149
        %v4183 = vunpack.c.h.b16 %v1149
        %v4184 = vunpack.c.l.b16 %v1150
        %v4185 = vunpack.c.h.b16 %v1150
        %v4186 = vunpack.c.l.b16 %v1151
        %v4187 = vunpack.c.h.b16 %v1151
        %v4188 = vunpack.c.l.b16 %v1152
        %v4189 = vunpack.c.h.b16 %v1152
        %v4190 = vunpack.c.l.b16 %v1153
        %v4191 = vunpack.c.h.b16 %v1153
        %v4192 = vunpack.c.l.b16 %v1154
        %v4193 = vunpack.c.h.b16 %v1154
        %v4194 = vunpack.c.l.b16 %v1155
        %v4195 = vunpack.c.h.b16 %v1155
        %v4196 = vunpack.c.l.b16 %v1156
        %v4197 = vunpack.c.h.b16 %v1156
        %v4198 = vunpack.c.l.b16 %v1157
        %v4199 = vunpack.c.h.b16 %v1157
        %v4200 = vunpack.c.l.b16 %v1158
        %v4201 = vunpack.c.h.b16 %v1158
        %v4202 = vunpack.c.l.b16 %v1159
        %v4203 = vunpack.c.h.b16 %v1159
        %v4204 = vunpack.c.l.b16 %v1160
        %v4205 = vunpack.c.h.b16 %v1160
        %v4206 = vunpack.c.l.b16 %v1161
        %v4207 = vunpack.c.h.b16 %v1161
        %v4208 = vunpack.c.l.b16 %v1162
        %v4209 = vunpack.c.h.b16 %v1162
        %v4210 = vunpack.c.l.b16 %v1163
        %v4211 = vunpack.c.h.b16 %v1163
        %v4212 = vunpack.c.l.b16 %v1164
        %v4213 = vunpack.c.h.b16 %v1164
        %v4214 = vunpack.c.l.b16 %v1165
        %v4215 = vunpack.c.h.b16 %v1165
        %v4216 = vunpack.c.l.b16 %v1166
        %v4217 = vunpack.c.h.b16 %v1166
        %v4218 = vunpack.c.l.b16 %v1167
        %v4219 = vunpack.c.h.b16 %v1167
        %v4220 = vunpack.c.l.b16 %v1168
        %v4221 = vunpack.c.h.b16 %v1168
        %v4222 = vunpack.c.l.b16 %v1169
        %v4223 = vunpack.c.h.b16 %v1169
        %v4224 = vunpack.c.l.b16 %v1170
        %v4225 = vunpack.c.h.b16 %v1170
        %v4226 = vunpack.c.l.b16 %v1171
        %v4227 = vunpack.c.h.b16 %v1171
        %v4228 = vunpack.c.l.b16 %v1172
        %v4229 = vunpack.c.h.b16 %v1172
        %v4230 = vunpack.c.l.b16 %v1173
        %v4231 = vunpack.c.h.b16 %v1173
        %v4232 = vunpack.c.l.b16 %v1174
        %v4233 = vunpack.c.h.b16 %v1174
        %v4234 = vunpack.c.l.b16 %v1175
        %v4235 = vunpack.c.h.b16 %v1175
        %v4236 = vunpack.c.l.b16 %v1176
        %v4237 = vunpack.c.h.b16 %v1176
        %v4238 = vunpack.c.l.b16 %v1177
        %v4239 = vunpack.c.h.b16 %v1177
        %v4240 = vunpack.c.l.b16 %v1178
        %v4241 = vunpack.c.h.b16 %v1178
        %v4242 = vunpack.c.l.b16 %v1179
        %v4243 = vunpack.c.h.b16 %v1179
        %v4244 = vunpack.c.l.b16 %v1180
        %v4245 = vunpack.c.h.b16 %v1180
        %v4246 = vunpack.c.l.b16 %v1181
        %v4247 = vunpack.c.h.b16 %v1181
        %v4248 = vunpack.c.l.b16 %v1182
        %v4249 = vunpack.c.h.b16 %v1182
        %v4250 = vunpack.c.l.b16 %v1183
        %v4251 = vunpack.c.h.b16 %v1183
        %v4252 = vunpack.c.l.b16 %v1184
        %v4253 = vunpack.c.h.b16 %v1184
        %v4254 = vunpack.c.l.b16 %v1185
        %v4255 = vunpack.c.h.b16 %v1185
        %v4256 = vunpack.c.l.b16 %v1186
        %v4257 = vunpack.c.h.b16 %v1186
        %v4258 = vunpack.c.l.b16 %v1187
        %v4259 = vunpack.c.h.b16 %v1187
        %v4260 = vunpack.c.l.b16 %v1188
        %v4261 = vunpack.c.h.b16 %v1188
        %v4262 = vunpack.c.l.b16 %v1189
        %v4263 = vunpack.c.h.b16 %v1189
        %v4264 = vunpack.c.l.b16 %v1190
        %v4265 = vunpack.c.h.b16 %v1190
        %v4266 = vunpack.c.l.b16 %v1191
        %v4267 = vunpack.c.h.b16 %v1191
        %v4268 = vunpack.c.l.b16 %v1192
        %v4269 = vunpack.c.h.b16 %v1192
        %v4270 = vunpack.c.l.b16 %v1193
        %v4271 = vunpack.c.h.b16 %v1193
        %v4272 = vunpack.c.l.b16 %v1194
        %v4273 = vunpack.c.h.b16 %v1194
        %v4274 = vunpack.c.l.b16 %v1195
        %v4275 = vunpack.c.h.b16 %v1195
        %v4276 = vunpack.c.l.b16 %v1196
        %v4277 = vunpack.c.h.b16 %v1196
        %v4278 = vunpack.c.l.b16 %v1197
        %v4279 = vunpack.c.h.b16 %v1197
        %v4280 = vunpack.c.l.b16 %v1198
        %v4281 = vunpack.c.h.b16 %v1198
        %v4282 = vunpack.c.l.b16 %v1199
        %v4283 = vunpack.c.h.b16 %v1199
        %v4284 = vunpack.c.l.b16 %v1200
        %v4285 = vunpack.c.h.b16 %v1200
        %v4286 = vunpack.c.l.b16 %v1201
        %v4287 = vunpack.c.h.b16 %v1201
        %v4288 = vunpack.c.l.b16 %v1202
        %v4289 = vunpack.c.h.b16 %v1202
        %v4290 = vunpack.c.l.b16 %v1203
        %v4291 = vunpack.c.h.b16 %v1203
        %v4292 = vunpack.c.l.b16 %v1204
        %v4293 = vunpack.c.h.b16 %v1204
        %v4294 = vunpack.c.l.b16 %v1205
        %v4295 = vunpack.c.h.b16 %v1205
        %v4296 = vunpack.c.l.b16 %v1206
        %v4297 = vunpack.c.h.b16 %v1206
        %v4298 = vunpack.c.l.b16 %v1207
        %v4299 = vunpack.c.h.b16 %v1207
        %v4300 = vunpack.c.l.b16 %v1208
        %v4301 = vunpack.c.h.b16 %v1208
        %v4302 = vunpack.c.l.b16 %v1209
        %v4303 = vunpack.c.h.b16 %v1209
        %v4304 = vunpack.c.l.b16 %v1210
        %v4305 = vunpack.c.h.b16 %v1210
        %v4306 = vunpack.c.l.b16 %v1211
        %v4307 = vunpack.c.h.b16 %v1211
        %v4308 = vunpack.c.l.b16 %v1212
        %v4309 = vunpack.c.h.b16 %v1212
        %v4310 = vunpack.c.l.b16 %v1213
        %v4311 = vunpack.c.h.b16 %v1213
        %v4312 = vunpack.c.l.b16 %v1214
        %v4313 = vunpack.c.h.b16 %v1214
        %v4314 = vunpack.c.l.b16 %v1215
        %v4315 = vunpack.c.h.b16 %v1215
        %v4316 = vunpack.c.l.b16 %v1216
        %v4317 = vunpack.c.h.b16 %v1216
        %v4318 = vunpack.c.l.b16 %v1217
        %v4319 = vunpack.c.h.b16 %v1217
        %v4320 = vunpack.c.l.b16 %v1218
        %v4321 = vunpack.c.h.b16 %v1218
        %v4322 = vunpack.c.l.b16 %v1219
        %v4323 = vunpack.c.h.b16 %v1219
        %v4324 = vunpack.c.l.b16 %v1220
        %v4325 = vunpack.c.h.b16 %v1220
        %v4326 = vunpack.c.l.b16 %v1221
        %v4327 = vunpack.c.h.b16 %v1221
        %v4328 = vunpack.c.l.b16 %v1222
        %v4329 = vunpack.c.h.b16 %v1222
        %v4330 = vunpack.c.l.b16 %v1223
        %v4331 = vunpack.c.h.b16 %v1223
        %v4332 = vunpack.c.l.b16 %v1224
        %v4333 = vunpack.c.h.b16 %v1224
        %v4334 = vunpack.c.l.b16 %v1225
        %v4335 = vunpack.c.h.b16 %v1225
        %v4336 = vunpack.c.l.b16 %v1226
        %v4337 = vunpack.c.h.b16 %v1226
        %v4338 = vunpack.c.l.b16 %v1227
        %v4339 = vunpack.c.h.b16 %v1227
        %v4340 = vunpack.c.l.b16 %v1228
        %v4341 = vunpack.c.h.b16 %v1228
        %v4342 = vunpack.c.l.b16 %v1229
        %v4343 = vunpack.c.h.b16 %v1229
        %v4344 = vunpack.c.l.b16 %v1230
        %v4345 = vunpack.c.h.b16 %v1230
        %v4346 = vunpack.c.l.b16 %v1231
        %v4347 = vunpack.c.h.b16 %v1231
        %v4348 = vunpack.c.l.b16 %v1232
        %v4349 = vunpack.c.h.b16 %v1232
        %v4350 = vunpack.c.l.b16 %v1233
        %v4351 = vunpack.c.h.b16 %v1233
        %v4352 = vunpack.c.l.b16 %v1234
        %v4353 = vunpack.c.h.b16 %v1234
        %v4354 = vunpack.c.l.b16 %v1235
        %v4355 = vunpack.c.h.b16 %v1235
        %v4356 = vunpack.c.l.b16 %v1236
        %v4357 = vunpack.c.h.b16 %v1236
        %v4358 = vunpack.c.l.b16 %v1237
        %v4359 = vunpack.c.h.b16 %v1237
        %v4360 = vunpack.c.l.b16 %v1238
        %v4361 = vunpack.c.h.b16 %v1238
        %v4362 = vunpack.c.l.b16 %v1239
        %v4363 = vunpack.c.h.b16 %v1239
        %v4364 = vunpack.c.l.b16 %v1240
        %v4365 = vunpack.c.h.b16 %v1240
        %v4366 = vunpack.c.l.b16 %v1241
        %v4367 = vunpack.c.h.b16 %v1241
        %v4368 = vunpack.c.l.b16 %v1242
        %v4369 = vunpack.c.h.b16 %v1242
        %v4370 = vunpack.c.l.b16 %v1243
        %v4371 = vunpack.c.h.b16 %v1243
        %v4372 = vunpack.c.l.b16 %v1244
        %v4373 = vunpack.c.h.b16 %v1244
        %v4374 = vunpack.c.l.b16 %v1245
        %v4375 = vunpack.c.h.b16 %v1245
        %v4376 = vunpack.c.l.b16 %v1246
        %v4377 = vunpack.c.h.b16 %v1246
        %v4378 = vunpack.c.l.b16 %v1247
        %v4379 = vunpack.c.h.b16 %v1247
        %v4380 = vunpack.c.l.b16 %v1248
        %v4381 = vunpack.c.h.b16 %v1248
        %v4382 = vunpack.c.l.b16 %v1249
        %v4383 = vunpack.c.h.b16 %v1249
        %v4384 = vunpack.c.l.b16 %v1250
        %v4385 = vunpack.c.h.b16 %v1250
        %v4386 = vunpack.c.l.b16 %v1251
        %v4387 = vunpack.c.h.b16 %v1251
        %v4388 = vunpack.c.l.b16 %v1252
        %v4389 = vunpack.c.h.b16 %v1252
        %v4390 = vunpack.c.l.b16 %v1253
        %v4391 = vunpack.c.h.b16 %v1253
        %v4392 = vunpack.c.l.b16 %v1254
        %v4393 = vunpack.c.h.b16 %v1254
        %v4394 = vunpack.c.l.b16 %v1255
        %v4395 = vunpack.c.h.b16 %v1255
        %v4396 = vunpack.c.l.b16 %v1256
        %v4397 = vunpack.c.h.b16 %v1256
        %v4398 = vunpack.c.l.b16 %v1257
        %v4399 = vunpack.c.h.b16 %v1257
        %v4400 = vunpack.c.l.b16 %v1258
        %v4401 = vunpack.c.h.b16 %v1258
        %v4402 = vunpack.c.l.b16 %v1259
        %v4403 = vunpack.c.h.b16 %v1259
        %v4404 = vunpack.c.l.b16 %v1260
        %v4405 = vunpack.c.h.b16 %v1260
        %v4406 = vunpack.c.l.b16 %v1261
        %v4407 = vunpack.c.h.b16 %v1261
        %v4408 = vunpack.c.l.b16 %v1262
        %v4409 = vunpack.c.h.b16 %v1262
        %v4410 = vunpack.c.l.b16 %v1263
        %v4411 = vunpack.c.h.b16 %v1263
        %v4412 = vunpack.c.l.b16 %v1264
        %v4413 = vunpack.c.h.b16 %v1264
        %v4414 = vunpack.c.l.b16 %v1265
        %v4415 = vunpack.c.h.b16 %v1265
        %v4416 = vunpack.c.l.b16 %v1266
        %v4417 = vunpack.c.h.b16 %v1266
        %v4418 = vunpack.c.l.b16 %v1267
        %v4419 = vunpack.c.h.b16 %v1267
        %v4420 = vunpack.c.l.b16 %v1268
        %v4421 = vunpack.c.h.b16 %v1268
        %v4422 = vunpack.c.l.b16 %v1269
        %v4423 = vunpack.c.h.b16 %v1269
        %v4424 = vunpack.c.l.b16 %v1270
        %v4425 = vunpack.c.h.b16 %v1270
        %v4426 = vunpack.c.l.b16 %v1271
        %v4427 = vunpack.c.h.b16 %v1271
        %v4428 = vpack.c.b16 %v2396, %v2380
        %v4429 = vpack.c.b16 %v2397, %v2381
        %v4430 = vpack.c.b16 %v2398, %v2382
        %v4431 = vpack.c.b16 %v2399, %v2383
        %v4432 = vpack.c.b16 %v2400, %v2384
        %v4433 = vpack.c.b16 %v2401, %v2385
        %v4434 = vpack.c.b16 %v2402, %v2386
        %v4435 = vpack.c.b16 %v2403, %v2387
        %v4436 = vpack.c.b16 %v2404, %v2388
        %v4437 = vpack.c.b16 %v2405, %v2389
        %v4438 = vpack.c.b16 %v2406, %v2390
        %v4439 = vpack.c.b16 %v2407, %v2391
        %v4440 = vpack.c.b16 %v2408, %v2392
        %v4441 = vpack.c.b16 %v2409, %v2393
        %v4442 = vpack.c.b16 %v2410, %v2394
        %v4443 = vpack.c.b16 %v2411, %v2395
        %v4444 = vpack.c.b16 %v2428, %v2412
        %v4445 = vpack.c.b16 %v2429, %v2413
        %v4446 = vpack.c.b16 %v2430, %v2414
        %v4447 = vpack.c.b16 %v2431, %v2415
        %v4448 = vpack.c.b16 %v2432, %v2416
        %v4449 = vpack.c.b16 %v2433, %v2417
        %v4450 = vpack.c.b16 %v2434, %v2418
        %v4451 = vpack.c.b16 %v2435, %v2419
        %v4452 = vpack.c.b16 %v2436, %v2420
        %v4453 = vpack.c.b16 %v2437, %v2421
        %v4454 = vpack.c.b16 %v2438, %v2422
        %v4455 = vpack.c.b16 %v2439, %v2423
        %v4456 = vpack.c.b16 %v2440, %v2424
        %v4457 = vpack.c.b16 %v2441, %v2425
        %v4458 = vpack.c.b16 %v2442, %v2426
        %v4459 = vpack.c.b16 %v2443, %v2427
        %v4460 = vpack.c.b16 %v2460, %v2444
        %v4461 = vpack.c.b16 %v2461, %v2445
        %v4462 = vpack.c.b16 %v2462, %v2446
        %v4463 = vpack.c.b16 %v2463, %v2447
        %v4464 = vpack.c.b16 %v2464, %v2448
        %v4465 = vpack.c.b16 %v2465, %v2449
        %v4466 = vpack.c.b16 %v2466, %v2450
        %v4467 = vpack.c.b16 %v2467, %v2451
        %v4468 = vpack.c.b16 %v2468, %v2452
        %v4469 = vpack.c.b16 %v2469, %v2453
        %v4470 = vpack.c.b16 %v2470, %v2454
        %v4471 = vpack.c.b16 %v2471, %v2455
        %v4472 = vpack.c.b16 %v2472, %v2456
        %v4473 = vpack.c.b16 %v2473, %v2457
        %v4474 = vpack.c.b16 %v2474, %v2458
        %v4475 = vpack.c.b16 %v2475, %v2459
        %v4476 = vpack.c.b16 %v2492, %v2476
        %v4477 = vpack.c.b16 %v2493, %v2477
        %v4478 = vpack.c.b16 %v2494, %v2478
        %v4479 = vpack.c.b16 %v2495, %v2479
        %v4480 = vpack.c.b16 %v2496, %v2480
        %v4481 = vpack.c.b16 %v2497, %v2481
        %v4482 = vpack.c.b16 %v2498, %v2482
        %v4483 = vpack.c.b16 %v2499, %v2483
        %v4484 = vpack.c.b16 %v2500, %v2484
        %v4485 = vpack.c.b16 %v2501, %v2485
        %v4486 = vpack.c.b16 %v2502, %v2486
        %v4487 = vpack.c.b16 %v2503, %v2487
        %v4488 = vpack.c.b16 %v2504, %v2488
        %v4489 = vpack.c.b16 %v2505, %v2489
        %v4490 = vpack.c.b16 %v2506, %v2490
        %v4491 = vpack.c.b16 %v2507, %v2491
        %v4492 = vpack.c.b16 %v2524, %v2508
        %v4493 = vpack.c.b16 %v2525, %v2509
        %v4494 = vpack.c.b16 %v2526, %v2510
        %v4495 = vpack.c.b16 %v2527, %v2511
        %v4496 = vpack.c.b16 %v2528, %v2512
        %v4497 = vpack.c.b16 %v2529, %v2513
        %v4498 = vpack.c.b16 %v2530, %v2514
        %v4499 = vpack.c.b16 %v2531, %v2515
        %v4500 = vpack.c.b16 %v2532, %v2516
        %v4501 = vpack.c.b16 %v2533, %v2517
        %v4502 = vpack.c.b16 %v2534, %v2518
        %v4503 = vpack.c.b16 %v2535, %v2519
        %v4504 = vpack.c.b16 %v2536, %v2520
        %v4505 = vpack.c.b16 %v2537, %v2521
        %v4506 = vpack.c.b16 %v2538, %v2522
        %v4507 = vpack.c.b16 %v2539, %v2523
        %v4508 = vpack.c.b16 %v2556, %v2540
        %v4509 = vpack.c.b16 %v2557, %v2541
        %v4510 = vpack.c.b16 %v2558, %v2542
        %v4511 = vpack.c.b16 %v2559, %v2543
        %v4512 = vpack.c.b16 %v2560, %v2544
        %v4513 = vpack.c.b16 %v2561, %v2545
        %v4514 = vpack.c.b16 %v2562, %v2546
        %v4515 = vpack.c.b16 %v2563, %v2547
        %v4516 = vpack.c.b16 %v2564, %v2548
        %v4517 = vpack.c.b16 %v2565, %v2549
        %v4518 = vpack.c.b16 %v2566, %v2550
        %v4519 = vpack.c.b16 %v2567, %v2551
        %v4520 = vpack.c.b16 %v2568, %v2552
        %v4521 = vpack.c.b16 %v2569, %v2553
        %v4522 = vpack.c.b16 %v2570, %v2554
        %v4523 = vpack.c.b16 %v2571, %v2555
        %v4524 = vpack.c.b16 %v2588, %v2572
        %v4525 = vpack.c.b16 %v2589, %v2573
        %v4526 = vpack.c.b16 %v2590, %v2574
        %v4527 = vpack.c.b16 %v2591, %v2575
        %v4528 = vpack.c.b16 %v2592, %v2576
        %v4529 = vpack.c.b16 %v2593, %v2577
        %v4530 = vpack.c.b16 %v2594, %v2578
        %v4531 = vpack.c.b16 %v2595, %v2579
        %v4532 = vpack.c.b16 %v2596, %v2580
        %v4533 = vpack.c.b16 %v2597, %v2581
        %v4534 = vpack.c.b16 %v2598, %v2582
        %v4535 = vpack.c.b16 %v2599, %v2583
        %v4536 = vpack.c.b16 %v2600, %v2584
        %v4537 = vpack.c.b16 %v2601, %v2585
        %v4538 = vpack.c.b16 %v2602, %v2586
        %v4539 = vpack.c.b16 %v2603, %v2587
        %v4540 = vpack.c.b16 %v2620, %v2604
        %v4541 = vpack.c.b16 %v2621, %v2605
        %v4542 = vpack.c.b16 %v2622, %v2606
        %v4543 = vpack.c.b16 %v2623, %v2607
        %v4544 = vpack.c.b16 %v2624, %v2608
        %v4545 = vpack.c.b16 %v2625, %v2609
        %v4546 = vpack.c.b16 %v2626, %v2610
        %v4547 = vpack.c.b16 %v2627, %v2611
        %v4548 = vpack.c.b16 %v2628, %v2612
        %v4549 = vpack.c.b16 %v2629, %v2613
        %v4550 = vpack.c.b16 %v2630, %v2614
        %v4551 = vpack.c.b16 %v2631, %v2615
        %v4552 = vpack.c.b16 %v2632, %v2616
        %v4553 = vpack.c.b16 %v2633, %v2617
        %v4554 = vpack.c.b16 %v2634, %v2618
        %v4555 = vpack.c.b16 %v2635, %v2619
        %v4556 = vpack.c.b16 %v2652, %v2636
        %v4557 = vpack.c.b16 %v2653, %v2637
        %v4558 = vpack.c.b16 %v2654, %v2638
        %v4559 = vpack.c.b16 %v2655, %v2639
        %v4560 = vpack.c.b16 %v2656, %v2640
        %v4561 = vpack.c.b16 %v2657, %v2641
        %v4562 = vpack.c.b16 %v2658, %v2642
        %v4563 = vpack.c.b16 %v2659, %v2643
        %v4564 = vpack.c.b16 %v2660, %v2644
        %v4565 = vpack.c.b16 %v2661, %v2645
        %v4566 = vpack.c.b16 %v2662, %v2646
        %v4567 = vpack.c.b16 %v2663, %v2647
        %v4568 = vpack.c.b16 %v2664, %v2648
        %v4569 = vpack.c.b16 %v2665, %v2649
        %v4570 = vpack.c.b16 %v2666, %v2650
        %v4571 = vpack.c.b16 %v2667, %v2651
        %v4572 = vpack.c.b16 %v2684, %v2668
        %v4573 = vpack.c.b16 %v2685, %v2669
        %v4574 = vpack.c.b16 %v2686, %v2670
        %v4575 = vpack.c.b16 %v2687, %v2671
        %v4576 = vpack.c.b16 %v2688, %v2672
        %v4577 = vpack.c.b16 %v2689, %v2673
        %v4578 = vpack.c.b16 %v2690, %v2674
        %v4579 = vpack.c.b16 %v2691, %v2675
        %v4580 = vpack.c.b16 %v2692, %v2676
        %v4581 = vpack.c.b16 %v2693, %v2677
        %v4582 = vpack.c.b16 %v2694, %v2678
        %v4583 = vpack.c.b16 %v2695, %v2679
        %v4584 = vpack.c.b16 %v2696, %v2680
        %v4585 = vpack.c.b16 %v2697, %v2681
        %v4586 = vpack.c.b16 %v2698, %v2682
        %v4587 = vpack.c.b16 %v2699, %v2683
        %v4588 = vpack.c.b16 %v2716, %v2700
        %v4589 = vpack.c.b16 %v2717, %v2701
        %v4590 = vpack.c.b16 %v2718, %v2702
        %v4591 = vpack.c.b16 %v2719, %v2703
        %v4592 = vpack.c.b16 %v2720, %v2704
        %v4593 = vpack.c.b16 %v2721, %v2705
        %v4594 = vpack.c.b16 %v2722, %v2706
        %v4595 = vpack.c.b16 %v2723, %v2707
        %v4596 = vpack.c.b16 %v2724, %v2708
        %v4597 = vpack.c.b16 %v2725, %v2709
        %v4598 = vpack.c.b16 %v2726, %v2710
        %v4599 = vpack.c.b16 %v2727, %v2711
        %v4600 = vpack.c.b16 %v2728, %v2712
        %v4601 = vpack.c.b16 %v2729, %v2713
        %v4602 = vpack.c.b16 %v2730, %v2714
        %v4603 = vpack.c.b16 %v2731, %v2715
        %v4604 = vpack.c.b16 %v2748, %v2732
        %v4605 = vpack.c.b16 %v2749, %v2733
        %v4606 = vpack.c.b16 %v2750, %v2734
        %v4607 = vpack.c.b16 %v2751, %v2735
        %v4608 = vpack.c.b16 %v2752, %v2736
        %v4609 = vpack.c.b16 %v2753, %v2737
        %v4610 = vpack.c.b16 %v2754, %v2738
        %v4611 = vpack.c.b16 %v2755, %v2739
        %v4612 = vpack.c.b16 %v2756, %v2740
        %v4613 = vpack.c.b16 %v2757, %v2741
        %v4614 = vpack.c.b16 %v2758, %v2742
        %v4615 = vpack.c.b16 %v2759, %v2743
        %v4616 = vpack.c.b16 %v2760, %v2744
        %v4617 = vpack.c.b16 %v2761, %v2745
        %v4618 = vpack.c.b16 %v2762, %v2746
        %v4619 = vpack.c.b16 %v2763, %v2747
        %v4620 = vpack.c.b16 %v2780, %v2764
        %v4621 = vpack.c.b16 %v2781, %v2765
        %v4622 = vpack.c.b16 %v2782, %v2766
        %v4623 = vpack.c.b16 %v2783, %v2767
        %v4624 = vpack.c.b16 %v2784, %v2768
        %v4625 = vpack.c.b16 %v2785, %v2769
        %v4626 = vpack.c.b16 %v2786, %v2770
        %v4627 = vpack.c.b16 %v2787, %v2771
        %v4628 = vpack.c.b16 %v2788, %v2772
        %v4629 = vpack.c.b16 %v2789, %v2773
        %v4630 = vpack.c.b16 %v2790, %v2774
        %v4631 = vpack.c.b16 %v2791, %v2775
        %v4632 = vpack.c.b16 %v2792, %v2776
        %v4633 = vpack.c.b16 %v2793, %v2777
        %v4634 = vpack.c.b16 %v2794, %v2778
        %v4635 = vpack.c.b16 %v2795, %v2779
        %v4636 = vpack.c.b16 %v2812, %v2796
        %v4637 = vpack.c.b16 %v2813, %v2797
        %v4638 = vpack.c.b16 %v2814, %v2798
        %v4639 = vpack.c.b16 %v2815, %v2799
        %v4640 = vpack.c.b16 %v2816, %v2800
        %v4641 = vpack.c.b16 %v2817, %v2801
        %v4642 = vpack.c.b16 %v2818, %v2802
        %v4643 = vpack.c.b16 %v2819, %v2803
        %v4644 = vpack.c.b16 %v2820, %v2804
        %v4645 = vpack.c.b16 %v2821, %v2805
        %v4646 = vpack.c.b16 %v2822, %v2806
        %v4647 = vpack.c.b16 %v2823, %v2807
        %v4648 = vpack.c.b16 %v2824, %v2808
        %v4649 = vpack.c.b16 %v2825, %v2809
        %v4650 = vpack.c.b16 %v2826, %v2810
        %v4651 = vpack.c.b16 %v2827, %v2811
        %v4652 = vpack.c.b16 %v2844, %v2828
        %v4653 = vpack.c.b16 %v2845, %v2829
        %v4654 = vpack.c.b16 %v2846, %v2830
        %v4655 = vpack.c.b16 %v2847, %v2831
        %v4656 = vpack.c.b16 %v2848, %v2832
        %v4657 = vpack.c.b16 %v2849, %v2833
        %v4658 = vpack.c.b16 %v2850, %v2834
        %v4659 = vpack.c.b16 %v2851, %v2835
        %v4660 = vpack.c.b16 %v2852, %v2836
        %v4661 = vpack.c.b16 %v2853, %v2837
        %v4662 = vpack.c.b16 %v2854, %v2838
        %v4663 = vpack.c.b16 %v2855, %v2839
        %v4664 = vpack.c.b16 %v2856, %v2840
        %v4665 = vpack.c.b16 %v2857, %v2841
        %v4666 = vpack.c.b16 %v2858, %v2842
        %v4667 = vpack.c.b16 %v2859, %v2843
        %v4668 = vpack.c.b16 %v2876, %v2860
        %v4669 = vpack.c.b16 %v2877, %v2861
        %v4670 = vpack.c.b16 %v2878, %v2862
        %v4671 = vpack.c.b16 %v2879, %v2863
        %v4672 = vpack.c.b16 %v2880, %v2864
        %v4673 = vpack.c.b16 %v2881, %v2865
        %v4674 = vpack.c.b16 %v2882, %v2866
        %v4675 = vpack.c.b16 %v2883, %v2867
        %v4676 = vpack.c.b16 %v2884, %v2868
        %v4677 = vpack.c.b16 %v2885, %v2869
        %v4678 = vpack.c.b16 %v2886, %v2870
        %v4679 = vpack.c.b16 %v2887, %v2871
        %v4680 = vpack.c.b16 %v2888, %v2872
        %v4681 = vpack.c.b16 %v2889, %v2873
        %v4682 = vpack.c.b16 %v2890, %v2874
        %v4683 = vpack.c.b16 %v2891, %v2875
        %v4684 = vpack.c.b16 %v2908, %v2892
        %v4685 = vpack.c.b16 %v2909, %v2893
        %v4686 = vpack.c.b16 %v2910, %v2894
        %v4687 = vpack.c.b16 %v2911, %v2895
        %v4688 = vpack.c.b16 %v2912, %v2896
        %v4689 = vpack.c.b16 %v2913, %v2897
        %v4690 = vpack.c.b16 %v2914, %v2898
        %v4691 = vpack.c.b16 %v2915, %v2899
        %v4692 = vpack.c.b16 %v2916, %v2900
        %v4693 = vpack.c.b16 %v2917, %v2901
        %v4694 = vpack.c.b16 %v2918, %v2902
        %v4695 = vpack.c.b16 %v2919, %v2903
        %v4696 = vpack.c.b16 %v2920, %v2904
        %v4697 = vpack.c.b16 %v2921, %v2905
        %v4698 = vpack.c.b16 %v2922, %v2906
        %v4699 = vpack.c.b16 %v2923, %v2907
        %v4700 = vpack.c.b16 %v2940, %v2924
        %v4701 = vpack.c.b16 %v2941, %v2925
        %v4702 = vpack.c.b16 %v2942, %v2926
        %v4703 = vpack.c.b16 %v2943, %v2927
        %v4704 = vpack.c.b16 %v2944, %v2928
        %v4705 = vpack.c.b16 %v2945, %v2929
        %v4706 = vpack.c.b16 %v2946, %v2930
        %v4707 = vpack.c.b16 %v2947, %v2931
        %v4708 = vpack.c.b16 %v2948, %v2932
        %v4709 = vpack.c.b16 %v2949, %v2933
        %v4710 = vpack.c.b16 %v2950, %v2934
        %v4711 = vpack.c.b16 %v2951, %v2935
        %v4712 = vpack.c.b16 %v2952, %v2936
        %v4713 = vpack.c.b16 %v2953, %v2937
        %v4714 = vpack.c.b16 %v2954, %v2938
        %v4715 = vpack.c.b16 %v2955, %v2939
        %v4716 = vpack.c.b16 %v2972, %v2956
        %v4717 = vpack.c.b16 %v2973, %v2957
        %v4718 = vpack.c.b16 %v2974, %v2958
        %v4719 = vpack.c.b16 %v2975, %v2959
        %v4720 = vpack.c.b16 %v2976, %v2960
        %v4721 = vpack.c.b16 %v2977, %v2961
        %v4722 = vpack.c.b16 %v2978, %v2962
        %v4723 = vpack.c.b16 %v2979, %v2963
        %v4724 = vpack.c.b16 %v2980, %v2964
        %v4725 = vpack.c.b16 %v2981, %v2965
        %v4726 = vpack.c.b16 %v2982, %v2966
        %v4727 = vpack.c.b16 %v2983, %v2967
        %v4728 = vpack.c.b16 %v2984, %v2968
        %v4729 = vpack.c.b16 %v2985, %v2969
        %v4730 = vpack.c.b16 %v2986, %v2970
        %v4731 = vpack.c.b16 %v2987, %v2971
        %v4732 = vpack.c.b16 %v3004, %v2988
        %v4733 = vpack.c.b16 %v3005, %v2989
        %v4734 = vpack.c.b16 %v3006, %v2990
        %v4735 = vpack.c.b16 %v3007, %v2991
        %v4736 = vpack.c.b16 %v3008, %v2992
        %v4737 = vpack.c.b16 %v3009, %v2993
        %v4738 = vpack.c.b16 %v3010, %v2994
        %v4739 = vpack.c.b16 %v3011, %v2995
        %v4740 = vpack.c.b16 %v3012, %v2996
        %v4741 = vpack.c.b16 %v3013, %v2997
        %v4742 = vpack.c.b16 %v3014, %v2998
        %v4743 = vpack.c.b16 %v3015, %v2999
        %v4744 = vpack.c.b16 %v3016, %v3000
        %v4745 = vpack.c.b16 %v3017, %v3001
        %v4746 = vpack.c.b16 %v3018, %v3002
        %v4747 = vpack.c.b16 %v3019, %v3003
        %v4748 = vpack.c.b16 %v3036, %v3020
        %v4749 = vpack.c.b16 %v3037, %v3021
        %v4750 = vpack.c.b16 %v3038, %v3022
        %v4751 = vpack.c.b16 %v3039, %v3023
        %v4752 = vpack.c.b16 %v3040, %v3024
        %v4753 = vpack.c.b16 %v3041, %v3025
        %v4754 = vpack.c.b16 %v3042, %v3026
        %v4755 = vpack.c.b16 %v3043, %v3027
        %v4756 = vpack.c.b16 %v3044, %v3028
        %v4757 = vpack.c.b16 %v3045, %v3029
        %v4758 = vpack.c.b16 %v3046, %v3030
        %v4759 = vpack.c.b16 %v3047, %v3031
        %v4760 = vpack.c.b16 %v3048, %v3032
        %v4761 = vpack.c.b16 %v3049, %v3033
        %v4762 = vpack.c.b16 %v3050, %v3034
        %v4763 = vpack.c.b16 %v3051, %v3035
        %v4764 = vpack.c.b16 %v3068, %v3052
        %v4765 = vpack.c.b16 %v3069, %v3053
        %v4766 = vpack.c.b16 %v3070, %v3054
        %v4767 = vpack.c.b16 %v3071, %v3055
        %v4768 = vpack.c.b16 %v3072, %v3056
        %v4769 = vpack.c.b16 %v3073, %v3057
        %v4770 = vpack.c.b16 %v3074, %v3058
        %v4771 = vpack.c.b16 %v3075, %v3059
        %v4772 = vpack.c.b16 %v3076, %v3060
        %v4773 = vpack.c.b16 %v3077, %v3061
        %v4774 = vpack.c.b16 %v3078, %v3062
        %v4775 = vpack.c.b16 %v3079, %v3063
        %v4776 = vpack.c.b16 %v3080, %v3064
        %v4777 = vpack.c.b16 %v3081, %v3065
        %v4778 = vpack.c.b16 %v3082, %v3066
        %v4779 = vpack.c.b16 %v3083, %v3067
        %v4780 = vpack.c.b16 %v3100, %v3084
        %v4781 = vpack.c.b16 %v3101, %v3085
        %v4782 = vpack.c.b16 %v3102, %v3086
        %v4783 = vpack.c.b16 %v3103, %v3087
        %v4784 = vpack.c.b16 %v3104, %v3088
        %v4785 = vpack.c.b16 %v3105, %v3089
        %v4786 = vpack.c.b16 %v3106, %v3090
        %v4787 = vpack.c.b16 %v3107, %v3091
        %v4788 = vpack.c.b16 %v3108, %v3092
        %v4789 = vpack.c.b16 %v3109, %v3093
        %v4790 = vpack.c.b16 %v3110, %v3094
        %v4791 = vpack.c.b16 %v3111, %v3095
        %v4792 = vpack.c.b16 %v3112, %v3096
        %v4793 = vpack.c.b16 %v3113, %v3097
        %v4794 = vpack.c.b16 %v3114, %v3098
        %v4795 = vpack.c.b16 %v3115, %v3099
        %v4796 = vpack.c.b16 %v3132, %v3116
        %v4797 = vpack.c.b16 %v3133, %v3117
        %v4798 = vpack.c.b16 %v3134, %v3118
        %v4799 = vpack.c.b16 %v3135, %v3119
        %v4800 = vpack.c.b16 %v3136, %v3120
        %v4801 = vpack.c.b16 %v3137, %v3121
        %v4802 = vpack.c.b16 %v3138, %v3122
        %v4803 = vpack.c.b16 %v3139, %v3123
        %v4804 = vpack.c.b16 %v3140, %v3124
        %v4805 = vpack.c.b16 %v3141, %v3125
        %v4806 = vpack.c.b16 %v3142, %v3126
        %v4807 = vpack.c.b16 %v3143, %v3127
        %v4808 = vpack.c.b16 %v3144, %v3128
        %v4809 = vpack.c.b16 %v3145, %v3129
        %v4810 = vpack.c.b16 %v3146, %v3130
        %v4811 = vpack.c.b16 %v3147, %v3131
        %v4812 = vpack.c.b16 %v3164, %v3148
        %v4813 = vpack.c.b16 %v3165, %v3149
        %v4814 = vpack.c.b16 %v3166, %v3150
        %v4815 = vpack.c.b16 %v3167, %v3151
        %v4816 = vpack.c.b16 %v3168, %v3152
        %v4817 = vpack.c.b16 %v3169, %v3153
        %v4818 = vpack.c.b16 %v3170, %v3154
        %v4819 = vpack.c.b16 %v3171, %v3155
        %v4820 = vpack.c.b16 %v3172, %v3156
        %v4821 = vpack.c.b16 %v3173, %v3157
        %v4822 = vpack.c.b16 %v3174, %v3158
        %v4823 = vpack.c.b16 %v3175, %v3159
        %v4824 = vpack.c.b16 %v3176, %v3160
        %v4825 = vpack.c.b16 %v3177, %v3161
        %v4826 = vpack.c.b16 %v3178, %v3162
        %v4827 = vpack.c.b16 %v3179, %v3163
        %v4828 = vpack.c.b16 %v3196, %v3180
        %v4829 = vpack.c.b16 %v3197, %v3181
        %v4830 = vpack.c.b16 %v3198, %v3182
        %v4831 = vpack.c.b16 %v3199, %v3183
        %v4832 = vpack.c.b16 %v3200, %v3184
        %v4833 = vpack.c.b16 %v3201, %v3185
        %v4834 = vpack.c.b16 %v3202, %v3186
        %v4835 = vpack.c.b16 %v3203, %v3187
        %v4836 = vpack.c.b16 %v3204, %v3188
        %v4837 = vpack.c.b16 %v3205, %v3189
        %v4838 = vpack.c.b16 %v3206, %v3190
        %v4839 = vpack.c.b16 %v3207, %v3191
        %v4840 = vpack.c.b16 %v3208, %v3192
        %v4841 = vpack.c.b16 %v3209, %v3193
        %v4842 = vpack.c.b16 %v3210, %v3194
        %v4843 = vpack.c.b16 %v3211, %v3195
        %v4844 = vpack.c.b16 %v3228, %v3212
        %v4845 = vpack.c.b16 %v3229, %v3213
        %v4846 = vpack.c.b16 %v3230, %v3214
        %v4847 = vpack.c.b16 %v3231, %v3215
        %v4848 = vpack.c.b16 %v3232, %v3216
        %v4849 = vpack.c.b16 %v3233, %v3217
        %v4850 = vpack.c.b16 %v3234, %v3218
        %v4851 = vpack.c.b16 %v3235, %v3219
        %v4852 = vpack.c.b16 %v3236, %v3220
        %v4853 = vpack.c.b16 %v3237, %v3221
        %v4854 = vpack.c.b16 %v3238, %v3222
        %v4855 = vpack.c.b16 %v3239, %v3223
        %v4856 = vpack.c.b16 %v3240, %v3224
        %v4857 = vpack.c.b16 %v3241, %v3225
        %v4858 = vpack.c.b16 %v3242, %v3226
        %v4859 = vpack.c.b16 %v3243, %v3227
        %v4860 = vpack.c.b16 %v3260, %v3244
        %v4861 = vpack.c.b16 %v3261, %v3245
        %v4862 = vpack.c.b16 %v3262, %v3246
        %v4863 = vpack.c.b16 %v3263, %v3247
        %v4864 = vpack.c.b16 %v3264, %v3248
        %v4865 = vpack.c.b16 %v3265, %v3249
        %v4866 = vpack.c.b16 %v3266, %v3250
        %v4867 = vpack.c.b16 %v3267, %v3251
        %v4868 = vpack.c.b16 %v3268, %v3252
        %v4869 = vpack.c.b16 %v3269, %v3253
        %v4870 = vpack.c.b16 %v3270, %v3254
        %v4871 = vpack.c.b16 %v3271, %v3255
        %v4872 = vpack.c.b16 %v3272, %v3256
        %v4873 = vpack.c.b16 %v3273, %v3257
        %v4874 = vpack.c.b16 %v3274, %v3258
        %v4875 = vpack.c.b16 %v3275, %v3259
        %v4876 = vpack.c.b16 %v3292, %v3276
        %v4877 = vpack.c.b16 %v3293, %v3277
        %v4878 = vpack.c.b16 %v3294, %v3278
        %v4879 = vpack.c.b16 %v3295, %v3279
        %v4880 = vpack.c.b16 %v3296, %v3280
        %v4881 = vpack.c.b16 %v3297, %v3281
        %v4882 = vpack.c.b16 %v3298, %v3282
        %v4883 = vpack.c.b16 %v3299, %v3283
        %v4884 = vpack.c.b16 %v3300, %v3284
        %v4885 = vpack.c.b16 %v3301, %v3285
        %v4886 = vpack.c.b16 %v3302, %v3286
        %v4887 = vpack.c.b16 %v3303, %v3287
        %v4888 = vpack.c.b16 %v3304, %v3288
        %v4889 = vpack.c.b16 %v3305, %v3289
        %v4890 = vpack.c.b16 %v3306, %v3290
        %v4891 = vpack.c.b16 %v3307, %v3291
        %v4892 = vpack.c.b16 %v3324, %v3308
        %v4893 = vpack.c.b16 %v3325, %v3309
        %v4894 = vpack.c.b16 %v3326, %v3310
        %v4895 = vpack.c.b16 %v3327, %v3311
        %v4896 = vpack.c.b16 %v3328, %v3312
        %v4897 = vpack.c.b16 %v3329, %v3313
        %v4898 = vpack.c.b16 %v3330, %v3314
        %v4899 = vpack.c.b16 %v3331, %v3315
        %v4900 = vpack.c.b16 %v3332, %v3316
        %v4901 = vpack.c.b16 %v3333, %v3317
        %v4902 = vpack.c.b16 %v3334, %v3318
        %v4903 = vpack.c.b16 %v3335, %v3319
        %v4904 = vpack.c.b16 %v3336, %v3320
        %v4905 = vpack.c.b16 %v3337, %v3321
        %v4906 = vpack.c.b16 %v3338, %v3322
        %v4907 = vpack.c.b16 %v3339, %v3323
        %v4908 = vpack.c.b16 %v3356, %v3340
        %v4909 = vpack.c.b16 %v3357, %v3341
        %v4910 = vpack.c.b16 %v3358, %v3342
        %v4911 = vpack.c.b16 %v3359, %v3343
        %v4912 = vpack.c.b16 %v3360, %v3344
        %v4913 = vpack.c.b16 %v3361, %v3345
        %v4914 = vpack.c.b16 %v3362, %v3346
        %v4915 = vpack.c.b16 %v3363, %v3347
        %v4916 = vpack.c.b16 %v3364, %v3348
        %v4917 = vpack.c.b16 %v3365, %v3349
        %v4918 = vpack.c.b16 %v3366, %v3350
        %v4919 = vpack.c.b16 %v3367, %v3351
        %v4920 = vpack.c.b16 %v3368, %v3352
        %v4921 = vpack.c.b16 %v3369, %v3353
        %v4922 = vpack.c.b16 %v3370, %v3354
        %v4923 = vpack.c.b16 %v3371, %v3355
        %v4924 = vpack.c.b16 %v3388, %v3372
        %v4925 = vpack.c.b16 %v3389, %v3373
        %v4926 = vpack.c.b16 %v3390, %v3374
        %v4927 = vpack.c.b16 %v3391, %v3375
        %v4928 = vpack.c.b16 %v3392, %v3376
        %v4929 = vpack.c.b16 %v3393, %v3377
        %v4930 = vpack.c.b16 %v3394, %v3378
        %v4931 = vpack.c.b16 %v3395, %v3379
        %v4932 = vpack.c.b16 %v3396, %v3380
        %v4933 = vpack.c.b16 %v3397, %v3381
        %v4934 = vpack.c.b16 %v3398, %v3382
        %v4935 = vpack.c.b16 %v3399, %v3383
        %v4936 = vpack.c.b16 %v3400, %v3384
        %v4937 = vpack.c.b16 %v3401, %v3385
        %v4938 = vpack.c.b16 %v3402, %v3386
        %v4939 = vpack.c.b16 %v3403, %v3387
        %v4940 = vpack.c.b16 %v3420, %v3404
        %v4941 = vpack.c.b16 %v3421, %v3405
        %v4942 = vpack.c.b16 %v3422, %v3406
        %v4943 = vpack.c.b16 %v3423, %v3407
        %v4944 = vpack.c.b16 %v3424, %v3408
        %v4945 = vpack.c.b16 %v3425, %v3409
        %v4946 = vpack.c.b16 %v3426, %v3410
        %v4947 = vpack.c.b16 %v3427, %v3411
        %v4948 = vpack.c.b16 %v3428, %v3412
        %v4949 = vpack.c.b16 %v3429, %v3413
        %v4950 = vpack.c.b16 %v3430, %v3414
        %v4951 = vpack.c.b16 %v3431, %v3415
        %v4952 = vpack.c.b16 %v3432, %v3416
        %v4953 = vpack.c.b16 %v3433, %v3417
        %v4954 = vpack.c.b16 %v3434, %v3418
        %v4955 = vpack.c.b16 %v3435, %v3419
        %v4956 = vpack.c.b16 %v3452, %v3436
        %v4957 = vpack.c.b16 %v3453, %v3437
        %v4958 = vpack.c.b16 %v3454, %v3438
        %v4959 = vpack.c.b16 %v3455, %v3439
        %v4960 = vpack.c.b16 %v3456, %v3440
        %v4961 = vpack.c.b16 %v3457, %v3441
        %v4962 = vpack.c.b16 %v3458, %v3442
        %v4963 = vpack.c.b16 %v3459, %v3443
        %v4964 = vpack.c.b16 %v3460, %v3444
        %v4965 = vpack.c.b16 %v3461, %v3445
        %v4966 = vpack.c.b16 %v3462, %v3446
        %v4967 = vpack.c.b16 %v3463, %v3447
        %v4968 = vpack.c.b16 %v3464, %v3448
        %v4969 = vpack.c.b16 %v3465, %v3449
        %v4970 = vpack.c.b16 %v3466, %v3450
        %v4971 = vpack.c.b16 %v3467, %v3451
        %v4972 = vpack.c.b16 %v3484, %v3468
        %v4973 = vpack.c.b16 %v3485, %v3469
        %v4974 = vpack.c.b16 %v3486, %v3470
        %v4975 = vpack.c.b16 %v3487, %v3471
        %v4976 = vpack.c.b16 %v3488, %v3472
        %v4977 = vpack.c.b16 %v3489, %v3473
        %v4978 = vpack.c.b16 %v3490, %v3474
        %v4979 = vpack.c.b16 %v3491, %v3475
        %v4980 = vpack.c.b16 %v3492, %v3476
        %v4981 = vpack.c.b16 %v3493, %v3477
        %v4982 = vpack.c.b16 %v3494, %v3478
        %v4983 = vpack.c.b16 %v3495, %v3479
        %v4984 = vpack.c.b16 %v3496, %v3480
        %v4985 = vpack.c.b16 %v3497, %v3481
        %v4986 = vpack.c.b16 %v3498, %v3482
        %v4987 = vpack.c.b16 %v3499, %v3483
        %v4988 = vpack.c.b16 %v3516, %v3500
        %v4989 = vpack.c.b16 %v3517, %v3501
        %v4990 = vpack.c.b16 %v3518, %v3502
        %v4991 = vpack.c.b16 %v3519, %v3503
        %v4992 = vpack.c.b16 %v3520, %v3504
        %v4993 = vpack.c.b16 %v3521, %v3505
        %v4994 = vpack.c.b16 %v3522, %v3506
        %v4995 = vpack.c.b16 %v3523, %v3507
        %v4996 = vpack.c.b16 %v3524, %v3508
        %v4997 = vpack.c.b16 %v3525, %v3509
        %v4998 = vpack.c.b16 %v3526, %v3510
        %v4999 = vpack.c.b16 %v3527, %v3511
        %v5000 = vpack.c.b16 %v3528, %v3512
        %v5001 = vpack.c.b16 %v3529, %v3513
        %v5002 = vpack.c.b16 %v3530, %v3514
        %v5003 = vpack.c.b16 %v3531, %v3515
        %v5004 = vpack.c.b16 %v3548, %v3532
        %v5005 = vpack.c.b16 %v3549, %v3533
        %v5006 = vpack.c.b16 %v3550, %v3534
        %v5007 = vpack.c.b16 %v3551, %v3535
        %v5008 = vpack.c.b16 %v3552, %v3536
        %v5009 = vpack.c.b16 %v3553, %v3537
        %v5010 = vpack.c.b16 %v3554, %v3538
        %v5011 = vpack.c.b16 %v3555, %v3539
        %v5012 = vpack.c.b16 %v3556, %v3540
        %v5013 = vpack.c.b16 %v3557, %v3541
        %v5014 = vpack.c.b16 %v3558, %v3542
        %v5015 = vpack.c.b16 %v3559, %v3543
        %v5016 = vpack.c.b16 %v3560, %v3544
        %v5017 = vpack.c.b16 %v3561, %v3545
        %v5018 = vpack.c.b16 %v3562, %v3546
        %v5019 = vpack.c.b16 %v3563, %v3547
        %v5020 = vpack.c.b16 %v3580, %v3564
        %v5021 = vpack.c.b16 %v3581, %v3565
        %v5022 = vpack.c.b16 %v3582, %v3566
        %v5023 = vpack.c.b16 %v3583, %v3567
        %v5024 = vpack.c.b16 %v3584, %v3568
        %v5025 = vpack.c.b16 %v3585, %v3569
        %v5026 = vpack.c.b16 %v3586, %v3570
        %v5027 = vpack.c.b16 %v3587, %v3571
        %v5028 = vpack.c.b16 %v3588, %v3572
        %v5029 = vpack.c.b16 %v3589, %v3573
        %v5030 = vpack.c.b16 %v3590, %v3574
        %v5031 = vpack.c.b16 %v3591, %v3575
        %v5032 = vpack.c.b16 %v3592, %v3576
        %v5033 = vpack.c.b16 %v3593, %v3577
        %v5034 = vpack.c.b16 %v3594, %v3578
        %v5035 = vpack.c.b16 %v3595, %v3579
        %v5036 = vpack.c.b16 %v3612, %v3596
        %v5037 = vpack.c.b16 %v3613, %v3597
        %v5038 = vpack.c.b16 %v3614, %v3598
        %v5039 = vpack.c.b16 %v3615, %v3599
        %v5040 = vpack.c.b16 %v3616, %v3600
        %v5041 = vpack.c.b16 %v3617, %v3601
        %v5042 = vpack.c.b16 %v3618, %v3602
        %v5043 = vpack.c.b16 %v3619, %v3603
        %v5044 = vpack.c.b16 %v3620, %v3604
        %v5045 = vpack.c.b16 %v3621, %v3605
        %v5046 = vpack.c.b16 %v3622, %v3606
        %v5047 = vpack.c.b16 %v3623, %v3607
        %v5048 = vpack.c.b16 %v3624, %v3608
        %v5049 = vpack.c.b16 %v3625, %v3609
        %v5050 = vpack.c.b16 %v3626, %v3610
        %v5051 = vpack.c.b16 %v3627, %v3611
        %v5052 = vpack.c.b16 %v3644, %v3628
        %v5053 = vpack.c.b16 %v3645, %v3629
        %v5054 = vpack.c.b16 %v3646, %v3630
        %v5055 = vpack.c.b16 %v3647, %v3631
        %v5056 = vpack.c.b16 %v3648, %v3632
        %v5057 = vpack.c.b16 %v3649, %v3633
        %v5058 = vpack.c.b16 %v3650, %v3634
        %v5059 = vpack.c.b16 %v3651, %v3635
        %v5060 = vpack.c.b16 %v3652, %v3636
        %v5061 = vpack.c.b16 %v3653, %v3637
        %v5062 = vpack.c.b16 %v3654, %v3638
        %v5063 = vpack.c.b16 %v3655, %v3639
        %v5064 = vpack.c.b16 %v3656, %v3640
        %v5065 = vpack.c.b16 %v3657, %v3641
        %v5066 = vpack.c.b16 %v3658, %v3642
        %v5067 = vpack.c.b16 %v3659, %v3643
        %v5068 = vpack.c.b16 %v3676, %v3660
        %v5069 = vpack.c.b16 %v3677, %v3661
        %v5070 = vpack.c.b16 %v3678, %v3662
        %v5071 = vpack.c.b16 %v3679, %v3663
        %v5072 = vpack.c.b16 %v3680, %v3664
        %v5073 = vpack.c.b16 %v3681, %v3665
        %v5074 = vpack.c.b16 %v3682, %v3666
        %v5075 = vpack.c.b16 %v3683, %v3667
        %v5076 = vpack.c.b16 %v3684, %v3668
        %v5077 = vpack.c.b16 %v3685, %v3669
        %v5078 = vpack.c.b16 %v3686, %v3670
        %v5079 = vpack.c.b16 %v3687, %v3671
        %v5080 = vpack.c.b16 %v3688, %v3672
        %v5081 = vpack.c.b16 %v3689, %v3673
        %v5082 = vpack.c.b16 %v3690, %v3674
        %v5083 = vpack.c.b16 %v3691, %v3675
        %v5084 = vpack.c.b16 %v3708, %v3692
        %v5085 = vpack.c.b16 %v3709, %v3693
        %v5086 = vpack.c.b16 %v3710, %v3694
        %v5087 = vpack.c.b16 %v3711, %v3695
        %v5088 = vpack.c.b16 %v3712, %v3696
        %v5089 = vpack.c.b16 %v3713, %v3697
        %v5090 = vpack.c.b16 %v3714, %v3698
        %v5091 = vpack.c.b16 %v3715, %v3699
        %v5092 = vpack.c.b16 %v3716, %v3700
        %v5093 = vpack.c.b16 %v3717, %v3701
        %v5094 = vpack.c.b16 %v3718, %v3702
        %v5095 = vpack.c.b16 %v3719, %v3703
        %v5096 = vpack.c.b16 %v3720, %v3704
        %v5097 = vpack.c.b16 %v3721, %v3705
        %v5098 = vpack.c.b16 %v3722, %v3706
        %v5099 = vpack.c.b16 %v3723, %v3707
        %v5100 = vpack.c.b16 %v3740, %v3724
        %v5101 = vpack.c.b16 %v3741, %v3725
        %v5102 = vpack.c.b16 %v3742, %v3726
        %v5103 = vpack.c.b16 %v3743, %v3727
        %v5104 = vpack.c.b16 %v3744, %v3728
        %v5105 = vpack.c.b16 %v3745, %v3729
        %v5106 = vpack.c.b16 %v3746, %v3730
        %v5107 = vpack.c.b16 %v3747, %v3731
        %v5108 = vpack.c.b16 %v3748, %v3732
        %v5109 = vpack.c.b16 %v3749, %v3733
        %v5110 = vpack.c.b16 %v3750, %v3734
        %v5111 = vpack.c.b16 %v3751, %v3735
        %v5112 = vpack.c.b16 %v3752, %v3736
        %v5113 = vpack.c.b16 %v3753, %v3737
        %v5114 = vpack.c.b16 %v3754, %v3738
        %v5115 = vpack.c.b16 %v3755, %v3739
        %v5116 = vpack.c.b16 %v3772, %v3756
        %v5117 = vpack.c.b16 %v3773, %v3757
        %v5118 = vpack.c.b16 %v3774, %v3758
        %v5119 = vpack.c.b16 %v3775, %v3759
        %v5120 = vpack.c.b16 %v3776, %v3760
        %v5121 = vpack.c.b16 %v3777, %v3761
        %v5122 = vpack.c.b16 %v3778, %v3762
        %v5123 = vpack.c.b16 %v3779, %v3763
        %v5124 = vpack.c.b16 %v3780, %v3764
        %v5125 = vpack.c.b16 %v3781, %v3765
        %v5126 = vpack.c.b16 %v3782, %v3766
        %v5127 = vpack.c.b16 %v3783, %v3767
        %v5128 = vpack.c.b16 %v3784, %v3768
        %v5129 = vpack.c.b16 %v3785, %v3769
        %v5130 = vpack.c.b16 %v3786, %v3770
        %v5131 = vpack.c.b16 %v3787, %v3771
        %v5132 = vpack.c.b16 %v3804, %v3788
        %v5133 = vpack.c.b16 %v3805, %v3789
        %v5134 = vpack.c.b16 %v3806, %v3790
        %v5135 = vpack.c.b16 %v3807, %v3791
        %v5136 = vpack.c.b16 %v3808, %v3792
        %v5137 = vpack.c.b16 %v3809, %v3793
        %v5138 = vpack.c.b16 %v3810, %v3794
        %v5139 = vpack.c.b16 %v3811, %v3795
        %v5140 = vpack.c.b16 %v3812, %v3796
        %v5141 = vpack.c.b16 %v3813, %v3797
        %v5142 = vpack.c.b16 %v3814, %v3798
        %v5143 = vpack.c.b16 %v3815, %v3799
        %v5144 = vpack.c.b16 %v3816, %v3800
        %v5145 = vpack.c.b16 %v3817, %v3801
        %v5146 = vpack.c.b16 %v3818, %v3802
        %v5147 = vpack.c.b16 %v3819, %v3803
        %v5148 = vpack.c.b16 %v3836, %v3820
        %v5149 = vpack.c.b16 %v3837, %v3821
        %v5150 = vpack.c.b16 %v3838, %v3822
        %v5151 = vpack.c.b16 %v3839, %v3823
        %v5152 = vpack.c.b16 %v3840, %v3824
        %v5153 = vpack.c.b16 %v3841, %v3825
        %v5154 = vpack.c.b16 %v3842, %v3826
        %v5155 = vpack.c.b16 %v3843, %v3827
        %v5156 = vpack.c.b16 %v3844, %v3828
        %v5157 = vpack.c.b16 %v3845, %v3829
        %v5158 = vpack.c.b16 %v3846, %v3830
        %v5159 = vpack.c.b16 %v3847, %v3831
        %v5160 = vpack.c.b16 %v3848, %v3832
        %v5161 = vpack.c.b16 %v3849, %v3833
        %v5162 = vpack.c.b16 %v3850, %v3834
        %v5163 = vpack.c.b16 %v3851, %v3835
        %v5164 = vpack.c.b16 %v3868, %v3852
        %v5165 = vpack.c.b16 %v3869, %v3853
        %v5166 = vpack.c.b16 %v3870, %v3854
        %v5167 = vpack.c.b16 %v3871, %v3855
        %v5168 = vpack.c.b16 %v3872, %v3856
        %v5169 = vpack.c.b16 %v3873, %v3857
        %v5170 = vpack.c.b16 %v3874, %v3858
        %v5171 = vpack.c.b16 %v3875, %v3859
        %v5172 = vpack.c.b16 %v3876, %v3860
        %v5173 = vpack.c.b16 %v3877, %v3861
        %v5174 = vpack.c.b16 %v3878, %v3862
        %v5175 = vpack.c.b16 %v3879, %v3863
        %v5176 = vpack.c.b16 %v3880, %v3864
        %v5177 = vpack.c.b16 %v3881, %v3865
        %v5178 = vpack.c.b16 %v3882, %v3866
        %v5179 = vpack.c.b16 %v3883, %v3867
        %v5180 = vpack.c.b16 %v3900, %v3884
        %v5181 = vpack.c.b16 %v3901, %v3885
        %v5182 = vpack.c.b16 %v3902, %v3886
        %v5183 = vpack.c.b16 %v3903, %v3887
        %v5184 = vpack.c.b16 %v3904, %v3888
        %v5185 = vpack.c.b16 %v3905, %v3889
        %v5186 = vpack.c.b16 %v3906, %v3890
        %v5187 = vpack.c.b16 %v3907, %v3891
        %v5188 = vpack.c.b16 %v3908, %v3892
        %v5189 = vpack.c.b16 %v3909, %v3893
        %v5190 = vpack.c.b16 %v3910, %v3894
        %v5191 = vpack.c.b16 %v3911, %v3895
        %v5192 = vpack.c.b16 %v3912, %v3896
        %v5193 = vpack.c.b16 %v3913, %v3897
        %v5194 = vpack.c.b16 %v3914, %v3898
        %v5195 = vpack.c.b16 %v3915, %v3899
        %v5196 = vpack.c.b16 %v3932, %v3916
        %v5197 = vpack.c.b16 %v3933, %v3917
        %v5198 = vpack.c.b16 %v3934, %v3918
        %v5199 = vpack.c.b16 %v3935, %v3919
        %v5200 = vpack.c.b16 %v3936, %v3920
        %v5201 = vpack.c.b16 %v3937, %v3921
        %v5202 = vpack.c.b16 %v3938, %v3922
        %v5203 = vpack.c.b16 %v3939, %v3923
        %v5204 = vpack.c.b16 %v3940, %v3924
        %v5205 = vpack.c.b16 %v3941, %v3925
        %v5206 = vpack.c.b16 %v3942, %v3926
        %v5207 = vpack.c.b16 %v3943, %v3927
        %v5208 = vpack.c.b16 %v3944, %v3928
        %v5209 = vpack.c.b16 %v3945, %v3929
        %v5210 = vpack.c.b16 %v3946, %v3930
        %v5211 = vpack.c.b16 %v3947, %v3931
        %v5212 = vpack.c.b16 %v3964, %v3948
        %v5213 = vpack.c.b16 %v3965, %v3949
        %v5214 = vpack.c.b16 %v3966, %v3950
        %v5215 = vpack.c.b16 %v3967, %v3951
        %v5216 = vpack.c.b16 %v3968, %v3952
        %v5217 = vpack.c.b16 %v3969, %v3953
        %v5218 = vpack.c.b16 %v3970, %v3954
        %v5219 = vpack.c.b16 %v3971, %v3955
        %v5220 = vpack.c.b16 %v3972, %v3956
        %v5221 = vpack.c.b16 %v3973, %v3957
        %v5222 = vpack.c.b16 %v3974, %v3958
        %v5223 = vpack.c.b16 %v3975, %v3959
        %v5224 = vpack.c.b16 %v3976, %v3960
        %v5225 = vpack.c.b16 %v3977, %v3961
        %v5226 = vpack.c.b16 %v3978, %v3962
        %v5227 = vpack.c.b16 %v3979, %v3963
        %v5228 = vpack.c.b16 %v3996, %v3980
        %v5229 = vpack.c.b16 %v3997, %v3981
        %v5230 = vpack.c.b16 %v3998, %v3982
        %v5231 = vpack.c.b16 %v3999, %v3983
        %v5232 = vpack.c.b16 %v4000, %v3984
        %v5233 = vpack.c.b16 %v4001, %v3985
        %v5234 = vpack.c.b16 %v4002, %v3986
        %v5235 = vpack.c.b16 %v4003, %v3987
        %v5236 = vpack.c.b16 %v4004, %v3988
        %v5237 = vpack.c.b16 %v4005, %v3989
        %v5238 = vpack.c.b16 %v4006, %v3990
        %v5239 = vpack.c.b16 %v4007, %v3991
        %v5240 = vpack.c.b16 %v4008, %v3992
        %v5241 = vpack.c.b16 %v4009, %v3993
        %v5242 = vpack.c.b16 %v4010, %v3994
        %v5243 = vpack.c.b16 %v4011, %v3995
        %v5244 = vpack.c.b16 %v4028, %v4012
        %v5245 = vpack.c.b16 %v4029, %v4013
        %v5246 = vpack.c.b16 %v4030, %v4014
        %v5247 = vpack.c.b16 %v4031, %v4015
        %v5248 = vpack.c.b16 %v4032, %v4016
        %v5249 = vpack.c.b16 %v4033, %v4017
        %v5250 = vpack.c.b16 %v4034, %v4018
        %v5251 = vpack.c.b16 %v4035, %v4019
        %v5252 = vpack.c.b16 %v4036, %v4020
        %v5253 = vpack.c.b16 %v4037, %v4021
        %v5254 = vpack.c.b16 %v4038, %v4022
        %v5255 = vpack.c.b16 %v4039, %v4023
        %v5256 = vpack.c.b16 %v4040, %v4024
        %v5257 = vpack.c.b16 %v4041, %v4025
        %v5258 = vpack.c.b16 %v4042, %v4026
        %v5259 = vpack.c.b16 %v4043, %v4027
        %v5260 = vpack.c.b16 %v4060, %v4044
        %v5261 = vpack.c.b16 %v4061, %v4045
        %v5262 = vpack.c.b16 %v4062, %v4046
        %v5263 = vpack.c.b16 %v4063, %v4047
        %v5264 = vpack.c.b16 %v4064, %v4048
        %v5265 = vpack.c.b16 %v4065, %v4049
        %v5266 = vpack.c.b16 %v4066, %v4050
        %v5267 = vpack.c.b16 %v4067, %v4051
        %v5268 = vpack.c.b16 %v4068, %v4052
        %v5269 = vpack.c.b16 %v4069, %v4053
        %v5270 = vpack.c.b16 %v4070, %v4054
        %v5271 = vpack.c.b16 %v4071, %v4055
        %v5272 = vpack.c.b16 %v4072, %v4056
        %v5273 = vpack.c.b16 %v4073, %v4057
        %v5274 = vpack.c.b16 %v4074, %v4058
        %v5275 = vpack.c.b16 %v4075, %v4059
        %v5276 = vpack.c.b16 %v4092, %v4076
        %v5277 = vpack.c.b16 %v4093, %v4077
        %v5278 = vpack.c.b16 %v4094, %v4078
        %v5279 = vpack.c.b16 %v4095, %v4079
        %v5280 = vpack.c.b16 %v4096, %v4080
        %v5281 = vpack.c.b16 %v4097, %v4081
        %v5282 = vpack.c.b16 %v4098, %v4082
        %v5283 = vpack.c.b16 %v4099, %v4083
        %v5284 = vpack.c.b16 %v4100, %v4084
        %v5285 = vpack.c.b16 %v4101, %v4085
        %v5286 = vpack.c.b16 %v4102, %v4086
        %v5287 = vpack.c.b16 %v4103, %v4087
        %v5288 = vpack.c.b16 %v4104, %v4088
        %v5289 = vpack.c.b16 %v4105, %v4089
        %v5290 = vpack.c.b16 %v4106, %v4090
        %v5291 = vpack.c.b16 %v4107, %v4091
        %v5292 = vpack.c.b16 %v4124, %v4108
        %v5293 = vpack.c.b16 %v4125, %v4109
        %v5294 = vpack.c.b16 %v4126, %v4110
        %v5295 = vpack.c.b16 %v4127, %v4111
        %v5296 = vpack.c.b16 %v4128, %v4112
        %v5297 = vpack.c.b16 %v4129, %v4113
        %v5298 = vpack.c.b16 %v4130, %v4114
        %v5299 = vpack.c.b16 %v4131, %v4115
        %v5300 = vpack.c.b16 %v4132, %v4116
        %v5301 = vpack.c.b16 %v4133, %v4117
        %v5302 = vpack.c.b16 %v4134, %v4118
        %v5303 = vpack.c.b16 %v4135, %v4119
        %v5304 = vpack.c.b16 %v4136, %v4120
        %v5305 = vpack.c.b16 %v4137, %v4121
        %v5306 = vpack.c.b16 %v4138, %v4122
        %v5307 = vpack.c.b16 %v4139, %v4123
        %v5308 = vpack.c.b16 %v4156, %v4140
        %v5309 = vpack.c.b16 %v4157, %v4141
        %v5310 = vpack.c.b16 %v4158, %v4142
        %v5311 = vpack.c.b16 %v4159, %v4143
        %v5312 = vpack.c.b16 %v4160, %v4144
        %v5313 = vpack.c.b16 %v4161, %v4145
        %v5314 = vpack.c.b16 %v4162, %v4146
        %v5315 = vpack.c.b16 %v4163, %v4147
        %v5316 = vpack.c.b16 %v4164, %v4148
        %v5317 = vpack.c.b16 %v4165, %v4149
        %v5318 = vpack.c.b16 %v4166, %v4150
        %v5319 = vpack.c.b16 %v4167, %v4151
        %v5320 = vpack.c.b16 %v4168, %v4152
        %v5321 = vpack.c.b16 %v4169, %v4153
        %v5322 = vpack.c.b16 %v4170, %v4154
        %v5323 = vpack.c.b16 %v4171, %v4155
        %v5324 = vpack.c.b16 %v4188, %v4172
        %v5325 = vpack.c.b16 %v4189, %v4173
        %v5326 = vpack.c.b16 %v4190, %v4174
        %v5327 = vpack.c.b16 %v4191, %v4175
        %v5328 = vpack.c.b16 %v4192, %v4176
        %v5329 = vpack.c.b16 %v4193, %v4177
        %v5330 = vpack.c.b16 %v4194, %v4178
        %v5331 = vpack.c.b16 %v4195, %v4179
        %v5332 = vpack.c.b16 %v4196, %v4180
        %v5333 = vpack.c.b16 %v4197, %v4181
        %v5334 = vpack.c.b16 %v4198, %v4182
        %v5335 = vpack.c.b16 %v4199, %v4183
        %v5336 = vpack.c.b16 %v4200, %v4184
        %v5337 = vpack.c.b16 %v4201, %v4185
        %v5338 = vpack.c.b16 %v4202, %v4186
        %v5339 = vpack.c.b16 %v4203, %v4187
        %v5340 = vpack.c.b16 %v4220, %v4204
        %v5341 = vpack.c.b16 %v4221, %v4205
        %v5342 = vpack.c.b16 %v4222, %v4206
        %v5343 = vpack.c.b16 %v4223, %v4207
        %v5344 = vpack.c.b16 %v4224, %v4208
        %v5345 = vpack.c.b16 %v4225, %v4209
        %v5346 = vpack.c.b16 %v4226, %v4210
        %v5347 = vpack.c.b16 %v4227, %v4211
        %v5348 = vpack.c.b16 %v4228, %v4212
        %v5349 = vpack.c.b16 %v4229, %v4213
        %v5350 = vpack.c.b16 %v4230, %v4214
        %v5351 = vpack.c.b16 %v4231, %v4215
        %v5352 = vpack.c.b16 %v4232, %v4216
        %v5353 = vpack.c.b16 %v4233, %v4217
        %v5354 = vpack.c.b16 %v4234, %v4218
        %v5355 = vpack.c.b16 %v4235, %v4219
        %v5356 = vpack.c.b16 %v4252, %v4236
        %v5357 = vpack.c.b16 %v4253, %v4237
        %v5358 = vpack.c.b16 %v4254, %v4238
        %v5359 = vpack.c.b16 %v4255, %v4239
        %v5360 = vpack.c.b16 %v4256, %v4240
        %v5361 = vpack.c.b16 %v4257, %v4241
        %v5362 = vpack.c.b16 %v4258, %v4242
        %v5363 = vpack.c.b16 %v4259, %v4243
        %v5364 = vpack.c.b16 %v4260, %v4244
        %v5365 = vpack.c.b16 %v4261, %v4245
        %v5366 = vpack.c.b16 %v4262, %v4246
        %v5367 = vpack.c.b16 %v4263, %v4247
        %v5368 = vpack.c.b16 %v4264, %v4248
        %v5369 = vpack.c.b16 %v4265, %v4249
        %v5370 = vpack.c.b16 %v4266, %v4250
        %v5371 = vpack.c.b16 %v4267, %v4251
        %v5372 = vpack.c.b16 %v4284, %v4268
        %v5373 = vpack.c.b16 %v4285, %v4269
        %v5374 = vpack.c.b16 %v4286, %v4270
        %v5375 = vpack.c.b16 %v4287, %v4271
        %v5376 = vpack.c.b16 %v4288, %v4272
        %v5377 = vpack.c.b16 %v4289, %v4273
        %v5378 = vpack.c.b16 %v4290, %v4274
        %v5379 = vpack.c.b16 %v4291, %v4275
        %v5380 = vpack.c.b16 %v4292, %v4276
        %v5381 = vpack.c.b16 %v4293, %v4277
        %v5382 = vpack.c.b16 %v4294, %v4278
        %v5383 = vpack.c.b16 %v4295, %v4279
        %v5384 = vpack.c.b16 %v4296, %v4280
        %v5385 = vpack.c.b16 %v4297, %v4281
        %v5386 = vpack.c.b16 %v4298, %v4282
        %v5387 = vpack.c.b16 %v4299, %v4283
        %v5388 = vpack.c.b16 %v4316, %v4300
        %v5389 = vpack.c.b16 %v4317, %v4301
        %v5390 = vpack.c.b16 %v4318, %v4302
        %v5391 = vpack.c.b16 %v4319, %v4303
        %v5392 = vpack.c.b16 %v4320, %v4304
        %v5393 = vpack.c.b16 %v4321, %v4305
        %v5394 = vpack.c.b16 %v4322, %v4306
        %v5395 = vpack.c.b16 %v4323, %v4307
        %v5396 = vpack.c.b16 %v4324, %v4308
        %v5397 = vpack.c.b16 %v4325, %v4309
        %v5398 = vpack.c.b16 %v4326, %v4310
        %v5399 = vpack.c.b16 %v4327, %v4311
        %v5400 = vpack.c.b16 %v4328, %v4312
        %v5401 = vpack.c.b16 %v4329, %v4313
        %v5402 = vpack.c.b16 %v4330, %v4314
        %v5403 = vpack.c.b16 %v4331, %v4315
        %v5404 = vpack.c.b16 %v4348, %v4332
        %v5405 = vpack.c.b16 %v4349, %v4333
        %v5406 = vpack.c.b16 %v4350, %v4334
        %v5407 = vpack.c.b16 %v4351, %v4335
        %v5408 = vpack.c.b16 %v4352, %v4336
        %v5409 = vpack.c.b16 %v4353, %v4337
        %v5410 = vpack.c.b16 %v4354, %v4338
        %v5411 = vpack.c.b16 %v4355, %v4339
        %v5412 = vpack.c.b16 %v4356, %v4340
        %v5413 = vpack.c.b16 %v4357, %v4341
        %v5414 = vpack.c.b16 %v4358, %v4342
        %v5415 = vpack.c.b16 %v4359, %v4343
        %v5416 = vpack.c.b16 %v4360, %v4344
        %v5417 = vpack.c.b16 %v4361, %v4345
        %v5418 = vpack.c.b16 %v4362, %v4346
        %v5419 = vpack.c.b16 %v4363, %v4347
        %v5420 = vpack.c.b16 %v4380, %v4364
        %v5421 = vpack.c.b16 %v4381, %v4365
        %v5422 = vpack.c.b16 %v4382, %v4366
        %v5423 = vpack.c.b16 %v4383, %v4367
        %v5424 = vpack.c.b16 %v4384, %v4368
        %v5425 = vpack.c.b16 %v4385, %v4369
        %v5426 = vpack.c.b16 %v4386, %v4370
        %v5427 = vpack.c.b16 %v4387, %v4371
        %v5428 = vpack.c.b16 %v4388, %v4372
        %v5429 = vpack.c.b16 %v4389, %v4373
        %v5430 = vpack.c.b16 %v4390, %v4374
        %v5431 = vpack.c.b16 %v4391, %v4375
        %v5432 = vpack.c.b16 %v4392, %v4376
        %v5433 = vpack.c.b16 %v4393, %v4377
        %v5434 = vpack.c.b16 %v4394, %v4378
        %v5435 = vpack.c.b16 %v4395, %v4379
        %v5436 = vpack.c.b16 %v4412, %v4396
        %v5437 = vpack.c.b16 %v4413, %v4397
        %v5438 = vpack.c.b16 %v4414, %v4398
        %v5439 = vpack.c.b16 %v4415, %v4399
        %v5440 = vpack.c.b16 %v4416, %v4400
        %v5441 = vpack.c.b16 %v4417, %v4401
        %v5442 = vpack.c.b16 %v4418, %v4402
        %v5443 = vpack.c.b16 %v4419, %v4403
        %v5444 = vpack.c.b16 %v4420, %v4404
        %v5445 = vpack.c.b16 %v4421, %v4405
        %v5446 = vpack.c.b16 %v4422, %v4406
        %v5447 = vpack.c.b16 %v4423, %v4407
        %v5448 = vpack.c.b16 %v4424, %v4408
        %v5449 = vpack.c.b16 %v4425, %v4409
        %v5450 = vpack.c.b16 %v4426, %v4410
        %v5451 = vpack.c.b16 %v4427, %v4411
        %6476 = vmatprep.subr.bf16.mxu0 %v4541
        %6477 = vmatpush1.bf16.msra.mxu0 %v4540
        %6478 = vmatprep.subr.bf16.mxu0 %v4525
        %6479 = vmatpush1.bf16.msra.mxu0 %v4524
        %6480 = vmatprep.subr.bf16.mxu0 %v4509
        %6481 = vmatpush1.bf16.msra.mxu0 %v4508
        %6482 = vmatprep.subr.bf16.mxu0 %v4493
        %6483 = vmatpush1.bf16.msra.mxu0 %v4492
        %6484 = vmatprep.subr.bf16.mxu0 %v4477
        %6485 = vmatpush1.bf16.msra.mxu0 %v4476
        %6486 = vmatprep.subr.bf16.mxu0 %v4461
        %6487 = vmatpush1.bf16.msra.mxu0 %v4460
        %6488 = vmatprep.subr.bf16.mxu0 %v4445
        %6489 = vmatpush1.bf16.msra.mxu0 %v4444
        %6490 = vmatprep.subr.bf16.mxu0 %v4429
        %6491 = vmatpush1.bf16.msra.mxu0 %v4428
        %6492 = vmatprep.subr.bf16.mxu0 %v4669
        %6493 = vmatpush2.bf16.msra.mxu0 %v4668
        %6494 = vmatprep.subr.bf16.mxu0 %v4653
        %6495 = vmatpush2.bf16.msra.mxu0 %v4652
        %6496 = vmatprep.subr.bf16.mxu0 %v4637
        %6497 = vmatpush2.bf16.msra.mxu0 %v4636
        %6498 = vmatprep.subr.bf16.mxu0 %v4621
        %6499 = vmatpush2.bf16.msra.mxu0 %v4620
        %6500 = vmatprep.subr.bf16.mxu0 %v4605
        %6501 = vmatpush2.bf16.msra.mxu0 %v4604
        %6502 = vmatprep.subr.bf16.mxu0 %v4589
        %6503 = vmatpush2.bf16.msra.mxu0 %v4588
        %6504 = vmatprep.subr.bf16.mxu0 %v4573
        %6505 = vmatpush2.bf16.msra.mxu0 %v4572
        %6506 = vmatprep.subr.bf16.mxu0 %v4557
        %6507 = vmatpush2.bf16.msra.mxu0 %v4556
        %6508 = vmatprep.mubr.bf16.mxu0 %v241
        %6509 = vmatmul.mubr.bf16.gmra.mxu0 %v240
        %v6510 = vpop.f32.mrf.mxu0
        %v6511 = vadd.f32 %v1279, %v6510
        %v6512 = vpop.f32.mrf.mxu0
        %v6513 = vadd.f32 %v1283, %v6512
        %v6514 = vpop.f32.mrf.mxu0
        %v6515 = vpop.f32.mrf.mxu0
        %6516 = vdwg.mxu0
        %6517 = vmatprep.subr.bf16.mxu0 %v4797
        %6518 = vmatpush1.bf16.msra.mxu0 %v4796
        %6519 = vmatprep.subr.bf16.mxu0 %v4781
        %6520 = vmatpush1.bf16.msra.mxu0 %v4780
        %6521 = vmatprep.subr.bf16.mxu0 %v4765
        %6522 = vmatpush1.bf16.msra.mxu0 %v4764
        %6523 = vmatprep.subr.bf16.mxu0 %v4749
        %6524 = vmatpush1.bf16.msra.mxu0 %v4748
        %6525 = vmatprep.subr.bf16.mxu0 %v4733
        %6526 = vmatpush1.bf16.msra.mxu0 %v4732
        %6527 = vmatprep.subr.bf16.mxu0 %v4717
        %6528 = vmatpush1.bf16.msra.mxu0 %v4716
        %6529 = vmatprep.subr.bf16.mxu0 %v4701
        %6530 = vmatpush1.bf16.msra.mxu0 %v4700
        %6531 = vmatprep.subr.bf16.mxu0 %v4685
        %6532 = vmatpush1.bf16.msra.mxu0 %v4684
        %6533 = vmatprep.subr.bf16.mxu0 %v4925
        %6534 = vmatpush2.bf16.msra.mxu0 %v4924
        %6535 = vmatprep.subr.bf16.mxu0 %v4909
        %6536 = vmatpush2.bf16.msra.mxu0 %v4908
        %6537 = vmatprep.subr.bf16.mxu0 %v4893
        %6538 = vmatpush2.bf16.msra.mxu0 %v4892
        %6539 = vmatprep.subr.bf16.mxu0 %v4877
        %6540 = vmatpush2.bf16.msra.mxu0 %v4876
        %6541 = vmatprep.subr.bf16.mxu0 %v4861
        %6542 = vmatpush2.bf16.msra.mxu0 %v4860
        %6543 = vmatprep.subr.bf16.mxu0 %v4845
        %6544 = vmatpush2.bf16.msra.mxu0 %v4844
        %6545 = vmatprep.subr.bf16.mxu0 %v4829
        %6546 = vmatpush2.bf16.msra.mxu0 %v4828
        %6547 = vmatprep.subr.bf16.mxu0 %v4813
        %6548 = vmatpush2.bf16.msra.mxu0 %v4812
        %6549 = vmatprep.mubr.bf16.mxu0 %v243
        %6550 = vmatmul.mubr.bf16.gmra.mxu0 %v242
        %v6551 = vpop.f32.mrf.mxu0
        %v6552 = vadd.f32 %v6511, %v6551
        %v6553 = vpop.f32.mrf.mxu0
        %v6554 = vadd.f32 %v6513, %v6553
        %v6555 = vpop.f32.mrf.mxu0
        %v6556 = vpop.f32.mrf.mxu0
        %6557 = vdwg.mxu0
        %6558 = vmatprep.subr.bf16.mxu0 %v5053
        %6559 = vmatpush1.bf16.msra.mxu0 %v5052
        %6560 = vmatprep.subr.bf16.mxu0 %v5037
        %6561 = vmatpush1.bf16.msra.mxu0 %v5036
        %6562 = vmatprep.subr.bf16.mxu0 %v5021
        %6563 = vmatpush1.bf16.msra.mxu0 %v5020
        %6564 = vmatprep.subr.bf16.mxu0 %v5005
        %6565 = vmatpush1.bf16.msra.mxu0 %v5004
        %6566 = vmatprep.subr.bf16.mxu0 %v4989
        %6567 = vmatpush1.bf16.msra.mxu0 %v4988
        %6568 = vmatprep.subr.bf16.mxu0 %v4973
        %6569 = vmatpush1.bf16.msra.mxu0 %v4972
        %6570 = vmatprep.subr.bf16.mxu0 %v4957
        %6571 = vmatpush1.bf16.msra.mxu0 %v4956
        %6572 = vmatprep.subr.bf16.mxu0 %v4941
        %6573 = vmatpush1.bf16.msra.mxu0 %v4940
        %6574 = vmatprep.subr.bf16.mxu0 %v5181
        %6575 = vmatpush2.bf16.msra.mxu0 %v5180
        %6576 = vmatprep.subr.bf16.mxu0 %v5165
        %6577 = vmatpush2.bf16.msra.mxu0 %v5164
        %6578 = vmatprep.subr.bf16.mxu0 %v5149
        %6579 = vmatpush2.bf16.msra.mxu0 %v5148
        %6580 = vmatprep.subr.bf16.mxu0 %v5133
        %6581 = vmatpush2.bf16.msra.mxu0 %v5132
        %6582 = vmatprep.subr.bf16.mxu0 %v5117
        %6583 = vmatpush2.bf16.msra.mxu0 %v5116
        %6584 = vmatprep.subr.bf16.mxu0 %v5101
        %6585 = vmatpush2.bf16.msra.mxu0 %v5100
        %6586 = vmatprep.subr.bf16.mxu0 %v5085
        %6587 = vmatpush2.bf16.msra.mxu0 %v5084
        %6588 = vmatprep.subr.bf16.mxu0 %v5069
        %6589 = vmatpush2.bf16.msra.mxu0 %v5068
        %6590 = vmatprep.mubr.bf16.mxu0 %v245
        %6591 = vmatmul.mubr.bf16.gmra.mxu0 %v244
        %v6592 = vpop.f32.mrf.mxu0
        %v6593 = vadd.f32 %v6552, %v6592
        %v6594 = vpop.f32.mrf.mxu0
        %v6595 = vadd.f32 %v6554, %v6594
        %v6596 = vpop.f32.mrf.mxu0
        %v6597 = vpop.f32.mrf.mxu0
        %6598 = vdwg.mxu0
        %6599 = vmatprep.subr.bf16.mxu0 %v5309
        %6600 = vmatpush1.bf16.msra.mxu0 %v5308
        %6601 = vmatprep.subr.bf16.mxu0 %v5293
        %6602 = vmatpush1.bf16.msra.mxu0 %v5292
        %6603 = vmatprep.subr.bf16.mxu0 %v5277
        %6604 = vmatpush1.bf16.msra.mxu0 %v5276
        %6605 = vmatprep.subr.bf16.mxu0 %v5261
        %6606 = vmatpush1.bf16.msra.mxu0 %v5260
        %6607 = vmatprep.subr.bf16.mxu0 %v5245
        %6608 = vmatpush1.bf16.msra.mxu0 %v5244
        %6609 = vmatprep.subr.bf16.mxu0 %v5229
        %6610 = vmatpush1.bf16.msra.mxu0 %v5228
        %6611 = vmatprep.subr.bf16.mxu0 %v5213
        %6612 = vmatpush1.bf16.msra.mxu0 %v5212
        %6613 = vmatprep.subr.bf16.mxu0 %v5197
        %6614 = vmatpush1.bf16.msra.mxu0 %v5196
        %6615 = vmatprep.subr.bf16.mxu0 %v5437
        %6616 = vmatpush2.bf16.msra.mxu0 %v5436
        %6617 = vmatprep.subr.bf16.mxu0 %v5421
        %6618 = vmatpush2.bf16.msra.mxu0 %v5420
        %6619 = vmatprep.subr.bf16.mxu0 %v5405
        %6620 = vmatpush2.bf16.msra.mxu0 %v5404
        %6621 = vmatprep.subr.bf16.mxu0 %v5389
        %6622 = vmatpush2.bf16.msra.mxu0 %v5388
        %6623 = vmatprep.subr.bf16.mxu0 %v5373
        %6624 = vmatpush2.bf16.msra.mxu0 %v5372
        %6625 = vmatprep.subr.bf16.mxu0 %v5357
        %6626 = vmatpush2.bf16.msra.mxu0 %v5356
        %6627 = vmatprep.subr.bf16.mxu0 %v5341
        %6628 = vmatpush2.bf16.msra.mxu0 %v5340
        %6629 = vmatprep.subr.bf16.mxu0 %v5325
        %6630 = vmatpush2.bf16.msra.mxu0 %v5324
        %6631 = vmatprep.mubr.bf16.mxu0 %v247
        %6632 = vmatmul.mubr.bf16.gmra.mxu0 %v246
        %v6633 = vpop.f32.mrf.mxu0
        %v6634 = vadd.f32 %v6593, %v6633
        %v6635 = vpop.f32.mrf.mxu0
        %v6636 = vadd.f32 %v6595, %v6635
        %v6637 = vpop.f32.mrf.mxu0
        %v6638 = vpop.f32.mrf.mxu0
        %6639 = vdwg.mxu0
        %6640 = vmatprep.subr.bf16.mxu0 %v4543
        %6641 = vmatpush1.bf16.msra.mxu0 %v4542
        %6642 = vmatprep.subr.bf16.mxu0 %v4527
        %6643 = vmatpush1.bf16.msra.mxu0 %v4526
        %6644 = vmatprep.subr.bf16.mxu0 %v4511
        %6645 = vmatpush1.bf16.msra.mxu0 %v4510
        %6646 = vmatprep.subr.bf16.mxu0 %v4495
        %6647 = vmatpush1.bf16.msra.mxu0 %v4494
        %6648 = vmatprep.subr.bf16.mxu0 %v4479
        %6649 = vmatpush1.bf16.msra.mxu0 %v4478
        %6650 = vmatprep.subr.bf16.mxu0 %v4463
        %6651 = vmatpush1.bf16.msra.mxu0 %v4462
        %6652 = vmatprep.subr.bf16.mxu0 %v4447
        %6653 = vmatpush1.bf16.msra.mxu0 %v4446
        %6654 = vmatprep.subr.bf16.mxu0 %v4431
        %6655 = vmatpush1.bf16.msra.mxu0 %v4430
        %6656 = vmatprep.subr.bf16.mxu0 %v4671
        %6657 = vmatpush2.bf16.msra.mxu0 %v4670
        %6658 = vmatprep.subr.bf16.mxu0 %v4655
        %6659 = vmatpush2.bf16.msra.mxu0 %v4654
        %6660 = vmatprep.subr.bf16.mxu0 %v4639
        %6661 = vmatpush2.bf16.msra.mxu0 %v4638
        %6662 = vmatprep.subr.bf16.mxu0 %v4623
        %6663 = vmatpush2.bf16.msra.mxu0 %v4622
        %6664 = vmatprep.subr.bf16.mxu0 %v4607
        %6665 = vmatpush2.bf16.msra.mxu0 %v4606
        %6666 = vmatprep.subr.bf16.mxu0 %v4591
        %6667 = vmatpush2.bf16.msra.mxu0 %v4590
        %6668 = vmatprep.subr.bf16.mxu0 %v4575
        %6669 = vmatpush2.bf16.msra.mxu0 %v4574
        %6670 = vmatprep.subr.bf16.mxu0 %v4559
        %6671 = vmatpush2.bf16.msra.mxu0 %v4558
        %6672 = vmatprep.mubr.bf16.mxu0 %v241
        %6673 = vmatmul.mubr.bf16.gmra.mxu0 %v240
        %v6674 = vpop.f32.mrf.mxu0
        %v6675 = vadd.f32 %v1287, %v6674
        %v6676 = vpop.f32.mrf.mxu0
        %v6677 = vadd.f32 %v1291, %v6676
        %v6678 = vpop.f32.mrf.mxu0
        %v6679 = vpop.f32.mrf.mxu0
        %6680 = vdwg.mxu0
        %6681 = vmatprep.subr.bf16.mxu0 %v4799
        %6682 = vmatpush1.bf16.msra.mxu0 %v4798
        %6683 = vmatprep.subr.bf16.mxu0 %v4783
        %6684 = vmatpush1.bf16.msra.mxu0 %v4782
        %6685 = vmatprep.subr.bf16.mxu0 %v4767
        %6686 = vmatpush1.bf16.msra.mxu0 %v4766
        %6687 = vmatprep.subr.bf16.mxu0 %v4751
        %6688 = vmatpush1.bf16.msra.mxu0 %v4750
        %6689 = vmatprep.subr.bf16.mxu0 %v4735
        %6690 = vmatpush1.bf16.msra.mxu0 %v4734
        %6691 = vmatprep.subr.bf16.mxu0 %v4719
        %6692 = vmatpush1.bf16.msra.mxu0 %v4718
        %6693 = vmatprep.subr.bf16.mxu0 %v4703
        %6694 = vmatpush1.bf16.msra.mxu0 %v4702
        %6695 = vmatprep.subr.bf16.mxu0 %v4687
        %6696 = vmatpush1.bf16.msra.mxu0 %v4686
        %6697 = vmatprep.subr.bf16.mxu0 %v4927
        %6698 = vmatpush2.bf16.msra.mxu0 %v4926
        %6699 = vmatprep.subr.bf16.mxu0 %v4911
        %6700 = vmatpush2.bf16.msra.mxu0 %v4910
        %6701 = vmatprep.subr.bf16.mxu0 %v4895
        %6702 = vmatpush2.bf16.msra.mxu0 %v4894
        %6703 = vmatprep.subr.bf16.mxu0 %v4879
        %6704 = vmatpush2.bf16.msra.mxu0 %v4878
        %6705 = vmatprep.subr.bf16.mxu0 %v4863
        %6706 = vmatpush2.bf16.msra.mxu0 %v4862
        %6707 = vmatprep.subr.bf16.mxu0 %v4847
        %6708 = vmatpush2.bf16.msra.mxu0 %v4846
        %6709 = vmatprep.subr.bf16.mxu0 %v4831
        %6710 = vmatpush2.bf16.msra.mxu0 %v4830
        %6711 = vmatprep.subr.bf16.mxu0 %v4815
        %6712 = vmatpush2.bf16.msra.mxu0 %v4814
        %6713 = vmatprep.mubr.bf16.mxu0 %v243
        %6714 = vmatmul.mubr.bf16.gmra.mxu0 %v242
        %v6715 = vpop.f32.mrf.mxu0
        %v6716 = vadd.f32 %v6675, %v6715
        %v6717 = vpop.f32.mrf.mxu0
        %v6718 = vadd.f32 %v6677, %v6717
        %v6719 = vpop.f32.mrf.mxu0
        %v6720 = vpop.f32.mrf.mxu0
        %6721 = vdwg.mxu0
        %6722 = vmatprep.subr.bf16.mxu0 %v5055
        %6723 = vmatpush1.bf16.msra.mxu0 %v5054
        %6724 = vmatprep.subr.bf16.mxu0 %v5039
        %6725 = vmatpush1.bf16.msra.mxu0 %v5038
        %6726 = vmatprep.subr.bf16.mxu0 %v5023
        %6727 = vmatpush1.bf16.msra.mxu0 %v5022
        %6728 = vmatprep.subr.bf16.mxu0 %v5007
        %6729 = vmatpush1.bf16.msra.mxu0 %v5006
        %6730 = vmatprep.subr.bf16.mxu0 %v4991
        %6731 = vmatpush1.bf16.msra.mxu0 %v4990
        %6732 = vmatprep.subr.bf16.mxu0 %v4975
        %6733 = vmatpush1.bf16.msra.mxu0 %v4974
        %6734 = vmatprep.subr.bf16.mxu0 %v4959
        %6735 = vmatpush1.bf16.msra.mxu0 %v4958
        %6736 = vmatprep.subr.bf16.mxu0 %v4943
        %6737 = vmatpush1.bf16.msra.mxu0 %v4942
        %6738 = vmatprep.subr.bf16.mxu0 %v5183
        %6739 = vmatpush2.bf16.msra.mxu0 %v5182
        %6740 = vmatprep.subr.bf16.mxu0 %v5167
        %6741 = vmatpush2.bf16.msra.mxu0 %v5166
        %6742 = vmatprep.subr.bf16.mxu0 %v5151
        %6743 = vmatpush2.bf16.msra.mxu0 %v5150
        %6744 = vmatprep.subr.bf16.mxu0 %v5135
        %6745 = vmatpush2.bf16.msra.mxu0 %v5134
        %6746 = vmatprep.subr.bf16.mxu0 %v5119
        %6747 = vmatpush2.bf16.msra.mxu0 %v5118
        %6748 = vmatprep.subr.bf16.mxu0 %v5103
        %6749 = vmatpush2.bf16.msra.mxu0 %v5102
        %6750 = vmatprep.subr.bf16.mxu0 %v5087
        %6751 = vmatpush2.bf16.msra.mxu0 %v5086
        %6752 = vmatprep.subr.bf16.mxu0 %v5071
        %6753 = vmatpush2.bf16.msra.mxu0 %v5070
        %6754 = vmatprep.mubr.bf16.mxu0 %v245
        %6755 = vmatmul.mubr.bf16.gmra.mxu0 %v244
        %v6756 = vpop.f32.mrf.mxu0
        %v6757 = vadd.f32 %v6716, %v6756
        %v6758 = vpop.f32.mrf.mxu0
        %v6759 = vadd.f32 %v6718, %v6758
        %v6760 = vpop.f32.mrf.mxu0
        %v6761 = vpop.f32.mrf.mxu0
        %6762 = vdwg.mxu0
        %6763 = vmatprep.subr.bf16.mxu0 %v5311
        %6764 = vmatpush1.bf16.msra.mxu0 %v5310
        %6765 = vmatprep.subr.bf16.mxu0 %v5295
        %6766 = vmatpush1.bf16.msra.mxu0 %v5294
        %6767 = vmatprep.subr.bf16.mxu0 %v5279
        %6768 = vmatpush1.bf16.msra.mxu0 %v5278
        %6769 = vmatprep.subr.bf16.mxu0 %v5263
        %6770 = vmatpush1.bf16.msra.mxu0 %v5262
        %6771 = vmatprep.subr.bf16.mxu0 %v5247
        %6772 = vmatpush1.bf16.msra.mxu0 %v5246
        %6773 = vmatprep.subr.bf16.mxu0 %v5231
        %6774 = vmatpush1.bf16.msra.mxu0 %v5230
        %6775 = vmatprep.subr.bf16.mxu0 %v5215
        %6776 = vmatpush1.bf16.msra.mxu0 %v5214
        %6777 = vmatprep.subr.bf16.mxu0 %v5199
        %6778 = vmatpush1.bf16.msra.mxu0 %v5198
        %6779 = vmatprep.subr.bf16.mxu0 %v5439
        %6780 = vmatpush2.bf16.msra.mxu0 %v5438
        %6781 = vmatprep.subr.bf16.mxu0 %v5423
        %6782 = vmatpush2.bf16.msra.mxu0 %v5422
        %6783 = vmatprep.subr.bf16.mxu0 %v5407
        %6784 = vmatpush2.bf16.msra.mxu0 %v5406
        %6785 = vmatprep.subr.bf16.mxu0 %v5391
        %6786 = vmatpush2.bf16.msra.mxu0 %v5390
        %6787 = vmatprep.subr.bf16.mxu0 %v5375
        %6788 = vmatpush2.bf16.msra.mxu0 %v5374
        %6789 = vmatprep.subr.bf16.mxu0 %v5359
        %6790 = vmatpush2.bf16.msra.mxu0 %v5358
        %6791 = vmatprep.subr.bf16.mxu0 %v5343
        %6792 = vmatpush2.bf16.msra.mxu0 %v5342
        %6793 = vmatprep.subr.bf16.mxu0 %v5327
        %6794 = vmatpush2.bf16.msra.mxu0 %v5326
        %6795 = vmatprep.mubr.bf16.mxu0 %v247
        %6796 = vmatmul.mubr.bf16.gmra.mxu0 %v246
        %v6797 = vpop.f32.mrf.mxu0
        %v6798 = vadd.f32 %v6757, %v6797
        %v6799 = vpop.f32.mrf.mxu0
        %v6800 = vadd.f32 %v6759, %v6799
        %v6801 = vpop.f32.mrf.mxu0
        %v6802 = vpop.f32.mrf.mxu0
        %6803 = vdwg.mxu0
        %6804 = vmatprep.subr.bf16.mxu0 %v4545
        %6805 = vmatpush1.bf16.msra.mxu0 %v4544
        %6806 = vmatprep.subr.bf16.mxu0 %v4529
        %6807 = vmatpush1.bf16.msra.mxu0 %v4528
        %6808 = vmatprep.subr.bf16.mxu0 %v4513
        %6809 = vmatpush1.bf16.msra.mxu0 %v4512
        %6810 = vmatprep.subr.bf16.mxu0 %v4497
        %6811 = vmatpush1.bf16.msra.mxu0 %v4496
        %6812 = vmatprep.subr.bf16.mxu0 %v4481
        %6813 = vmatpush1.bf16.msra.mxu0 %v4480
        %6814 = vmatprep.subr.bf16.mxu0 %v4465
        %6815 = vmatpush1.bf16.msra.mxu0 %v4464
        %6816 = vmatprep.subr.bf16.mxu0 %v4449
        %6817 = vmatpush1.bf16.msra.mxu0 %v4448
        %6818 = vmatprep.subr.bf16.mxu0 %v4433
        %6819 = vmatpush1.bf16.msra.mxu0 %v4432
        %6820 = vmatprep.subr.bf16.mxu0 %v4673
        %6821 = vmatpush2.bf16.msra.mxu0 %v4672
        %6822 = vmatprep.subr.bf16.mxu0 %v4657
        %6823 = vmatpush2.bf16.msra.mxu0 %v4656
        %6824 = vmatprep.subr.bf16.mxu0 %v4641
        %6825 = vmatpush2.bf16.msra.mxu0 %v4640
        %6826 = vmatprep.subr.bf16.mxu0 %v4625
        %6827 = vmatpush2.bf16.msra.mxu0 %v4624
        %6828 = vmatprep.subr.bf16.mxu0 %v4609
        %6829 = vmatpush2.bf16.msra.mxu0 %v4608
        %6830 = vmatprep.subr.bf16.mxu0 %v4593
        %6831 = vmatpush2.bf16.msra.mxu0 %v4592
        %6832 = vmatprep.subr.bf16.mxu0 %v4577
        %6833 = vmatpush2.bf16.msra.mxu0 %v4576
        %6834 = vmatprep.subr.bf16.mxu0 %v4561
        %6835 = vmatpush2.bf16.msra.mxu0 %v4560
        %6836 = vmatprep.mubr.bf16.mxu0 %v241
        %6837 = vmatmul.mubr.bf16.gmra.mxu0 %v240
        %v6838 = vpop.f32.mrf.mxu0
        %v6839 = vadd.f32 %v1295, %v6838
        %v6840 = vpop.f32.mrf.mxu0
        %v6841 = vadd.f32 %v1299, %v6840
        %v6842 = vpop.f32.mrf.mxu0
        %v6843 = vpop.f32.mrf.mxu0
        %6844 = vdwg.mxu0
        %6845 = vmatprep.subr.bf16.mxu0 %v4801
        %6846 = vmatpush1.bf16.msra.mxu0 %v4800
        %6847 = vmatprep.subr.bf16.mxu0 %v4785
        %6848 = vmatpush1.bf16.msra.mxu0 %v4784
        %6849 = vmatprep.subr.bf16.mxu0 %v4769
        %6850 = vmatpush1.bf16.msra.mxu0 %v4768
        %6851 = vmatprep.subr.bf16.mxu0 %v4753
        %6852 = vmatpush1.bf16.msra.mxu0 %v4752
        %6853 = vmatprep.subr.bf16.mxu0 %v4737
        %6854 = vmatpush1.bf16.msra.mxu0 %v4736
        %6855 = vmatprep.subr.bf16.mxu0 %v4721
        %6856 = vmatpush1.bf16.msra.mxu0 %v4720
        %6857 = vmatprep.subr.bf16.mxu0 %v4705
        %6858 = vmatpush1.bf16.msra.mxu0 %v4704
        %6859 = vmatprep.subr.bf16.mxu0 %v4689
        %6860 = vmatpush1.bf16.msra.mxu0 %v4688
        %6861 = vmatprep.subr.bf16.mxu0 %v4929
        %6862 = vmatpush2.bf16.msra.mxu0 %v4928
        %6863 = vmatprep.subr.bf16.mxu0 %v4913
        %6864 = vmatpush2.bf16.msra.mxu0 %v4912
        %6865 = vmatprep.subr.bf16.mxu0 %v4897
        %6866 = vmatpush2.bf16.msra.mxu0 %v4896
        %6867 = vmatprep.subr.bf16.mxu0 %v4881
        %6868 = vmatpush2.bf16.msra.mxu0 %v4880
        %6869 = vmatprep.subr.bf16.mxu0 %v4865
        %6870 = vmatpush2.bf16.msra.mxu0 %v4864
        %6871 = vmatprep.subr.bf16.mxu0 %v4849
        %6872 = vmatpush2.bf16.msra.mxu0 %v4848
        %6873 = vmatprep.subr.bf16.mxu0 %v4833
        %6874 = vmatpush2.bf16.msra.mxu0 %v4832
        %6875 = vmatprep.subr.bf16.mxu0 %v4817
        %6876 = vmatpush2.bf16.msra.mxu0 %v4816
        %6877 = vmatprep.mubr.bf16.mxu0 %v243
        %6878 = vmatmul.mubr.bf16.gmra.mxu0 %v242
        %v6879 = vpop.f32.mrf.mxu0
        %v6880 = vadd.f32 %v6839, %v6879
        %v6881 = vpop.f32.mrf.mxu0
        %v6882 = vadd.f32 %v6841, %v6881
        %v6883 = vpop.f32.mrf.mxu0
        %v6884 = vpop.f32.mrf.mxu0
        %6885 = vdwg.mxu0
        %6886 = vmatprep.subr.bf16.mxu0 %v5057
        %6887 = vmatpush1.bf16.msra.mxu0 %v5056
        %6888 = vmatprep.subr.bf16.mxu0 %v5041
        %6889 = vmatpush1.bf16.msra.mxu0 %v5040
        %6890 = vmatprep.subr.bf16.mxu0 %v5025
        %6891 = vmatpush1.bf16.msra.mxu0 %v5024
        %6892 = vmatprep.subr.bf16.mxu0 %v5009
        %6893 = vmatpush1.bf16.msra.mxu0 %v5008
        %6894 = vmatprep.subr.bf16.mxu0 %v4993
        %6895 = vmatpush1.bf16.msra.mxu0 %v4992
        %6896 = vmatprep.subr.bf16.mxu0 %v4977
        %6897 = vmatpush1.bf16.msra.mxu0 %v4976
        %6898 = vmatprep.subr.bf16.mxu0 %v4961
        %6899 = vmatpush1.bf16.msra.mxu0 %v4960
        %6900 = vmatprep.subr.bf16.mxu0 %v4945
        %6901 = vmatpush1.bf16.msra.mxu0 %v4944
        %6902 = vmatprep.subr.bf16.mxu0 %v5185
        %6903 = vmatpush2.bf16.msra.mxu0 %v5184
        %6904 = vmatprep.subr.bf16.mxu0 %v5169
        %6905 = vmatpush2.bf16.msra.mxu0 %v5168
        %6906 = vmatprep.subr.bf16.mxu0 %v5153
        %6907 = vmatpush2.bf16.msra.mxu0 %v5152
        %6908 = vmatprep.subr.bf16.mxu0 %v5137
        %6909 = vmatpush2.bf16.msra.mxu0 %v5136
        %6910 = vmatprep.subr.bf16.mxu0 %v5121
        %6911 = vmatpush2.bf16.msra.mxu0 %v5120
        %6912 = vmatprep.subr.bf16.mxu0 %v5105
        %6913 = vmatpush2.bf16.msra.mxu0 %v5104
        %6914 = vmatprep.subr.bf16.mxu0 %v5089
        %6915 = vmatpush2.bf16.msra.mxu0 %v5088
        %6916 = vmatprep.subr.bf16.mxu0 %v5073
        %6917 = vmatpush2.bf16.msra.mxu0 %v5072
        %6918 = vmatprep.mubr.bf16.mxu0 %v245
        %6919 = vmatmul.mubr.bf16.gmra.mxu0 %v244
        %v6920 = vpop.f32.mrf.mxu0
        %v6921 = vadd.f32 %v6880, %v6920
        %v6922 = vpop.f32.mrf.mxu0
        %v6923 = vadd.f32 %v6882, %v6922
        %v6924 = vpop.f32.mrf.mxu0
        %v6925 = vpop.f32.mrf.mxu0
        %6926 = vdwg.mxu0
        %6927 = vmatprep.subr.bf16.mxu0 %v5313
        %6928 = vmatpush1.bf16.msra.mxu0 %v5312
        %6929 = vmatprep.subr.bf16.mxu0 %v5297
        %6930 = vmatpush1.bf16.msra.mxu0 %v5296
        %6931 = vmatprep.subr.bf16.mxu0 %v5281
        %6932 = vmatpush1.bf16.msra.mxu0 %v5280
        %6933 = vmatprep.subr.bf16.mxu0 %v5265
        %6934 = vmatpush1.bf16.msra.mxu0 %v5264
        %6935 = vmatprep.subr.bf16.mxu0 %v5249
        %6936 = vmatpush1.bf16.msra.mxu0 %v5248
        %6937 = vmatprep.subr.bf16.mxu0 %v5233
        %6938 = vmatpush1.bf16.msra.mxu0 %v5232
        %6939 = vmatprep.subr.bf16.mxu0 %v5217
        %6940 = vmatpush1.bf16.msra.mxu0 %v5216
        %6941 = vmatprep.subr.bf16.mxu0 %v5201
        %6942 = vmatpush1.bf16.msra.mxu0 %v5200
        %6943 = vmatprep.subr.bf16.mxu0 %v5441
        %6944 = vmatpush2.bf16.msra.mxu0 %v5440
        %6945 = vmatprep.subr.bf16.mxu0 %v5425
        %6946 = vmatpush2.bf16.msra.mxu0 %v5424
        %6947 = vmatprep.subr.bf16.mxu0 %v5409
        %6948 = vmatpush2.bf16.msra.mxu0 %v5408
        %6949 = vmatprep.subr.bf16.mxu0 %v5393
        %6950 = vmatpush2.bf16.msra.mxu0 %v5392
        %6951 = vmatprep.subr.bf16.mxu0 %v5377
        %6952 = vmatpush2.bf16.msra.mxu0 %v5376
        %6953 = vmatprep.subr.bf16.mxu0 %v5361
        %6954 = vmatpush2.bf16.msra.mxu0 %v5360
        %6955 = vmatprep.subr.bf16.mxu0 %v5345
        %6956 = vmatpush2.bf16.msra.mxu0 %v5344
        %6957 = vmatprep.subr.bf16.mxu0 %v5329
        %6958 = vmatpush2.bf16.msra.mxu0 %v5328
        %6959 = vmatprep.mubr.bf16.mxu0 %v247
        %6960 = vmatmul.mubr.bf16.gmra.mxu0 %v246
        %v6961 = vpop.f32.mrf.mxu0
        %v6962 = vadd.f32 %v6921, %v6961
        %v6963 = vpop.f32.mrf.mxu0
        %v6964 = vadd.f32 %v6923, %v6963
        %v6965 = vpop.f32.mrf.mxu0
        %v6966 = vpop.f32.mrf.mxu0
        %6967 = vdwg.mxu0
        %6968 = vmatprep.subr.bf16.mxu0 %v4547
        %6969 = vmatpush1.bf16.msra.mxu0 %v4546
        %6970 = vmatprep.subr.bf16.mxu0 %v4531
        %6971 = vmatpush1.bf16.msra.mxu0 %v4530
        %6972 = vmatprep.subr.bf16.mxu0 %v4515
        %6973 = vmatpush1.bf16.msra.mxu0 %v4514
        %6974 = vmatprep.subr.bf16.mxu0 %v4499
        %6975 = vmatpush1.bf16.msra.mxu0 %v4498
        %6976 = vmatprep.subr.bf16.mxu0 %v4483
        %6977 = vmatpush1.bf16.msra.mxu0 %v4482
        %6978 = vmatprep.subr.bf16.mxu0 %v4467
        %6979 = vmatpush1.bf16.msra.mxu0 %v4466
        %6980 = vmatprep.subr.bf16.mxu0 %v4451
        %6981 = vmatpush1.bf16.msra.mxu0 %v4450
        %6982 = vmatprep.subr.bf16.mxu0 %v4435
        %6983 = vmatpush1.bf16.msra.mxu0 %v4434
        %6984 = vmatprep.subr.bf16.mxu0 %v4675
        %6985 = vmatpush2.bf16.msra.mxu0 %v4674
        %6986 = vmatprep.subr.bf16.mxu0 %v4659
        %6987 = vmatpush2.bf16.msra.mxu0 %v4658
        %6988 = vmatprep.subr.bf16.mxu0 %v4643
        %6989 = vmatpush2.bf16.msra.mxu0 %v4642
        %6990 = vmatprep.subr.bf16.mxu0 %v4627
        %6991 = vmatpush2.bf16.msra.mxu0 %v4626
        %6992 = vmatprep.subr.bf16.mxu0 %v4611
        %6993 = vmatpush2.bf16.msra.mxu0 %v4610
        %6994 = vmatprep.subr.bf16.mxu0 %v4595
        %6995 = vmatpush2.bf16.msra.mxu0 %v4594
        %6996 = vmatprep.subr.bf16.mxu0 %v4579
        %6997 = vmatpush2.bf16.msra.mxu0 %v4578
        %6998 = vmatprep.subr.bf16.mxu0 %v4563
        %6999 = vmatpush2.bf16.msra.mxu0 %v4562
        %7000 = vmatprep.mubr.bf16.mxu0 %v241
        %7001 = vmatmul.mubr.bf16.gmra.mxu0 %v240
        %v7002 = vpop.f32.mrf.mxu0
        %v7003 = vadd.f32 %v1303, %v7002
        %v7004 = vpop.f32.mrf.mxu0
        %v7005 = vadd.f32 %v1307, %v7004
        %v7006 = vpop.f32.mrf.mxu0
        %v7007 = vpop.f32.mrf.mxu0
        %7008 = vdwg.mxu0
        %7009 = vmatprep.subr.bf16.mxu0 %v4803
        %7010 = vmatpush1.bf16.msra.mxu0 %v4802
        %7011 = vmatprep.subr.bf16.mxu0 %v4787
        %7012 = vmatpush1.bf16.msra.mxu0 %v4786
        %7013 = vmatprep.subr.bf16.mxu0 %v4771
        %7014 = vmatpush1.bf16.msra.mxu0 %v4770
        %7015 = vmatprep.subr.bf16.mxu0 %v4755
        %7016 = vmatpush1.bf16.msra.mxu0 %v4754
        %7017 = vmatprep.subr.bf16.mxu0 %v4739
        %7018 = vmatpush1.bf16.msra.mxu0 %v4738
        %7019 = vmatprep.subr.bf16.mxu0 %v4723
        %7020 = vmatpush1.bf16.msra.mxu0 %v4722
        %7021 = vmatprep.subr.bf16.mxu0 %v4707
        %7022 = vmatpush1.bf16.msra.mxu0 %v4706
        %7023 = vmatprep.subr.bf16.mxu0 %v4691
        %7024 = vmatpush1.bf16.msra.mxu0 %v4690
        %7025 = vmatprep.subr.bf16.mxu0 %v4931
        %7026 = vmatpush2.bf16.msra.mxu0 %v4930
        %7027 = vmatprep.subr.bf16.mxu0 %v4915
        %7028 = vmatpush2.bf16.msra.mxu0 %v4914
        %7029 = vmatprep.subr.bf16.mxu0 %v4899
        %7030 = vmatpush2.bf16.msra.mxu0 %v4898
        %7031 = vmatprep.subr.bf16.mxu0 %v4883
        %7032 = vmatpush2.bf16.msra.mxu0 %v4882
        %7033 = vmatprep.subr.bf16.mxu0 %v4867
        %7034 = vmatpush2.bf16.msra.mxu0 %v4866
        %7035 = vmatprep.subr.bf16.mxu0 %v4851
        %7036 = vmatpush2.bf16.msra.mxu0 %v4850
        %7037 = vmatprep.subr.bf16.mxu0 %v4835
        %7038 = vmatpush2.bf16.msra.mxu0 %v4834
        %7039 = vmatprep.subr.bf16.mxu0 %v4819
        %7040 = vmatpush2.bf16.msra.mxu0 %v4818
        %7041 = vmatprep.mubr.bf16.mxu0 %v243
        %7042 = vmatmul.mubr.bf16.gmra.mxu0 %v242
        %v7043 = vpop.f32.mrf.mxu0
        %v7044 = vadd.f32 %v7003, %v7043
        %v7045 = vpop.f32.mrf.mxu0
        %v7046 = vadd.f32 %v7005, %v7045
        %v7047 = vpop.f32.mrf.mxu0
        %v7048 = vpop.f32.mrf.mxu0
        %7049 = vdwg.mxu0
        %7050 = vmatprep.subr.bf16.mxu0 %v5059
        %7051 = vmatpush1.bf16.msra.mxu0 %v5058
        %7052 = vmatprep.subr.bf16.mxu0 %v5043
        %7053 = vmatpush1.bf16.msra.mxu0 %v5042
        %7054 = vmatprep.subr.bf16.mxu0 %v5027
        %7055 = vmatpush1.bf16.msra.mxu0 %v5026
        %7056 = vmatprep.subr.bf16.mxu0 %v5011
        %7057 = vmatpush1.bf16.msra.mxu0 %v5010
        %7058 = vmatprep.subr.bf16.mxu0 %v4995
        %7059 = vmatpush1.bf16.msra.mxu0 %v4994
        %7060 = vmatprep.subr.bf16.mxu0 %v4979
        %7061 = vmatpush1.bf16.msra.mxu0 %v4978
        %7062 = vmatprep.subr.bf16.mxu0 %v4963
        %7063 = vmatpush1.bf16.msra.mxu0 %v4962
        %7064 = vmatprep.subr.bf16.mxu0 %v4947
        %7065 = vmatpush1.bf16.msra.mxu0 %v4946
        %7066 = vmatprep.subr.bf16.mxu0 %v5187
        %7067 = vmatpush2.bf16.msra.mxu0 %v5186
        %7068 = vmatprep.subr.bf16.mxu0 %v5171
        %7069 = vmatpush2.bf16.msra.mxu0 %v5170
        %7070 = vmatprep.subr.bf16.mxu0 %v5155
        %7071 = vmatpush2.bf16.msra.mxu0 %v5154
        %7072 = vmatprep.subr.bf16.mxu0 %v5139
        %7073 = vmatpush2.bf16.msra.mxu0 %v5138
        %7074 = vmatprep.subr.bf16.mxu0 %v5123
        %7075 = vmatpush2.bf16.msra.mxu0 %v5122
        %7076 = vmatprep.subr.bf16.mxu0 %v5107
        %7077 = vmatpush2.bf16.msra.mxu0 %v5106
        %7078 = vmatprep.subr.bf16.mxu0 %v5091
        %7079 = vmatpush2.bf16.msra.mxu0 %v5090
        %7080 = vmatprep.subr.bf16.mxu0 %v5075
        %7081 = vmatpush2.bf16.msra.mxu0 %v5074
        %7082 = vmatprep.mubr.bf16.mxu0 %v245
        %7083 = vmatmul.mubr.bf16.gmra.mxu0 %v244
        %v7084 = vpop.f32.mrf.mxu0
        %v7085 = vadd.f32 %v7044, %v7084
        %v7086 = vpop.f32.mrf.mxu0
        %v7087 = vadd.f32 %v7046, %v7086
        %v7088 = vpop.f32.mrf.mxu0
        %v7089 = vpop.f32.mrf.mxu0
        %7090 = vdwg.mxu0
        %7091 = vmatprep.subr.bf16.mxu0 %v5315
        %7092 = vmatpush1.bf16.msra.mxu0 %v5314
        %7093 = vmatprep.subr.bf16.mxu0 %v5299
        %7094 = vmatpush1.bf16.msra.mxu0 %v5298
        %7095 = vmatprep.subr.bf16.mxu0 %v5283
        %7096 = vmatpush1.bf16.msra.mxu0 %v5282
        %7097 = vmatprep.subr.bf16.mxu0 %v5267
        %7098 = vmatpush1.bf16.msra.mxu0 %v5266
        %7099 = vmatprep.subr.bf16.mxu0 %v5251
        %7100 = vmatpush1.bf16.msra.mxu0 %v5250
        %7101 = vmatprep.subr.bf16.mxu0 %v5235
        %7102 = vmatpush1.bf16.msra.mxu0 %v5234
        %7103 = vmatprep.subr.bf16.mxu0 %v5219
        %7104 = vmatpush1.bf16.msra.mxu0 %v5218
        %7105 = vmatprep.subr.bf16.mxu0 %v5203
        %7106 = vmatpush1.bf16.msra.mxu0 %v5202
        %7107 = vmatprep.subr.bf16.mxu0 %v5443
        %7108 = vmatpush2.bf16.msra.mxu0 %v5442
        %7109 = vmatprep.subr.bf16.mxu0 %v5427
        %7110 = vmatpush2.bf16.msra.mxu0 %v5426
        %7111 = vmatprep.subr.bf16.mxu0 %v5411
        %7112 = vmatpush2.bf16.msra.mxu0 %v5410
        %7113 = vmatprep.subr.bf16.mxu0 %v5395
        %7114 = vmatpush2.bf16.msra.mxu0 %v5394
        %7115 = vmatprep.subr.bf16.mxu0 %v5379
        %7116 = vmatpush2.bf16.msra.mxu0 %v5378
        %7117 = vmatprep.subr.bf16.mxu0 %v5363
        %7118 = vmatpush2.bf16.msra.mxu0 %v5362
        %7119 = vmatprep.subr.bf16.mxu0 %v5347
        %7120 = vmatpush2.bf16.msra.mxu0 %v5346
        %7121 = vmatprep.subr.bf16.mxu0 %v5331
        %7122 = vmatpush2.bf16.msra.mxu0 %v5330
        %7123 = vmatprep.mubr.bf16.mxu0 %v247
        %7124 = vmatmul.mubr.bf16.gmra.mxu0 %v246
        %v7125 = vpop.f32.mrf.mxu0
        %v7126 = vadd.f32 %v7085, %v7125
        %v7127 = vpop.f32.mrf.mxu0
        %v7128 = vadd.f32 %v7087, %v7127
        %v7129 = vpop.f32.mrf.mxu0
        %v7130 = vpop.f32.mrf.mxu0
        %7131 = vdwg.mxu0
        %7132 = vmatprep.subr.bf16.mxu0 %v4549
        %7133 = vmatpush1.bf16.msra.mxu0 %v4548
        %7134 = vmatprep.subr.bf16.mxu0 %v4533
        %7135 = vmatpush1.bf16.msra.mxu0 %v4532
        %7136 = vmatprep.subr.bf16.mxu0 %v4517
        %7137 = vmatpush1.bf16.msra.mxu0 %v4516
        %7138 = vmatprep.subr.bf16.mxu0 %v4501
        %7139 = vmatpush1.bf16.msra.mxu0 %v4500
        %7140 = vmatprep.subr.bf16.mxu0 %v4485
        %7141 = vmatpush1.bf16.msra.mxu0 %v4484
        %7142 = vmatprep.subr.bf16.mxu0 %v4469
        %7143 = vmatpush1.bf16.msra.mxu0 %v4468
        %7144 = vmatprep.subr.bf16.mxu0 %v4453
        %7145 = vmatpush1.bf16.msra.mxu0 %v4452
        %7146 = vmatprep.subr.bf16.mxu0 %v4437
        %7147 = vmatpush1.bf16.msra.mxu0 %v4436
        %7148 = vmatprep.subr.bf16.mxu0 %v4677
        %7149 = vmatpush2.bf16.msra.mxu0 %v4676
        %7150 = vmatprep.subr.bf16.mxu0 %v4661
        %7151 = vmatpush2.bf16.msra.mxu0 %v4660
        %7152 = vmatprep.subr.bf16.mxu0 %v4645
        %7153 = vmatpush2.bf16.msra.mxu0 %v4644
        %7154 = vmatprep.subr.bf16.mxu0 %v4629
        %7155 = vmatpush2.bf16.msra.mxu0 %v4628
        %7156 = vmatprep.subr.bf16.mxu0 %v4613
        %7157 = vmatpush2.bf16.msra.mxu0 %v4612
        %7158 = vmatprep.subr.bf16.mxu0 %v4597
        %7159 = vmatpush2.bf16.msra.mxu0 %v4596
        %7160 = vmatprep.subr.bf16.mxu0 %v4581
        %7161 = vmatpush2.bf16.msra.mxu0 %v4580
        %7162 = vmatprep.subr.bf16.mxu0 %v4565
        %7163 = vmatpush2.bf16.msra.mxu0 %v4564
        %7164 = vmatprep.mubr.bf16.mxu0 %v241
        %7165 = vmatmul.mubr.bf16.gmra.mxu0 %v240
        %v7166 = vpop.f32.mrf.mxu0
        %v7167 = vadd.f32 %v1311, %v7166
        %v7168 = vpop.f32.mrf.mxu0
        %v7169 = vadd.f32 %v1315, %v7168
        %v7170 = vpop.f32.mrf.mxu0
        %v7171 = vpop.f32.mrf.mxu0
        %7172 = vdwg.mxu0
        %7173 = vmatprep.subr.bf16.mxu0 %v4805
        %7174 = vmatpush1.bf16.msra.mxu0 %v4804
        %7175 = vmatprep.subr.bf16.mxu0 %v4789
        %7176 = vmatpush1.bf16.msra.mxu0 %v4788
        %7177 = vmatprep.subr.bf16.mxu0 %v4773
        %7178 = vmatpush1.bf16.msra.mxu0 %v4772
        %7179 = vmatprep.subr.bf16.mxu0 %v4757
        %7180 = vmatpush1.bf16.msra.mxu0 %v4756
        %7181 = vmatprep.subr.bf16.mxu0 %v4741
        %7182 = vmatpush1.bf16.msra.mxu0 %v4740
        %7183 = vmatprep.subr.bf16.mxu0 %v4725
        %7184 = vmatpush1.bf16.msra.mxu0 %v4724
        %7185 = vmatprep.subr.bf16.mxu0 %v4709
        %7186 = vmatpush1.bf16.msra.mxu0 %v4708
        %7187 = vmatprep.subr.bf16.mxu0 %v4693
        %7188 = vmatpush1.bf16.msra.mxu0 %v4692
        %7189 = vmatprep.subr.bf16.mxu0 %v4933
        %7190 = vmatpush2.bf16.msra.mxu0 %v4932
        %7191 = vmatprep.subr.bf16.mxu0 %v4917
        %7192 = vmatpush2.bf16.msra.mxu0 %v4916
        %7193 = vmatprep.subr.bf16.mxu0 %v4901
        %7194 = vmatpush2.bf16.msra.mxu0 %v4900
        %7195 = vmatprep.subr.bf16.mxu0 %v4885
        %7196 = vmatpush2.bf16.msra.mxu0 %v4884
        %7197 = vmatprep.subr.bf16.mxu0 %v4869
        %7198 = vmatpush2.bf16.msra.mxu0 %v4868
        %7199 = vmatprep.subr.bf16.mxu0 %v4853
        %7200 = vmatpush2.bf16.msra.mxu0 %v4852
        %7201 = vmatprep.subr.bf16.mxu0 %v4837
        %7202 = vmatpush2.bf16.msra.mxu0 %v4836
        %7203 = vmatprep.subr.bf16.mxu0 %v4821
        %7204 = vmatpush2.bf16.msra.mxu0 %v4820
        %7205 = vmatprep.mubr.bf16.mxu0 %v243
        %7206 = vmatmul.mubr.bf16.gmra.mxu0 %v242
        %v7207 = vpop.f32.mrf.mxu0
        %v7208 = vadd.f32 %v7167, %v7207
        %v7209 = vpop.f32.mrf.mxu0
        %v7210 = vadd.f32 %v7169, %v7209
        %v7211 = vpop.f32.mrf.mxu0
        %v7212 = vpop.f32.mrf.mxu0
        %7213 = vdwg.mxu0
        %7214 = vmatprep.subr.bf16.mxu0 %v5061
        %7215 = vmatpush1.bf16.msra.mxu0 %v5060
        %7216 = vmatprep.subr.bf16.mxu0 %v5045
        %7217 = vmatpush1.bf16.msra.mxu0 %v5044
        %7218 = vmatprep.subr.bf16.mxu0 %v5029
        %7219 = vmatpush1.bf16.msra.mxu0 %v5028
        %7220 = vmatprep.subr.bf16.mxu0 %v5013
        %7221 = vmatpush1.bf16.msra.mxu0 %v5012
        %7222 = vmatprep.subr.bf16.mxu0 %v4997
        %7223 = vmatpush1.bf16.msra.mxu0 %v4996
        %7224 = vmatprep.subr.bf16.mxu0 %v4981
        %7225 = vmatpush1.bf16.msra.mxu0 %v4980
        %7226 = vmatprep.subr.bf16.mxu0 %v4965
        %7227 = vmatpush1.bf16.msra.mxu0 %v4964
        %7228 = vmatprep.subr.bf16.mxu0 %v4949
        %7229 = vmatpush1.bf16.msra.mxu0 %v4948
        %7230 = vmatprep.subr.bf16.mxu0 %v5189
        %7231 = vmatpush2.bf16.msra.mxu0 %v5188
        %7232 = vmatprep.subr.bf16.mxu0 %v5173
        %7233 = vmatpush2.bf16.msra.mxu0 %v5172
        %7234 = vmatprep.subr.bf16.mxu0 %v5157
        %7235 = vmatpush2.bf16.msra.mxu0 %v5156
        %7236 = vmatprep.subr.bf16.mxu0 %v5141
        %7237 = vmatpush2.bf16.msra.mxu0 %v5140
        %7238 = vmatprep.subr.bf16.mxu0 %v5125
        %7239 = vmatpush2.bf16.msra.mxu0 %v5124
        %7240 = vmatprep.subr.bf16.mxu0 %v5109
        %7241 = vmatpush2.bf16.msra.mxu0 %v5108
        %7242 = vmatprep.subr.bf16.mxu0 %v5093
        %7243 = vmatpush2.bf16.msra.mxu0 %v5092
        %7244 = vmatprep.subr.bf16.mxu0 %v5077
        %7245 = vmatpush2.bf16.msra.mxu0 %v5076
        %7246 = vmatprep.mubr.bf16.mxu0 %v245
        %7247 = vmatmul.mubr.bf16.gmra.mxu0 %v244
        %v7248 = vpop.f32.mrf.mxu0
        %v7249 = vadd.f32 %v7208, %v7248
        %v7250 = vpop.f32.mrf.mxu0
        %v7251 = vadd.f32 %v7210, %v7250
        %v7252 = vpop.f32.mrf.mxu0
        %v7253 = vpop.f32.mrf.mxu0
        %7254 = vdwg.mxu0
        %7255 = vmatprep.subr.bf16.mxu0 %v5317
        %7256 = vmatpush1.bf16.msra.mxu0 %v5316
        %7257 = vmatprep.subr.bf16.mxu0 %v5301
        %7258 = vmatpush1.bf16.msra.mxu0 %v5300
        %7259 = vmatprep.subr.bf16.mxu0 %v5285
        %7260 = vmatpush1.bf16.msra.mxu0 %v5284
        %7261 = vmatprep.subr.bf16.mxu0 %v5269
        %7262 = vmatpush1.bf16.msra.mxu0 %v5268
        %7263 = vmatprep.subr.bf16.mxu0 %v5253
        %7264 = vmatpush1.bf16.msra.mxu0 %v5252
        %7265 = vmatprep.subr.bf16.mxu0 %v5237
        %7266 = vmatpush1.bf16.msra.mxu0 %v5236
        %7267 = vmatprep.subr.bf16.mxu0 %v5221
        %7268 = vmatpush1.bf16.msra.mxu0 %v5220
        %7269 = vmatprep.subr.bf16.mxu0 %v5205
        %7270 = vmatpush1.bf16.msra.mxu0 %v5204
        %7271 = vmatprep.subr.bf16.mxu0 %v5445
        %7272 = vmatpush2.bf16.msra.mxu0 %v5444
        %7273 = vmatprep.subr.bf16.mxu0 %v5429
        %7274 = vmatpush2.bf16.msra.mxu0 %v5428
        %7275 = vmatprep.subr.bf16.mxu0 %v5413
        %7276 = vmatpush2.bf16.msra.mxu0 %v5412
        %7277 = vmatprep.subr.bf16.mxu0 %v5397
        %7278 = vmatpush2.bf16.msra.mxu0 %v5396
        %7279 = vmatprep.subr.bf16.mxu0 %v5381
        %7280 = vmatpush2.bf16.msra.mxu0 %v5380
        %7281 = vmatprep.subr.bf16.mxu0 %v5365
        %7282 = vmatpush2.bf16.msra.mxu0 %v5364
        %7283 = vmatprep.subr.bf16.mxu0 %v5349
        %7284 = vmatpush2.bf16.msra.mxu0 %v5348
        %7285 = vmatprep.subr.bf16.mxu0 %v5333
        %7286 = vmatpush2.bf16.msra.mxu0 %v5332
        %7287 = vmatprep.mubr.bf16.mxu0 %v247
        %7288 = vmatmul.mubr.bf16.gmra.mxu0 %v246
        %v7289 = vpop.f32.mrf.mxu0
        %v7290 = vadd.f32 %v7249, %v7289
        %v7291 = vpop.f32.mrf.mxu0
        %v7292 = vadd.f32 %v7251, %v7291
        %v7293 = vpop.f32.mrf.mxu0
        %v7294 = vpop.f32.mrf.mxu0
        %7295 = vdwg.mxu0
        %7296 = vmatprep.subr.bf16.mxu0 %v4551
        %7297 = vmatpush1.bf16.msra.mxu0 %v4550
        %7298 = vmatprep.subr.bf16.mxu0 %v4535
        %7299 = vmatpush1.bf16.msra.mxu0 %v4534
        %7300 = vmatprep.subr.bf16.mxu0 %v4519
        %7301 = vmatpush1.bf16.msra.mxu0 %v4518
        %7302 = vmatprep.subr.bf16.mxu0 %v4503
        %7303 = vmatpush1.bf16.msra.mxu0 %v4502
        %7304 = vmatprep.subr.bf16.mxu0 %v4487
        %7305 = vmatpush1.bf16.msra.mxu0 %v4486
        %7306 = vmatprep.subr.bf16.mxu0 %v4471
        %7307 = vmatpush1.bf16.msra.mxu0 %v4470
        %7308 = vmatprep.subr.bf16.mxu0 %v4455
        %7309 = vmatpush1.bf16.msra.mxu0 %v4454
        %7310 = vmatprep.subr.bf16.mxu0 %v4439
        %7311 = vmatpush1.bf16.msra.mxu0 %v4438
        %7312 = vmatprep.subr.bf16.mxu0 %v4679
        %7313 = vmatpush2.bf16.msra.mxu0 %v4678
        %7314 = vmatprep.subr.bf16.mxu0 %v4663
        %7315 = vmatpush2.bf16.msra.mxu0 %v4662
        %7316 = vmatprep.subr.bf16.mxu0 %v4647
        %7317 = vmatpush2.bf16.msra.mxu0 %v4646
        %7318 = vmatprep.subr.bf16.mxu0 %v4631
        %7319 = vmatpush2.bf16.msra.mxu0 %v4630
        %7320 = vmatprep.subr.bf16.mxu0 %v4615
        %7321 = vmatpush2.bf16.msra.mxu0 %v4614
        %7322 = vmatprep.subr.bf16.mxu0 %v4599
        %7323 = vmatpush2.bf16.msra.mxu0 %v4598
        %7324 = vmatprep.subr.bf16.mxu0 %v4583
        %7325 = vmatpush2.bf16.msra.mxu0 %v4582
        %7326 = vmatprep.subr.bf16.mxu0 %v4567
        %7327 = vmatpush2.bf16.msra.mxu0 %v4566
        %7328 = vmatprep.mubr.bf16.mxu0 %v241
        %7329 = vmatmul.mubr.bf16.gmra.mxu0 %v240
        %v7330 = vpop.f32.mrf.mxu0
        %v7331 = vadd.f32 %v1319, %v7330
        %v7332 = vpop.f32.mrf.mxu0
        %v7333 = vadd.f32 %v1323, %v7332
        %v7334 = vpop.f32.mrf.mxu0
        %v7335 = vpop.f32.mrf.mxu0
        %7336 = vdwg.mxu0
        %7337 = vmatprep.subr.bf16.mxu0 %v4807
        %7338 = vmatpush1.bf16.msra.mxu0 %v4806
        %7339 = vmatprep.subr.bf16.mxu0 %v4791
        %7340 = vmatpush1.bf16.msra.mxu0 %v4790
        %7341 = vmatprep.subr.bf16.mxu0 %v4775
        %7342 = vmatpush1.bf16.msra.mxu0 %v4774
        %7343 = vmatprep.subr.bf16.mxu0 %v4759
        %7344 = vmatpush1.bf16.msra.mxu0 %v4758
        %7345 = vmatprep.subr.bf16.mxu0 %v4743
        %7346 = vmatpush1.bf16.msra.mxu0 %v4742
        %7347 = vmatprep.subr.bf16.mxu0 %v4727
        %7348 = vmatpush1.bf16.msra.mxu0 %v4726
        %7349 = vmatprep.subr.bf16.mxu0 %v4711
        %7350 = vmatpush1.bf16.msra.mxu0 %v4710
        %7351 = vmatprep.subr.bf16.mxu0 %v4695
        %7352 = vmatpush1.bf16.msra.mxu0 %v4694
        %7353 = vmatprep.subr.bf16.mxu0 %v4935
        %7354 = vmatpush2.bf16.msra.mxu0 %v4934
        %7355 = vmatprep.subr.bf16.mxu0 %v4919
        %7356 = vmatpush2.bf16.msra.mxu0 %v4918
        %7357 = vmatprep.subr.bf16.mxu0 %v4903
        %7358 = vmatpush2.bf16.msra.mxu0 %v4902
        %7359 = vmatprep.subr.bf16.mxu0 %v4887
        %7360 = vmatpush2.bf16.msra.mxu0 %v4886
        %7361 = vmatprep.subr.bf16.mxu0 %v4871
        %7362 = vmatpush2.bf16.msra.mxu0 %v4870
        %7363 = vmatprep.subr.bf16.mxu0 %v4855
        %7364 = vmatpush2.bf16.msra.mxu0 %v4854
        %7365 = vmatprep.subr.bf16.mxu0 %v4839
        %7366 = vmatpush2.bf16.msra.mxu0 %v4838
        %7367 = vmatprep.subr.bf16.mxu0 %v4823
        %7368 = vmatpush2.bf16.msra.mxu0 %v4822
        %7369 = vmatprep.mubr.bf16.mxu0 %v243
        %7370 = vmatmul.mubr.bf16.gmra.mxu0 %v242
        %v7371 = vpop.f32.mrf.mxu0
        %v7372 = vadd.f32 %v7331, %v7371
        %v7373 = vpop.f32.mrf.mxu0
        %v7374 = vadd.f32 %v7333, %v7373
        %v7375 = vpop.f32.mrf.mxu0
        %v7376 = vpop.f32.mrf.mxu0
        %7377 = vdwg.mxu0
        %7378 = vmatprep.subr.bf16.mxu0 %v5063
        %7379 = vmatpush1.bf16.msra.mxu0 %v5062
        %7380 = vmatprep.subr.bf16.mxu0 %v5047
        %7381 = vmatpush1.bf16.msra.mxu0 %v5046
        %7382 = vmatprep.subr.bf16.mxu0 %v5031
        %7383 = vmatpush1.bf16.msra.mxu0 %v5030
        %7384 = vmatprep.subr.bf16.mxu0 %v5015
        %7385 = vmatpush1.bf16.msra.mxu0 %v5014
        %7386 = vmatprep.subr.bf16.mxu0 %v4999
        %7387 = vmatpush1.bf16.msra.mxu0 %v4998
        %7388 = vmatprep.subr.bf16.mxu0 %v4983
        %7389 = vmatpush1.bf16.msra.mxu0 %v4982
        %7390 = vmatprep.subr.bf16.mxu0 %v4967
        %7391 = vmatpush1.bf16.msra.mxu0 %v4966
        %7392 = vmatprep.subr.bf16.mxu0 %v4951
        %7393 = vmatpush1.bf16.msra.mxu0 %v4950
        %7394 = vmatprep.subr.bf16.mxu0 %v5191
        %7395 = vmatpush2.bf16.msra.mxu0 %v5190
        %7396 = vmatprep.subr.bf16.mxu0 %v5175
        %7397 = vmatpush2.bf16.msra.mxu0 %v5174
        %7398 = vmatprep.subr.bf16.mxu0 %v5159
        %7399 = vmatpush2.bf16.msra.mxu0 %v5158
        %7400 = vmatprep.subr.bf16.mxu0 %v5143
        %7401 = vmatpush2.bf16.msra.mxu0 %v5142
        %7402 = vmatprep.subr.bf16.mxu0 %v5127
        %7403 = vmatpush2.bf16.msra.mxu0 %v5126
        %7404 = vmatprep.subr.bf16.mxu0 %v5111
        %7405 = vmatpush2.bf16.msra.mxu0 %v5110
        %7406 = vmatprep.subr.bf16.mxu0 %v5095
        %7407 = vmatpush2.bf16.msra.mxu0 %v5094
        %7408 = vmatprep.subr.bf16.mxu0 %v5079
        %7409 = vmatpush2.bf16.msra.mxu0 %v5078
        %7410 = vmatprep.mubr.bf16.mxu0 %v245
        %7411 = vmatmul.mubr.bf16.gmra.mxu0 %v244
        %v7412 = vpop.f32.mrf.mxu0
        %v7413 = vadd.f32 %v7372, %v7412
        %v7414 = vpop.f32.mrf.mxu0
        %v7415 = vadd.f32 %v7374, %v7414
        %v7416 = vpop.f32.mrf.mxu0
        %v7417 = vpop.f32.mrf.mxu0
        %7418 = vdwg.mxu0
        %7419 = vmatprep.subr.bf16.mxu0 %v5319
        %7420 = vmatpush1.bf16.msra.mxu0 %v5318
        %7421 = vmatprep.subr.bf16.mxu0 %v5303
        %7422 = vmatpush1.bf16.msra.mxu0 %v5302
        %7423 = vmatprep.subr.bf16.mxu0 %v5287
        %7424 = vmatpush1.bf16.msra.mxu0 %v5286
        %7425 = vmatprep.subr.bf16.mxu0 %v5271
        %7426 = vmatpush1.bf16.msra.mxu0 %v5270
        %7427 = vmatprep.subr.bf16.mxu0 %v5255
        %7428 = vmatpush1.bf16.msra.mxu0 %v5254
        %7429 = vmatprep.subr.bf16.mxu0 %v5239
        %7430 = vmatpush1.bf16.msra.mxu0 %v5238
        %7431 = vmatprep.subr.bf16.mxu0 %v5223
        %7432 = vmatpush1.bf16.msra.mxu0 %v5222
        %7433 = vmatprep.subr.bf16.mxu0 %v5207
        %7434 = vmatpush1.bf16.msra.mxu0 %v5206
        %7435 = vmatprep.subr.bf16.mxu0 %v5447
        %7436 = vmatpush2.bf16.msra.mxu0 %v5446
        %7437 = vmatprep.subr.bf16.mxu0 %v5431
        %7438 = vmatpush2.bf16.msra.mxu0 %v5430
        %7439 = vmatprep.subr.bf16.mxu0 %v5415
        %7440 = vmatpush2.bf16.msra.mxu0 %v5414
        %7441 = vmatprep.subr.bf16.mxu0 %v5399
        %7442 = vmatpush2.bf16.msra.mxu0 %v5398
        %7443 = vmatprep.subr.bf16.mxu0 %v5383
        %7444 = vmatpush2.bf16.msra.mxu0 %v5382
        %7445 = vmatprep.subr.bf16.mxu0 %v5367
        %7446 = vmatpush2.bf16.msra.mxu0 %v5366
        %7447 = vmatprep.subr.bf16.mxu0 %v5351
        %7448 = vmatpush2.bf16.msra.mxu0 %v5350
        %7449 = vmatprep.subr.bf16.mxu0 %v5335
        %7450 = vmatpush2.bf16.msra.mxu0 %v5334
        %7451 = vmatprep.mubr.bf16.mxu0 %v247
        %7452 = vmatmul.mubr.bf16.gmra.mxu0 %v246
        %v7453 = vpop.f32.mrf.mxu0
        %v7454 = vadd.f32 %v7413, %v7453
        %v7455 = vpop.f32.mrf.mxu0
        %v7456 = vadd.f32 %v7415, %v7455
        %v7457 = vpop.f32.mrf.mxu0
        %v7458 = vpop.f32.mrf.mxu0
        %7459 = vdwg.mxu0
        %7460 = vmatprep.subr.bf16.mxu0 %v4553
        %7461 = vmatpush1.bf16.msra.mxu0 %v4552
        %7462 = vmatprep.subr.bf16.mxu0 %v4537
        %7463 = vmatpush1.bf16.msra.mxu0 %v4536
        %7464 = vmatprep.subr.bf16.mxu0 %v4521
        %7465 = vmatpush1.bf16.msra.mxu0 %v4520
        %7466 = vmatprep.subr.bf16.mxu0 %v4505
        %7467 = vmatpush1.bf16.msra.mxu0 %v4504
        %7468 = vmatprep.subr.bf16.mxu0 %v4489
        %7469 = vmatpush1.bf16.msra.mxu0 %v4488
        %7470 = vmatprep.subr.bf16.mxu0 %v4473
        %7471 = vmatpush1.bf16.msra.mxu0 %v4472
        %7472 = vmatprep.subr.bf16.mxu0 %v4457
        %7473 = vmatpush1.bf16.msra.mxu0 %v4456
        %7474 = vmatprep.subr.bf16.mxu0 %v4441
        %7475 = vmatpush1.bf16.msra.mxu0 %v4440
        %7476 = vmatprep.subr.bf16.mxu0 %v4681
        %7477 = vmatpush2.bf16.msra.mxu0 %v4680
        %7478 = vmatprep.subr.bf16.mxu0 %v4665
        %7479 = vmatpush2.bf16.msra.mxu0 %v4664
        %7480 = vmatprep.subr.bf16.mxu0 %v4649
        %7481 = vmatpush2.bf16.msra.mxu0 %v4648
        %7482 = vmatprep.subr.bf16.mxu0 %v4633
        %7483 = vmatpush2.bf16.msra.mxu0 %v4632
        %7484 = vmatprep.subr.bf16.mxu0 %v4617
        %7485 = vmatpush2.bf16.msra.mxu0 %v4616
        %7486 = vmatprep.subr.bf16.mxu0 %v4601
        %7487 = vmatpush2.bf16.msra.mxu0 %v4600
        %7488 = vmatprep.subr.bf16.mxu0 %v4585
        %7489 = vmatpush2.bf16.msra.mxu0 %v4584
        %7490 = vmatprep.subr.bf16.mxu0 %v4569
        %7491 = vmatpush2.bf16.msra.mxu0 %v4568
        %7492 = vmatprep.mubr.bf16.mxu0 %v241
        %7493 = vmatmul.mubr.bf16.gmra.mxu0 %v240
        %v7494 = vpop.f32.mrf.mxu0
        %v7495 = vadd.f32 %v1327, %v7494
        %v7496 = vpop.f32.mrf.mxu0
        %v7497 = vadd.f32 %v1331, %v7496
        %v7498 = vpop.f32.mrf.mxu0
        %v7499 = vpop.f32.mrf.mxu0
        %7500 = vdwg.mxu0
        %7501 = vmatprep.subr.bf16.mxu0 %v4809
        %7502 = vmatpush1.bf16.msra.mxu0 %v4808
        %7503 = vmatprep.subr.bf16.mxu0 %v4793
        %7504 = vmatpush1.bf16.msra.mxu0 %v4792
        %7505 = vmatprep.subr.bf16.mxu0 %v4777
        %7506 = vmatpush1.bf16.msra.mxu0 %v4776
        %7507 = vmatprep.subr.bf16.mxu0 %v4761
        %7508 = vmatpush1.bf16.msra.mxu0 %v4760
        %7509 = vmatprep.subr.bf16.mxu0 %v4745
        %7510 = vmatpush1.bf16.msra.mxu0 %v4744
        %7511 = vmatprep.subr.bf16.mxu0 %v4729
        %7512 = vmatpush1.bf16.msra.mxu0 %v4728
        %7513 = vmatprep.subr.bf16.mxu0 %v4713
        %7514 = vmatpush1.bf16.msra.mxu0 %v4712
        %7515 = vmatprep.subr.bf16.mxu0 %v4697
        %7516 = vmatpush1.bf16.msra.mxu0 %v4696
        %7517 = vmatprep.subr.bf16.mxu0 %v4937
        %7518 = vmatpush2.bf16.msra.mxu0 %v4936
        %7519 = vmatprep.subr.bf16.mxu0 %v4921
        %7520 = vmatpush2.bf16.msra.mxu0 %v4920
        %7521 = vmatprep.subr.bf16.mxu0 %v4905
        %7522 = vmatpush2.bf16.msra.mxu0 %v4904
        %7523 = vmatprep.subr.bf16.mxu0 %v4889
        %7524 = vmatpush2.bf16.msra.mxu0 %v4888
        %7525 = vmatprep.subr.bf16.mxu0 %v4873
        %7526 = vmatpush2.bf16.msra.mxu0 %v4872
        %7527 = vmatprep.subr.bf16.mxu0 %v4857
        %7528 = vmatpush2.bf16.msra.mxu0 %v4856
        %7529 = vmatprep.subr.bf16.mxu0 %v4841
        %7530 = vmatpush2.bf16.msra.mxu0 %v4840
        %7531 = vmatprep.subr.bf16.mxu0 %v4825
        %7532 = vmatpush2.bf16.msra.mxu0 %v4824
        %7533 = vmatprep.mubr.bf16.mxu0 %v243
        %7534 = vmatmul.mubr.bf16.gmra.mxu0 %v242
        %v7535 = vpop.f32.mrf.mxu0
        %v7536 = vadd.f32 %v7495, %v7535
        %v7537 = vpop.f32.mrf.mxu0
        %v7538 = vadd.f32 %v7497, %v7537
        %v7539 = vpop.f32.mrf.mxu0
        %v7540 = vpop.f32.mrf.mxu0
        %7541 = vdwg.mxu0
        %7542 = vmatprep.subr.bf16.mxu0 %v5065
        %7543 = vmatpush1.bf16.msra.mxu0 %v5064
        %7544 = vmatprep.subr.bf16.mxu0 %v5049
        %7545 = vmatpush1.bf16.msra.mxu0 %v5048
        %7546 = vmatprep.subr.bf16.mxu0 %v5033
        %7547 = vmatpush1.bf16.msra.mxu0 %v5032
        %7548 = vmatprep.subr.bf16.mxu0 %v5017
        %7549 = vmatpush1.bf16.msra.mxu0 %v5016
        %7550 = vmatprep.subr.bf16.mxu0 %v5001
        %7551 = vmatpush1.bf16.msra.mxu0 %v5000
        %7552 = vmatprep.subr.bf16.mxu0 %v4985
        %7553 = vmatpush1.bf16.msra.mxu0 %v4984
        %7554 = vmatprep.subr.bf16.mxu0 %v4969
        %7555 = vmatpush1.bf16.msra.mxu0 %v4968
        %7556 = vmatprep.subr.bf16.mxu0 %v4953
        %7557 = vmatpush1.bf16.msra.mxu0 %v4952
        %7558 = vmatprep.subr.bf16.mxu0 %v5193
        %7559 = vmatpush2.bf16.msra.mxu0 %v5192
        %7560 = vmatprep.subr.bf16.mxu0 %v5177
        %7561 = vmatpush2.bf16.msra.mxu0 %v5176
        %7562 = vmatprep.subr.bf16.mxu0 %v5161
        %7563 = vmatpush2.bf16.msra.mxu0 %v5160
        %7564 = vmatprep.subr.bf16.mxu0 %v5145
        %7565 = vmatpush2.bf16.msra.mxu0 %v5144
        %7566 = vmatprep.subr.bf16.mxu0 %v5129
        %7567 = vmatpush2.bf16.msra.mxu0 %v5128
        %7568 = vmatprep.subr.bf16.mxu0 %v5113
        %7569 = vmatpush2.bf16.msra.mxu0 %v5112
        %7570 = vmatprep.subr.bf16.mxu0 %v5097
        %7571 = vmatpush2.bf16.msra.mxu0 %v5096
        %7572 = vmatprep.subr.bf16.mxu0 %v5081
        %7573 = vmatpush2.bf16.msra.mxu0 %v5080
        %7574 = vmatprep.mubr.bf16.mxu0 %v245
        %7575 = vmatmul.mubr.bf16.gmra.mxu0 %v244
        %v7576 = vpop.f32.mrf.mxu0
        %v7577 = vadd.f32 %v7536, %v7576
        %v7578 = vpop.f32.mrf.mxu0
        %v7579 = vadd.f32 %v7538, %v7578
        %v7580 = vpop.f32.mrf.mxu0
        %v7581 = vpop.f32.mrf.mxu0
        %7582 = vdwg.mxu0
        %7583 = vmatprep.subr.bf16.mxu0 %v5321
        %7584 = vmatpush1.bf16.msra.mxu0 %v5320
        %7585 = vmatprep.subr.bf16.mxu0 %v5305
        %7586 = vmatpush1.bf16.msra.mxu0 %v5304
        %7587 = vmatprep.subr.bf16.mxu0 %v5289
        %7588 = vmatpush1.bf16.msra.mxu0 %v5288
        %7589 = vmatprep.subr.bf16.mxu0 %v5273
        %7590 = vmatpush1.bf16.msra.mxu0 %v5272
        %7591 = vmatprep.subr.bf16.mxu0 %v5257
        %7592 = vmatpush1.bf16.msra.mxu0 %v5256
        %7593 = vmatprep.subr.bf16.mxu0 %v5241
        %7594 = vmatpush1.bf16.msra.mxu0 %v5240
        %7595 = vmatprep.subr.bf16.mxu0 %v5225
        %7596 = vmatpush1.bf16.msra.mxu0 %v5224
        %7597 = vmatprep.subr.bf16.mxu0 %v5209
        %7598 = vmatpush1.bf16.msra.mxu0 %v5208
        %7599 = vmatprep.subr.bf16.mxu0 %v5449
        %7600 = vmatpush2.bf16.msra.mxu0 %v5448
        %7601 = vmatprep.subr.bf16.mxu0 %v5433
        %7602 = vmatpush2.bf16.msra.mxu0 %v5432
        %7603 = vmatprep.subr.bf16.mxu0 %v5417
        %7604 = vmatpush2.bf16.msra.mxu0 %v5416
        %7605 = vmatprep.subr.bf16.mxu0 %v5401
        %7606 = vmatpush2.bf16.msra.mxu0 %v5400
        %7607 = vmatprep.subr.bf16.mxu0 %v5385
        %7608 = vmatpush2.bf16.msra.mxu0 %v5384
        %7609 = vmatprep.subr.bf16.mxu0 %v5369
        %7610 = vmatpush2.bf16.msra.mxu0 %v5368
        %7611 = vmatprep.subr.bf16.mxu0 %v5353
        %7612 = vmatpush2.bf16.msra.mxu0 %v5352
        %7613 = vmatprep.subr.bf16.mxu0 %v5337
        %7614 = vmatpush2.bf16.msra.mxu0 %v5336
        %7615 = vmatprep.mubr.bf16.mxu0 %v247
        %7616 = vmatmul.mubr.bf16.gmra.mxu0 %v246
        %v7617 = vpop.f32.mrf.mxu0
        %v7618 = vadd.f32 %v7577, %v7617
        %v7619 = vpop.f32.mrf.mxu0
        %v7620 = vadd.f32 %v7579, %v7619
        %v7621 = vpop.f32.mrf.mxu0
        %v7622 = vpop.f32.mrf.mxu0
        %7623 = vdwg.mxu0
        %7624 = vmatprep.subr.bf16.mxu0 %v4555
        %7625 = vmatpush1.bf16.msra.mxu0 %v4554
        %7626 = vmatprep.subr.bf16.mxu0 %v4539
        %7627 = vmatpush1.bf16.msra.mxu0 %v4538
        %7628 = vmatprep.subr.bf16.mxu0 %v4523
        %7629 = vmatpush1.bf16.msra.mxu0 %v4522
        %7630 = vmatprep.subr.bf16.mxu0 %v4507
        %7631 = vmatpush1.bf16.msra.mxu0 %v4506
        %7632 = vmatprep.subr.bf16.mxu0 %v4491
        %7633 = vmatpush1.bf16.msra.mxu0 %v4490
        %7634 = vmatprep.subr.bf16.mxu0 %v4475
        %7635 = vmatpush1.bf16.msra.mxu0 %v4474
        %7636 = vmatprep.subr.bf16.mxu0 %v4459
        %7637 = vmatpush1.bf16.msra.mxu0 %v4458
        %7638 = vmatprep.subr.bf16.mxu0 %v4443
        %7639 = vmatpush1.bf16.msra.mxu0 %v4442
        %7640 = vmatprep.subr.bf16.mxu0 %v4683
        %7641 = vmatpush2.bf16.msra.mxu0 %v4682
        %7642 = vmatprep.subr.bf16.mxu0 %v4667
        %7643 = vmatpush2.bf16.msra.mxu0 %v4666
        %7644 = vmatprep.subr.bf16.mxu0 %v4651
        %7645 = vmatpush2.bf16.msra.mxu0 %v4650
        %7646 = vmatprep.subr.bf16.mxu0 %v4635
        %7647 = vmatpush2.bf16.msra.mxu0 %v4634
        %7648 = vmatprep.subr.bf16.mxu0 %v4619
        %7649 = vmatpush2.bf16.msra.mxu0 %v4618
        %7650 = vmatprep.subr.bf16.mxu0 %v4603
        %7651 = vmatpush2.bf16.msra.mxu0 %v4602
        %7652 = vmatprep.subr.bf16.mxu0 %v4587
        %7653 = vmatpush2.bf16.msra.mxu0 %v4586
        %7654 = vmatprep.subr.bf16.mxu0 %v4571
        %7655 = vmatpush2.bf16.msra.mxu0 %v4570
        %7656 = vmatprep.mubr.bf16.mxu0 %v241
        %7657 = vmatmul.mubr.bf16.gmra.mxu0 %v240
        %v7658 = vpop.f32.mrf.mxu0
        %v7659 = vadd.f32 %v1335, %v7658
        %v7660 = vpop.f32.mrf.mxu0
        %v7661 = vadd.f32 %v1339, %v7660
        %v7662 = vpop.f32.mrf.mxu0
        %v7663 = vpop.f32.mrf.mxu0
        %7664 = vdwg.mxu0
        %7665 = vmatprep.subr.bf16.mxu0 %v4811
        %7666 = vmatpush1.bf16.msra.mxu0 %v4810
        %7667 = vmatprep.subr.bf16.mxu0 %v4795
        %7668 = vmatpush1.bf16.msra.mxu0 %v4794
        %7669 = vmatprep.subr.bf16.mxu0 %v4779
        %7670 = vmatpush1.bf16.msra.mxu0 %v4778
        %7671 = vmatprep.subr.bf16.mxu0 %v4763
        %7672 = vmatpush1.bf16.msra.mxu0 %v4762
        %7673 = vmatprep.subr.bf16.mxu0 %v4747
        %7674 = vmatpush1.bf16.msra.mxu0 %v4746
        %7675 = vmatprep.subr.bf16.mxu0 %v4731
        %7676 = vmatpush1.bf16.msra.mxu0 %v4730
        %7677 = vmatprep.subr.bf16.mxu0 %v4715
        %7678 = vmatpush1.bf16.msra.mxu0 %v4714
        %7679 = vmatprep.subr.bf16.mxu0 %v4699
        %7680 = vmatpush1.bf16.msra.mxu0 %v4698
        %7681 = vmatprep.subr.bf16.mxu0 %v4939
        %7682 = vmatpush2.bf16.msra.mxu0 %v4938
        %7683 = vmatprep.subr.bf16.mxu0 %v4923
        %7684 = vmatpush2.bf16.msra.mxu0 %v4922
        %7685 = vmatprep.subr.bf16.mxu0 %v4907
        %7686 = vmatpush2.bf16.msra.mxu0 %v4906
        %7687 = vmatprep.subr.bf16.mxu0 %v4891
        %7688 = vmatpush2.bf16.msra.mxu0 %v4890
        %7689 = vmatprep.subr.bf16.mxu0 %v4875
        %7690 = vmatpush2.bf16.msra.mxu0 %v4874
        %7691 = vmatprep.subr.bf16.mxu0 %v4859
        %7692 = vmatpush2.bf16.msra.mxu0 %v4858
        %7693 = vmatprep.subr.bf16.mxu0 %v4843
        %7694 = vmatpush2.bf16.msra.mxu0 %v4842
        %7695 = vmatprep.subr.bf16.mxu0 %v4827
        %7696 = vmatpush2.bf16.msra.mxu0 %v4826
        %7697 = vmatprep.mubr.bf16.mxu0 %v243
        %7698 = vmatmul.mubr.bf16.gmra.mxu0 %v242
        %v7699 = vpop.f32.mrf.mxu0
        %v7700 = vadd.f32 %v7659, %v7699
        %v7701 = vpop.f32.mrf.mxu0
        %v7702 = vadd.f32 %v7661, %v7701
        %v7703 = vpop.f32.mrf.mxu0
        %v7704 = vpop.f32.mrf.mxu0
        %7705 = vdwg.mxu0
        %7706 = vmatprep.subr.bf16.mxu0 %v5067
        %7707 = vmatpush1.bf16.msra.mxu0 %v5066
        %7708 = vmatprep.subr.bf16.mxu0 %v5051
        %7709 = vmatpush1.bf16.msra.mxu0 %v5050
        %7710 = vmatprep.subr.bf16.mxu0 %v5035
        %7711 = vmatpush1.bf16.msra.mxu0 %v5034
        %7712 = vmatprep.subr.bf16.mxu0 %v5019
        %7713 = vmatpush1.bf16.msra.mxu0 %v5018
        %7714 = vmatprep.subr.bf16.mxu0 %v5003
        %7715 = vmatpush1.bf16.msra.mxu0 %v5002
        %7716 = vmatprep.subr.bf16.mxu0 %v4987
        %7717 = vmatpush1.bf16.msra.mxu0 %v4986
        %7718 = vmatprep.subr.bf16.mxu0 %v4971
        %7719 = vmatpush1.bf16.msra.mxu0 %v4970
        %7720 = vmatprep.subr.bf16.mxu0 %v4955
        %7721 = vmatpush1.bf16.msra.mxu0 %v4954
        %7722 = vmatprep.subr.bf16.mxu0 %v5195
        %7723 = vmatpush2.bf16.msra.mxu0 %v5194
        %7724 = vmatprep.subr.bf16.mxu0 %v5179
        %7725 = vmatpush2.bf16.msra.mxu0 %v5178
        %7726 = vmatprep.subr.bf16.mxu0 %v5163
        %7727 = vmatpush2.bf16.msra.mxu0 %v5162
        %7728 = vmatprep.subr.bf16.mxu0 %v5147
        %7729 = vmatpush2.bf16.msra.mxu0 %v5146
        %7730 = vmatprep.subr.bf16.mxu0 %v5131
        %7731 = vmatpush2.bf16.msra.mxu0 %v5130
        %7732 = vmatprep.subr.bf16.mxu0 %v5115
        %7733 = vmatpush2.bf16.msra.mxu0 %v5114
        %7734 = vmatprep.subr.bf16.mxu0 %v5099
        %7735 = vmatpush2.bf16.msra.mxu0 %v5098
        %7736 = vmatprep.subr.bf16.mxu0 %v5083
        %7737 = vmatpush2.bf16.msra.mxu0 %v5082
        %7738 = vmatprep.mubr.bf16.mxu0 %v245
        %7739 = vmatmul.mubr.bf16.gmra.mxu0 %v244
        %v7740 = vpop.f32.mrf.mxu0
        %v7741 = vadd.f32 %v7700, %v7740
        %v7742 = vpop.f32.mrf.mxu0
        %v7743 = vadd.f32 %v7702, %v7742
        %v7744 = vpop.f32.mrf.mxu0
        %v7745 = vpop.f32.mrf.mxu0
        %7746 = vdwg.mxu0
        %7747 = vmatprep.subr.bf16.mxu0 %v5323
        %7748 = vmatpush1.bf16.msra.mxu0 %v5322
        %7749 = vmatprep.subr.bf16.mxu0 %v5307
        %7750 = vmatpush1.bf16.msra.mxu0 %v5306
        %7751 = vmatprep.subr.bf16.mxu0 %v5291
        %7752 = vmatpush1.bf16.msra.mxu0 %v5290
        %7753 = vmatprep.subr.bf16.mxu0 %v5275
        %7754 = vmatpush1.bf16.msra.mxu0 %v5274
        %7755 = vmatprep.subr.bf16.mxu0 %v5259
        %7756 = vmatpush1.bf16.msra.mxu0 %v5258
        %7757 = vmatprep.subr.bf16.mxu0 %v5243
        %7758 = vmatpush1.bf16.msra.mxu0 %v5242
        %7759 = vmatprep.subr.bf16.mxu0 %v5227
        %7760 = vmatpush1.bf16.msra.mxu0 %v5226
        %7761 = vmatprep.subr.bf16.mxu0 %v5211
        %7762 = vmatpush1.bf16.msra.mxu0 %v5210
        %7763 = vmatprep.subr.bf16.mxu0 %v5451
        %7764 = vmatpush2.bf16.msra.mxu0 %v5450
        %7765 = vmatprep.subr.bf16.mxu0 %v5435
        %7766 = vmatpush2.bf16.msra.mxu0 %v5434
        %7767 = vmatprep.subr.bf16.mxu0 %v5419
        %7768 = vmatpush2.bf16.msra.mxu0 %v5418
        %7769 = vmatprep.subr.bf16.mxu0 %v5403
        %7770 = vmatpush2.bf16.msra.mxu0 %v5402
        %7771 = vmatprep.subr.bf16.mxu0 %v5387
        %7772 = vmatpush2.bf16.msra.mxu0 %v5386
        %7773 = vmatprep.subr.bf16.mxu0 %v5371
        %7774 = vmatpush2.bf16.msra.mxu0 %v5370
        %7775 = vmatprep.subr.bf16.mxu0 %v5355
        %7776 = vmatpush2.bf16.msra.mxu0 %v5354
        %7777 = vmatprep.subr.bf16.mxu0 %v5339
        %7778 = vmatpush2.bf16.msra.mxu0 %v5338
        %7779 = vmatprep.mubr.bf16.mxu0 %v247
        %7780 = vmatmul.mubr.bf16.gmra.mxu0 %v246
        %v7781 = vpop.f32.mrf.mxu0
        %v7782 = vadd.f32 %v7741, %v7781
        %v7783 = vpop.f32.mrf.mxu0
        %v7784 = vadd.f32 %v7743, %v7783
        %v7785 = vpop.f32.mrf.mxu0
        %v7786 = vpop.f32.mrf.mxu0
        %7787 = vdwg.mxu0
        %7788 = vst [vmem:[%s230] sm:$0xff] %v6634
        %7789 = vst [vmem:[%s230 + $0x8] sm:$0xff] %v6636
        %7790 = vst [vmem:[%s230 + $0x10] sm:$0xff] %v6798
        %7791 = vst [vmem:[%s230 + $0x18] sm:$0xff] %v6800
        %7792 = vst [vmem:[%s230 + $0x20] sm:$0xff] %v6962
        %7793 = vst [vmem:[%s230 + $0x28] sm:$0xff] %v6964
        %7794 = vst [vmem:[%s230 + $0x30] sm:$0xff] %v7126
        %7795 = vst [vmem:[%s230 + $0x38] sm:$0xff] %v7128
        %7796 = vst [vmem:[%s230 + $0x40] sm:$0xff] %v7290
        %7797 = vst [vmem:[%s230 + $0x48] sm:$0xff] %v7292
        %7798 = vst [vmem:[%s230 + $0x50] sm:$0xff] %v7454
        %7799 = vst [vmem:[%s230 + $0x58] sm:$0xff] %v7456
        %7800 = vst [vmem:[%s230 + $0x60] sm:$0xff] %v7618
        %7801 = vst [vmem:[%s230 + $0x68] sm:$0xff] %v7620
        %7802 = vst [vmem:[%s230 + $0x70] sm:$0xff] %v7782
        %7803 = vst [vmem:[%s230 + $0x78] sm:$0xff] %v7784
        %s7804 = smul.u32 16, %s20
        %p7805 = scmp.lt.s32.totalorder %s7804, 63
        %s7806 = scalar_select %p7805, %s7804, 63
        %s7807 = smul.addr %s7806, 8
        %s7808 = scalar_lea.vmem %s3, %s7807
        // Predicated region
        $region41: #{vae_net_forward.3} parent=31 // pred_check
          %p7809 = pneg %p111
        $region42: #{vae_net_forward.3} parent=31 // pred_check_branch
          %7811 = sbr.rel (%p7809) target = $region44
        $region43: #{vae_net_forward.3} parent=31 // pred_region
          %s7812 = smul.u32 16, %s20
        $region44: #{vae_net_forward.3} parent=31 // pred_fallthru
          _
      $region32: #{vae_net_forward.3} parent=5 // pred_fallthru
        _
      %p7813 = scmp.le.s32.totalorder 2, %s15
      // Predicated region
      $region45: #{vae_net_forward.3} parent=5 // pred_check
        %p7814 = pneg %p7813
      $region46: #{vae_net_forward.3} parent=5 // pred_check_branch
        %7816 = sbr.rel (%p7814) target = $region48
      $region47: #{vae_net_forward.3} parent=5 // pred_region
        %s7817 = ssub.s32 %s15, 2
        // Predicated region
        $region49: #{vae_net_forward.3} parent=47 // pred_check
          %p7818 = pneg %p117
        $region50: #{vae_net_forward.3} parent=47 // pred_check_branch
          %7820 = sbr.rel (%p7818) target = $region52
        $region51: #{vae_net_forward.3} parent=47 // pred_region
          %s7821 = smul.u32 16, %s21
          %p7822 = scmp.lt.s32.totalorder %s7821, 63
          %s7823 = scalar_select %p7822, %s7821, 63
          %s7824 = smul.addr %s7823, 8
          %s7825 = scalar_lea.vmem %s3, %s7824
        $region52: #{vae_net_forward.3} parent=47 // pred_fallthru
          _
      $region48: #{vae_net_forward.3} parent=5 // pred_fallthru
        _
    $region6: #{vae_net_forward.3} parent=1 // loop_footer
      %s19 = sadd.s32 1, %s15
    $region7: #{vae_net_forward.3} parent=1 // loop_footer_branch
      %14 = sbr.rel target = $region3
    $region8: #{vae_net_forward.3} parent=1 // loop_exit
      _
    %7826 = vsyncpa [#allocation3], 1
    %s7827 = scalar_lea.sflag [#allocation3], 1
    %7828 = vsyncpa %s7827, 1
    %7829 = vsyncpa [#allocation5], 1
    %s7830 = scalar_lea.sflag [#allocation5], 1
    %7831 = vsyncpa %s7830, 1

</llo_original>
